<compile_context>
chip_gen: v7x
topology: tpu7x:2x2x1
jax: 0.10.0
libtpu: 0.0.40
codegen_flags: <defaults>
</compile_context>

<pallas_src>
import functools

import jax
import jax.numpy as jnp
from jax import lax
from jax.experimental import pallas as pl
from jax.experimental.pallas import tpu as pltpu

EPS = 1e-5
C = 64  # DB1 hard-codes BatchNorm2d(64) -> outplanes must be 64


# ---------------------------------------------------------------------------
# Fused kernel
# ---------------------------------------------------------------------------
def _bn_relu_train(y, gamma, beta, n_rows):
    """PyTorch training-mode BatchNorm (batch stats, biased var) + ReLU."""
    inv_m = 1.0 / n_rows
    mean = jnp.sum(y, axis=0, keepdims=True) * inv_m          # (1, C)
    mean_sq = jnp.sum(y * y, axis=0, keepdims=True) * inv_m   # (1, C)
    var = mean_sq - mean * mean                               # biased variance
    scale = gamma * lax.rsqrt(var + EPS)                      # EUP rsqrt
    shift = beta - mean * scale
    return jnp.maximum(y * scale + shift, 0.0)


def db1_fused_kernel(x_ref, w1_ref, w2_ref, g1_ref, b1_ref, g2_ref, b2_ref,
                     o_ref, pad_ref, col_ref, *, n, h, w, cin):
    m = n * h * w

    # ---- squeeze1: 1x1 conv ----
    x = x_ref[...]                                            # (M, Cin)
    if cin <= 8:
        # tiny Cin: broadcasted VPU FMAs, skip the MXU entirely
        y1 = x[:, 0:1] * w1_ref[0:1, :]
        for c in range(1, cin):
            y1 = y1 + x[:, c:c + 1] * w1_ref[c:c + 1, :]
    else:
        y1 = jnp.dot(x, w1_ref[...], preferred_element_type=jnp.float32)
    # conv bias omitted: exactly cancelled by training-mode BN mean subtraction
    a1 = _bn_relu_train(y1, g1_ref[...], b1_ref[...], m)      # (M, 64)

    # ---- zero-pad (pad=2) into VMEM scratch ----
    pad_ref[...] = jnp.zeros(pad_ref.shape, pad_ref.dtype)
    pad_ref[:, 2:2 + h, 2:2 + w, :] = a1.reshape(n, h, w, C)

    # ---- im2col: stack the 9 dilated (dilation=2) taps along contraction ----
    for ky in range(3):
        for kx in range(3):
            tap = ky * 3 + kx
            patch = pad_ref[:, 2 * ky:2 * ky + h, 2 * kx:2 * kx + w, :]
            col_ref[:, tap * C:(tap + 1) * C] = patch.reshape(m, C)

    # ---- squeeze2: single (M, 576) x (576, 64) MXU matmul ----
    y2 = jnp.dot(col_ref[...], w2_ref[...],
                 preferred_element_type=jnp.float32)          # (M, 64)

    # ---- BN + ReLU, write out ----
    o_ref[...] = _bn_relu_train(y2, g2_ref[...], b2_ref[...], m)


# ---------------------------------------------------------------------------
# Wrapper
# ---------------------------------------------------------------------------
def db1_forward(x_nhwc, params):
    """Fused DB1 forward. x_nhwc: (N, H, W, Cin) f32. Returns (z, z) in NHWC."""
    n, h, w, cin = x_nhwc.shape
    m = n * h * w
    x2d = x_nhwc.reshape(m, cin)

    kernel = functools.partial(db1_fused_kernel, n=n, h=h, w=w, cin=cin)
    y2d = pl.pallas_call(
        kernel,
        out_shape=jax.ShapeDtypeStruct((m, C), jnp.float32),
        grid=(1,),
        in_specs=[
            pl.BlockSpec((m, cin), lambda i: (0, 0)),     # x (flattened NHWC)
            pl.BlockSpec((cin, C), lambda i: (0, 0)),     # w1
            pl.BlockSpec((9 * C, C), lambda i: (0, 0)),   # w2 in im2col layout
            pl.BlockSpec((1, C), lambda i: (0, 0)),       # bn1 gamma
            pl.BlockSpec((1, C), lambda i: (0, 0)),       # bn1 beta
            pl.BlockSpec((1, C), lambda i: (0, 0)),       # bn2 gamma
            pl.BlockSpec((1, C), lambda i: (0, 0)),       # bn2 beta
        ],
        out_specs=pl.BlockSpec((m, C), lambda i: (0, 0)),
        scratch_shapes=[
            pltpu.VMEM((n, h + 4, w + 4, C), jnp.float32),  # zero-padded a1
            pltpu.VMEM((m, 9 * C), jnp.float32),            # im2col buffer
        ],
        compiler_params=pltpu.CompilerParams(
            dimension_semantics=("arbitrary",),
            vmem_limit_bytes=32 * 1024 * 1024,
        ),
    )(x2d, params["w1"], params["w2col"],
      params["bn1_g"], params["bn1_b"], params["bn2_g"], params["bn2_b"])

    z = y2d.reshape(n, h, w, C)
    return z, z  # DB1.forward returns (z, z)


# ---------------------------------------------------------------------------
# Plain-JAX reference (same training-mode BN semantics) for a numeric check
# ---------------------------------------------------------------------------
def db1_reference(x_nhwc, params):
    def bn_relu(y, gamma, beta):
        y2d = y.reshape(-1, C)
        mean = jnp.mean(y2d, axis=0)
        var = jnp.mean((y2d - mean) ** 2, axis=0)
        yhat = (y - mean) / jnp.sqrt(var + EPS) * gamma.reshape(-1) \
            + beta.reshape(-1)
        return jnp.maximum(yhat, 0.0)

    y1 = jnp.einsum("nhwc,cd->nhwd", x_nhwc, params["w1"])
    a1 = bn_relu(y1, params["bn1_g"], params["bn1_b"])
    w2 = params["w2col"].reshape(3, 3, C, C)
    y2 = lax.conv_general_dilated(
        a1, w2, window_strides=(1, 1), padding=((2, 2), (2, 2)),
        rhs_dilation=(2, 2), dimension_numbers=("NHWC", "HWIO", "NHWC"))
    return bn_relu(y2, params["bn2_g"], params["bn2_b"])


def init_params(key, inplanes, outplanes=64):
    assert outplanes == 64, "BatchNorm2d(64) in DB1 hard-codes 64 channels"
    k1, k2 = jax.random.split(key)
    # kaiming_normal_(mode='fan_in') with ReLU gain sqrt(2)
    std1 = (2.0 / (inplanes * 1 * 1)) ** 0.5
    std2 = (2.0 / (64 * 3 * 3)) ** 0.5
    w2 = jax.random.normal(k2, (3, 3, 64, 64), jnp.float32) * std2  # kh,kw,ci,co
    return {
        # conv biases are zero-init and cancel exactly under training-mode BN,
        # so they are omitted entirely.
        "w1": jax.random.normal(k1, (inplanes, 64), jnp.float32) * std1,
        "w2col": w2.reshape(9 * 64, 64),  # row (ky*3+kx)*64 + ci, col = co
        "bn1_g": jnp.ones((1, 64), jnp.float32),
        "bn1_b": jnp.zeros((1, 64), jnp.float32),
        "bn2_g": jnp.ones((1, 64), jnp.float32),
        "bn2_b": jnp.zeros((1, 64), jnp.float32),
    }


if __name__ == "__main__":
    key = jax.random.PRNGKey(0)
    kx, kp = jax.random.split(key)

    # PyTorch would see NCHW (2, 4, 16, 16); the kernel uses NHWC internally.
    N, Cin, H, W = 2, 4, 16, 16
    x_nchw = jax.random.normal(kx, (N, Cin, H, W), jnp.float32)
    x_nhwc = jnp.transpose(x_nchw, (0, 2, 3, 1))

    params = init_params(kp, inplanes=Cin, outplanes=64)

    fwd = jax.jit(functools.partial(db1_forward, params=params))
    z1, z2 = fwd(x_nhwc)
    jax.block_until_ready((z1, z2))
    assert z1.shape == (N, H, W, 64) and z2.shape == (N, H, W, 64)

    # Numeric check vs. plain-JAX reference (loose tol: both paths use default
    # TPU matmul precision).
    z_ref = jax.jit(functools.partial(db1_reference, params=params))(x_nhwc)
    max_err = float(jnp.max(jnp.abs(z1 - z_ref)))
    assert max_err < 1e-1, f"max abs err too large: {max_err}"

    print("KERNEL_OK")
</pallas_src>

<mosaic_0001>
module attributes {stable_mosaic.version = 11 : i64} {
  func.func @db1_fused_kernel(%arg0: i32, %arg1: memref<512x4xf32, #tpu.memory_space<vmem>>, %arg2: memref<4x64xf32, #tpu.memory_space<vmem>>, %arg3: memref<576x64xf32, #tpu.memory_space<vmem>>, %arg4: memref<1x64xf32, #tpu.memory_space<vmem>>, %arg5: memref<1x64xf32, #tpu.memory_space<vmem>>, %arg6: memref<1x64xf32, #tpu.memory_space<vmem>>, %arg7: memref<1x64xf32, #tpu.memory_space<vmem>>, %arg8: memref<512x64xf32, #tpu.memory_space<vmem>>, %arg9: memref<2x20x20x64xf32, #tpu.memory_space<vmem>>, %arg10: memref<512x576xf32, #tpu.memory_space<vmem>>) attributes {dimension_semantics = [#tpu.dimension_semantics<arbitrary>], iteration_bounds = array<i64: 1>, scalar_prefetch = 0 : i64, scratch_operands = 2 : i64, tpu.core_type = #tpu.core_type<tc>, window_params = [{pipeline_mode = #tpu.pipeline_mode<synchronous>, transform_indices = @transform_0, window_bounds = array<i64: 512, 4>}, {pipeline_mode = #tpu.pipeline_mode<synchronous>, transform_indices = @transform_1, window_bounds = array<i64: 4, 64>}, {pipeline_mode = #tpu.pipeline_mode<synchronous>, transform_indices = @transform_2, window_bounds = array<i64: 576, 64>}, {pipeline_mode = #tpu.pipeline_mode<synchronous>, transform_indices = @transform_3, window_bounds = array<i64: 1, 64>}, {pipeline_mode = #tpu.pipeline_mode<synchronous>, transform_indices = @transform_4, window_bounds = array<i64: 1, 64>}, {pipeline_mode = #tpu.pipeline_mode<synchronous>, transform_indices = @transform_5, window_bounds = array<i64: 1, 64>}, {pipeline_mode = #tpu.pipeline_mode<synchronous>, transform_indices = @transform_6, window_bounds = array<i64: 1, 64>}, {pipeline_mode = #tpu.pipeline_mode<synchronous>, transform_indices = @transform_7, window_bounds = array<i64: 512, 64>}]} {
    %c0 = arith.constant 0 : index
    %c0_0 = arith.constant 0 : index
    %0 = vector.load %arg1[%c0, %c0_0] : memref<512x4xf32, #tpu.memory_space<vmem>>, vector<512x4xf32>
    %1 = vector.extract_strided_slice %0 {offsets = [0, 0], sizes = [512, 1], strides = [1, 1]} : vector<512x4xf32> to vector<512x1xf32>
    %c0_1 = arith.constant 0 : index
    %c0_2 = arith.constant 0 : index
    %2 = vector.load %arg2[%c0_1, %c0_2] : memref<4x64xf32, #tpu.memory_space<vmem>>, vector<1x64xf32>
    %3 = vector.broadcast %1 : vector<512x1xf32> to vector<512x64xf32>
    %4 = vector.broadcast %2 : vector<1x64xf32> to vector<512x64xf32>
    %5 = arith.mulf %3, %4 : vector<512x64xf32>
    %6 = vector.extract_strided_slice %0 {offsets = [0, 1], sizes = [512, 1], strides = [1, 1]} : vector<512x4xf32> to vector<512x1xf32>
    %c1 = arith.constant 1 : index
    %c0_3 = arith.constant 0 : index
    %7 = vector.load %arg2[%c1, %c0_3] : memref<4x64xf32, #tpu.memory_space<vmem>>, vector<1x64xf32>
    %8 = vector.broadcast %6 : vector<512x1xf32> to vector<512x64xf32>
    %9 = vector.broadcast %7 : vector<1x64xf32> to vector<512x64xf32>
    %10 = arith.mulf %8, %9 : vector<512x64xf32>
    %11 = arith.addf %5, %10 : vector<512x64xf32>
    %12 = vector.extract_strided_slice %0 {offsets = [0, 2], sizes = [512, 1], strides = [1, 1]} : vector<512x4xf32> to vector<512x1xf32>
    %c2 = arith.constant 2 : index
    %c0_4 = arith.constant 0 : index
    %13 = vector.load %arg2[%c2, %c0_4] : memref<4x64xf32, #tpu.memory_space<vmem>>, vector<1x64xf32>
    %14 = vector.broadcast %12 : vector<512x1xf32> to vector<512x64xf32>
    %15 = vector.broadcast %13 : vector<1x64xf32> to vector<512x64xf32>
    %16 = arith.mulf %14, %15 : vector<512x64xf32>
    %17 = arith.addf %11, %16 : vector<512x64xf32>
    %18 = vector.extract_strided_slice %0 {offsets = [0, 3], sizes = [512, 1], strides = [1, 1]} : vector<512x4xf32> to vector<512x1xf32>
    %c3 = arith.constant 3 : index
    %c0_5 = arith.constant 0 : index
    %19 = vector.load %arg2[%c3, %c0_5] : memref<4x64xf32, #tpu.memory_space<vmem>>, vector<1x64xf32>
    %20 = vector.broadcast %18 : vector<512x1xf32> to vector<512x64xf32>
    %21 = vector.broadcast %19 : vector<1x64xf32> to vector<512x64xf32>
    %22 = arith.mulf %20, %21 : vector<512x64xf32>
    %23 = arith.addf %17, %22 : vector<512x64xf32>
    %c0_6 = arith.constant 0 : index
    %c0_7 = arith.constant 0 : index
    %24 = vector.load %arg4[%c0_6, %c0_7] : memref<1x64xf32, #tpu.memory_space<vmem>>, vector<1x64xf32>
    %c0_8 = arith.constant 0 : index
    %c0_9 = arith.constant 0 : index
    %25 = vector.load %arg5[%c0_8, %c0_9] : memref<1x64xf32, #tpu.memory_space<vmem>>, vector<1x64xf32>
    %cst = arith.constant dense<0.000000e+00> : vector<64xf32>
    %26 = vector.multi_reduction <add>, %23, %cst [0] : vector<512x64xf32> to vector<64xf32>
    %27 = vector.shape_cast %26 : vector<64xf32> to vector<1x64xf32>
    %cst_10 = arith.constant 0.001953125 : f32
    %28 = vector.broadcast %cst_10 : f32 to vector<1x64xf32>
    %29 = arith.mulf %27, %28 : vector<1x64xf32>
    %30 = arith.mulf %23, %23 : vector<512x64xf32>
    %cst_11 = arith.constant dense<0.000000e+00> : vector<64xf32>
    %31 = vector.multi_reduction <add>, %30, %cst_11 [0] : vector<512x64xf32> to vector<64xf32>
    %32 = vector.shape_cast %31 : vector<64xf32> to vector<1x64xf32>
    %cst_12 = arith.constant 0.001953125 : f32
    %33 = vector.broadcast %cst_12 : f32 to vector<1x64xf32>
    %34 = arith.mulf %32, %33 : vector<1x64xf32>
    %35 = arith.mulf %29, %29 : vector<1x64xf32>
    %36 = arith.subf %34, %35 : vector<1x64xf32>
    %cst_13 = arith.constant 9.99999974E-6 : f32
    %37 = vector.broadcast %cst_13 : f32 to vector<1x64xf32>
    %38 = arith.addf %36, %37 : vector<1x64xf32>
    %39 = math.rsqrt %38 : vector<1x64xf32>
    %40 = arith.mulf %24, %39 : vector<1x64xf32>
    %41 = arith.mulf %29, %40 : vector<1x64xf32>
    %42 = arith.subf %25, %41 : vector<1x64xf32>
    %43 = vector.broadcast %40 : vector<1x64xf32> to vector<512x64xf32>
    %44 = arith.mulf %23, %43 : vector<512x64xf32>
    %45 = vector.broadcast %42 : vector<1x64xf32> to vector<512x64xf32>
    %46 = arith.addf %44, %45 : vector<512x64xf32>
    %cst_14 = arith.constant 0.000000e+00 : f32
    %47 = vector.broadcast %cst_14 : f32 to vector<512x64xf32>
    %48 = arith.maximumf %46, %47 : vector<512x64xf32>
    %cst_15 = arith.constant 0.000000e+00 : f32
    %49 = vector.broadcast %cst_15 : f32 to vector<2x20x20x64xf32>
    %c0_16 = arith.constant 0 : index
    %c0_17 = arith.constant 0 : index
    %c0_18 = arith.constant 0 : index
    %c0_19 = arith.constant 0 : index
    %50 = vector.load %arg9[%c0_16, %c0_17, %c0_18, %c0_19] : memref<2x20x20x64xf32, #tpu.memory_space<vmem>>, vector<2x20x20x64xf32>
    tpu.vector_store %arg9[%c0_16, %c0_17, %c0_18, %c0_19], %49 {strides = array<i32>} : memref<2x20x20x64xf32, #tpu.memory_space<vmem>>, vector<2x20x20x64xf32>,
    %51 = vector.shape_cast %48 : vector<512x64xf32> to vector<2x16x16x64xf32>
    %c0_20 = arith.constant 0 : index
    %c2_21 = arith.constant 2 : index
    %c2_22 = arith.constant 2 : index
    %c0_23 = arith.constant 0 : index
    %52 = vector.load %arg9[%c0_20, %c2_21, %c2_22, %c0_23] : memref<2x20x20x64xf32, #tpu.memory_space<vmem>>, vector<2x16x16x64xf32>
    tpu.vector_store %arg9[%c0_20, %c2_21, %c2_22, %c0_23], %51 {strides = array<i32>} : memref<2x20x20x64xf32, #tpu.memory_space<vmem>>, vector<2x16x16x64xf32>,
    %c0_24 = arith.constant 0 : index
    %c0_25 = arith.constant 0 : index
    %c0_26 = arith.constant 0 : index
    %c0_27 = arith.constant 0 : index
    %53 = vector.load %arg9[%c0_24, %c0_25, %c0_26, %c0_27] : memref<2x20x20x64xf32, #tpu.memory_space<vmem>>, vector<2x16x16x64xf32>
    %54 = vector.shape_cast %53 : vector<2x16x16x64xf32> to vector<512x64xf32>
    %c0_28 = arith.constant 0 : index
    %c0_29 = arith.constant 0 : index
    %55 = vector.load %arg10[%c0_28, %c0_29] : memref<512x576xf32, #tpu.memory_space<vmem>>, vector<512x64xf32>
    tpu.vector_store %arg10[%c0_28, %c0_29], %54 {strides = array<i32>} : memref<512x576xf32, #tpu.memory_space<vmem>>, vector<512x64xf32>,
    %c0_30 = arith.constant 0 : index
    %c0_31 = arith.constant 0 : index
    %c2_32 = arith.constant 2 : index
    %c0_33 = arith.constant 0 : index
    %56 = vector.load %arg9[%c0_30, %c0_31, %c2_32, %c0_33] : memref<2x20x20x64xf32, #tpu.memory_space<vmem>>, vector<2x16x16x64xf32>
    %57 = vector.shape_cast %56 : vector<2x16x16x64xf32> to vector<512x64xf32>
    %c0_34 = arith.constant 0 : index
    %c64 = arith.constant 64 : index
    %58 = vector.load %arg10[%c0_34, %c64] : memref<512x576xf32, #tpu.memory_space<vmem>>, vector<512x64xf32>
    tpu.vector_store %arg10[%c0_34, %c64], %57 {strides = array<i32>} : memref<512x576xf32, #tpu.memory_space<vmem>>, vector<512x64xf32>,
    %c0_35 = arith.constant 0 : index
    %c0_36 = arith.constant 0 : index
    %c4 = arith.constant 4 : index
    %c0_37 = arith.constant 0 : index
    %59 = vector.load %arg9[%c0_35, %c0_36, %c4, %c0_37] : memref<2x20x20x64xf32, #tpu.memory_space<vmem>>, vector<2x16x16x64xf32>
    %60 = vector.shape_cast %59 : vector<2x16x16x64xf32> to vector<512x64xf32>
    %c0_38 = arith.constant 0 : index
    %c128 = arith.constant 128 : index
    %61 = vector.load %arg10[%c0_38, %c128] : memref<512x576xf32, #tpu.memory_space<vmem>>, vector<512x64xf32>
    tpu.vector_store %arg10[%c0_38, %c128], %60 {strides = array<i32>} : memref<512x576xf32, #tpu.memory_space<vmem>>, vector<512x64xf32>,
    %c0_39 = arith.constant 0 : index
    %c2_40 = arith.constant 2 : index
    %c0_41 = arith.constant 0 : index
    %c0_42 = arith.constant 0 : index
    %62 = vector.load %arg9[%c0_39, %c2_40, %c0_41, %c0_42] : memref<2x20x20x64xf32, #tpu.memory_space<vmem>>, vector<2x16x16x64xf32>
    %63 = vector.shape_cast %62 : vector<2x16x16x64xf32> to vector<512x64xf32>
    %c0_43 = arith.constant 0 : index
    %c192 = arith.constant 192 : index
    %64 = vector.load %arg10[%c0_43, %c192] : memref<512x576xf32, #tpu.memory_space<vmem>>, vector<512x64xf32>
    tpu.vector_store %arg10[%c0_43, %c192], %63 {strides = array<i32>} : memref<512x576xf32, #tpu.memory_space<vmem>>, vector<512x64xf32>,
    %c0_44 = arith.constant 0 : index
    %c2_45 = arith.constant 2 : index
    %c2_46 = arith.constant 2 : index
    %c0_47 = arith.constant 0 : index
    %65 = vector.load %arg9[%c0_44, %c2_45, %c2_46, %c0_47] : memref<2x20x20x64xf32, #tpu.memory_space<vmem>>, vector<2x16x16x64xf32>
    %66 = vector.shape_cast %65 : vector<2x16x16x64xf32> to vector<512x64xf32>
    %c0_48 = arith.constant 0 : index
    %c256 = arith.constant 256 : index
    %67 = vector.load %arg10[%c0_48, %c256] : memref<512x576xf32, #tpu.memory_space<vmem>>, vector<512x64xf32>
    tpu.vector_store %arg10[%c0_48, %c256], %66 {strides = array<i32>} : memref<512x576xf32, #tpu.memory_space<vmem>>, vector<512x64xf32>,
    %c0_49 = arith.constant 0 : index
    %c2_50 = arith.constant 2 : index
    %c4_51 = arith.constant 4 : index
    %c0_52 = arith.constant 0 : index
    %68 = vector.load %arg9[%c0_49, %c2_50, %c4_51, %c0_52] : memref<2x20x20x64xf32, #tpu.memory_space<vmem>>, vector<2x16x16x64xf32>
    %69 = vector.shape_cast %68 : vector<2x16x16x64xf32> to vector<512x64xf32>
    %c0_53 = arith.constant 0 : index
    %c320 = arith.constant 320 : index
    %70 = vector.load %arg10[%c0_53, %c320] : memref<512x576xf32, #tpu.memory_space<vmem>>, vector<512x64xf32>
    tpu.vector_store %arg10[%c0_53, %c320], %69 {strides = array<i32>} : memref<512x576xf32, #tpu.memory_space<vmem>>, vector<512x64xf32>,
    %c0_54 = arith.constant 0 : index
    %c4_55 = arith.constant 4 : index
    %c0_56 = arith.constant 0 : index
    %c0_57 = arith.constant 0 : index
    %71 = vector.load %arg9[%c0_54, %c4_55, %c0_56, %c0_57] : memref<2x20x20x64xf32, #tpu.memory_space<vmem>>, vector<2x16x16x64xf32>
    %72 = vector.shape_cast %71 : vector<2x16x16x64xf32> to vector<512x64xf32>
    %c0_58 = arith.constant 0 : index
    %c384 = arith.constant 384 : index
    %73 = vector.load %arg10[%c0_58, %c384] : memref<512x576xf32, #tpu.memory_space<vmem>>, vector<512x64xf32>
    tpu.vector_store %arg10[%c0_58, %c384], %72 {strides = array<i32>} : memref<512x576xf32, #tpu.memory_space<vmem>>, vector<512x64xf32>,
    %c0_59 = arith.constant 0 : index
    %c4_60 = arith.constant 4 : index
    %c2_61 = arith.constant 2 : index
    %c0_62 = arith.constant 0 : index
    %74 = vector.load %arg9[%c0_59, %c4_60, %c2_61, %c0_62] : memref<2x20x20x64xf32, #tpu.memory_space<vmem>>, vector<2x16x16x64xf32>
    %75 = vector.shape_cast %74 : vector<2x16x16x64xf32> to vector<512x64xf32>
    %c0_63 = arith.constant 0 : index
    %c448 = arith.constant 448 : index
    %76 = vector.load %arg10[%c0_63, %c448] : memref<512x576xf32, #tpu.memory_space<vmem>>, vector<512x64xf32>
    tpu.vector_store %arg10[%c0_63, %c448], %75 {strides = array<i32>} : memref<512x576xf32, #tpu.memory_space<vmem>>, vector<512x64xf32>,
    %c0_64 = arith.constant 0 : index
    %c4_65 = arith.constant 4 : index
    %c4_66 = arith.constant 4 : index
    %c0_67 = arith.constant 0 : index
    %77 = vector.load %arg9[%c0_64, %c4_65, %c4_66, %c0_67] : memref<2x20x20x64xf32, #tpu.memory_space<vmem>>, vector<2x16x16x64xf32>
    %78 = vector.shape_cast %77 : vector<2x16x16x64xf32> to vector<512x64xf32>
    %c0_68 = arith.constant 0 : index
    %c512 = arith.constant 512 : index
    %79 = vector.load %arg10[%c0_68, %c512] : memref<512x576xf32, #tpu.memory_space<vmem>>, vector<512x64xf32>
    tpu.vector_store %arg10[%c0_68, %c512], %78 {strides = array<i32>} : memref<512x576xf32, #tpu.memory_space<vmem>>, vector<512x64xf32>,
    %c0_69 = arith.constant 0 : index
    %c0_70 = arith.constant 0 : index
    %80 = vector.load %arg10[%c0_69, %c0_70] : memref<512x576xf32, #tpu.memory_space<vmem>>, vector<512x576xf32>
    %c0_71 = arith.constant 0 : index
    %c0_72 = arith.constant 0 : index
    %81 = vector.load %arg3[%c0_71, %c0_72] : memref<576x64xf32, #tpu.memory_space<vmem>>, vector<576x64xf32>
    %cst_73 = arith.constant dense<0.000000e+00> : vector<512x64xf32>
    %82 = tpu.matmul %80, %81, %cst_73 {dimension_numbers = #tpu.dot_dimension_numbers<[1], [0], [0], [1], [0, 0, 1, 1], [], []>} : vector<512x576xf32>, vector<576x64xf32>, vector<512x64xf32> -> vector<512x64xf32>
    %c0_74 = arith.constant 0 : index
    %c0_75 = arith.constant 0 : index
    %83 = vector.load %arg6[%c0_74, %c0_75] : memref<1x64xf32, #tpu.memory_space<vmem>>, vector<1x64xf32>
    %c0_76 = arith.constant 0 : index
    %c0_77 = arith.constant 0 : index
    %84 = vector.load %arg7[%c0_76, %c0_77] : memref<1x64xf32, #tpu.memory_space<vmem>>, vector<1x64xf32>
    %cst_78 = arith.constant dense<0.000000e+00> : vector<64xf32>
    %85 = vector.multi_reduction <add>, %82, %cst_78 [0] : vector<512x64xf32> to vector<64xf32>
    %86 = vector.shape_cast %85 : vector<64xf32> to vector<1x64xf32>
    %cst_79 = arith.constant 0.001953125 : f32
    %87 = vector.broadcast %cst_79 : f32 to vector<1x64xf32>
    %88 = arith.mulf %86, %87 : vector<1x64xf32>
    %89 = arith.mulf %82, %82 : vector<512x64xf32>
    %cst_80 = arith.constant dense<0.000000e+00> : vector<64xf32>
    %90 = vector.multi_reduction <add>, %89, %cst_80 [0] : vector<512x64xf32> to vector<64xf32>
    %91 = vector.shape_cast %90 : vector<64xf32> to vector<1x64xf32>
    %cst_81 = arith.constant 0.001953125 : f32
    %92 = vector.broadcast %cst_81 : f32 to vector<1x64xf32>
    %93 = arith.mulf %91, %92 : vector<1x64xf32>
    %94 = arith.mulf %88, %88 : vector<1x64xf32>
    %95 = arith.subf %93, %94 : vector<1x64xf32>
    %cst_82 = arith.constant 9.99999974E-6 : f32
    %96 = vector.broadcast %cst_82 : f32 to vector<1x64xf32>
    %97 = arith.addf %95, %96 : vector<1x64xf32>
    %98 = math.rsqrt %97 : vector<1x64xf32>
    %99 = arith.mulf %83, %98 : vector<1x64xf32>
    %100 = arith.mulf %88, %99 : vector<1x64xf32>
    %101 = arith.subf %84, %100 : vector<1x64xf32>
    %102 = vector.broadcast %99 : vector<1x64xf32> to vector<512x64xf32>
    %103 = arith.mulf %82, %102 : vector<512x64xf32>
    %104 = vector.broadcast %101 : vector<1x64xf32> to vector<512x64xf32>
    %105 = arith.addf %103, %104 : vector<512x64xf32>
    %cst_83 = arith.constant 0.000000e+00 : f32
    %106 = vector.broadcast %cst_83 : f32 to vector<512x64xf32>
    %107 = arith.maximumf %105, %106 : vector<512x64xf32>
    %c0_84 = arith.constant 0 : index
    %c0_85 = arith.constant 0 : index
    %108 = vector.load %arg8[%c0_84, %c0_85] : memref<512x64xf32, #tpu.memory_space<vmem>>, vector<512x64xf32>
    tpu.vector_store %arg8[%c0_84, %c0_85], %107 {strides = array<i32>} : memref<512x64xf32, #tpu.memory_space<vmem>>, vector<512x64xf32>,
    return
  }
  func.func @transform_0(%arg0: i32) -> (i32, i32) {
    %c0_i32 = arith.constant 0 : i32
    %c0_i32_0 = arith.constant 0 : i32
    %c0_i32_1 = arith.constant 0 : i32
    return %c0_i32, %c0_i32_0 : i32, i32
  }
  func.func @transform_1(%arg0: i32) -> (i32, i32) {
    %c0_i32 = arith.constant 0 : i32
    %c0_i32_0 = arith.constant 0 : i32
    %c0_i32_1 = arith.constant 0 : i32
    return %c0_i32, %c0_i32_0 : i32, i32
  }
  func.func @transform_2(%arg0: i32) -> (i32, i32) {
    %c0_i32 = arith.constant 0 : i32
    %c0_i32_0 = arith.constant 0 : i32
    %c0_i32_1 = arith.constant 0 : i32
    return %c0_i32, %c0_i32_0 : i32, i32
  }
  func.func @transform_3(%arg0: i32) -> (i32, i32) {
    %c0_i32 = arith.constant 0 : i32
    %c0_i32_0 = arith.constant 0 : i32
    %c0_i32_1 = arith.constant 0 : i32
    return %c0_i32, %c0_i32_0 : i32, i32
  }
  func.func @transform_4(%arg0: i32) -> (i32, i32) {
    %c0_i32 = arith.constant 0 : i32
    %c0_i32_0 = arith.constant 0 : i32
    %c0_i32_1 = arith.constant 0 : i32
    return %c0_i32, %c0_i32_0 : i32, i32
  }
  func.func @transform_5(%arg0: i32) -> (i32, i32) {
    %c0_i32 = arith.constant 0 : i32
    %c0_i32_0 = arith.constant 0 : i32
    %c0_i32_1 = arith.constant 0 : i32
    return %c0_i32, %c0_i32_0 : i32, i32
  }
  func.func @transform_6(%arg0: i32) -> (i32, i32) {
    %c0_i32 = arith.constant 0 : i32
    %c0_i32_0 = arith.constant 0 : i32
    %c0_i32_1 = arith.constant 0 : i32
    return %c0_i32, %c0_i32_0 : i32, i32
  }
  func.func @transform_7(%arg0: i32) -> (i32, i32) {
    %c0_i32 = arith.constant 0 : i32
    %c0_i32_0 = arith.constant 0 : i32
    %c0_i32_1 = arith.constant 0 : i32
    return %c0_i32, %c0_i32_0 : i32, i32
  }
}

</mosaic_0001>

<llo_original>
// kernel: db1_forward.1
$region0: #{db1_forward.1}
  #allocation0 [shape = 'u32[]', space=smem, size = 0x4, offset = 0x4, fixed_abs, tag = 'smem constant byte address 0x4 - core index']
  #allocation1 [shape = 'u32[144,128]{1,0:T(1,128)}', space=vmem, size = 0x12000, scoped, tag = 'internal scratch']
  #allocation2 [shape = 'f32[2,20,20,64]{3,2,1,0:T(8,128)}', space=vmem, size = 0x78000, scoped, tag = 'scratch operand']
  #allocation3 [shape = 'f32[512,576]{1,0:T(8,128)}', space=vmem, size = 0x140000, scoped, tag = 'scratch operand']
  %s0 = inlined_call_operand.vmem [shape: f32[512,4], index: 0, kind: input, shape index: {}]
  %s1 = inlined_call_operand.vmem [shape: f32[4,64], index: 1, kind: input, shape index: {}]
  %s2 = inlined_call_operand.vmem [shape: f32[576,64], index: 2, kind: input, shape index: {}]
  %s3 = inlined_call_operand.vmem [shape: f32[1,64], index: 3, kind: input, shape index: {}, may-alias: {3,5}]
  %s4 = inlined_call_operand.vmem [shape: f32[1,64], index: 4, kind: input, shape index: {}, may-alias: {4,6}]
  %s5 = inlined_call_operand.vmem [shape: f32[1,64], index: 5, kind: input, shape index: {}, may-alias: {3,5}]
  %s6 = inlined_call_operand.vmem [shape: f32[1,64], index: 6, kind: input, shape index: {}, may-alias: {4,6}]
  %s7 = inlined_call_operand.vmem [shape: f32[512,64], index: 7, kind: output, shape index: {}]
  %s8 = sld [smem:[#allocation0]]
  $region38: #{db1_forward.1} parent=0
    _
  %s10 = ssub.s32 1, %s8
  %s11 = scalar_select 0, %s10, %s8
  // Predicated region
  $region2: #{db1_forward.1} parent=0 // pred_check
    _
  $region3: #{db1_forward.1} parent=0 // pred_check_branch
    %13 = sbr.rel (0) target = $region5
  $region4: #{db1_forward.1} parent=0 // pred_region
    _
  $region5: #{db1_forward.1} parent=0 // pred_fallthru
    _
  // Predicated region
  $region6: #{db1_forward.1} parent=0 // pred_check
    _
  $region7: #{db1_forward.1} parent=0 // pred_check_branch
    %15 = sbr.rel (0) target = $region9
  $region8: #{db1_forward.1} parent=0 // pred_region
    _
  $region9: #{db1_forward.1} parent=0 // pred_fallthru
    _
  // Predicated region
  $region10: #{db1_forward.1} parent=0 // pred_check
    _
  $region11: #{db1_forward.1} parent=0 // pred_check_branch
    %17 = sbr.rel (0) target = $region13
  $region12: #{db1_forward.1} parent=0 // pred_region
    _
  $region13: #{db1_forward.1} parent=0 // pred_fallthru
    _
  // Predicated region
  $region14: #{db1_forward.1} parent=0 // pred_check
    _
  $region15: #{db1_forward.1} parent=0 // pred_check_branch
    %19 = sbr.rel (0) target = $region17
  $region16: #{db1_forward.1} parent=0 // pred_region
    _
  $region17: #{db1_forward.1} parent=0 // pred_fallthru
    _
  // Predicated region
  $region18: #{db1_forward.1} parent=0 // pred_check
    _
  $region19: #{db1_forward.1} parent=0 // pred_check_branch
    %21 = sbr.rel (0) target = $region21
  $region20: #{db1_forward.1} parent=0 // pred_region
    _
  $region21: #{db1_forward.1} parent=0 // pred_fallthru
    _
  // Predicated region
  $region22: #{db1_forward.1} parent=0 // pred_check
    _
  $region23: #{db1_forward.1} parent=0 // pred_check_branch
    %23 = sbr.rel (0) target = $region25
  $region24: #{db1_forward.1} parent=0 // pred_region
    _
  $region25: #{db1_forward.1} parent=0 // pred_fallthru
    _
  // Predicated region
  $region26: #{db1_forward.1} parent=0 // pred_check
    _
  $region27: #{db1_forward.1} parent=0 // pred_check_branch
    %25 = sbr.rel (0) target = $region29
  $region28: #{db1_forward.1} parent=0 // pred_region
    _
  $region29: #{db1_forward.1} parent=0 // pred_fallthru
    _
  %v26 = vld [vmem:[%s0] sm:$0xff]
  %v27 = vld [vmem:[%s0 + $0x8] sm:$0xff]
  %v28 = vld [vmem:[%s0 + $0x10] sm:$0xff]
  %v29 = vld [vmem:[%s0 + $0x18] sm:$0xff]
  %v30 = vld [vmem:[%s0 + $0x20] sm:$0xff]
  %v31 = vld [vmem:[%s0 + $0x28] sm:$0xff]
  %v32 = vld [vmem:[%s0 + $0x30] sm:$0xff]
  %v33 = vld [vmem:[%s0 + $0x38] sm:$0xff]
  %v34 = vld [vmem:[%s0 + $0x40] sm:$0xff]
  %v35 = vld [vmem:[%s0 + $0x48] sm:$0xff]
  %v36 = vld [vmem:[%s0 + $0x50] sm:$0xff]
  %v37 = vld [vmem:[%s0 + $0x58] sm:$0xff]
  %v38 = vld [vmem:[%s0 + $0x60] sm:$0xff]
  %v39 = vld [vmem:[%s0 + $0x68] sm:$0xff]
  %v40 = vld [vmem:[%s0 + $0x70] sm:$0xff]
  %v41 = vld [vmem:[%s0 + $0x78] sm:$0xff]
  %v42 = vld [vmem:[%s0 + $0x80] sm:$0xff]
  %v43 = vld [vmem:[%s0 + $0x88] sm:$0xff]
  %v44 = vld [vmem:[%s0 + $0x90] sm:$0xff]
  %v45 = vld [vmem:[%s0 + $0x98] sm:$0xff]
  %v46 = vld [vmem:[%s0 + $0xa0] sm:$0xff]
  %v47 = vld [vmem:[%s0 + $0xa8] sm:$0xff]
  %v48 = vld [vmem:[%s0 + $0xb0] sm:$0xff]
  %v49 = vld [vmem:[%s0 + $0xb8] sm:$0xff]
  %v50 = vld [vmem:[%s0 + $0xc0] sm:$0xff]
  %v51 = vld [vmem:[%s0 + $0xc8] sm:$0xff]
  %v52 = vld [vmem:[%s0 + $0xd0] sm:$0xff]
  %v53 = vld [vmem:[%s0 + $0xd8] sm:$0xff]
  %v54 = vld [vmem:[%s0 + $0xe0] sm:$0xff]
  %v55 = vld [vmem:[%s0 + $0xe8] sm:$0xff]
  %v56 = vld [vmem:[%s0 + $0xf0] sm:$0xff]
  %v57 = vld [vmem:[%s0 + $0xf8] sm:$0xff]
  %v58 = vld [vmem:[%s0 + $0x100] sm:$0xff]
  %v59 = vld [vmem:[%s0 + $0x108] sm:$0xff]
  %v60 = vld [vmem:[%s0 + $0x110] sm:$0xff]
  %v61 = vld [vmem:[%s0 + $0x118] sm:$0xff]
  %v62 = vld [vmem:[%s0 + $0x120] sm:$0xff]
  %v63 = vld [vmem:[%s0 + $0x128] sm:$0xff]
  %v64 = vld [vmem:[%s0 + $0x130] sm:$0xff]
  %v65 = vld [vmem:[%s0 + $0x138] sm:$0xff]
  %v66 = vld [vmem:[%s0 + $0x140] sm:$0xff]
  %v67 = vld [vmem:[%s0 + $0x148] sm:$0xff]
  %v68 = vld [vmem:[%s0 + $0x150] sm:$0xff]
  %v69 = vld [vmem:[%s0 + $0x158] sm:$0xff]
  %v70 = vld [vmem:[%s0 + $0x160] sm:$0xff]
  %v71 = vld [vmem:[%s0 + $0x168] sm:$0xff]
  %v72 = vld [vmem:[%s0 + $0x170] sm:$0xff]
  %v73 = vld [vmem:[%s0 + $0x178] sm:$0xff]
  %v74 = vld [vmem:[%s0 + $0x180] sm:$0xff]
  %v75 = vld [vmem:[%s0 + $0x188] sm:$0xff]
  %v76 = vld [vmem:[%s0 + $0x190] sm:$0xff]
  %v77 = vld [vmem:[%s0 + $0x198] sm:$0xff]
  %v78 = vld [vmem:[%s0 + $0x1a0] sm:$0xff]
  %v79 = vld [vmem:[%s0 + $0x1a8] sm:$0xff]
  %v80 = vld [vmem:[%s0 + $0x1b0] sm:$0xff]
  %v81 = vld [vmem:[%s0 + $0x1b8] sm:$0xff]
  %v82 = vld [vmem:[%s0 + $0x1c0] sm:$0xff]
  %v83 = vld [vmem:[%s0 + $0x1c8] sm:$0xff]
  %v84 = vld [vmem:[%s0 + $0x1d0] sm:$0xff]
  %v85 = vld [vmem:[%s0 + $0x1d8] sm:$0xff]
  %v86 = vld [vmem:[%s0 + $0x1e0] sm:$0xff]
  %v87 = vld [vmem:[%s0 + $0x1e8] sm:$0xff]
  %v88 = vld [vmem:[%s0 + $0x1f0] sm:$0xff]
  %v89 = vld [vmem:[%s0 + $0x1f8] sm:$0xff]
  %v90 = vld [vmem:[%s1] sm:$0x1]
  %92 = vset.pattern.permute.xlu0 0
  %93 = vperm.xlu0 %92, %v26
  %v94 = vpop.permute.xlu0 %93
  %97 = vset.pattern.permute.xlu0 0
  %98 = vperm.xlu0 %97, %v27
  %v99 = vpop.permute.xlu0 %98
  %102 = vset.pattern.permute.xlu0 0
  %103 = vperm.xlu0 %102, %v28
  %v104 = vpop.permute.xlu0 %103
  %107 = vset.pattern.permute.xlu0 0
  %108 = vperm.xlu0 %107, %v29
  %v109 = vpop.permute.xlu0 %108
  %112 = vset.pattern.permute.xlu0 0
  %113 = vperm.xlu0 %112, %v30
  %v114 = vpop.permute.xlu0 %113
  %117 = vset.pattern.permute.xlu0 0
  %118 = vperm.xlu0 %117, %v31
  %v119 = vpop.permute.xlu0 %118
  %122 = vset.pattern.permute.xlu0 0
  %123 = vperm.xlu0 %122, %v32
  %v124 = vpop.permute.xlu0 %123
  %127 = vset.pattern.permute.xlu0 0
  %128 = vperm.xlu0 %127, %v33
  %v129 = vpop.permute.xlu0 %128
  %132 = vset.pattern.permute.xlu0 0
  %133 = vperm.xlu0 %132, %v34
  %v134 = vpop.permute.xlu0 %133
  %137 = vset.pattern.permute.xlu0 0
  %138 = vperm.xlu0 %137, %v35
  %v139 = vpop.permute.xlu0 %138
  %142 = vset.pattern.permute.xlu0 0
  %143 = vperm.xlu0 %142, %v36
  %v144 = vpop.permute.xlu0 %143
  %147 = vset.pattern.permute.xlu0 0
  %148 = vperm.xlu0 %147, %v37
  %v149 = vpop.permute.xlu0 %148
  %152 = vset.pattern.permute.xlu0 0
  %153 = vperm.xlu0 %152, %v38
  %v154 = vpop.permute.xlu0 %153
  %157 = vset.pattern.permute.xlu0 0
  %158 = vperm.xlu0 %157, %v39
  %v159 = vpop.permute.xlu0 %158
  %162 = vset.pattern.permute.xlu0 0
  %163 = vperm.xlu0 %162, %v40
  %v164 = vpop.permute.xlu0 %163
  %167 = vset.pattern.permute.xlu0 0
  %168 = vperm.xlu0 %167, %v41
  %v169 = vpop.permute.xlu0 %168
  %172 = vset.pattern.permute.xlu0 0
  %173 = vperm.xlu0 %172, %v42
  %v174 = vpop.permute.xlu0 %173
  %177 = vset.pattern.permute.xlu0 0
  %178 = vperm.xlu0 %177, %v43
  %v179 = vpop.permute.xlu0 %178
  %182 = vset.pattern.permute.xlu0 0
  %183 = vperm.xlu0 %182, %v44
  %v184 = vpop.permute.xlu0 %183
  %187 = vset.pattern.permute.xlu0 0
  %188 = vperm.xlu0 %187, %v45
  %v189 = vpop.permute.xlu0 %188
  %192 = vset.pattern.permute.xlu0 0
  %193 = vperm.xlu0 %192, %v46
  %v194 = vpop.permute.xlu0 %193
  %197 = vset.pattern.permute.xlu0 0
  %198 = vperm.xlu0 %197, %v47
  %v199 = vpop.permute.xlu0 %198
  %202 = vset.pattern.permute.xlu0 0
  %203 = vperm.xlu0 %202, %v48
  %v204 = vpop.permute.xlu0 %203
  %207 = vset.pattern.permute.xlu0 0
  %208 = vperm.xlu0 %207, %v49
  %v209 = vpop.permute.xlu0 %208
  %212 = vset.pattern.permute.xlu0 0
  %213 = vperm.xlu0 %212, %v50
  %v214 = vpop.permute.xlu0 %213
  %217 = vset.pattern.permute.xlu0 0
  %218 = vperm.xlu0 %217, %v51
  %v219 = vpop.permute.xlu0 %218
  %222 = vset.pattern.permute.xlu0 0
  %223 = vperm.xlu0 %222, %v52
  %v224 = vpop.permute.xlu0 %223
  %227 = vset.pattern.permute.xlu0 0
  %228 = vperm.xlu0 %227, %v53
  %v229 = vpop.permute.xlu0 %228
  %232 = vset.pattern.permute.xlu0 0
  %233 = vperm.xlu0 %232, %v54
  %v234 = vpop.permute.xlu0 %233
  %237 = vset.pattern.permute.xlu0 0
  %238 = vperm.xlu0 %237, %v55
  %v239 = vpop.permute.xlu0 %238
  %242 = vset.pattern.permute.xlu0 0
  %243 = vperm.xlu0 %242, %v56
  %v244 = vpop.permute.xlu0 %243
  %247 = vset.pattern.permute.xlu0 0
  %248 = vperm.xlu0 %247, %v57
  %v249 = vpop.permute.xlu0 %248
  %252 = vset.pattern.permute.xlu0 0
  %253 = vperm.xlu0 %252, %v58
  %v254 = vpop.permute.xlu0 %253
  %257 = vset.pattern.permute.xlu0 0
  %258 = vperm.xlu0 %257, %v59
  %v259 = vpop.permute.xlu0 %258
  %262 = vset.pattern.permute.xlu0 0
  %263 = vperm.xlu0 %262, %v60
  %v264 = vpop.permute.xlu0 %263
  %267 = vset.pattern.permute.xlu0 0
  %268 = vperm.xlu0 %267, %v61
  %v269 = vpop.permute.xlu0 %268
  %272 = vset.pattern.permute.xlu0 0
  %273 = vperm.xlu0 %272, %v62
  %v274 = vpop.permute.xlu0 %273
  %277 = vset.pattern.permute.xlu0 0
  %278 = vperm.xlu0 %277, %v63
  %v279 = vpop.permute.xlu0 %278
  %282 = vset.pattern.permute.xlu0 0
  %283 = vperm.xlu0 %282, %v64
  %v284 = vpop.permute.xlu0 %283
  %287 = vset.pattern.permute.xlu0 0
  %288 = vperm.xlu0 %287, %v65
  %v289 = vpop.permute.xlu0 %288
  %292 = vset.pattern.permute.xlu0 0
  %293 = vperm.xlu0 %292, %v66
  %v294 = vpop.permute.xlu0 %293
  %297 = vset.pattern.permute.xlu0 0
  %298 = vperm.xlu0 %297, %v67
  %v299 = vpop.permute.xlu0 %298
  %302 = vset.pattern.permute.xlu0 0
  %303 = vperm.xlu0 %302, %v68
  %v304 = vpop.permute.xlu0 %303
  %307 = vset.pattern.permute.xlu0 0
  %308 = vperm.xlu0 %307, %v69
  %v309 = vpop.permute.xlu0 %308
  %312 = vset.pattern.permute.xlu0 0
  %313 = vperm.xlu0 %312, %v70
  %v314 = vpop.permute.xlu0 %313
  %317 = vset.pattern.permute.xlu0 0
  %318 = vperm.xlu0 %317, %v71
  %v319 = vpop.permute.xlu0 %318
  %322 = vset.pattern.permute.xlu0 0
  %323 = vperm.xlu0 %322, %v72
  %v324 = vpop.permute.xlu0 %323
  %327 = vset.pattern.permute.xlu0 0
  %328 = vperm.xlu0 %327, %v73
  %v329 = vpop.permute.xlu0 %328
  %332 = vset.pattern.permute.xlu0 0
  %333 = vperm.xlu0 %332, %v74
  %v334 = vpop.permute.xlu0 %333
  %337 = vset.pattern.permute.xlu0 0
  %338 = vperm.xlu0 %337, %v75
  %v339 = vpop.permute.xlu0 %338
  %342 = vset.pattern.permute.xlu0 0
  %343 = vperm.xlu0 %342, %v76
  %v344 = vpop.permute.xlu0 %343
  %347 = vset.pattern.permute.xlu0 0
  %348 = vperm.xlu0 %347, %v77
  %v349 = vpop.permute.xlu0 %348
  %352 = vset.pattern.permute.xlu0 0
  %353 = vperm.xlu0 %352, %v78
  %v354 = vpop.permute.xlu0 %353
  %357 = vset.pattern.permute.xlu0 0
  %358 = vperm.xlu0 %357, %v79
  %v359 = vpop.permute.xlu0 %358
  %362 = vset.pattern.permute.xlu0 0
  %363 = vperm.xlu0 %362, %v80
  %v364 = vpop.permute.xlu0 %363
  %367 = vset.pattern.permute.xlu0 0
  %368 = vperm.xlu0 %367, %v81
  %v369 = vpop.permute.xlu0 %368
  %372 = vset.pattern.permute.xlu0 0
  %373 = vperm.xlu0 %372, %v82
  %v374 = vpop.permute.xlu0 %373
  %377 = vset.pattern.permute.xlu0 0
  %378 = vperm.xlu0 %377, %v83
  %v379 = vpop.permute.xlu0 %378
  %382 = vset.pattern.permute.xlu0 0
  %383 = vperm.xlu0 %382, %v84
  %v384 = vpop.permute.xlu0 %383
  %387 = vset.pattern.permute.xlu0 0
  %388 = vperm.xlu0 %387, %v85
  %v389 = vpop.permute.xlu0 %388
  %392 = vset.pattern.permute.xlu0 0
  %393 = vperm.xlu0 %392, %v86
  %v394 = vpop.permute.xlu0 %393
  %397 = vset.pattern.permute.xlu0 0
  %398 = vperm.xlu0 %397, %v87
  %v399 = vpop.permute.xlu0 %398
  %402 = vset.pattern.permute.xlu0 0
  %403 = vperm.xlu0 %402, %v88
  %v404 = vpop.permute.xlu0 %403
  %407 = vset.pattern.permute.xlu0 0
  %408 = vperm.xlu0 %407, %v89
  %v409 = vpop.permute.xlu0 %408
  %v411 = vlaneseq
  %v412 = vshrl.u32 %v411, 7
  %v413 = vsub.s32 0, %v412
  %v414 = vrot.slane %v90, %v413
  %v415 = vmul.f32 %v94, %v414
  %v416 = vmul.f32 %v99, %v414
  %v417 = vmul.f32 %v104, %v414
  %v418 = vmul.f32 %v109, %v414
  %v419 = vmul.f32 %v114, %v414
  %v420 = vmul.f32 %v119, %v414
  %v421 = vmul.f32 %v124, %v414
  %v422 = vmul.f32 %v129, %v414
  %v423 = vmul.f32 %v134, %v414
  %v424 = vmul.f32 %v139, %v414
  %v425 = vmul.f32 %v144, %v414
  %v426 = vmul.f32 %v149, %v414
  %v427 = vmul.f32 %v154, %v414
  %v428 = vmul.f32 %v159, %v414
  %v429 = vmul.f32 %v164, %v414
  %v430 = vmul.f32 %v169, %v414
  %v431 = vmul.f32 %v174, %v414
  %v432 = vmul.f32 %v179, %v414
  %v433 = vmul.f32 %v184, %v414
  %v434 = vmul.f32 %v189, %v414
  %v435 = vmul.f32 %v194, %v414
  %v436 = vmul.f32 %v199, %v414
  %v437 = vmul.f32 %v204, %v414
  %v438 = vmul.f32 %v209, %v414
  %v439 = vmul.f32 %v214, %v414
  %v440 = vmul.f32 %v219, %v414
  %v441 = vmul.f32 %v224, %v414
  %v442 = vmul.f32 %v229, %v414
  %v443 = vmul.f32 %v234, %v414
  %v444 = vmul.f32 %v239, %v414
  %v445 = vmul.f32 %v244, %v414
  %v446 = vmul.f32 %v249, %v414
  %v447 = vmul.f32 %v254, %v414
  %v448 = vmul.f32 %v259, %v414
  %v449 = vmul.f32 %v264, %v414
  %v450 = vmul.f32 %v269, %v414
  %v451 = vmul.f32 %v274, %v414
  %v452 = vmul.f32 %v279, %v414
  %v453 = vmul.f32 %v284, %v414
  %v454 = vmul.f32 %v289, %v414
  %v455 = vmul.f32 %v294, %v414
  %v456 = vmul.f32 %v299, %v414
  %v457 = vmul.f32 %v304, %v414
  %v458 = vmul.f32 %v309, %v414
  %v459 = vmul.f32 %v314, %v414
  %v460 = vmul.f32 %v319, %v414
  %v461 = vmul.f32 %v324, %v414
  %v462 = vmul.f32 %v329, %v414
  %v463 = vmul.f32 %v334, %v414
  %v464 = vmul.f32 %v339, %v414
  %v465 = vmul.f32 %v344, %v414
  %v466 = vmul.f32 %v349, %v414
  %v467 = vmul.f32 %v354, %v414
  %v468 = vmul.f32 %v359, %v414
  %v469 = vmul.f32 %v364, %v414
  %v470 = vmul.f32 %v369, %v414
  %v471 = vmul.f32 %v374, %v414
  %v472 = vmul.f32 %v379, %v414
  %v473 = vmul.f32 %v384, %v414
  %v474 = vmul.f32 %v389, %v414
  %v475 = vmul.f32 %v394, %v414
  %v476 = vmul.f32 %v399, %v414
  %v477 = vmul.f32 %v404, %v414
  %v478 = vmul.f32 %v409, %v414
  %v479 = vld [vmem:[%s1 + $0x1] sm:$0x1]
  %480 = vset.pattern.permute.xlu0 1
  %481 = vperm.xlu0 %480, %v26
  %v482 = vpop.permute.xlu0 %481
  %484 = vset.pattern.permute.xlu0 1
  %485 = vperm.xlu0 %484, %v27
  %v486 = vpop.permute.xlu0 %485
  %488 = vset.pattern.permute.xlu0 1
  %489 = vperm.xlu0 %488, %v28
  %v490 = vpop.permute.xlu0 %489
  %492 = vset.pattern.permute.xlu0 1
  %493 = vperm.xlu0 %492, %v29
  %v494 = vpop.permute.xlu0 %493
  %496 = vset.pattern.permute.xlu0 1
  %497 = vperm.xlu0 %496, %v30
  %v498 = vpop.permute.xlu0 %497
  %500 = vset.pattern.permute.xlu0 1
  %501 = vperm.xlu0 %500, %v31
  %v502 = vpop.permute.xlu0 %501
  %504 = vset.pattern.permute.xlu0 1
  %505 = vperm.xlu0 %504, %v32
  %v506 = vpop.permute.xlu0 %505
  %508 = vset.pattern.permute.xlu0 1
  %509 = vperm.xlu0 %508, %v33
  %v510 = vpop.permute.xlu0 %509
  %512 = vset.pattern.permute.xlu0 1
  %513 = vperm.xlu0 %512, %v34
  %v514 = vpop.permute.xlu0 %513
  %516 = vset.pattern.permute.xlu0 1
  %517 = vperm.xlu0 %516, %v35
  %v518 = vpop.permute.xlu0 %517
  %520 = vset.pattern.permute.xlu0 1
  %521 = vperm.xlu0 %520, %v36
  %v522 = vpop.permute.xlu0 %521
  %524 = vset.pattern.permute.xlu0 1
  %525 = vperm.xlu0 %524, %v37
  %v526 = vpop.permute.xlu0 %525
  %528 = vset.pattern.permute.xlu0 1
  %529 = vperm.xlu0 %528, %v38
  %v530 = vpop.permute.xlu0 %529
  %532 = vset.pattern.permute.xlu0 1
  %533 = vperm.xlu0 %532, %v39
  %v534 = vpop.permute.xlu0 %533
  %536 = vset.pattern.permute.xlu0 1
  %537 = vperm.xlu0 %536, %v40
  %v538 = vpop.permute.xlu0 %537
  %540 = vset.pattern.permute.xlu0 1
  %541 = vperm.xlu0 %540, %v41
  %v542 = vpop.permute.xlu0 %541
  %544 = vset.pattern.permute.xlu0 1
  %545 = vperm.xlu0 %544, %v42
  %v546 = vpop.permute.xlu0 %545
  %548 = vset.pattern.permute.xlu0 1
  %549 = vperm.xlu0 %548, %v43
  %v550 = vpop.permute.xlu0 %549
  %552 = vset.pattern.permute.xlu0 1
  %553 = vperm.xlu0 %552, %v44
  %v554 = vpop.permute.xlu0 %553
  %556 = vset.pattern.permute.xlu0 1
  %557 = vperm.xlu0 %556, %v45
  %v558 = vpop.permute.xlu0 %557
  %560 = vset.pattern.permute.xlu0 1
  %561 = vperm.xlu0 %560, %v46
  %v562 = vpop.permute.xlu0 %561
  %564 = vset.pattern.permute.xlu0 1
  %565 = vperm.xlu0 %564, %v47
  %v566 = vpop.permute.xlu0 %565
  %568 = vset.pattern.permute.xlu0 1
  %569 = vperm.xlu0 %568, %v48
  %v570 = vpop.permute.xlu0 %569
  %572 = vset.pattern.permute.xlu0 1
  %573 = vperm.xlu0 %572, %v49
  %v574 = vpop.permute.xlu0 %573
  %576 = vset.pattern.permute.xlu0 1
  %577 = vperm.xlu0 %576, %v50
  %v578 = vpop.permute.xlu0 %577
  %580 = vset.pattern.permute.xlu0 1
  %581 = vperm.xlu0 %580, %v51
  %v582 = vpop.permute.xlu0 %581
  %584 = vset.pattern.permute.xlu0 1
  %585 = vperm.xlu0 %584, %v52
  %v586 = vpop.permute.xlu0 %585
  %588 = vset.pattern.permute.xlu0 1
  %589 = vperm.xlu0 %588, %v53
  %v590 = vpop.permute.xlu0 %589
  %592 = vset.pattern.permute.xlu0 1
  %593 = vperm.xlu0 %592, %v54
  %v594 = vpop.permute.xlu0 %593
  %596 = vset.pattern.permute.xlu0 1
  %597 = vperm.xlu0 %596, %v55
  %v598 = vpop.permute.xlu0 %597
  %600 = vset.pattern.permute.xlu0 1
  %601 = vperm.xlu0 %600, %v56
  %v602 = vpop.permute.xlu0 %601
  %604 = vset.pattern.permute.xlu0 1
  %605 = vperm.xlu0 %604, %v57
  %v606 = vpop.permute.xlu0 %605
  %608 = vset.pattern.permute.xlu0 1
  %609 = vperm.xlu0 %608, %v58
  %v610 = vpop.permute.xlu0 %609
  %612 = vset.pattern.permute.xlu0 1
  %613 = vperm.xlu0 %612, %v59
  %v614 = vpop.permute.xlu0 %613
  %616 = vset.pattern.permute.xlu0 1
  %617 = vperm.xlu0 %616, %v60
  %v618 = vpop.permute.xlu0 %617
  %620 = vset.pattern.permute.xlu0 1
  %621 = vperm.xlu0 %620, %v61
  %v622 = vpop.permute.xlu0 %621
  %624 = vset.pattern.permute.xlu0 1
  %625 = vperm.xlu0 %624, %v62
  %v626 = vpop.permute.xlu0 %625
  %628 = vset.pattern.permute.xlu0 1
  %629 = vperm.xlu0 %628, %v63
  %v630 = vpop.permute.xlu0 %629
  %632 = vset.pattern.permute.xlu0 1
  %633 = vperm.xlu0 %632, %v64
  %v634 = vpop.permute.xlu0 %633
  %636 = vset.pattern.permute.xlu0 1
  %637 = vperm.xlu0 %636, %v65
  %v638 = vpop.permute.xlu0 %637
  %640 = vset.pattern.permute.xlu0 1
  %641 = vperm.xlu0 %640, %v66
  %v642 = vpop.permute.xlu0 %641
  %644 = vset.pattern.permute.xlu0 1
  %645 = vperm.xlu0 %644, %v67
  %v646 = vpop.permute.xlu0 %645
  %648 = vset.pattern.permute.xlu0 1
  %649 = vperm.xlu0 %648, %v68
  %v650 = vpop.permute.xlu0 %649
  %652 = vset.pattern.permute.xlu0 1
  %653 = vperm.xlu0 %652, %v69
  %v654 = vpop.permute.xlu0 %653
  %656 = vset.pattern.permute.xlu0 1
  %657 = vperm.xlu0 %656, %v70
  %v658 = vpop.permute.xlu0 %657
  %660 = vset.pattern.permute.xlu0 1
  %661 = vperm.xlu0 %660, %v71
  %v662 = vpop.permute.xlu0 %661
  %664 = vset.pattern.permute.xlu0 1
  %665 = vperm.xlu0 %664, %v72
  %v666 = vpop.permute.xlu0 %665
  %668 = vset.pattern.permute.xlu0 1
  %669 = vperm.xlu0 %668, %v73
  %v670 = vpop.permute.xlu0 %669
  %672 = vset.pattern.permute.xlu0 1
  %673 = vperm.xlu0 %672, %v74
  %v674 = vpop.permute.xlu0 %673
  %676 = vset.pattern.permute.xlu0 1
  %677 = vperm.xlu0 %676, %v75
  %v678 = vpop.permute.xlu0 %677
  %680 = vset.pattern.permute.xlu0 1
  %681 = vperm.xlu0 %680, %v76
  %v682 = vpop.permute.xlu0 %681
  %684 = vset.pattern.permute.xlu0 1
  %685 = vperm.xlu0 %684, %v77
  %v686 = vpop.permute.xlu0 %685
  %688 = vset.pattern.permute.xlu0 1
  %689 = vperm.xlu0 %688, %v78
  %v690 = vpop.permute.xlu0 %689
  %692 = vset.pattern.permute.xlu0 1
  %693 = vperm.xlu0 %692, %v79
  %v694 = vpop.permute.xlu0 %693
  %696 = vset.pattern.permute.xlu0 1
  %697 = vperm.xlu0 %696, %v80
  %v698 = vpop.permute.xlu0 %697
  %700 = vset.pattern.permute.xlu0 1
  %701 = vperm.xlu0 %700, %v81
  %v702 = vpop.permute.xlu0 %701
  %704 = vset.pattern.permute.xlu0 1
  %705 = vperm.xlu0 %704, %v82
  %v706 = vpop.permute.xlu0 %705
  %708 = vset.pattern.permute.xlu0 1
  %709 = vperm.xlu0 %708, %v83
  %v710 = vpop.permute.xlu0 %709
  %712 = vset.pattern.permute.xlu0 1
  %713 = vperm.xlu0 %712, %v84
  %v714 = vpop.permute.xlu0 %713
  %716 = vset.pattern.permute.xlu0 1
  %717 = vperm.xlu0 %716, %v85
  %v718 = vpop.permute.xlu0 %717
  %720 = vset.pattern.permute.xlu0 1
  %721 = vperm.xlu0 %720, %v86
  %v722 = vpop.permute.xlu0 %721
  %724 = vset.pattern.permute.xlu0 1
  %725 = vperm.xlu0 %724, %v87
  %v726 = vpop.permute.xlu0 %725
  %728 = vset.pattern.permute.xlu0 1
  %729 = vperm.xlu0 %728, %v88
  %v730 = vpop.permute.xlu0 %729
  %732 = vset.pattern.permute.xlu0 1
  %733 = vperm.xlu0 %732, %v89
  %v734 = vpop.permute.xlu0 %733
  %v736 = vlaneseq
  %v737 = vshrl.u32 %v736, 7
  %v738 = vsub.s32 0, %v737
  %v739 = vrot.slane %v479, %v738
  %v740 = vmul.f32 %v482, %v739
  %v741 = vmul.f32 %v486, %v739
  %v742 = vmul.f32 %v490, %v739
  %v743 = vmul.f32 %v494, %v739
  %v744 = vmul.f32 %v498, %v739
  %v745 = vmul.f32 %v502, %v739
  %v746 = vmul.f32 %v506, %v739
  %v747 = vmul.f32 %v510, %v739
  %v748 = vmul.f32 %v514, %v739
  %v749 = vmul.f32 %v518, %v739
  %v750 = vmul.f32 %v522, %v739
  %v751 = vmul.f32 %v526, %v739
  %v752 = vmul.f32 %v530, %v739
  %v753 = vmul.f32 %v534, %v739
  %v754 = vmul.f32 %v538, %v739
  %v755 = vmul.f32 %v542, %v739
  %v756 = vmul.f32 %v546, %v739
  %v757 = vmul.f32 %v550, %v739
  %v758 = vmul.f32 %v554, %v739
  %v759 = vmul.f32 %v558, %v739
  %v760 = vmul.f32 %v562, %v739
  %v761 = vmul.f32 %v566, %v739
  %v762 = vmul.f32 %v570, %v739
  %v763 = vmul.f32 %v574, %v739
  %v764 = vmul.f32 %v578, %v739
  %v765 = vmul.f32 %v582, %v739
  %v766 = vmul.f32 %v586, %v739
  %v767 = vmul.f32 %v590, %v739
  %v768 = vmul.f32 %v594, %v739
  %v769 = vmul.f32 %v598, %v739
  %v770 = vmul.f32 %v602, %v739
  %v771 = vmul.f32 %v606, %v739
  %v772 = vmul.f32 %v610, %v739
  %v773 = vmul.f32 %v614, %v739
  %v774 = vmul.f32 %v618, %v739
  %v775 = vmul.f32 %v622, %v739
  %v776 = vmul.f32 %v626, %v739
  %v777 = vmul.f32 %v630, %v739
  %v778 = vmul.f32 %v634, %v739
  %v779 = vmul.f32 %v638, %v739
  %v780 = vmul.f32 %v642, %v739
  %v781 = vmul.f32 %v646, %v739
  %v782 = vmul.f32 %v650, %v739
  %v783 = vmul.f32 %v654, %v739
  %v784 = vmul.f32 %v658, %v739
  %v785 = vmul.f32 %v662, %v739
  %v786 = vmul.f32 %v666, %v739
  %v787 = vmul.f32 %v670, %v739
  %v788 = vmul.f32 %v674, %v739
  %v789 = vmul.f32 %v678, %v739
  %v790 = vmul.f32 %v682, %v739
  %v791 = vmul.f32 %v686, %v739
  %v792 = vmul.f32 %v690, %v739
  %v793 = vmul.f32 %v694, %v739
  %v794 = vmul.f32 %v698, %v739
  %v795 = vmul.f32 %v702, %v739
  %v796 = vmul.f32 %v706, %v739
  %v797 = vmul.f32 %v710, %v739
  %v798 = vmul.f32 %v714, %v739
  %v799 = vmul.f32 %v718, %v739
  %v800 = vmul.f32 %v722, %v739
  %v801 = vmul.f32 %v726, %v739
  %v802 = vmul.f32 %v730, %v739
  %v803 = vmul.f32 %v734, %v739
  %v804 = vadd.f32 %v415, %v740
  %v805 = vadd.f32 %v416, %v741
  %v806 = vadd.f32 %v417, %v742
  %v807 = vadd.f32 %v418, %v743
  %v808 = vadd.f32 %v419, %v744
  %v809 = vadd.f32 %v420, %v745
  %v810 = vadd.f32 %v421, %v746
  %v811 = vadd.f32 %v422, %v747
  %v812 = vadd.f32 %v423, %v748
  %v813 = vadd.f32 %v424, %v749
  %v814 = vadd.f32 %v425, %v750
  %v815 = vadd.f32 %v426, %v751
  %v816 = vadd.f32 %v427, %v752
  %v817 = vadd.f32 %v428, %v753
  %v818 = vadd.f32 %v429, %v754
  %v819 = vadd.f32 %v430, %v755
  %v820 = vadd.f32 %v431, %v756
  %v821 = vadd.f32 %v432, %v757
  %v822 = vadd.f32 %v433, %v758
  %v823 = vadd.f32 %v434, %v759
  %v824 = vadd.f32 %v435, %v760
  %v825 = vadd.f32 %v436, %v761
  %v826 = vadd.f32 %v437, %v762
  %v827 = vadd.f32 %v438, %v763
  %v828 = vadd.f32 %v439, %v764
  %v829 = vadd.f32 %v440, %v765
  %v830 = vadd.f32 %v441, %v766
  %v831 = vadd.f32 %v442, %v767
  %v832 = vadd.f32 %v443, %v768
  %v833 = vadd.f32 %v444, %v769
  %v834 = vadd.f32 %v445, %v770
  %v835 = vadd.f32 %v446, %v771
  %v836 = vadd.f32 %v447, %v772
  %v837 = vadd.f32 %v448, %v773
  %v838 = vadd.f32 %v449, %v774
  %v839 = vadd.f32 %v450, %v775
  %v840 = vadd.f32 %v451, %v776
  %v841 = vadd.f32 %v452, %v777
  %v842 = vadd.f32 %v453, %v778
  %v843 = vadd.f32 %v454, %v779
  %v844 = vadd.f32 %v455, %v780
  %v845 = vadd.f32 %v456, %v781
  %v846 = vadd.f32 %v457, %v782
  %v847 = vadd.f32 %v458, %v783
  %v848 = vadd.f32 %v459, %v784
  %v849 = vadd.f32 %v460, %v785
  %v850 = vadd.f32 %v461, %v786
  %v851 = vadd.f32 %v462, %v787
  %v852 = vadd.f32 %v463, %v788
  %v853 = vadd.f32 %v464, %v789
  %v854 = vadd.f32 %v465, %v790
  %v855 = vadd.f32 %v466, %v791
  %v856 = vadd.f32 %v467, %v792
  %v857 = vadd.f32 %v468, %v793
  %v858 = vadd.f32 %v469, %v794
  %v859 = vadd.f32 %v470, %v795
  %v860 = vadd.f32 %v471, %v796
  %v861 = vadd.f32 %v472, %v797
  %v862 = vadd.f32 %v473, %v798
  %v863 = vadd.f32 %v474, %v799
  %v864 = vadd.f32 %v475, %v800
  %v865 = vadd.f32 %v476, %v801
  %v866 = vadd.f32 %v477, %v802
  %v867 = vadd.f32 %v478, %v803
  %v868 = vld [vmem:[%s1 + $0x2] sm:$0x1]
  %869 = vset.pattern.permute.xlu0 2
  %870 = vperm.xlu0 %869, %v26
  %v871 = vpop.permute.xlu0 %870
  %873 = vset.pattern.permute.xlu0 2
  %874 = vperm.xlu0 %873, %v27
  %v875 = vpop.permute.xlu0 %874
  %877 = vset.pattern.permute.xlu0 2
  %878 = vperm.xlu0 %877, %v28
  %v879 = vpop.permute.xlu0 %878
  %881 = vset.pattern.permute.xlu0 2
  %882 = vperm.xlu0 %881, %v29
  %v883 = vpop.permute.xlu0 %882
  %885 = vset.pattern.permute.xlu0 2
  %886 = vperm.xlu0 %885, %v30
  %v887 = vpop.permute.xlu0 %886
  %889 = vset.pattern.permute.xlu0 2
  %890 = vperm.xlu0 %889, %v31
  %v891 = vpop.permute.xlu0 %890
  %893 = vset.pattern.permute.xlu0 2
  %894 = vperm.xlu0 %893, %v32
  %v895 = vpop.permute.xlu0 %894
  %897 = vset.pattern.permute.xlu0 2
  %898 = vperm.xlu0 %897, %v33
  %v899 = vpop.permute.xlu0 %898
  %901 = vset.pattern.permute.xlu0 2
  %902 = vperm.xlu0 %901, %v34
  %v903 = vpop.permute.xlu0 %902
  %905 = vset.pattern.permute.xlu0 2
  %906 = vperm.xlu0 %905, %v35
  %v907 = vpop.permute.xlu0 %906
  %909 = vset.pattern.permute.xlu0 2
  %910 = vperm.xlu0 %909, %v36
  %v911 = vpop.permute.xlu0 %910
  %913 = vset.pattern.permute.xlu0 2
  %914 = vperm.xlu0 %913, %v37
  %v915 = vpop.permute.xlu0 %914
  %917 = vset.pattern.permute.xlu0 2
  %918 = vperm.xlu0 %917, %v38
  %v919 = vpop.permute.xlu0 %918
  %921 = vset.pattern.permute.xlu0 2
  %922 = vperm.xlu0 %921, %v39
  %v923 = vpop.permute.xlu0 %922
  %925 = vset.pattern.permute.xlu0 2
  %926 = vperm.xlu0 %925, %v40
  %v927 = vpop.permute.xlu0 %926
  %929 = vset.pattern.permute.xlu0 2
  %930 = vperm.xlu0 %929, %v41
  %v931 = vpop.permute.xlu0 %930
  %933 = vset.pattern.permute.xlu0 2
  %934 = vperm.xlu0 %933, %v42
  %v935 = vpop.permute.xlu0 %934
  %937 = vset.pattern.permute.xlu0 2
  %938 = vperm.xlu0 %937, %v43
  %v939 = vpop.permute.xlu0 %938
  %941 = vset.pattern.permute.xlu0 2
  %942 = vperm.xlu0 %941, %v44
  %v943 = vpop.permute.xlu0 %942
  %945 = vset.pattern.permute.xlu0 2
  %946 = vperm.xlu0 %945, %v45
  %v947 = vpop.permute.xlu0 %946
  %949 = vset.pattern.permute.xlu0 2
  %950 = vperm.xlu0 %949, %v46
  %v951 = vpop.permute.xlu0 %950
  %953 = vset.pattern.permute.xlu0 2
  %954 = vperm.xlu0 %953, %v47
  %v955 = vpop.permute.xlu0 %954
  %957 = vset.pattern.permute.xlu0 2
  %958 = vperm.xlu0 %957, %v48
  %v959 = vpop.permute.xlu0 %958
  %961 = vset.pattern.permute.xlu0 2
  %962 = vperm.xlu0 %961, %v49
  %v963 = vpop.permute.xlu0 %962
  %965 = vset.pattern.permute.xlu0 2
  %966 = vperm.xlu0 %965, %v50
  %v967 = vpop.permute.xlu0 %966
  %969 = vset.pattern.permute.xlu0 2
  %970 = vperm.xlu0 %969, %v51
  %v971 = vpop.permute.xlu0 %970
  %973 = vset.pattern.permute.xlu0 2
  %974 = vperm.xlu0 %973, %v52
  %v975 = vpop.permute.xlu0 %974
  %977 = vset.pattern.permute.xlu0 2
  %978 = vperm.xlu0 %977, %v53
  %v979 = vpop.permute.xlu0 %978
  %981 = vset.pattern.permute.xlu0 2
  %982 = vperm.xlu0 %981, %v54
  %v983 = vpop.permute.xlu0 %982
  %985 = vset.pattern.permute.xlu0 2
  %986 = vperm.xlu0 %985, %v55
  %v987 = vpop.permute.xlu0 %986
  %989 = vset.pattern.permute.xlu0 2
  %990 = vperm.xlu0 %989, %v56
  %v991 = vpop.permute.xlu0 %990
  %993 = vset.pattern.permute.xlu0 2
  %994 = vperm.xlu0 %993, %v57
  %v995 = vpop.permute.xlu0 %994
  %997 = vset.pattern.permute.xlu0 2
  %998 = vperm.xlu0 %997, %v58
  %v999 = vpop.permute.xlu0 %998
  %1001 = vset.pattern.permute.xlu0 2
  %1002 = vperm.xlu0 %1001, %v59
  %v1003 = vpop.permute.xlu0 %1002
  %1005 = vset.pattern.permute.xlu0 2
  %1006 = vperm.xlu0 %1005, %v60
  %v1007 = vpop.permute.xlu0 %1006
  %1009 = vset.pattern.permute.xlu0 2
  %1010 = vperm.xlu0 %1009, %v61
  %v1011 = vpop.permute.xlu0 %1010
  %1013 = vset.pattern.permute.xlu0 2
  %1014 = vperm.xlu0 %1013, %v62
  %v1015 = vpop.permute.xlu0 %1014
  %1017 = vset.pattern.permute.xlu0 2
  %1018 = vperm.xlu0 %1017, %v63
  %v1019 = vpop.permute.xlu0 %1018
  %1021 = vset.pattern.permute.xlu0 2
  %1022 = vperm.xlu0 %1021, %v64
  %v1023 = vpop.permute.xlu0 %1022
  %1025 = vset.pattern.permute.xlu0 2
  %1026 = vperm.xlu0 %1025, %v65
  %v1027 = vpop.permute.xlu0 %1026
  %1029 = vset.pattern.permute.xlu0 2
  %1030 = vperm.xlu0 %1029, %v66
  %v1031 = vpop.permute.xlu0 %1030
  %1033 = vset.pattern.permute.xlu0 2
  %1034 = vperm.xlu0 %1033, %v67
  %v1035 = vpop.permute.xlu0 %1034
  %1037 = vset.pattern.permute.xlu0 2
  %1038 = vperm.xlu0 %1037, %v68
  %v1039 = vpop.permute.xlu0 %1038
  %1041 = vset.pattern.permute.xlu0 2
  %1042 = vperm.xlu0 %1041, %v69
  %v1043 = vpop.permute.xlu0 %1042
  %1045 = vset.pattern.permute.xlu0 2
  %1046 = vperm.xlu0 %1045, %v70
  %v1047 = vpop.permute.xlu0 %1046
  %1049 = vset.pattern.permute.xlu0 2
  %1050 = vperm.xlu0 %1049, %v71
  %v1051 = vpop.permute.xlu0 %1050
  %1053 = vset.pattern.permute.xlu0 2
  %1054 = vperm.xlu0 %1053, %v72
  %v1055 = vpop.permute.xlu0 %1054
  %1057 = vset.pattern.permute.xlu0 2
  %1058 = vperm.xlu0 %1057, %v73
  %v1059 = vpop.permute.xlu0 %1058
  %1061 = vset.pattern.permute.xlu0 2
  %1062 = vperm.xlu0 %1061, %v74
  %v1063 = vpop.permute.xlu0 %1062
  %1065 = vset.pattern.permute.xlu0 2
  %1066 = vperm.xlu0 %1065, %v75
  %v1067 = vpop.permute.xlu0 %1066
  %1069 = vset.pattern.permute.xlu0 2
  %1070 = vperm.xlu0 %1069, %v76
  %v1071 = vpop.permute.xlu0 %1070
  %1073 = vset.pattern.permute.xlu0 2
  %1074 = vperm.xlu0 %1073, %v77
  %v1075 = vpop.permute.xlu0 %1074
  %1077 = vset.pattern.permute.xlu0 2
  %1078 = vperm.xlu0 %1077, %v78
  %v1079 = vpop.permute.xlu0 %1078
  %1081 = vset.pattern.permute.xlu0 2
  %1082 = vperm.xlu0 %1081, %v79
  %v1083 = vpop.permute.xlu0 %1082
  %1085 = vset.pattern.permute.xlu0 2
  %1086 = vperm.xlu0 %1085, %v80
  %v1087 = vpop.permute.xlu0 %1086
  %1089 = vset.pattern.permute.xlu0 2
  %1090 = vperm.xlu0 %1089, %v81
  %v1091 = vpop.permute.xlu0 %1090
  %1093 = vset.pattern.permute.xlu0 2
  %1094 = vperm.xlu0 %1093, %v82
  %v1095 = vpop.permute.xlu0 %1094
  %1097 = vset.pattern.permute.xlu0 2
  %1098 = vperm.xlu0 %1097, %v83
  %v1099 = vpop.permute.xlu0 %1098
  %1101 = vset.pattern.permute.xlu0 2
  %1102 = vperm.xlu0 %1101, %v84
  %v1103 = vpop.permute.xlu0 %1102
  %1105 = vset.pattern.permute.xlu0 2
  %1106 = vperm.xlu0 %1105, %v85
  %v1107 = vpop.permute.xlu0 %1106
  %1109 = vset.pattern.permute.xlu0 2
  %1110 = vperm.xlu0 %1109, %v86
  %v1111 = vpop.permute.xlu0 %1110
  %1113 = vset.pattern.permute.xlu0 2
  %1114 = vperm.xlu0 %1113, %v87
  %v1115 = vpop.permute.xlu0 %1114
  %1117 = vset.pattern.permute.xlu0 2
  %1118 = vperm.xlu0 %1117, %v88
  %v1119 = vpop.permute.xlu0 %1118
  %1121 = vset.pattern.permute.xlu0 2
  %1122 = vperm.xlu0 %1121, %v89
  %v1123 = vpop.permute.xlu0 %1122
  %v1125 = vlaneseq
  %v1126 = vshrl.u32 %v1125, 7
  %v1127 = vsub.s32 0, %v1126
  %v1128 = vrot.slane %v868, %v1127
  %v1129 = vmul.f32 %v871, %v1128
  %v1130 = vmul.f32 %v875, %v1128
  %v1131 = vmul.f32 %v879, %v1128
  %v1132 = vmul.f32 %v883, %v1128
  %v1133 = vmul.f32 %v887, %v1128
  %v1134 = vmul.f32 %v891, %v1128
  %v1135 = vmul.f32 %v895, %v1128
  %v1136 = vmul.f32 %v899, %v1128
  %v1137 = vmul.f32 %v903, %v1128
  %v1138 = vmul.f32 %v907, %v1128
  %v1139 = vmul.f32 %v911, %v1128
  %v1140 = vmul.f32 %v915, %v1128
  %v1141 = vmul.f32 %v919, %v1128
  %v1142 = vmul.f32 %v923, %v1128
  %v1143 = vmul.f32 %v927, %v1128
  %v1144 = vmul.f32 %v931, %v1128
  %v1145 = vmul.f32 %v935, %v1128
  %v1146 = vmul.f32 %v939, %v1128
  %v1147 = vmul.f32 %v943, %v1128
  %v1148 = vmul.f32 %v947, %v1128
  %v1149 = vmul.f32 %v951, %v1128
  %v1150 = vmul.f32 %v955, %v1128
  %v1151 = vmul.f32 %v959, %v1128
  %v1152 = vmul.f32 %v963, %v1128
  %v1153 = vmul.f32 %v967, %v1128
  %v1154 = vmul.f32 %v971, %v1128
  %v1155 = vmul.f32 %v975, %v1128
  %v1156 = vmul.f32 %v979, %v1128
  %v1157 = vmul.f32 %v983, %v1128
  %v1158 = vmul.f32 %v987, %v1128
  %v1159 = vmul.f32 %v991, %v1128
  %v1160 = vmul.f32 %v995, %v1128
  %v1161 = vmul.f32 %v999, %v1128
  %v1162 = vmul.f32 %v1003, %v1128
  %v1163 = vmul.f32 %v1007, %v1128
  %v1164 = vmul.f32 %v1011, %v1128
  %v1165 = vmul.f32 %v1015, %v1128
  %v1166 = vmul.f32 %v1019, %v1128
  %v1167 = vmul.f32 %v1023, %v1128
  %v1168 = vmul.f32 %v1027, %v1128
  %v1169 = vmul.f32 %v1031, %v1128
  %v1170 = vmul.f32 %v1035, %v1128
  %v1171 = vmul.f32 %v1039, %v1128
  %v1172 = vmul.f32 %v1043, %v1128
  %v1173 = vmul.f32 %v1047, %v1128
  %v1174 = vmul.f32 %v1051, %v1128
  %v1175 = vmul.f32 %v1055, %v1128
  %v1176 = vmul.f32 %v1059, %v1128
  %v1177 = vmul.f32 %v1063, %v1128
  %v1178 = vmul.f32 %v1067, %v1128
  %v1179 = vmul.f32 %v1071, %v1128
  %v1180 = vmul.f32 %v1075, %v1128
  %v1181 = vmul.f32 %v1079, %v1128
  %v1182 = vmul.f32 %v1083, %v1128
  %v1183 = vmul.f32 %v1087, %v1128
  %v1184 = vmul.f32 %v1091, %v1128
  %v1185 = vmul.f32 %v1095, %v1128
  %v1186 = vmul.f32 %v1099, %v1128
  %v1187 = vmul.f32 %v1103, %v1128
  %v1188 = vmul.f32 %v1107, %v1128
  %v1189 = vmul.f32 %v1111, %v1128
  %v1190 = vmul.f32 %v1115, %v1128
  %v1191 = vmul.f32 %v1119, %v1128
  %v1192 = vmul.f32 %v1123, %v1128
  %v1193 = vadd.f32 %v804, %v1129
  %v1194 = vadd.f32 %v805, %v1130
  %v1195 = vadd.f32 %v806, %v1131
  %v1196 = vadd.f32 %v807, %v1132
  %v1197 = vadd.f32 %v808, %v1133
  %v1198 = vadd.f32 %v809, %v1134
  %v1199 = vadd.f32 %v810, %v1135
  %v1200 = vadd.f32 %v811, %v1136
  %v1201 = vadd.f32 %v812, %v1137
  %v1202 = vadd.f32 %v813, %v1138
  %v1203 = vadd.f32 %v814, %v1139
  %v1204 = vadd.f32 %v815, %v1140
  %v1205 = vadd.f32 %v816, %v1141
  %v1206 = vadd.f32 %v817, %v1142
  %v1207 = vadd.f32 %v818, %v1143
  %v1208 = vadd.f32 %v819, %v1144
  %v1209 = vadd.f32 %v820, %v1145
  %v1210 = vadd.f32 %v821, %v1146
  %v1211 = vadd.f32 %v822, %v1147
  %v1212 = vadd.f32 %v823, %v1148
  %v1213 = vadd.f32 %v824, %v1149
  %v1214 = vadd.f32 %v825, %v1150
  %v1215 = vadd.f32 %v826, %v1151
  %v1216 = vadd.f32 %v827, %v1152
  %v1217 = vadd.f32 %v828, %v1153
  %v1218 = vadd.f32 %v829, %v1154
  %v1219 = vadd.f32 %v830, %v1155
  %v1220 = vadd.f32 %v831, %v1156
  %v1221 = vadd.f32 %v832, %v1157
  %v1222 = vadd.f32 %v833, %v1158
  %v1223 = vadd.f32 %v834, %v1159
  %v1224 = vadd.f32 %v835, %v1160
  %v1225 = vadd.f32 %v836, %v1161
  %v1226 = vadd.f32 %v837, %v1162
  %v1227 = vadd.f32 %v838, %v1163
  %v1228 = vadd.f32 %v839, %v1164
  %v1229 = vadd.f32 %v840, %v1165
  %v1230 = vadd.f32 %v841, %v1166
  %v1231 = vadd.f32 %v842, %v1167
  %v1232 = vadd.f32 %v843, %v1168
  %v1233 = vadd.f32 %v844, %v1169
  %v1234 = vadd.f32 %v845, %v1170
  %v1235 = vadd.f32 %v846, %v1171
  %v1236 = vadd.f32 %v847, %v1172
  %v1237 = vadd.f32 %v848, %v1173
  %v1238 = vadd.f32 %v849, %v1174
  %v1239 = vadd.f32 %v850, %v1175
  %v1240 = vadd.f32 %v851, %v1176
  %v1241 = vadd.f32 %v852, %v1177
  %v1242 = vadd.f32 %v853, %v1178
  %v1243 = vadd.f32 %v854, %v1179
  %v1244 = vadd.f32 %v855, %v1180
  %v1245 = vadd.f32 %v856, %v1181
  %v1246 = vadd.f32 %v857, %v1182
  %v1247 = vadd.f32 %v858, %v1183
  %v1248 = vadd.f32 %v859, %v1184
  %v1249 = vadd.f32 %v860, %v1185
  %v1250 = vadd.f32 %v861, %v1186
  %v1251 = vadd.f32 %v862, %v1187
  %v1252 = vadd.f32 %v863, %v1188
  %v1253 = vadd.f32 %v864, %v1189
  %v1254 = vadd.f32 %v865, %v1190
  %v1255 = vadd.f32 %v866, %v1191
  %v1256 = vadd.f32 %v867, %v1192
  %v1257 = vld [vmem:[%s1 + $0x3] sm:$0x1]
  %1258 = vset.pattern.permute.xlu0 3
  %1259 = vperm.xlu0 %1258, %v26
  %v1260 = vpop.permute.xlu0 %1259
  %1262 = vset.pattern.permute.xlu0 3
  %1263 = vperm.xlu0 %1262, %v27
  %v1264 = vpop.permute.xlu0 %1263
  %1266 = vset.pattern.permute.xlu0 3
  %1267 = vperm.xlu0 %1266, %v28
  %v1268 = vpop.permute.xlu0 %1267
  %1270 = vset.pattern.permute.xlu0 3
  %1271 = vperm.xlu0 %1270, %v29
  %v1272 = vpop.permute.xlu0 %1271
  %1274 = vset.pattern.permute.xlu0 3
  %1275 = vperm.xlu0 %1274, %v30
  %v1276 = vpop.permute.xlu0 %1275
  %1278 = vset.pattern.permute.xlu0 3
  %1279 = vperm.xlu0 %1278, %v31
  %v1280 = vpop.permute.xlu0 %1279
  %1282 = vset.pattern.permute.xlu0 3
  %1283 = vperm.xlu0 %1282, %v32
  %v1284 = vpop.permute.xlu0 %1283
  %1286 = vset.pattern.permute.xlu0 3
  %1287 = vperm.xlu0 %1286, %v33
  %v1288 = vpop.permute.xlu0 %1287
  %1290 = vset.pattern.permute.xlu0 3
  %1291 = vperm.xlu0 %1290, %v34
  %v1292 = vpop.permute.xlu0 %1291
  %1294 = vset.pattern.permute.xlu0 3
  %1295 = vperm.xlu0 %1294, %v35
  %v1296 = vpop.permute.xlu0 %1295
  %1298 = vset.pattern.permute.xlu0 3
  %1299 = vperm.xlu0 %1298, %v36
  %v1300 = vpop.permute.xlu0 %1299
  %1302 = vset.pattern.permute.xlu0 3
  %1303 = vperm.xlu0 %1302, %v37
  %v1304 = vpop.permute.xlu0 %1303
  %1306 = vset.pattern.permute.xlu0 3
  %1307 = vperm.xlu0 %1306, %v38
  %v1308 = vpop.permute.xlu0 %1307
  %1310 = vset.pattern.permute.xlu0 3
  %1311 = vperm.xlu0 %1310, %v39
  %v1312 = vpop.permute.xlu0 %1311
  %1314 = vset.pattern.permute.xlu0 3
  %1315 = vperm.xlu0 %1314, %v40
  %v1316 = vpop.permute.xlu0 %1315
  %1318 = vset.pattern.permute.xlu0 3
  %1319 = vperm.xlu0 %1318, %v41
  %v1320 = vpop.permute.xlu0 %1319
  %1322 = vset.pattern.permute.xlu0 3
  %1323 = vperm.xlu0 %1322, %v42
  %v1324 = vpop.permute.xlu0 %1323
  %1326 = vset.pattern.permute.xlu0 3
  %1327 = vperm.xlu0 %1326, %v43
  %v1328 = vpop.permute.xlu0 %1327
  %1330 = vset.pattern.permute.xlu0 3
  %1331 = vperm.xlu0 %1330, %v44
  %v1332 = vpop.permute.xlu0 %1331
  %1334 = vset.pattern.permute.xlu0 3
  %1335 = vperm.xlu0 %1334, %v45
  %v1336 = vpop.permute.xlu0 %1335
  %1338 = vset.pattern.permute.xlu0 3
  %1339 = vperm.xlu0 %1338, %v46
  %v1340 = vpop.permute.xlu0 %1339
  %1342 = vset.pattern.permute.xlu0 3
  %1343 = vperm.xlu0 %1342, %v47
  %v1344 = vpop.permute.xlu0 %1343
  %1346 = vset.pattern.permute.xlu0 3
  %1347 = vperm.xlu0 %1346, %v48
  %v1348 = vpop.permute.xlu0 %1347
  %1350 = vset.pattern.permute.xlu0 3
  %1351 = vperm.xlu0 %1350, %v49
  %v1352 = vpop.permute.xlu0 %1351
  %1354 = vset.pattern.permute.xlu0 3
  %1355 = vperm.xlu0 %1354, %v50
  %v1356 = vpop.permute.xlu0 %1355
  %1358 = vset.pattern.permute.xlu0 3
  %1359 = vperm.xlu0 %1358, %v51
  %v1360 = vpop.permute.xlu0 %1359
  %1362 = vset.pattern.permute.xlu0 3
  %1363 = vperm.xlu0 %1362, %v52
  %v1364 = vpop.permute.xlu0 %1363
  %1366 = vset.pattern.permute.xlu0 3
  %1367 = vperm.xlu0 %1366, %v53
  %v1368 = vpop.permute.xlu0 %1367
  %1370 = vset.pattern.permute.xlu0 3
  %1371 = vperm.xlu0 %1370, %v54
  %v1372 = vpop.permute.xlu0 %1371
  %1374 = vset.pattern.permute.xlu0 3
  %1375 = vperm.xlu0 %1374, %v55
  %v1376 = vpop.permute.xlu0 %1375
  %1378 = vset.pattern.permute.xlu0 3
  %1379 = vperm.xlu0 %1378, %v56
  %v1380 = vpop.permute.xlu0 %1379
  %1382 = vset.pattern.permute.xlu0 3
  %1383 = vperm.xlu0 %1382, %v57
  %v1384 = vpop.permute.xlu0 %1383
  %1386 = vset.pattern.permute.xlu0 3
  %1387 = vperm.xlu0 %1386, %v58
  %v1388 = vpop.permute.xlu0 %1387
  %1390 = vset.pattern.permute.xlu0 3
  %1391 = vperm.xlu0 %1390, %v59
  %v1392 = vpop.permute.xlu0 %1391
  %1394 = vset.pattern.permute.xlu0 3
  %1395 = vperm.xlu0 %1394, %v60
  %v1396 = vpop.permute.xlu0 %1395
  %1398 = vset.pattern.permute.xlu0 3
  %1399 = vperm.xlu0 %1398, %v61
  %v1400 = vpop.permute.xlu0 %1399
  %1402 = vset.pattern.permute.xlu0 3
  %1403 = vperm.xlu0 %1402, %v62
  %v1404 = vpop.permute.xlu0 %1403
  %1406 = vset.pattern.permute.xlu0 3
  %1407 = vperm.xlu0 %1406, %v63
  %v1408 = vpop.permute.xlu0 %1407
  %1410 = vset.pattern.permute.xlu0 3
  %1411 = vperm.xlu0 %1410, %v64
  %v1412 = vpop.permute.xlu0 %1411
  %1414 = vset.pattern.permute.xlu0 3
  %1415 = vperm.xlu0 %1414, %v65
  %v1416 = vpop.permute.xlu0 %1415
  %1418 = vset.pattern.permute.xlu0 3
  %1419 = vperm.xlu0 %1418, %v66
  %v1420 = vpop.permute.xlu0 %1419
  %1422 = vset.pattern.permute.xlu0 3
  %1423 = vperm.xlu0 %1422, %v67
  %v1424 = vpop.permute.xlu0 %1423
  %1426 = vset.pattern.permute.xlu0 3
  %1427 = vperm.xlu0 %1426, %v68
  %v1428 = vpop.permute.xlu0 %1427
  %1430 = vset.pattern.permute.xlu0 3
  %1431 = vperm.xlu0 %1430, %v69
  %v1432 = vpop.permute.xlu0 %1431
  %1434 = vset.pattern.permute.xlu0 3
  %1435 = vperm.xlu0 %1434, %v70
  %v1436 = vpop.permute.xlu0 %1435
  %1438 = vset.pattern.permute.xlu0 3
  %1439 = vperm.xlu0 %1438, %v71
  %v1440 = vpop.permute.xlu0 %1439
  %1442 = vset.pattern.permute.xlu0 3
  %1443 = vperm.xlu0 %1442, %v72
  %v1444 = vpop.permute.xlu0 %1443
  %1446 = vset.pattern.permute.xlu0 3
  %1447 = vperm.xlu0 %1446, %v73
  %v1448 = vpop.permute.xlu0 %1447
  %1450 = vset.pattern.permute.xlu0 3
  %1451 = vperm.xlu0 %1450, %v74
  %v1452 = vpop.permute.xlu0 %1451
  %1454 = vset.pattern.permute.xlu0 3
  %1455 = vperm.xlu0 %1454, %v75
  %v1456 = vpop.permute.xlu0 %1455
  %1458 = vset.pattern.permute.xlu0 3
  %1459 = vperm.xlu0 %1458, %v76
  %v1460 = vpop.permute.xlu0 %1459
  %1462 = vset.pattern.permute.xlu0 3
  %1463 = vperm.xlu0 %1462, %v77
  %v1464 = vpop.permute.xlu0 %1463
  %1466 = vset.pattern.permute.xlu0 3
  %1467 = vperm.xlu0 %1466, %v78
  %v1468 = vpop.permute.xlu0 %1467
  %1470 = vset.pattern.permute.xlu0 3
  %1471 = vperm.xlu0 %1470, %v79
  %v1472 = vpop.permute.xlu0 %1471
  %1474 = vset.pattern.permute.xlu0 3
  %1475 = vperm.xlu0 %1474, %v80
  %v1476 = vpop.permute.xlu0 %1475
  %1478 = vset.pattern.permute.xlu0 3
  %1479 = vperm.xlu0 %1478, %v81
  %v1480 = vpop.permute.xlu0 %1479
  %1482 = vset.pattern.permute.xlu0 3
  %1483 = vperm.xlu0 %1482, %v82
  %v1484 = vpop.permute.xlu0 %1483
  %1486 = vset.pattern.permute.xlu0 3
  %1487 = vperm.xlu0 %1486, %v83
  %v1488 = vpop.permute.xlu0 %1487
  %1490 = vset.pattern.permute.xlu0 3
  %1491 = vperm.xlu0 %1490, %v84
  %v1492 = vpop.permute.xlu0 %1491
  %1494 = vset.pattern.permute.xlu0 3
  %1495 = vperm.xlu0 %1494, %v85
  %v1496 = vpop.permute.xlu0 %1495
  %1498 = vset.pattern.permute.xlu0 3
  %1499 = vperm.xlu0 %1498, %v86
  %v1500 = vpop.permute.xlu0 %1499
  %1502 = vset.pattern.permute.xlu0 3
  %1503 = vperm.xlu0 %1502, %v87
  %v1504 = vpop.permute.xlu0 %1503
  %1506 = vset.pattern.permute.xlu0 3
  %1507 = vperm.xlu0 %1506, %v88
  %v1508 = vpop.permute.xlu0 %1507
  %1510 = vset.pattern.permute.xlu0 3
  %1511 = vperm.xlu0 %1510, %v89
  %v1512 = vpop.permute.xlu0 %1511
  %v1514 = vlaneseq
  %v1515 = vshrl.u32 %v1514, 7
  %v1516 = vsub.s32 0, %v1515
  %v1517 = vrot.slane %v1257, %v1516
  %v1518 = vmul.f32 %v1260, %v1517
  %v1519 = vmul.f32 %v1264, %v1517
  %v1520 = vmul.f32 %v1268, %v1517
  %v1521 = vmul.f32 %v1272, %v1517
  %v1522 = vmul.f32 %v1276, %v1517
  %v1523 = vmul.f32 %v1280, %v1517
  %v1524 = vmul.f32 %v1284, %v1517
  %v1525 = vmul.f32 %v1288, %v1517
  %v1526 = vmul.f32 %v1292, %v1517
  %v1527 = vmul.f32 %v1296, %v1517
  %v1528 = vmul.f32 %v1300, %v1517
  %v1529 = vmul.f32 %v1304, %v1517
  %v1530 = vmul.f32 %v1308, %v1517
  %v1531 = vmul.f32 %v1312, %v1517
  %v1532 = vmul.f32 %v1316, %v1517
  %v1533 = vmul.f32 %v1320, %v1517
  %v1534 = vmul.f32 %v1324, %v1517
  %v1535 = vmul.f32 %v1328, %v1517
  %v1536 = vmul.f32 %v1332, %v1517
  %v1537 = vmul.f32 %v1336, %v1517
  %v1538 = vmul.f32 %v1340, %v1517
  %v1539 = vmul.f32 %v1344, %v1517
  %v1540 = vmul.f32 %v1348, %v1517
  %v1541 = vmul.f32 %v1352, %v1517
  %v1542 = vmul.f32 %v1356, %v1517
  %v1543 = vmul.f32 %v1360, %v1517
  %v1544 = vmul.f32 %v1364, %v1517
  %v1545 = vmul.f32 %v1368, %v1517
  %v1546 = vmul.f32 %v1372, %v1517
  %v1547 = vmul.f32 %v1376, %v1517
  %v1548 = vmul.f32 %v1380, %v1517
  %v1549 = vmul.f32 %v1384, %v1517
  %v1550 = vmul.f32 %v1388, %v1517
  %v1551 = vmul.f32 %v1392, %v1517
  %v1552 = vmul.f32 %v1396, %v1517
  %v1553 = vmul.f32 %v1400, %v1517
  %v1554 = vmul.f32 %v1404, %v1517
  %v1555 = vmul.f32 %v1408, %v1517
  %v1556 = vmul.f32 %v1412, %v1517
  %v1557 = vmul.f32 %v1416, %v1517
  %v1558 = vmul.f32 %v1420, %v1517
  %v1559 = vmul.f32 %v1424, %v1517
  %v1560 = vmul.f32 %v1428, %v1517
  %v1561 = vmul.f32 %v1432, %v1517
  %v1562 = vmul.f32 %v1436, %v1517
  %v1563 = vmul.f32 %v1440, %v1517
  %v1564 = vmul.f32 %v1444, %v1517
  %v1565 = vmul.f32 %v1448, %v1517
  %v1566 = vmul.f32 %v1452, %v1517
  %v1567 = vmul.f32 %v1456, %v1517
  %v1568 = vmul.f32 %v1460, %v1517
  %v1569 = vmul.f32 %v1464, %v1517
  %v1570 = vmul.f32 %v1468, %v1517
  %v1571 = vmul.f32 %v1472, %v1517
  %v1572 = vmul.f32 %v1476, %v1517
  %v1573 = vmul.f32 %v1480, %v1517
  %v1574 = vmul.f32 %v1484, %v1517
  %v1575 = vmul.f32 %v1488, %v1517
  %v1576 = vmul.f32 %v1492, %v1517
  %v1577 = vmul.f32 %v1496, %v1517
  %v1578 = vmul.f32 %v1500, %v1517
  %v1579 = vmul.f32 %v1504, %v1517
  %v1580 = vmul.f32 %v1508, %v1517
  %v1581 = vmul.f32 %v1512, %v1517
  %v1582 = vadd.f32 %v1193, %v1518
  %v1583 = vadd.f32 %v1194, %v1519
  %v1584 = vadd.f32 %v1195, %v1520
  %v1585 = vadd.f32 %v1196, %v1521
  %v1586 = vadd.f32 %v1197, %v1522
  %v1587 = vadd.f32 %v1198, %v1523
  %v1588 = vadd.f32 %v1199, %v1524
  %v1589 = vadd.f32 %v1200, %v1525
  %v1590 = vadd.f32 %v1201, %v1526
  %v1591 = vadd.f32 %v1202, %v1527
  %v1592 = vadd.f32 %v1203, %v1528
  %v1593 = vadd.f32 %v1204, %v1529
  %v1594 = vadd.f32 %v1205, %v1530
  %v1595 = vadd.f32 %v1206, %v1531
  %v1596 = vadd.f32 %v1207, %v1532
  %v1597 = vadd.f32 %v1208, %v1533
  %v1598 = vadd.f32 %v1209, %v1534
  %v1599 = vadd.f32 %v1210, %v1535
  %v1600 = vadd.f32 %v1211, %v1536
  %v1601 = vadd.f32 %v1212, %v1537
  %v1602 = vadd.f32 %v1213, %v1538
  %v1603 = vadd.f32 %v1214, %v1539
  %v1604 = vadd.f32 %v1215, %v1540
  %v1605 = vadd.f32 %v1216, %v1541
  %v1606 = vadd.f32 %v1217, %v1542
  %v1607 = vadd.f32 %v1218, %v1543
  %v1608 = vadd.f32 %v1219, %v1544
  %v1609 = vadd.f32 %v1220, %v1545
  %v1610 = vadd.f32 %v1221, %v1546
  %v1611 = vadd.f32 %v1222, %v1547
  %v1612 = vadd.f32 %v1223, %v1548
  %v1613 = vadd.f32 %v1224, %v1549
  %v1614 = vadd.f32 %v1225, %v1550
  %v1615 = vadd.f32 %v1226, %v1551
  %v1616 = vadd.f32 %v1227, %v1552
  %v1617 = vadd.f32 %v1228, %v1553
  %v1618 = vadd.f32 %v1229, %v1554
  %v1619 = vadd.f32 %v1230, %v1555
  %v1620 = vadd.f32 %v1231, %v1556
  %v1621 = vadd.f32 %v1232, %v1557
  %v1622 = vadd.f32 %v1233, %v1558
  %v1623 = vadd.f32 %v1234, %v1559
  %v1624 = vadd.f32 %v1235, %v1560
  %v1625 = vadd.f32 %v1236, %v1561
  %v1626 = vadd.f32 %v1237, %v1562
  %v1627 = vadd.f32 %v1238, %v1563
  %v1628 = vadd.f32 %v1239, %v1564
  %v1629 = vadd.f32 %v1240, %v1565
  %v1630 = vadd.f32 %v1241, %v1566
  %v1631 = vadd.f32 %v1242, %v1567
  %v1632 = vadd.f32 %v1243, %v1568
  %v1633 = vadd.f32 %v1244, %v1569
  %v1634 = vadd.f32 %v1245, %v1570
  %v1635 = vadd.f32 %v1246, %v1571
  %v1636 = vadd.f32 %v1247, %v1572
  %v1637 = vadd.f32 %v1248, %v1573
  %v1638 = vadd.f32 %v1249, %v1574
  %v1639 = vadd.f32 %v1250, %v1575
  %v1640 = vadd.f32 %v1251, %v1576
  %v1641 = vadd.f32 %v1252, %v1577
  %v1642 = vadd.f32 %v1253, %v1578
  %v1643 = vadd.f32 %v1254, %v1579
  %v1644 = vadd.f32 %v1255, %v1580
  %v1645 = vadd.f32 %v1256, %v1581
  %v1646 = vld [vmem:[%s3] sm:$0x1]
  %v1647 = vld [vmem:[%s4] sm:$0x1]
  %vm1648 = vcmask 523264
  %v1649 = vsel %vm1648, %v1582, 0.0
  %v1650 = vsel %vm1648, %v1583, 0.0
  %v1651 = vadd.f32 %v1649, %v1650
  %v1652 = vsel %vm1648, %v1584, 0.0
  %v1653 = vadd.f32 %v1651, %v1652
  %v1654 = vsel %vm1648, %v1585, 0.0
  %v1655 = vadd.f32 %v1653, %v1654
  %v1656 = vsel %vm1648, %v1586, 0.0
  %v1657 = vadd.f32 %v1655, %v1656
  %v1658 = vsel %vm1648, %v1587, 0.0
  %v1659 = vadd.f32 %v1657, %v1658
  %v1660 = vsel %vm1648, %v1588, 0.0
  %v1661 = vadd.f32 %v1659, %v1660
  %v1662 = vsel %vm1648, %v1589, 0.0
  %v1663 = vadd.f32 %v1661, %v1662
  %v1664 = vsel %vm1648, %v1590, 0.0
  %v1665 = vadd.f32 %v1663, %v1664
  %v1666 = vsel %vm1648, %v1591, 0.0
  %v1667 = vadd.f32 %v1665, %v1666
  %v1668 = vsel %vm1648, %v1592, 0.0
  %v1669 = vadd.f32 %v1667, %v1668
  %v1670 = vsel %vm1648, %v1593, 0.0
  %v1671 = vadd.f32 %v1669, %v1670
  %v1672 = vsel %vm1648, %v1594, 0.0
  %v1673 = vadd.f32 %v1671, %v1672
  %v1674 = vsel %vm1648, %v1595, 0.0
  %v1675 = vadd.f32 %v1673, %v1674
  %v1676 = vsel %vm1648, %v1596, 0.0
  %v1677 = vadd.f32 %v1675, %v1676
  %v1678 = vsel %vm1648, %v1597, 0.0
  %v1679 = vadd.f32 %v1677, %v1678
  %v1680 = vsel %vm1648, %v1598, 0.0
  %v1681 = vadd.f32 %v1679, %v1680
  %v1682 = vsel %vm1648, %v1599, 0.0
  %v1683 = vadd.f32 %v1681, %v1682
  %v1684 = vsel %vm1648, %v1600, 0.0
  %v1685 = vadd.f32 %v1683, %v1684
  %v1686 = vsel %vm1648, %v1601, 0.0
  %v1687 = vadd.f32 %v1685, %v1686
  %v1688 = vsel %vm1648, %v1602, 0.0
  %v1689 = vadd.f32 %v1687, %v1688
  %v1690 = vsel %vm1648, %v1603, 0.0
  %v1691 = vadd.f32 %v1689, %v1690
  %v1692 = vsel %vm1648, %v1604, 0.0
  %v1693 = vadd.f32 %v1691, %v1692
  %v1694 = vsel %vm1648, %v1605, 0.0
  %v1695 = vadd.f32 %v1693, %v1694
  %v1696 = vsel %vm1648, %v1606, 0.0
  %v1697 = vadd.f32 %v1695, %v1696
  %v1698 = vsel %vm1648, %v1607, 0.0
  %v1699 = vadd.f32 %v1697, %v1698
  %v1700 = vsel %vm1648, %v1608, 0.0
  %v1701 = vadd.f32 %v1699, %v1700
  %v1702 = vsel %vm1648, %v1609, 0.0
  %v1703 = vadd.f32 %v1701, %v1702
  %v1704 = vsel %vm1648, %v1610, 0.0
  %v1705 = vadd.f32 %v1703, %v1704
  %v1706 = vsel %vm1648, %v1611, 0.0
  %v1707 = vadd.f32 %v1705, %v1706
  %v1708 = vsel %vm1648, %v1612, 0.0
  %v1709 = vadd.f32 %v1707, %v1708
  %v1710 = vsel %vm1648, %v1613, 0.0
  %v1711 = vadd.f32 %v1709, %v1710
  %v1712 = vsel %vm1648, %v1614, 0.0
  %v1713 = vadd.f32 %v1711, %v1712
  %v1714 = vsel %vm1648, %v1615, 0.0
  %v1715 = vadd.f32 %v1713, %v1714
  %v1716 = vsel %vm1648, %v1616, 0.0
  %v1717 = vadd.f32 %v1715, %v1716
  %v1718 = vsel %vm1648, %v1617, 0.0
  %v1719 = vadd.f32 %v1717, %v1718
  %v1720 = vsel %vm1648, %v1618, 0.0
  %v1721 = vadd.f32 %v1719, %v1720
  %v1722 = vsel %vm1648, %v1619, 0.0
  %v1723 = vadd.f32 %v1721, %v1722
  %v1724 = vsel %vm1648, %v1620, 0.0
  %v1725 = vadd.f32 %v1723, %v1724
  %v1726 = vsel %vm1648, %v1621, 0.0
  %v1727 = vadd.f32 %v1725, %v1726
  %v1728 = vsel %vm1648, %v1622, 0.0
  %v1729 = vadd.f32 %v1727, %v1728
  %v1730 = vsel %vm1648, %v1623, 0.0
  %v1731 = vadd.f32 %v1729, %v1730
  %v1732 = vsel %vm1648, %v1624, 0.0
  %v1733 = vadd.f32 %v1731, %v1732
  %v1734 = vsel %vm1648, %v1625, 0.0
  %v1735 = vadd.f32 %v1733, %v1734
  %v1736 = vsel %vm1648, %v1626, 0.0
  %v1737 = vadd.f32 %v1735, %v1736
  %v1738 = vsel %vm1648, %v1627, 0.0
  %v1739 = vadd.f32 %v1737, %v1738
  %v1740 = vsel %vm1648, %v1628, 0.0
  %v1741 = vadd.f32 %v1739, %v1740
  %v1742 = vsel %vm1648, %v1629, 0.0
  %v1743 = vadd.f32 %v1741, %v1742
  %v1744 = vsel %vm1648, %v1630, 0.0
  %v1745 = vadd.f32 %v1743, %v1744
  %v1746 = vsel %vm1648, %v1631, 0.0
  %v1747 = vadd.f32 %v1745, %v1746
  %v1748 = vsel %vm1648, %v1632, 0.0
  %v1749 = vadd.f32 %v1747, %v1748
  %v1750 = vsel %vm1648, %v1633, 0.0
  %v1751 = vadd.f32 %v1749, %v1750
  %v1752 = vsel %vm1648, %v1634, 0.0
  %v1753 = vadd.f32 %v1751, %v1752
  %v1754 = vsel %vm1648, %v1635, 0.0
  %v1755 = vadd.f32 %v1753, %v1754
  %v1756 = vsel %vm1648, %v1636, 0.0
  %v1757 = vadd.f32 %v1755, %v1756
  %v1758 = vsel %vm1648, %v1637, 0.0
  %v1759 = vadd.f32 %v1757, %v1758
  %v1760 = vsel %vm1648, %v1638, 0.0
  %v1761 = vadd.f32 %v1759, %v1760
  %v1762 = vsel %vm1648, %v1639, 0.0
  %v1763 = vadd.f32 %v1761, %v1762
  %v1764 = vsel %vm1648, %v1640, 0.0
  %v1765 = vadd.f32 %v1763, %v1764
  %v1766 = vsel %vm1648, %v1641, 0.0
  %v1767 = vadd.f32 %v1765, %v1766
  %v1768 = vsel %vm1648, %v1642, 0.0
  %v1769 = vadd.f32 %v1767, %v1768
  %v1770 = vsel %vm1648, %v1643, 0.0
  %v1771 = vadd.f32 %v1769, %v1770
  %v1772 = vsel %vm1648, %v1644, 0.0
  %v1773 = vadd.f32 %v1771, %v1772
  %v1774 = vsel %vm1648, %v1645, 0.0
  %v1775 = vadd.f32 %v1773, %v1774
  %v1776 = vrot.slane %v1775, 4
  %v1777 = vadd.f32 %v1775, %v1776
  %v1778 = vrot.slane %v1777, 2
  %v1779 = vadd.f32 %v1777, %v1778
  %v1780 = vrot.slane %v1779, 1
  %v1781 = vadd.f32 %v1779, %v1780
  %v1782 = vmul.f32 %v1781, 0.001953125
  %v1783 = vmul.f32 %v1582, %v1582
  %v1784 = vmul.f32 %v1583, %v1583
  %v1785 = vmul.f32 %v1584, %v1584
  %v1786 = vmul.f32 %v1585, %v1585
  %v1787 = vmul.f32 %v1586, %v1586
  %v1788 = vmul.f32 %v1587, %v1587
  %v1789 = vmul.f32 %v1588, %v1588
  %v1790 = vmul.f32 %v1589, %v1589
  %v1791 = vmul.f32 %v1590, %v1590
  %v1792 = vmul.f32 %v1591, %v1591
  %v1793 = vmul.f32 %v1592, %v1592
  %v1794 = vmul.f32 %v1593, %v1593
  %v1795 = vmul.f32 %v1594, %v1594
  %v1796 = vmul.f32 %v1595, %v1595
  %v1797 = vmul.f32 %v1596, %v1596
  %v1798 = vmul.f32 %v1597, %v1597
  %v1799 = vmul.f32 %v1598, %v1598
  %v1800 = vmul.f32 %v1599, %v1599
  %v1801 = vmul.f32 %v1600, %v1600
  %v1802 = vmul.f32 %v1601, %v1601
  %v1803 = vmul.f32 %v1602, %v1602
  %v1804 = vmul.f32 %v1603, %v1603
  %v1805 = vmul.f32 %v1604, %v1604
  %v1806 = vmul.f32 %v1605, %v1605
  %v1807 = vmul.f32 %v1606, %v1606
  %v1808 = vmul.f32 %v1607, %v1607
  %v1809 = vmul.f32 %v1608, %v1608
  %v1810 = vmul.f32 %v1609, %v1609
  %v1811 = vmul.f32 %v1610, %v1610
  %v1812 = vmul.f32 %v1611, %v1611
  %v1813 = vmul.f32 %v1612, %v1612
  %v1814 = vmul.f32 %v1613, %v1613
  %v1815 = vmul.f32 %v1614, %v1614
  %v1816 = vmul.f32 %v1615, %v1615
  %v1817 = vmul.f32 %v1616, %v1616
  %v1818 = vmul.f32 %v1617, %v1617
  %v1819 = vmul.f32 %v1618, %v1618
  %v1820 = vmul.f32 %v1619, %v1619
  %v1821 = vmul.f32 %v1620, %v1620
  %v1822 = vmul.f32 %v1621, %v1621
  %v1823 = vmul.f32 %v1622, %v1622
  %v1824 = vmul.f32 %v1623, %v1623
  %v1825 = vmul.f32 %v1624, %v1624
  %v1826 = vmul.f32 %v1625, %v1625
  %v1827 = vmul.f32 %v1626, %v1626
  %v1828 = vmul.f32 %v1627, %v1627
  %v1829 = vmul.f32 %v1628, %v1628
  %v1830 = vmul.f32 %v1629, %v1629
  %v1831 = vmul.f32 %v1630, %v1630
  %v1832 = vmul.f32 %v1631, %v1631
  %v1833 = vmul.f32 %v1632, %v1632
  %v1834 = vmul.f32 %v1633, %v1633
  %v1835 = vmul.f32 %v1634, %v1634
  %v1836 = vmul.f32 %v1635, %v1635
  %v1837 = vmul.f32 %v1636, %v1636
  %v1838 = vmul.f32 %v1637, %v1637
  %v1839 = vmul.f32 %v1638, %v1638
  %v1840 = vmul.f32 %v1639, %v1639
  %v1841 = vmul.f32 %v1640, %v1640
  %v1842 = vmul.f32 %v1641, %v1641
  %v1843 = vmul.f32 %v1642, %v1642
  %v1844 = vmul.f32 %v1643, %v1643
  %v1845 = vmul.f32 %v1644, %v1644
  %v1846 = vmul.f32 %v1645, %v1645
  %v1847 = vsel %vm1648, %v1783, 0.0
  %v1848 = vsel %vm1648, %v1784, 0.0
  %v1849 = vadd.f32 %v1847, %v1848
  %v1850 = vsel %vm1648, %v1785, 0.0
  %v1851 = vadd.f32 %v1849, %v1850
  %v1852 = vsel %vm1648, %v1786, 0.0
  %v1853 = vadd.f32 %v1851, %v1852
  %v1854 = vsel %vm1648, %v1787, 0.0
  %v1855 = vadd.f32 %v1853, %v1854
  %v1856 = vsel %vm1648, %v1788, 0.0
  %v1857 = vadd.f32 %v1855, %v1856
  %v1858 = vsel %vm1648, %v1789, 0.0
  %v1859 = vadd.f32 %v1857, %v1858
  %v1860 = vsel %vm1648, %v1790, 0.0
  %v1861 = vadd.f32 %v1859, %v1860
  %v1862 = vsel %vm1648, %v1791, 0.0
  %v1863 = vadd.f32 %v1861, %v1862
  %v1864 = vsel %vm1648, %v1792, 0.0
  %v1865 = vadd.f32 %v1863, %v1864
  %v1866 = vsel %vm1648, %v1793, 0.0
  %v1867 = vadd.f32 %v1865, %v1866
  %v1868 = vsel %vm1648, %v1794, 0.0
  %v1869 = vadd.f32 %v1867, %v1868
  %v1870 = vsel %vm1648, %v1795, 0.0
  %v1871 = vadd.f32 %v1869, %v1870
  %v1872 = vsel %vm1648, %v1796, 0.0
  %v1873 = vadd.f32 %v1871, %v1872
  %v1874 = vsel %vm1648, %v1797, 0.0
  %v1875 = vadd.f32 %v1873, %v1874
  %v1876 = vsel %vm1648, %v1798, 0.0
  %v1877 = vadd.f32 %v1875, %v1876
  %v1878 = vsel %vm1648, %v1799, 0.0
  %v1879 = vadd.f32 %v1877, %v1878
  %v1880 = vsel %vm1648, %v1800, 0.0
  %v1881 = vadd.f32 %v1879, %v1880
  %v1882 = vsel %vm1648, %v1801, 0.0
  %v1883 = vadd.f32 %v1881, %v1882
  %v1884 = vsel %vm1648, %v1802, 0.0
  %v1885 = vadd.f32 %v1883, %v1884
  %v1886 = vsel %vm1648, %v1803, 0.0
  %v1887 = vadd.f32 %v1885, %v1886
  %v1888 = vsel %vm1648, %v1804, 0.0
  %v1889 = vadd.f32 %v1887, %v1888
  %v1890 = vsel %vm1648, %v1805, 0.0
  %v1891 = vadd.f32 %v1889, %v1890
  %v1892 = vsel %vm1648, %v1806, 0.0
  %v1893 = vadd.f32 %v1891, %v1892
  %v1894 = vsel %vm1648, %v1807, 0.0
  %v1895 = vadd.f32 %v1893, %v1894
  %v1896 = vsel %vm1648, %v1808, 0.0
  %v1897 = vadd.f32 %v1895, %v1896
  %v1898 = vsel %vm1648, %v1809, 0.0
  %v1899 = vadd.f32 %v1897, %v1898
  %v1900 = vsel %vm1648, %v1810, 0.0
  %v1901 = vadd.f32 %v1899, %v1900
  %v1902 = vsel %vm1648, %v1811, 0.0
  %v1903 = vadd.f32 %v1901, %v1902
  %v1904 = vsel %vm1648, %v1812, 0.0
  %v1905 = vadd.f32 %v1903, %v1904
  %v1906 = vsel %vm1648, %v1813, 0.0
  %v1907 = vadd.f32 %v1905, %v1906
  %v1908 = vsel %vm1648, %v1814, 0.0
  %v1909 = vadd.f32 %v1907, %v1908
  %v1910 = vsel %vm1648, %v1815, 0.0
  %v1911 = vadd.f32 %v1909, %v1910
  %v1912 = vsel %vm1648, %v1816, 0.0
  %v1913 = vadd.f32 %v1911, %v1912
  %v1914 = vsel %vm1648, %v1817, 0.0
  %v1915 = vadd.f32 %v1913, %v1914
  %v1916 = vsel %vm1648, %v1818, 0.0
  %v1917 = vadd.f32 %v1915, %v1916
  %v1918 = vsel %vm1648, %v1819, 0.0
  %v1919 = vadd.f32 %v1917, %v1918
  %v1920 = vsel %vm1648, %v1820, 0.0
  %v1921 = vadd.f32 %v1919, %v1920
  %v1922 = vsel %vm1648, %v1821, 0.0
  %v1923 = vadd.f32 %v1921, %v1922
  %v1924 = vsel %vm1648, %v1822, 0.0
  %v1925 = vadd.f32 %v1923, %v1924
  %v1926 = vsel %vm1648, %v1823, 0.0
  %v1927 = vadd.f32 %v1925, %v1926
  %v1928 = vsel %vm1648, %v1824, 0.0
  %v1929 = vadd.f32 %v1927, %v1928
  %v1930 = vsel %vm1648, %v1825, 0.0
  %v1931 = vadd.f32 %v1929, %v1930
  %v1932 = vsel %vm1648, %v1826, 0.0
  %v1933 = vadd.f32 %v1931, %v1932
  %v1934 = vsel %vm1648, %v1827, 0.0
  %v1935 = vadd.f32 %v1933, %v1934
  %v1936 = vsel %vm1648, %v1828, 0.0
  %v1937 = vadd.f32 %v1935, %v1936
  %v1938 = vsel %vm1648, %v1829, 0.0
  %v1939 = vadd.f32 %v1937, %v1938
  %v1940 = vsel %vm1648, %v1830, 0.0
  %v1941 = vadd.f32 %v1939, %v1940
  %v1942 = vsel %vm1648, %v1831, 0.0
  %v1943 = vadd.f32 %v1941, %v1942
  %v1944 = vsel %vm1648, %v1832, 0.0
  %v1945 = vadd.f32 %v1943, %v1944
  %v1946 = vsel %vm1648, %v1833, 0.0
  %v1947 = vadd.f32 %v1945, %v1946
  %v1948 = vsel %vm1648, %v1834, 0.0
  %v1949 = vadd.f32 %v1947, %v1948
  %v1950 = vsel %vm1648, %v1835, 0.0
  %v1951 = vadd.f32 %v1949, %v1950
  %v1952 = vsel %vm1648, %v1836, 0.0
  %v1953 = vadd.f32 %v1951, %v1952
  %v1954 = vsel %vm1648, %v1837, 0.0
  %v1955 = vadd.f32 %v1953, %v1954
  %v1956 = vsel %vm1648, %v1838, 0.0
  %v1957 = vadd.f32 %v1955, %v1956
  %v1958 = vsel %vm1648, %v1839, 0.0
  %v1959 = vadd.f32 %v1957, %v1958
  %v1960 = vsel %vm1648, %v1840, 0.0
  %v1961 = vadd.f32 %v1959, %v1960
  %v1962 = vsel %vm1648, %v1841, 0.0
  %v1963 = vadd.f32 %v1961, %v1962
  %v1964 = vsel %vm1648, %v1842, 0.0
  %v1965 = vadd.f32 %v1963, %v1964
  %v1966 = vsel %vm1648, %v1843, 0.0
  %v1967 = vadd.f32 %v1965, %v1966
  %v1968 = vsel %vm1648, %v1844, 0.0
  %v1969 = vadd.f32 %v1967, %v1968
  %v1970 = vsel %vm1648, %v1845, 0.0
  %v1971 = vadd.f32 %v1969, %v1970
  %v1972 = vsel %vm1648, %v1846, 0.0
  %v1973 = vadd.f32 %v1971, %v1972
  %v1974 = vrot.slane %v1973, 4
  %v1975 = vadd.f32 %v1973, %v1974
  %v1976 = vrot.slane %v1975, 2
  %v1977 = vadd.f32 %v1975, %v1976
  %v1978 = vrot.slane %v1977, 1
  %v1979 = vadd.f32 %v1977, %v1978
  %v1980 = vmul.f32 %v1979, 0.001953125
  %v1981 = vmul.f32 %v1782, %v1782
  %v1982 = vsub.f32 %v1980, %v1981
  %v1983 = vadd.f32 %v1982, 1e-05
  %v1984 = vrsqrt.pop %v1983
  %v1985 = vmul.f32 %v1646, %v1984
  %v1986 = vmul.f32 %v1782, %v1985
  %v1987 = vsub.f32 %v1647, %v1986
  %v1989 = vlaneseq
  %v1990 = vshrl.u32 %v1989, 7
  %v1991 = vsub.s32 0, %v1990
  %v1992 = vrot.slane %v1985, %v1991
  %v1994 = vmul.f32 %v1582, %v1992
  %v1995 = vmul.f32 %v1583, %v1992
  %v1996 = vmul.f32 %v1584, %v1992
  %v1997 = vmul.f32 %v1585, %v1992
  %v1998 = vmul.f32 %v1586, %v1992
  %v1999 = vmul.f32 %v1587, %v1992
  %v2000 = vmul.f32 %v1588, %v1992
  %v2001 = vmul.f32 %v1589, %v1992
  %v2002 = vmul.f32 %v1590, %v1992
  %v2003 = vmul.f32 %v1591, %v1992
  %v2004 = vmul.f32 %v1592, %v1992
  %v2005 = vmul.f32 %v1593, %v1992
  %v2006 = vmul.f32 %v1594, %v1992
  %v2007 = vmul.f32 %v1595, %v1992
  %v2008 = vmul.f32 %v1596, %v1992
  %v2009 = vmul.f32 %v1597, %v1992
  %v2010 = vmul.f32 %v1598, %v1992
  %v2011 = vmul.f32 %v1599, %v1992
  %v2012 = vmul.f32 %v1600, %v1992
  %v2013 = vmul.f32 %v1601, %v1992
  %v2014 = vmul.f32 %v1602, %v1992
  %v2015 = vmul.f32 %v1603, %v1992
  %v2016 = vmul.f32 %v1604, %v1992
  %v2017 = vmul.f32 %v1605, %v1992
  %v2018 = vmul.f32 %v1606, %v1992
  %v2019 = vmul.f32 %v1607, %v1992
  %v2020 = vmul.f32 %v1608, %v1992
  %v2021 = vmul.f32 %v1609, %v1992
  %v2022 = vmul.f32 %v1610, %v1992
  %v2023 = vmul.f32 %v1611, %v1992
  %v2024 = vmul.f32 %v1612, %v1992
  %v2025 = vmul.f32 %v1613, %v1992
  %v2026 = vmul.f32 %v1614, %v1992
  %v2027 = vmul.f32 %v1615, %v1992
  %v2028 = vmul.f32 %v1616, %v1992
  %v2029 = vmul.f32 %v1617, %v1992
  %v2030 = vmul.f32 %v1618, %v1992
  %v2031 = vmul.f32 %v1619, %v1992
  %v2032 = vmul.f32 %v1620, %v1992
  %v2033 = vmul.f32 %v1621, %v1992
  %v2034 = vmul.f32 %v1622, %v1992
  %v2035 = vmul.f32 %v1623, %v1992
  %v2036 = vmul.f32 %v1624, %v1992
  %v2037 = vmul.f32 %v1625, %v1992
  %v2038 = vmul.f32 %v1626, %v1992
  %v2039 = vmul.f32 %v1627, %v1992
  %v2040 = vmul.f32 %v1628, %v1992
  %v2041 = vmul.f32 %v1629, %v1992
  %v2042 = vmul.f32 %v1630, %v1992
  %v2043 = vmul.f32 %v1631, %v1992
  %v2044 = vmul.f32 %v1632, %v1992
  %v2045 = vmul.f32 %v1633, %v1992
  %v2046 = vmul.f32 %v1634, %v1992
  %v2047 = vmul.f32 %v1635, %v1992
  %v2048 = vmul.f32 %v1636, %v1992
  %v2049 = vmul.f32 %v1637, %v1992
  %v2050 = vmul.f32 %v1638, %v1992
  %v2051 = vmul.f32 %v1639, %v1992
  %v2052 = vmul.f32 %v1640, %v1992
  %v2053 = vmul.f32 %v1641, %v1992
  %v2054 = vmul.f32 %v1642, %v1992
  %v2055 = vmul.f32 %v1643, %v1992
  %v2056 = vmul.f32 %v1644, %v1992
  %v2057 = vmul.f32 %v1645, %v1992
  %v2059 = vlaneseq
  %v2060 = vshrl.u32 %v2059, 7
  %v2061 = vsub.s32 0, %v2060
  %v2062 = vrot.slane %v1987, %v2061
  %v2064 = vadd.f32 %v1994, %v2062
  %v2065 = vadd.f32 %v1995, %v2062
  %v2066 = vadd.f32 %v1996, %v2062
  %v2067 = vadd.f32 %v1997, %v2062
  %v2068 = vadd.f32 %v1998, %v2062
  %v2069 = vadd.f32 %v1999, %v2062
  %v2070 = vadd.f32 %v2000, %v2062
  %v2071 = vadd.f32 %v2001, %v2062
  %v2072 = vadd.f32 %v2002, %v2062
  %v2073 = vadd.f32 %v2003, %v2062
  %v2074 = vadd.f32 %v2004, %v2062
  %v2075 = vadd.f32 %v2005, %v2062
  %v2076 = vadd.f32 %v2006, %v2062
  %v2077 = vadd.f32 %v2007, %v2062
  %v2078 = vadd.f32 %v2008, %v2062
  %v2079 = vadd.f32 %v2009, %v2062
  %v2080 = vadd.f32 %v2010, %v2062
  %v2081 = vadd.f32 %v2011, %v2062
  %v2082 = vadd.f32 %v2012, %v2062
  %v2083 = vadd.f32 %v2013, %v2062
  %v2084 = vadd.f32 %v2014, %v2062
  %v2085 = vadd.f32 %v2015, %v2062
  %v2086 = vadd.f32 %v2016, %v2062
  %v2087 = vadd.f32 %v2017, %v2062
  %v2088 = vadd.f32 %v2018, %v2062
  %v2089 = vadd.f32 %v2019, %v2062
  %v2090 = vadd.f32 %v2020, %v2062
  %v2091 = vadd.f32 %v2021, %v2062
  %v2092 = vadd.f32 %v2022, %v2062
  %v2093 = vadd.f32 %v2023, %v2062
  %v2094 = vadd.f32 %v2024, %v2062
  %v2095 = vadd.f32 %v2025, %v2062
  %v2096 = vadd.f32 %v2026, %v2062
  %v2097 = vadd.f32 %v2027, %v2062
  %v2098 = vadd.f32 %v2028, %v2062
  %v2099 = vadd.f32 %v2029, %v2062
  %v2100 = vadd.f32 %v2030, %v2062
  %v2101 = vadd.f32 %v2031, %v2062
  %v2102 = vadd.f32 %v2032, %v2062
  %v2103 = vadd.f32 %v2033, %v2062
  %v2104 = vadd.f32 %v2034, %v2062
  %v2105 = vadd.f32 %v2035, %v2062
  %v2106 = vadd.f32 %v2036, %v2062
  %v2107 = vadd.f32 %v2037, %v2062
  %v2108 = vadd.f32 %v2038, %v2062
  %v2109 = vadd.f32 %v2039, %v2062
  %v2110 = vadd.f32 %v2040, %v2062
  %v2111 = vadd.f32 %v2041, %v2062
  %v2112 = vadd.f32 %v2042, %v2062
  %v2113 = vadd.f32 %v2043, %v2062
  %v2114 = vadd.f32 %v2044, %v2062
  %v2115 = vadd.f32 %v2045, %v2062
  %v2116 = vadd.f32 %v2046, %v2062
  %v2117 = vadd.f32 %v2047, %v2062
  %v2118 = vadd.f32 %v2048, %v2062
  %v2119 = vadd.f32 %v2049, %v2062
  %v2120 = vadd.f32 %v2050, %v2062
  %v2121 = vadd.f32 %v2051, %v2062
  %v2122 = vadd.f32 %v2052, %v2062
  %v2123 = vadd.f32 %v2053, %v2062
  %v2124 = vadd.f32 %v2054, %v2062
  %v2125 = vadd.f32 %v2055, %v2062
  %v2126 = vadd.f32 %v2056, %v2062
  %v2127 = vadd.f32 %v2057, %v2062
  %v2128 = vmax.f32 %v2064, 0.0
  %v2129 = vmax.f32 %v2065, 0.0
  %v2130 = vmax.f32 %v2066, 0.0
  %v2131 = vmax.f32 %v2067, 0.0
  %v2132 = vmax.f32 %v2068, 0.0
  %v2133 = vmax.f32 %v2069, 0.0
  %v2134 = vmax.f32 %v2070, 0.0
  %v2135 = vmax.f32 %v2071, 0.0
  %v2136 = vmax.f32 %v2072, 0.0
  %v2137 = vmax.f32 %v2073, 0.0
  %v2138 = vmax.f32 %v2074, 0.0
  %v2139 = vmax.f32 %v2075, 0.0
  %v2140 = vmax.f32 %v2076, 0.0
  %v2141 = vmax.f32 %v2077, 0.0
  %v2142 = vmax.f32 %v2078, 0.0
  %v2143 = vmax.f32 %v2079, 0.0
  %v2144 = vmax.f32 %v2080, 0.0
  %v2145 = vmax.f32 %v2081, 0.0
  %v2146 = vmax.f32 %v2082, 0.0
  %v2147 = vmax.f32 %v2083, 0.0
  %v2148 = vmax.f32 %v2084, 0.0
  %v2149 = vmax.f32 %v2085, 0.0
  %v2150 = vmax.f32 %v2086, 0.0
  %v2151 = vmax.f32 %v2087, 0.0
  %v2152 = vmax.f32 %v2088, 0.0
  %v2153 = vmax.f32 %v2089, 0.0
  %v2154 = vmax.f32 %v2090, 0.0
  %v2155 = vmax.f32 %v2091, 0.0
  %v2156 = vmax.f32 %v2092, 0.0
  %v2157 = vmax.f32 %v2093, 0.0
  %v2158 = vmax.f32 %v2094, 0.0
  %v2159 = vmax.f32 %v2095, 0.0
  %v2160 = vmax.f32 %v2096, 0.0
  %v2161 = vmax.f32 %v2097, 0.0
  %v2162 = vmax.f32 %v2098, 0.0
  %v2163 = vmax.f32 %v2099, 0.0
  %v2164 = vmax.f32 %v2100, 0.0
  %v2165 = vmax.f32 %v2101, 0.0
  %v2166 = vmax.f32 %v2102, 0.0
  %v2167 = vmax.f32 %v2103, 0.0
  %v2168 = vmax.f32 %v2104, 0.0
  %v2169 = vmax.f32 %v2105, 0.0
  %v2170 = vmax.f32 %v2106, 0.0
  %v2171 = vmax.f32 %v2107, 0.0
  %v2172 = vmax.f32 %v2108, 0.0
  %v2173 = vmax.f32 %v2109, 0.0
  %v2174 = vmax.f32 %v2110, 0.0
  %v2175 = vmax.f32 %v2111, 0.0
  %v2176 = vmax.f32 %v2112, 0.0
  %v2177 = vmax.f32 %v2113, 0.0
  %v2178 = vmax.f32 %v2114, 0.0
  %v2179 = vmax.f32 %v2115, 0.0
  %v2180 = vmax.f32 %v2116, 0.0
  %v2181 = vmax.f32 %v2117, 0.0
  %v2182 = vmax.f32 %v2118, 0.0
  %v2183 = vmax.f32 %v2119, 0.0
  %v2184 = vmax.f32 %v2120, 0.0
  %v2185 = vmax.f32 %v2121, 0.0
  %v2186 = vmax.f32 %v2122, 0.0
  %v2187 = vmax.f32 %v2123, 0.0
  %v2188 = vmax.f32 %v2124, 0.0
  %v2189 = vmax.f32 %v2125, 0.0
  %v2190 = vmax.f32 %v2126, 0.0
  %v2191 = vmax.f32 %v2127, 0.0
  %2192 = vst.msk [vmem:[#allocation2] sm:$0xff] %vm1648, 0.0
  %2193 = vst.msk [vmem:[#allocation2 + $0x8] sm:$0xff] %vm1648, 0.0
  %vm2194 = vcmask 519168
  %2195 = vst.msk [vmem:[#allocation2 + $0x10] sm:$0xf] %vm2194, 0.0
  %2196 = vst.msk [vmem:[#allocation2 + $0x18] sm:$0xff] %vm1648, 0.0
  %2197 = vst.msk [vmem:[#allocation2 + $0x20] sm:$0xff] %vm1648, 0.0
  %2198 = vst.msk [vmem:[#allocation2 + $0x28] sm:$0xf] %vm2194, 0.0
  %2199 = vst.msk [vmem:[#allocation2 + $0x30] sm:$0xff] %vm1648, 0.0
  %2200 = vst.msk [vmem:[#allocation2 + $0x38] sm:$0xff] %vm1648, 0.0
  %2201 = vst.msk [vmem:[#allocation2 + $0x40] sm:$0xf] %vm2194, 0.0
  %2202 = vst.msk [vmem:[#allocation2 + $0x48] sm:$0xff] %vm1648, 0.0
  %2203 = vst.msk [vmem:[#allocation2 + $0x50] sm:$0xff] %vm1648, 0.0
  %2204 = vst.msk [vmem:[#allocation2 + $0x58] sm:$0xf] %vm2194, 0.0
  %2205 = vst.msk [vmem:[#allocation2 + $0x60] sm:$0xff] %vm1648, 0.0
  %2206 = vst.msk [vmem:[#allocation2 + $0x68] sm:$0xff] %vm1648, 0.0
  %2207 = vst.msk [vmem:[#allocation2 + $0x70] sm:$0xf] %vm2194, 0.0
  %2208 = vst.msk [vmem:[#allocation2 + $0x78] sm:$0xff] %vm1648, 0.0
  %2209 = vst.msk [vmem:[#allocation2 + $0x80] sm:$0xff] %vm1648, 0.0
  %2210 = vst.msk [vmem:[#allocation2 + $0x88] sm:$0xf] %vm2194, 0.0
  %2211 = vst.msk [vmem:[#allocation2 + $0x90] sm:$0xff] %vm1648, 0.0
  %2212 = vst.msk [vmem:[#allocation2 + $0x98] sm:$0xff] %vm1648, 0.0
  %2213 = vst.msk [vmem:[#allocation2 + $0xa0] sm:$0xf] %vm2194, 0.0
  %2214 = vst.msk [vmem:[#allocation2 + $0xa8] sm:$0xff] %vm1648, 0.0
  %2215 = vst.msk [vmem:[#allocation2 + $0xb0] sm:$0xff] %vm1648, 0.0
  %2216 = vst.msk [vmem:[#allocation2 + $0xb8] sm:$0xf] %vm2194, 0.0
  %2217 = vst.msk [vmem:[#allocation2 + $0xc0] sm:$0xff] %vm1648, 0.0
  %2218 = vst.msk [vmem:[#allocation2 + $0xc8] sm:$0xff] %vm1648, 0.0
  %2219 = vst.msk [vmem:[#allocation2 + $0xd0] sm:$0xf] %vm2194, 0.0
  %2220 = vst.msk [vmem:[#allocation2 + $0xd8] sm:$0xff] %vm1648, 0.0
  %2221 = vst.msk [vmem:[#allocation2 + $0xe0] sm:$0xff] %vm1648, 0.0
  %2222 = vst.msk [vmem:[#allocation2 + $0xe8] sm:$0xf] %vm2194, 0.0
  %2223 = vst.msk [vmem:[#allocation2 + $0xf0] sm:$0xff] %vm1648, 0.0
  %2224 = vst.msk [vmem:[#allocation2 + $0xf8] sm:$0xff] %vm1648, 0.0
  %2225 = vst.msk [vmem:[#allocation2 + $0x100] sm:$0xf] %vm2194, 0.0
  %2226 = vst.msk [vmem:[#allocation2 + $0x108] sm:$0xff] %vm1648, 0.0
  %2227 = vst.msk [vmem:[#allocation2 + $0x110] sm:$0xff] %vm1648, 0.0
  %2228 = vst.msk [vmem:[#allocation2 + $0x118] sm:$0xf] %vm2194, 0.0
  %2229 = vst.msk [vmem:[#allocation2 + $0x120] sm:$0xff] %vm1648, 0.0
  %2230 = vst.msk [vmem:[#allocation2 + $0x128] sm:$0xff] %vm1648, 0.0
  %2231 = vst.msk [vmem:[#allocation2 + $0x130] sm:$0xf] %vm2194, 0.0
  %2232 = vst.msk [vmem:[#allocation2 + $0x138] sm:$0xff] %vm1648, 0.0
  %2233 = vst.msk [vmem:[#allocation2 + $0x140] sm:$0xff] %vm1648, 0.0
  %2234 = vst.msk [vmem:[#allocation2 + $0x148] sm:$0xf] %vm2194, 0.0
  %2235 = vst.msk [vmem:[#allocation2 + $0x150] sm:$0xff] %vm1648, 0.0
  %2236 = vst.msk [vmem:[#allocation2 + $0x158] sm:$0xff] %vm1648, 0.0
  %2237 = vst.msk [vmem:[#allocation2 + $0x160] sm:$0xf] %vm2194, 0.0
  %2238 = vst.msk [vmem:[#allocation2 + $0x168] sm:$0xff] %vm1648, 0.0
  %2239 = vst.msk [vmem:[#allocation2 + $0x170] sm:$0xff] %vm1648, 0.0
  %2240 = vst.msk [vmem:[#allocation2 + $0x178] sm:$0xf] %vm2194, 0.0
  %2241 = vst.msk [vmem:[#allocation2 + $0x180] sm:$0xff] %vm1648, 0.0
  %2242 = vst.msk [vmem:[#allocation2 + $0x188] sm:$0xff] %vm1648, 0.0
  %2243 = vst.msk [vmem:[#allocation2 + $0x190] sm:$0xf] %vm2194, 0.0
  %2244 = vst.msk [vmem:[#allocation2 + $0x198] sm:$0xff] %vm1648, 0.0
  %2245 = vst.msk [vmem:[#allocation2 + $0x1a0] sm:$0xff] %vm1648, 0.0
  %2246 = vst.msk [vmem:[#allocation2 + $0x1a8] sm:$0xf] %vm2194, 0.0
  %2247 = vst.msk [vmem:[#allocation2 + $0x1b0] sm:$0xff] %vm1648, 0.0
  %2248 = vst.msk [vmem:[#allocation2 + $0x1b8] sm:$0xff] %vm1648, 0.0
  %2249 = vst.msk [vmem:[#allocation2 + $0x1c0] sm:$0xf] %vm2194, 0.0
  %2250 = vst.msk [vmem:[#allocation2 + $0x1c8] sm:$0xff] %vm1648, 0.0
  %2251 = vst.msk [vmem:[#allocation2 + $0x1d0] sm:$0xff] %vm1648, 0.0
  %2252 = vst.msk [vmem:[#allocation2 + $0x1d8] sm:$0xf] %vm2194, 0.0
  %2253 = vst.msk [vmem:[#allocation2 + $0x1e0] sm:$0xff] %vm1648, 0.0
  %2254 = vst.msk [vmem:[#allocation2 + $0x1e8] sm:$0xff] %vm1648, 0.0
  %2255 = vst.msk [vmem:[#allocation2 + $0x1f0] sm:$0xf] %vm2194, 0.0
  %2256 = vst.msk [vmem:[#allocation2 + $0x1f8] sm:$0xff] %vm1648, 0.0
  %2257 = vst.msk [vmem:[#allocation2 + $0x200] sm:$0xff] %vm1648, 0.0
  %2258 = vst.msk [vmem:[#allocation2 + $0x208] sm:$0xf] %vm2194, 0.0
  %2259 = vst.msk [vmem:[#allocation2 + $0x210] sm:$0xff] %vm1648, 0.0
  %2260 = vst.msk [vmem:[#allocation2 + $0x218] sm:$0xff] %vm1648, 0.0
  %2261 = vst.msk [vmem:[#allocation2 + $0x220] sm:$0xf] %vm2194, 0.0
  %2262 = vst.msk [vmem:[#allocation2 + $0x228] sm:$0xff] %vm1648, 0.0
  %2263 = vst.msk [vmem:[#allocation2 + $0x230] sm:$0xff] %vm1648, 0.0
  %2264 = vst.msk [vmem:[#allocation2 + $0x238] sm:$0xf] %vm2194, 0.0
  %2265 = vst.msk [vmem:[#allocation2 + $0x240] sm:$0xff] %vm1648, 0.0
  %2266 = vst.msk [vmem:[#allocation2 + $0x248] sm:$0xff] %vm1648, 0.0
  %2267 = vst.msk [vmem:[#allocation2 + $0x250] sm:$0xf] %vm2194, 0.0
  %2268 = vst.msk [vmem:[#allocation2 + $0x258] sm:$0xff] %vm1648, 0.0
  %2269 = vst.msk [vmem:[#allocation2 + $0x260] sm:$0xff] %vm1648, 0.0
  %2270 = vst.msk [vmem:[#allocation2 + $0x268] sm:$0xf] %vm2194, 0.0
  %2271 = vst.msk [vmem:[#allocation2 + $0x270] sm:$0xff] %vm1648, 0.0
  %2272 = vst.msk [vmem:[#allocation2 + $0x278] sm:$0xff] %vm1648, 0.0
  %2273 = vst.msk [vmem:[#allocation2 + $0x280] sm:$0xf] %vm2194, 0.0
  %2274 = vst.msk [vmem:[#allocation2 + $0x288] sm:$0xff] %vm1648, 0.0
  %2275 = vst.msk [vmem:[#allocation2 + $0x290] sm:$0xff] %vm1648, 0.0
  %2276 = vst.msk [vmem:[#allocation2 + $0x298] sm:$0xf] %vm2194, 0.0
  %2277 = vst.msk [vmem:[#allocation2 + $0x2a0] sm:$0xff] %vm1648, 0.0
  %2278 = vst.msk [vmem:[#allocation2 + $0x2a8] sm:$0xff] %vm1648, 0.0
  %2279 = vst.msk [vmem:[#allocation2 + $0x2b0] sm:$0xf] %vm2194, 0.0
  %2280 = vst.msk [vmem:[#allocation2 + $0x2b8] sm:$0xff] %vm1648, 0.0
  %2281 = vst.msk [vmem:[#allocation2 + $0x2c0] sm:$0xff] %vm1648, 0.0
  %2282 = vst.msk [vmem:[#allocation2 + $0x2c8] sm:$0xf] %vm2194, 0.0
  %2283 = vst.msk [vmem:[#allocation2 + $0x2d0] sm:$0xff] %vm1648, 0.0
  %2284 = vst.msk [vmem:[#allocation2 + $0x2d8] sm:$0xff] %vm1648, 0.0
  %2285 = vst.msk [vmem:[#allocation2 + $0x2e0] sm:$0xf] %vm2194, 0.0
  %2286 = vst.msk [vmem:[#allocation2 + $0x2e8] sm:$0xff] %vm1648, 0.0
  %2287 = vst.msk [vmem:[#allocation2 + $0x2f0] sm:$0xff] %vm1648, 0.0
  %2288 = vst.msk [vmem:[#allocation2 + $0x2f8] sm:$0xf] %vm2194, 0.0
  %2289 = vst.msk [vmem:[#allocation2 + $0x300] sm:$0xff] %vm1648, 0.0
  %2290 = vst.msk [vmem:[#allocation2 + $0x308] sm:$0xff] %vm1648, 0.0
  %2291 = vst.msk [vmem:[#allocation2 + $0x310] sm:$0xf] %vm2194, 0.0
  %2292 = vst.msk [vmem:[#allocation2 + $0x318] sm:$0xff] %vm1648, 0.0
  %2293 = vst.msk [vmem:[#allocation2 + $0x320] sm:$0xff] %vm1648, 0.0
  %2294 = vst.msk [vmem:[#allocation2 + $0x328] sm:$0xf] %vm2194, 0.0
  %2295 = vst.msk [vmem:[#allocation2 + $0x330] sm:$0xff] %vm1648, 0.0
  %2296 = vst.msk [vmem:[#allocation2 + $0x338] sm:$0xff] %vm1648, 0.0
  %2297 = vst.msk [vmem:[#allocation2 + $0x340] sm:$0xf] %vm2194, 0.0
  %2298 = vst.msk [vmem:[#allocation2 + $0x348] sm:$0xff] %vm1648, 0.0
  %2299 = vst.msk [vmem:[#allocation2 + $0x350] sm:$0xff] %vm1648, 0.0
  %2300 = vst.msk [vmem:[#allocation2 + $0x358] sm:$0xf] %vm2194, 0.0
  %2301 = vst.msk [vmem:[#allocation2 + $0x360] sm:$0xff] %vm1648, 0.0
  %2302 = vst.msk [vmem:[#allocation2 + $0x368] sm:$0xff] %vm1648, 0.0
  %2303 = vst.msk [vmem:[#allocation2 + $0x370] sm:$0xf] %vm2194, 0.0
  %2304 = vst.msk [vmem:[#allocation2 + $0x378] sm:$0xff] %vm1648, 0.0
  %2305 = vst.msk [vmem:[#allocation2 + $0x380] sm:$0xff] %vm1648, 0.0
  %2306 = vst.msk [vmem:[#allocation2 + $0x388] sm:$0xf] %vm2194, 0.0
  %2307 = vst.msk [vmem:[#allocation2 + $0x390] sm:$0xff] %vm1648, 0.0
  %2308 = vst.msk [vmem:[#allocation2 + $0x398] sm:$0xff] %vm1648, 0.0
  %2309 = vst.msk [vmem:[#allocation2 + $0x3a0] sm:$0xf] %vm2194, 0.0
  %2310 = vst.msk [vmem:[#allocation2 + $0x3a8] sm:$0xff] %vm1648, 0.0
  %2311 = vst.msk [vmem:[#allocation2 + $0x3b0] sm:$0xff] %vm1648, 0.0
  %2312 = vst.msk [vmem:[#allocation2 + $0x3b8] sm:$0xf] %vm2194, 0.0
  %s2313 = scalar_lea.vmem [#allocation2], 48
  %2314 = vst.msk [vmem:[%s2313 + $0x2] sm:$0xff] %vm1648, %v2128
  %2315 = vst.msk [vmem:[%s2313 + $0xa] sm:$0xff] %vm1648, %v2129
  %2316 = vst.msk [vmem:[%s2313 + $0x1a] sm:$0xff] %vm1648, %v2130
  %2317 = vst.msk [vmem:[%s2313 + $0x22] sm:$0xff] %vm1648, %v2131
  %2318 = vst.msk [vmem:[%s2313 + $0x32] sm:$0xff] %vm1648, %v2132
  %2319 = vst.msk [vmem:[%s2313 + $0x3a] sm:$0xff] %vm1648, %v2133
  %2320 = vst.msk [vmem:[%s2313 + $0x4a] sm:$0xff] %vm1648, %v2134
  %2321 = vst.msk [vmem:[%s2313 + $0x52] sm:$0xff] %vm1648, %v2135
  %2322 = vst.msk [vmem:[%s2313 + $0x62] sm:$0xff] %vm1648, %v2136
  %2323 = vst.msk [vmem:[%s2313 + $0x6a] sm:$0xff] %vm1648, %v2137
  %2324 = vst.msk [vmem:[%s2313 + $0x7a] sm:$0xff] %vm1648, %v2138
  %2325 = vst.msk [vmem:[%s2313 + $0x82] sm:$0xff] %vm1648, %v2139
  %2326 = vst.msk [vmem:[%s2313 + $0x92] sm:$0xff] %vm1648, %v2140
  %2327 = vst.msk [vmem:[%s2313 + $0x9a] sm:$0xff] %vm1648, %v2141
  %2328 = vst.msk [vmem:[%s2313 + $0xaa] sm:$0xff] %vm1648, %v2142
  %2329 = vst.msk [vmem:[%s2313 + $0xb2] sm:$0xff] %vm1648, %v2143
  %2330 = vst.msk [vmem:[%s2313 + $0xc2] sm:$0xff] %vm1648, %v2144
  %2331 = vst.msk [vmem:[%s2313 + $0xca] sm:$0xff] %vm1648, %v2145
  %2332 = vst.msk [vmem:[%s2313 + $0xda] sm:$0xff] %vm1648, %v2146
  %2333 = vst.msk [vmem:[%s2313 + $0xe2] sm:$0xff] %vm1648, %v2147
  %2334 = vst.msk [vmem:[%s2313 + $0xf2] sm:$0xff] %vm1648, %v2148
  %2335 = vst.msk [vmem:[%s2313 + $0xfa] sm:$0xff] %vm1648, %v2149
  %2336 = vst.msk [vmem:[%s2313 + $0x10a] sm:$0xff] %vm1648, %v2150
  %2337 = vst.msk [vmem:[%s2313 + $0x112] sm:$0xff] %vm1648, %v2151
  %2338 = vst.msk [vmem:[%s2313 + $0x122] sm:$0xff] %vm1648, %v2152
  %2339 = vst.msk [vmem:[%s2313 + $0x12a] sm:$0xff] %vm1648, %v2153
  %2340 = vst.msk [vmem:[%s2313 + $0x13a] sm:$0xff] %vm1648, %v2154
  %2341 = vst.msk [vmem:[%s2313 + $0x142] sm:$0xff] %vm1648, %v2155
  %2342 = vst.msk [vmem:[%s2313 + $0x152] sm:$0xff] %vm1648, %v2156
  %2343 = vst.msk [vmem:[%s2313 + $0x15a] sm:$0xff] %vm1648, %v2157
  %2344 = vst.msk [vmem:[%s2313 + $0x16a] sm:$0xff] %vm1648, %v2158
  %2345 = vst.msk [vmem:[%s2313 + $0x172] sm:$0xff] %vm1648, %v2159
  %2346 = vst.msk [vmem:[%s2313 + $0x1e2] sm:$0xff] %vm1648, %v2160
  %2347 = vst.msk [vmem:[%s2313 + $0x1ea] sm:$0xff] %vm1648, %v2161
  %2348 = vst.msk [vmem:[%s2313 + $0x1fa] sm:$0xff] %vm1648, %v2162
  %2349 = vst.msk [vmem:[%s2313 + $0x202] sm:$0xff] %vm1648, %v2163
  %2350 = vst.msk [vmem:[%s2313 + $0x212] sm:$0xff] %vm1648, %v2164
  %2351 = vst.msk [vmem:[%s2313 + $0x21a] sm:$0xff] %vm1648, %v2165
  %2352 = vst.msk [vmem:[%s2313 + $0x22a] sm:$0xff] %vm1648, %v2166
  %2353 = vst.msk [vmem:[%s2313 + $0x232] sm:$0xff] %vm1648, %v2167
  %2354 = vst.msk [vmem:[%s2313 + $0x242] sm:$0xff] %vm1648, %v2168
  %2355 = vst.msk [vmem:[%s2313 + $0x24a] sm:$0xff] %vm1648, %v2169
  %2356 = vst.msk [vmem:[%s2313 + $0x25a] sm:$0xff] %vm1648, %v2170
  %2357 = vst.msk [vmem:[%s2313 + $0x262] sm:$0xff] %vm1648, %v2171
  %2358 = vst.msk [vmem:[%s2313 + $0x272] sm:$0xff] %vm1648, %v2172
  %2359 = vst.msk [vmem:[%s2313 + $0x27a] sm:$0xff] %vm1648, %v2173
  %2360 = vst.msk [vmem:[%s2313 + $0x28a] sm:$0xff] %vm1648, %v2174
  %2361 = vst.msk [vmem:[%s2313 + $0x292] sm:$0xff] %vm1648, %v2175
  %2362 = vst.msk [vmem:[%s2313 + $0x2a2] sm:$0xff] %vm1648, %v2176
  %2363 = vst.msk [vmem:[%s2313 + $0x2aa] sm:$0xff] %vm1648, %v2177
  %2364 = vst.msk [vmem:[%s2313 + $0x2ba] sm:$0xff] %vm1648, %v2178
  %2365 = vst.msk [vmem:[%s2313 + $0x2c2] sm:$0xff] %vm1648, %v2179
  %2366 = vst.msk [vmem:[%s2313 + $0x2d2] sm:$0xff] %vm1648, %v2180
  %2367 = vst.msk [vmem:[%s2313 + $0x2da] sm:$0xff] %vm1648, %v2181
  %2368 = vst.msk [vmem:[%s2313 + $0x2ea] sm:$0xff] %vm1648, %v2182
  %2369 = vst.msk [vmem:[%s2313 + $0x2f2] sm:$0xff] %vm1648, %v2183
  %2370 = vst.msk [vmem:[%s2313 + $0x302] sm:$0xff] %vm1648, %v2184
  %2371 = vst.msk [vmem:[%s2313 + $0x30a] sm:$0xff] %vm1648, %v2185
  %2372 = vst.msk [vmem:[%s2313 + $0x31a] sm:$0xff] %vm1648, %v2186
  %2373 = vst.msk [vmem:[%s2313 + $0x322] sm:$0xff] %vm1648, %v2187
  %2374 = vst.msk [vmem:[%s2313 + $0x332] sm:$0xff] %vm1648, %v2188
  %2375 = vst.msk [vmem:[%s2313 + $0x33a] sm:$0xff] %vm1648, %v2189
  %2376 = vst.msk [vmem:[%s2313 + $0x34a] sm:$0xff] %vm1648, %v2190
  %2377 = vst.msk [vmem:[%s2313 + $0x352] sm:$0xff] %vm1648, %v2191
  %v2378 = vld [vmem:[#allocation2] sm:$0xff]
  %v2379 = vld [vmem:[#allocation2 + $0x8] sm:$0xff]
  %v2380 = vld [vmem:[#allocation2 + $0x18] sm:$0xff]
  %v2381 = vld [vmem:[#allocation2 + $0x20] sm:$0xff]
  %v2382 = vld [vmem:[#allocation2 + $0x30] sm:$0xff]
  %v2383 = vld [vmem:[#allocation2 + $0x38] sm:$0xff]
  %v2384 = vld [vmem:[#allocation2 + $0x48] sm:$0xff]
  %v2385 = vld [vmem:[#allocation2 + $0x50] sm:$0xff]
  %v2386 = vld [vmem:[#allocation2 + $0x60] sm:$0xff]
  %v2387 = vld [vmem:[#allocation2 + $0x68] sm:$0xff]
  %v2388 = vld [vmem:[#allocation2 + $0x78] sm:$0xff]
  %v2389 = vld [vmem:[#allocation2 + $0x80] sm:$0xff]
  %v2390 = vld [vmem:[#allocation2 + $0x90] sm:$0xff]
  %v2391 = vld [vmem:[#allocation2 + $0x98] sm:$0xff]
  %v2392 = vld [vmem:[#allocation2 + $0xa8] sm:$0xff]
  %v2393 = vld [vmem:[#allocation2 + $0xb0] sm:$0xff]
  %v2394 = vld [vmem:[#allocation2 + $0xc0] sm:$0xff]
  %v2395 = vld [vmem:[#allocation2 + $0xc8] sm:$0xff]
  %v2396 = vld [vmem:[#allocation2 + $0xd8] sm:$0xff]
  %v2397 = vld [vmem:[#allocation2 + $0xe0] sm:$0xff]
  %v2398 = vld [vmem:[#allocation2 + $0xf0] sm:$0xff]
  %v2399 = vld [vmem:[#allocation2 + $0xf8] sm:$0xff]
  %v2400 = vld [vmem:[#allocation2 + $0x108] sm:$0xff]
  %v2401 = vld [vmem:[#allocation2 + $0x110] sm:$0xff]
  %v2402 = vld [vmem:[#allocation2 + $0x120] sm:$0xff]
  %v2403 = vld [vmem:[#allocation2 + $0x128] sm:$0xff]
  %v2404 = vld [vmem:[#allocation2 + $0x138] sm:$0xff]
  %v2405 = vld [vmem:[#allocation2 + $0x140] sm:$0xff]
  %v2406 = vld [vmem:[#allocation2 + $0x150] sm:$0xff]
  %v2407 = vld [vmem:[#allocation2 + $0x158] sm:$0xff]
  %v2408 = vld [vmem:[#allocation2 + $0x168] sm:$0xff]
  %v2409 = vld [vmem:[#allocation2 + $0x170] sm:$0xff]
  %v2410 = vld [vmem:[#allocation2 + $0x1e0] sm:$0xff]
  %v2411 = vld [vmem:[#allocation2 + $0x1e8] sm:$0xff]
  %v2412 = vld [vmem:[#allocation2 + $0x1f8] sm:$0xff]
  %v2413 = vld [vmem:[#allocation2 + $0x200] sm:$0xff]
  %v2414 = vld [vmem:[#allocation2 + $0x210] sm:$0xff]
  %v2415 = vld [vmem:[#allocation2 + $0x218] sm:$0xff]
  %v2416 = vld [vmem:[#allocation2 + $0x228] sm:$0xff]
  %v2417 = vld [vmem:[#allocation2 + $0x230] sm:$0xff]
  %v2418 = vld [vmem:[#allocation2 + $0x240] sm:$0xff]
  %v2419 = vld [vmem:[#allocation2 + $0x248] sm:$0xff]
  %v2420 = vld [vmem:[#allocation2 + $0x258] sm:$0xff]
  %v2421 = vld [vmem:[#allocation2 + $0x260] sm:$0xff]
  %v2422 = vld [vmem:[#allocation2 + $0x270] sm:$0xff]
  %v2423 = vld [vmem:[#allocation2 + $0x278] sm:$0xff]
  %v2424 = vld [vmem:[#allocation2 + $0x288] sm:$0xff]
  %v2425 = vld [vmem:[#allocation2 + $0x290] sm:$0xff]
  %v2426 = vld [vmem:[#allocation2 + $0x2a0] sm:$0xff]
  %v2427 = vld [vmem:[#allocation2 + $0x2a8] sm:$0xff]
  %v2428 = vld [vmem:[#allocation2 + $0x2b8] sm:$0xff]
  %v2429 = vld [vmem:[#allocation2 + $0x2c0] sm:$0xff]
  %v2430 = vld [vmem:[#allocation2 + $0x2d0] sm:$0xff]
  %v2431 = vld [vmem:[#allocation2 + $0x2d8] sm:$0xff]
  %v2432 = vld [vmem:[#allocation2 + $0x2e8] sm:$0xff]
  %v2433 = vld [vmem:[#allocation2 + $0x2f0] sm:$0xff]
  %v2434 = vld [vmem:[#allocation2 + $0x300] sm:$0xff]
  %v2435 = vld [vmem:[#allocation2 + $0x308] sm:$0xff]
  %v2436 = vld [vmem:[#allocation2 + $0x318] sm:$0xff]
  %v2437 = vld [vmem:[#allocation2 + $0x320] sm:$0xff]
  %v2438 = vld [vmem:[#allocation2 + $0x330] sm:$0xff]
  %v2439 = vld [vmem:[#allocation2 + $0x338] sm:$0xff]
  %v2440 = vld [vmem:[#allocation2 + $0x348] sm:$0xff]
  %v2441 = vld [vmem:[#allocation2 + $0x350] sm:$0xff]
  %2442 = vst.msk [vmem:[#allocation3] sm:$0xff] %vm1648, %v2378
  %2443 = vst.msk [vmem:[#allocation3 + $0x28] sm:$0xff] %vm1648, %v2379
  %2444 = vst.msk [vmem:[#allocation3 + $0x50] sm:$0xff] %vm1648, %v2380
  %2445 = vst.msk [vmem:[#allocation3 + $0x78] sm:$0xff] %vm1648, %v2381
  %2446 = vst.msk [vmem:[#allocation3 + $0xa0] sm:$0xff] %vm1648, %v2382
  %2447 = vst.msk [vmem:[#allocation3 + $0xc8] sm:$0xff] %vm1648, %v2383
  %2448 = vst.msk [vmem:[#allocation3 + $0xf0] sm:$0xff] %vm1648, %v2384
  %2449 = vst.msk [vmem:[#allocation3 + $0x118] sm:$0xff] %vm1648, %v2385
  %2450 = vst.msk [vmem:[#allocation3 + $0x140] sm:$0xff] %vm1648, %v2386
  %2451 = vst.msk [vmem:[#allocation3 + $0x168] sm:$0xff] %vm1648, %v2387
  %2452 = vst.msk [vmem:[#allocation3 + $0x190] sm:$0xff] %vm1648, %v2388
  %2453 = vst.msk [vmem:[#allocation3 + $0x1b8] sm:$0xff] %vm1648, %v2389
  %2454 = vst.msk [vmem:[#allocation3 + $0x1e0] sm:$0xff] %vm1648, %v2390
  %2455 = vst.msk [vmem:[#allocation3 + $0x208] sm:$0xff] %vm1648, %v2391
  %2456 = vst.msk [vmem:[#allocation3 + $0x230] sm:$0xff] %vm1648, %v2392
  %2457 = vst.msk [vmem:[#allocation3 + $0x258] sm:$0xff] %vm1648, %v2393
  %2458 = vst.msk [vmem:[#allocation3 + $0x280] sm:$0xff] %vm1648, %v2394
  %2459 = vst.msk [vmem:[#allocation3 + $0x2a8] sm:$0xff] %vm1648, %v2395
  %2460 = vst.msk [vmem:[#allocation3 + $0x2d0] sm:$0xff] %vm1648, %v2396
  %2461 = vst.msk [vmem:[#allocation3 + $0x2f8] sm:$0xff] %vm1648, %v2397
  %2462 = vst.msk [vmem:[#allocation3 + $0x320] sm:$0xff] %vm1648, %v2398
  %2463 = vst.msk [vmem:[#allocation3 + $0x348] sm:$0xff] %vm1648, %v2399
  %2464 = vst.msk [vmem:[#allocation3 + $0x370] sm:$0xff] %vm1648, %v2400
  %2465 = vst.msk [vmem:[#allocation3 + $0x398] sm:$0xff] %vm1648, %v2401
  %2466 = vst.msk [vmem:[#allocation3 + $0x3c0] sm:$0xff] %vm1648, %v2402
  %2467 = vst.msk [vmem:[#allocation3 + $0x3e8] sm:$0xff] %vm1648, %v2403
  %2468 = vst.msk [vmem:[#allocation3 + $0x410] sm:$0xff] %vm1648, %v2404
  %2469 = vst.msk [vmem:[#allocation3 + $0x438] sm:$0xff] %vm1648, %v2405
  %2470 = vst.msk [vmem:[#allocation3 + $0x460] sm:$0xff] %vm1648, %v2406
  %2471 = vst.msk [vmem:[#allocation3 + $0x488] sm:$0xff] %vm1648, %v2407
  %2472 = vst.msk [vmem:[#allocation3 + $0x4b0] sm:$0xff] %vm1648, %v2408
  %2473 = vst.msk [vmem:[#allocation3 + $0x4d8] sm:$0xff] %vm1648, %v2409
  %2474 = vst.msk [vmem:[#allocation3 + $0x500] sm:$0xff] %vm1648, %v2410
  %2475 = vst.msk [vmem:[#allocation3 + $0x528] sm:$0xff] %vm1648, %v2411
  %2476 = vst.msk [vmem:[#allocation3 + $0x550] sm:$0xff] %vm1648, %v2412
  %2477 = vst.msk [vmem:[#allocation3 + $0x578] sm:$0xff] %vm1648, %v2413
  %2478 = vst.msk [vmem:[#allocation3 + $0x5a0] sm:$0xff] %vm1648, %v2414
  %2479 = vst.msk [vmem:[#allocation3 + $0x5c8] sm:$0xff] %vm1648, %v2415
  %2480 = vst.msk [vmem:[#allocation3 + $0x5f0] sm:$0xff] %vm1648, %v2416
  %2481 = vst.msk [vmem:[#allocation3 + $0x618] sm:$0xff] %vm1648, %v2417
  %2482 = vst.msk [vmem:[#allocation3 + $0x640] sm:$0xff] %vm1648, %v2418
  %2483 = vst.msk [vmem:[#allocation3 + $0x668] sm:$0xff] %vm1648, %v2419
  %2484 = vst.msk [vmem:[#allocation3 + $0x690] sm:$0xff] %vm1648, %v2420
  %2485 = vst.msk [vmem:[#allocation3 + $0x6b8] sm:$0xff] %vm1648, %v2421
  %2486 = vst.msk [vmem:[#allocation3 + $0x6e0] sm:$0xff] %vm1648, %v2422
  %2487 = vst.msk [vmem:[#allocation3 + $0x708] sm:$0xff] %vm1648, %v2423
  %2488 = vst.msk [vmem:[#allocation3 + $0x730] sm:$0xff] %vm1648, %v2424
  %2489 = vst.msk [vmem:[#allocation3 + $0x758] sm:$0xff] %vm1648, %v2425
  %2490 = vst.msk [vmem:[#allocation3 + $0x780] sm:$0xff] %vm1648, %v2426
  %2491 = vst.msk [vmem:[#allocation3 + $0x7a8] sm:$0xff] %vm1648, %v2427
  %2492 = vst.msk [vmem:[#allocation3 + $0x7d0] sm:$0xff] %vm1648, %v2428
  %2493 = vst.msk [vmem:[#allocation3 + $0x7f8] sm:$0xff] %vm1648, %v2429
  %2494 = vst.msk [vmem:[#allocation3 + $0x820] sm:$0xff] %vm1648, %v2430
  %2495 = vst.msk [vmem:[#allocation3 + $0x848] sm:$0xff] %vm1648, %v2431
  %2496 = vst.msk [vmem:[#allocation3 + $0x870] sm:$0xff] %vm1648, %v2432
  %2497 = vst.msk [vmem:[#allocation3 + $0x898] sm:$0xff] %vm1648, %v2433
  %2498 = vst.msk [vmem:[#allocation3 + $0x8c0] sm:$0xff] %vm1648, %v2434
  %2499 = vst.msk [vmem:[#allocation3 + $0x8e8] sm:$0xff] %vm1648, %v2435
  %2500 = vst.msk [vmem:[#allocation3 + $0x910] sm:$0xff] %vm1648, %v2436
  %2501 = vst.msk [vmem:[#allocation3 + $0x938] sm:$0xff] %vm1648, %v2437
  %2502 = vst.msk [vmem:[#allocation3 + $0x960] sm:$0xff] %vm1648, %v2438
  %2503 = vst.msk [vmem:[#allocation3 + $0x988] sm:$0xff] %vm1648, %v2439
  %2504 = vst.msk [vmem:[#allocation3 + $0x9b0] sm:$0xff] %vm1648, %v2440
  %2505 = vst.msk [vmem:[#allocation3 + $0x9d8] sm:$0xff] %vm1648, %v2441
  %v2506 = vld [vmem:[#allocation2 + $0x2] sm:$0xff]
  %v2507 = vld [vmem:[#allocation2 + $0xa] sm:$0xff]
  %v2508 = vld [vmem:[#allocation2 + $0x1a] sm:$0xff]
  %v2509 = vld [vmem:[#allocation2 + $0x22] sm:$0xff]
  %v2510 = vld [vmem:[#allocation2 + $0x32] sm:$0xff]
  %v2511 = vld [vmem:[#allocation2 + $0x3a] sm:$0xff]
  %v2512 = vld [vmem:[#allocation2 + $0x4a] sm:$0xff]
  %v2513 = vld [vmem:[#allocation2 + $0x52] sm:$0xff]
  %v2514 = vld [vmem:[#allocation2 + $0x62] sm:$0xff]
  %v2515 = vld [vmem:[#allocation2 + $0x6a] sm:$0xff]
  %v2516 = vld [vmem:[#allocation2 + $0x7a] sm:$0xff]
  %v2517 = vld [vmem:[#allocation2 + $0x82] sm:$0xff]
  %v2518 = vld [vmem:[#allocation2 + $0x92] sm:$0xff]
  %v2519 = vld [vmem:[#allocation2 + $0x9a] sm:$0xff]
  %v2520 = vld [vmem:[#allocation2 + $0xaa] sm:$0xff]
  %v2521 = vld [vmem:[#allocation2 + $0xb2] sm:$0xff]
  %v2522 = vld [vmem:[#allocation2 + $0xc2] sm:$0xff]
  %v2523 = vld [vmem:[#allocation2 + $0xca] sm:$0xff]
  %v2524 = vld [vmem:[#allocation2 + $0xda] sm:$0xff]
  %v2525 = vld [vmem:[#allocation2 + $0xe2] sm:$0xff]
  %v2526 = vld [vmem:[#allocation2 + $0xf2] sm:$0xff]
  %v2527 = vld [vmem:[#allocation2 + $0xfa] sm:$0xff]
  %v2528 = vld [vmem:[#allocation2 + $0x10a] sm:$0xff]
  %v2529 = vld [vmem:[#allocation2 + $0x112] sm:$0xff]
  %v2530 = vld [vmem:[#allocation2 + $0x122] sm:$0xff]
  %v2531 = vld [vmem:[#allocation2 + $0x12a] sm:$0xff]
  %v2532 = vld [vmem:[#allocation2 + $0x13a] sm:$0xff]
  %v2533 = vld [vmem:[#allocation2 + $0x142] sm:$0xff]
  %v2534 = vld [vmem:[#allocation2 + $0x152] sm:$0xff]
  %v2535 = vld [vmem:[#allocation2 + $0x15a] sm:$0xff]
  %v2536 = vld [vmem:[#allocation2 + $0x16a] sm:$0xff]
  %v2537 = vld [vmem:[#allocation2 + $0x172] sm:$0xff]
  %v2538 = vld [vmem:[#allocation2 + $0x1e2] sm:$0xff]
  %v2539 = vld [vmem:[#allocation2 + $0x1ea] sm:$0xff]
  %v2540 = vld [vmem:[#allocation2 + $0x1fa] sm:$0xff]
  %v2541 = vld [vmem:[#allocation2 + $0x202] sm:$0xff]
  %v2542 = vld [vmem:[#allocation2 + $0x212] sm:$0xff]
  %v2543 = vld [vmem:[#allocation2 + $0x21a] sm:$0xff]
  %v2544 = vld [vmem:[#allocation2 + $0x22a] sm:$0xff]
  %v2545 = vld [vmem:[#allocation2 + $0x232] sm:$0xff]
  %v2546 = vld [vmem:[#allocation2 + $0x242] sm:$0xff]
  %v2547 = vld [vmem:[#allocation2 + $0x24a] sm:$0xff]
  %v2548 = vld [vmem:[#allocation2 + $0x25a] sm:$0xff]
  %v2549 = vld [vmem:[#allocation2 + $0x262] sm:$0xff]
  %v2550 = vld [vmem:[#allocation2 + $0x272] sm:$0xff]
  %v2551 = vld [vmem:[#allocation2 + $0x27a] sm:$0xff]
  %v2552 = vld [vmem:[#allocation2 + $0x28a] sm:$0xff]
  %v2553 = vld [vmem:[#allocation2 + $0x292] sm:$0xff]
  %v2554 = vld [vmem:[#allocation2 + $0x2a2] sm:$0xff]
  %v2555 = vld [vmem:[#allocation2 + $0x2aa] sm:$0xff]
  %v2556 = vld [vmem:[#allocation2 + $0x2ba] sm:$0xff]
  %v2557 = vld [vmem:[#allocation2 + $0x2c2] sm:$0xff]
  %v2558 = vld [vmem:[#allocation2 + $0x2d2] sm:$0xff]
  %v2559 = vld [vmem:[#allocation2 + $0x2da] sm:$0xff]
  %v2560 = vld [vmem:[#allocation2 + $0x2ea] sm:$0xff]
  %v2561 = vld [vmem:[#allocation2 + $0x2f2] sm:$0xff]
  %v2562 = vld [vmem:[#allocation2 + $0x302] sm:$0xff]
  %v2563 = vld [vmem:[#allocation2 + $0x30a] sm:$0xff]
  %v2564 = vld [vmem:[#allocation2 + $0x31a] sm:$0xff]
  %v2565 = vld [vmem:[#allocation2 + $0x322] sm:$0xff]
  %v2566 = vld [vmem:[#allocation2 + $0x332] sm:$0xff]
  %v2567 = vld [vmem:[#allocation2 + $0x33a] sm:$0xff]
  %v2568 = vld [vmem:[#allocation2 + $0x34a] sm:$0xff]
  %v2569 = vld [vmem:[#allocation2 + $0x352] sm:$0xff]
  %2634 = vrot.lane.b32.xlu0 %v2506, 64
  %v2635 = vpop.permute.xlu0 %2634
  %2636 = vrot.lane.b32.xlu0 %v2507, 64
  %v2637 = vpop.permute.xlu0 %2636
  %2638 = vrot.lane.b32.xlu0 %v2508, 64
  %v2639 = vpop.permute.xlu0 %2638
  %2640 = vrot.lane.b32.xlu0 %v2509, 64
  %v2641 = vpop.permute.xlu0 %2640
  %2642 = vrot.lane.b32.xlu0 %v2510, 64
  %v2643 = vpop.permute.xlu0 %2642
  %2644 = vrot.lane.b32.xlu0 %v2511, 64
  %v2645 = vpop.permute.xlu0 %2644
  %2646 = vrot.lane.b32.xlu0 %v2512, 64
  %v2647 = vpop.permute.xlu0 %2646
  %2648 = vrot.lane.b32.xlu0 %v2513, 64
  %v2649 = vpop.permute.xlu0 %2648
  %2650 = vrot.lane.b32.xlu0 %v2514, 64
  %v2651 = vpop.permute.xlu0 %2650
  %2652 = vrot.lane.b32.xlu0 %v2515, 64
  %v2653 = vpop.permute.xlu0 %2652
  %2654 = vrot.lane.b32.xlu0 %v2516, 64
  %v2655 = vpop.permute.xlu0 %2654
  %2656 = vrot.lane.b32.xlu0 %v2517, 64
  %v2657 = vpop.permute.xlu0 %2656
  %2658 = vrot.lane.b32.xlu0 %v2518, 64
  %v2659 = vpop.permute.xlu0 %2658
  %2660 = vrot.lane.b32.xlu0 %v2519, 64
  %v2661 = vpop.permute.xlu0 %2660
  %2662 = vrot.lane.b32.xlu0 %v2520, 64
  %v2663 = vpop.permute.xlu0 %2662
  %2664 = vrot.lane.b32.xlu0 %v2521, 64
  %v2665 = vpop.permute.xlu0 %2664
  %2666 = vrot.lane.b32.xlu0 %v2522, 64
  %v2667 = vpop.permute.xlu0 %2666
  %2668 = vrot.lane.b32.xlu0 %v2523, 64
  %v2669 = vpop.permute.xlu0 %2668
  %2670 = vrot.lane.b32.xlu0 %v2524, 64
  %v2671 = vpop.permute.xlu0 %2670
  %2672 = vrot.lane.b32.xlu0 %v2525, 64
  %v2673 = vpop.permute.xlu0 %2672
  %2674 = vrot.lane.b32.xlu0 %v2526, 64
  %v2675 = vpop.permute.xlu0 %2674
  %2676 = vrot.lane.b32.xlu0 %v2527, 64
  %v2677 = vpop.permute.xlu0 %2676
  %2678 = vrot.lane.b32.xlu0 %v2528, 64
  %v2679 = vpop.permute.xlu0 %2678
  %2680 = vrot.lane.b32.xlu0 %v2529, 64
  %v2681 = vpop.permute.xlu0 %2680
  %2682 = vrot.lane.b32.xlu0 %v2530, 64
  %v2683 = vpop.permute.xlu0 %2682
  %2684 = vrot.lane.b32.xlu0 %v2531, 64
  %v2685 = vpop.permute.xlu0 %2684
  %2686 = vrot.lane.b32.xlu0 %v2532, 64
  %v2687 = vpop.permute.xlu0 %2686
  %2688 = vrot.lane.b32.xlu0 %v2533, 64
  %v2689 = vpop.permute.xlu0 %2688
  %2690 = vrot.lane.b32.xlu0 %v2534, 64
  %v2691 = vpop.permute.xlu0 %2690
  %2692 = vrot.lane.b32.xlu0 %v2535, 64
  %v2693 = vpop.permute.xlu0 %2692
  %2694 = vrot.lane.b32.xlu0 %v2536, 64
  %v2695 = vpop.permute.xlu0 %2694
  %2696 = vrot.lane.b32.xlu0 %v2537, 64
  %v2697 = vpop.permute.xlu0 %2696
  %2698 = vrot.lane.b32.xlu0 %v2538, 64
  %v2699 = vpop.permute.xlu0 %2698
  %2700 = vrot.lane.b32.xlu0 %v2539, 64
  %v2701 = vpop.permute.xlu0 %2700
  %2702 = vrot.lane.b32.xlu0 %v2540, 64
  %v2703 = vpop.permute.xlu0 %2702
  %2704 = vrot.lane.b32.xlu0 %v2541, 64
  %v2705 = vpop.permute.xlu0 %2704
  %2706 = vrot.lane.b32.xlu0 %v2542, 64
  %v2707 = vpop.permute.xlu0 %2706
  %2708 = vrot.lane.b32.xlu0 %v2543, 64
  %v2709 = vpop.permute.xlu0 %2708
  %2710 = vrot.lane.b32.xlu0 %v2544, 64
  %v2711 = vpop.permute.xlu0 %2710
  %2712 = vrot.lane.b32.xlu0 %v2545, 64
  %v2713 = vpop.permute.xlu0 %2712
  %2714 = vrot.lane.b32.xlu0 %v2546, 64
  %v2715 = vpop.permute.xlu0 %2714
  %2716 = vrot.lane.b32.xlu0 %v2547, 64
  %v2717 = vpop.permute.xlu0 %2716
  %2718 = vrot.lane.b32.xlu0 %v2548, 64
  %v2719 = vpop.permute.xlu0 %2718
  %2720 = vrot.lane.b32.xlu0 %v2549, 64
  %v2721 = vpop.permute.xlu0 %2720
  %2722 = vrot.lane.b32.xlu0 %v2550, 64
  %v2723 = vpop.permute.xlu0 %2722
  %2724 = vrot.lane.b32.xlu0 %v2551, 64
  %v2725 = vpop.permute.xlu0 %2724
  %2726 = vrot.lane.b32.xlu0 %v2552, 64
  %v2727 = vpop.permute.xlu0 %2726
  %2728 = vrot.lane.b32.xlu0 %v2553, 64
  %v2729 = vpop.permute.xlu0 %2728
  %2730 = vrot.lane.b32.xlu0 %v2554, 64
  %v2731 = vpop.permute.xlu0 %2730
  %2732 = vrot.lane.b32.xlu0 %v2555, 64
  %v2733 = vpop.permute.xlu0 %2732
  %2734 = vrot.lane.b32.xlu0 %v2556, 64
  %v2735 = vpop.permute.xlu0 %2734
  %2736 = vrot.lane.b32.xlu0 %v2557, 64
  %v2737 = vpop.permute.xlu0 %2736
  %2738 = vrot.lane.b32.xlu0 %v2558, 64
  %v2739 = vpop.permute.xlu0 %2738
  %2740 = vrot.lane.b32.xlu0 %v2559, 64
  %v2741 = vpop.permute.xlu0 %2740
  %2742 = vrot.lane.b32.xlu0 %v2560, 64
  %v2743 = vpop.permute.xlu0 %2742
  %2744 = vrot.lane.b32.xlu0 %v2561, 64
  %v2745 = vpop.permute.xlu0 %2744
  %2746 = vrot.lane.b32.xlu0 %v2562, 64
  %v2747 = vpop.permute.xlu0 %2746
  %2748 = vrot.lane.b32.xlu0 %v2563, 64
  %v2749 = vpop.permute.xlu0 %2748
  %2750 = vrot.lane.b32.xlu0 %v2564, 64
  %v2751 = vpop.permute.xlu0 %2750
  %2752 = vrot.lane.b32.xlu0 %v2565, 64
  %v2753 = vpop.permute.xlu0 %2752
  %2754 = vrot.lane.b32.xlu0 %v2566, 64
  %v2755 = vpop.permute.xlu0 %2754
  %2756 = vrot.lane.b32.xlu0 %v2567, 64
  %v2757 = vpop.permute.xlu0 %2756
  %2758 = vrot.lane.b32.xlu0 %v2568, 64
  %v2759 = vpop.permute.xlu0 %2758
  %2760 = vrot.lane.b32.xlu0 %v2569, 64
  %v2761 = vpop.permute.xlu0 %2760
  %vm2826 = vcmask 1048064
  %2827 = vst.msk [vmem:[#allocation3] sm:$0xff] %vm2826, %v2635
  %2828 = vst.msk [vmem:[#allocation3 + $0x28] sm:$0xff] %vm2826, %v2637
  %2829 = vst.msk [vmem:[#allocation3 + $0x50] sm:$0xff] %vm2826, %v2639
  %2830 = vst.msk [vmem:[#allocation3 + $0x78] sm:$0xff] %vm2826, %v2641
  %2831 = vst.msk [vmem:[#allocation3 + $0xa0] sm:$0xff] %vm2826, %v2643
  %2832 = vst.msk [vmem:[#allocation3 + $0xc8] sm:$0xff] %vm2826, %v2645
  %2833 = vst.msk [vmem:[#allocation3 + $0xf0] sm:$0xff] %vm2826, %v2647
  %2834 = vst.msk [vmem:[#allocation3 + $0x118] sm:$0xff] %vm2826, %v2649
  %2835 = vst.msk [vmem:[#allocation3 + $0x140] sm:$0xff] %vm2826, %v2651
  %2836 = vst.msk [vmem:[#allocation3 + $0x168] sm:$0xff] %vm2826, %v2653
  %2837 = vst.msk [vmem:[#allocation3 + $0x190] sm:$0xff] %vm2826, %v2655
  %2838 = vst.msk [vmem:[#allocation3 + $0x1b8] sm:$0xff] %vm2826, %v2657
  %2839 = vst.msk [vmem:[#allocation3 + $0x1e0] sm:$0xff] %vm2826, %v2659
  %2840 = vst.msk [vmem:[#allocation3 + $0x208] sm:$0xff] %vm2826, %v2661
  %2841 = vst.msk [vmem:[#allocation3 + $0x230] sm:$0xff] %vm2826, %v2663
  %2842 = vst.msk [vmem:[#allocation3 + $0x258] sm:$0xff] %vm2826, %v2665
  %2843 = vst.msk [vmem:[#allocation3 + $0x280] sm:$0xff] %vm2826, %v2667
  %2844 = vst.msk [vmem:[#allocation3 + $0x2a8] sm:$0xff] %vm2826, %v2669
  %2845 = vst.msk [vmem:[#allocation3 + $0x2d0] sm:$0xff] %vm2826, %v2671
  %2846 = vst.msk [vmem:[#allocation3 + $0x2f8] sm:$0xff] %vm2826, %v2673
  %2847 = vst.msk [vmem:[#allocation3 + $0x320] sm:$0xff] %vm2826, %v2675
  %2848 = vst.msk [vmem:[#allocation3 + $0x348] sm:$0xff] %vm2826, %v2677
  %2849 = vst.msk [vmem:[#allocation3 + $0x370] sm:$0xff] %vm2826, %v2679
  %2850 = vst.msk [vmem:[#allocation3 + $0x398] sm:$0xff] %vm2826, %v2681
  %2851 = vst.msk [vmem:[#allocation3 + $0x3c0] sm:$0xff] %vm2826, %v2683
  %2852 = vst.msk [vmem:[#allocation3 + $0x3e8] sm:$0xff] %vm2826, %v2685
  %2853 = vst.msk [vmem:[#allocation3 + $0x410] sm:$0xff] %vm2826, %v2687
  %2854 = vst.msk [vmem:[#allocation3 + $0x438] sm:$0xff] %vm2826, %v2689
  %2855 = vst.msk [vmem:[#allocation3 + $0x460] sm:$0xff] %vm2826, %v2691
  %2856 = vst.msk [vmem:[#allocation3 + $0x488] sm:$0xff] %vm2826, %v2693
  %2857 = vst.msk [vmem:[#allocation3 + $0x4b0] sm:$0xff] %vm2826, %v2695
  %2858 = vst.msk [vmem:[#allocation3 + $0x4d8] sm:$0xff] %vm2826, %v2697
  %2859 = vst.msk [vmem:[#allocation3 + $0x500] sm:$0xff] %vm2826, %v2699
  %2860 = vst.msk [vmem:[#allocation3 + $0x528] sm:$0xff] %vm2826, %v2701
  %2861 = vst.msk [vmem:[#allocation3 + $0x550] sm:$0xff] %vm2826, %v2703
  %2862 = vst.msk [vmem:[#allocation3 + $0x578] sm:$0xff] %vm2826, %v2705
  %2863 = vst.msk [vmem:[#allocation3 + $0x5a0] sm:$0xff] %vm2826, %v2707
  %2864 = vst.msk [vmem:[#allocation3 + $0x5c8] sm:$0xff] %vm2826, %v2709
  %2865 = vst.msk [vmem:[#allocation3 + $0x5f0] sm:$0xff] %vm2826, %v2711
  %2866 = vst.msk [vmem:[#allocation3 + $0x618] sm:$0xff] %vm2826, %v2713
  %2867 = vst.msk [vmem:[#allocation3 + $0x640] sm:$0xff] %vm2826, %v2715
  %2868 = vst.msk [vmem:[#allocation3 + $0x668] sm:$0xff] %vm2826, %v2717
  %2869 = vst.msk [vmem:[#allocation3 + $0x690] sm:$0xff] %vm2826, %v2719
  %2870 = vst.msk [vmem:[#allocation3 + $0x6b8] sm:$0xff] %vm2826, %v2721
  %2871 = vst.msk [vmem:[#allocation3 + $0x6e0] sm:$0xff] %vm2826, %v2723
  %2872 = vst.msk [vmem:[#allocation3 + $0x708] sm:$0xff] %vm2826, %v2725
  %2873 = vst.msk [vmem:[#allocation3 + $0x730] sm:$0xff] %vm2826, %v2727
  %2874 = vst.msk [vmem:[#allocation3 + $0x758] sm:$0xff] %vm2826, %v2729
  %2875 = vst.msk [vmem:[#allocation3 + $0x780] sm:$0xff] %vm2826, %v2731
  %2876 = vst.msk [vmem:[#allocation3 + $0x7a8] sm:$0xff] %vm2826, %v2733
  %2877 = vst.msk [vmem:[#allocation3 + $0x7d0] sm:$0xff] %vm2826, %v2735
  %2878 = vst.msk [vmem:[#allocation3 + $0x7f8] sm:$0xff] %vm2826, %v2737
  %2879 = vst.msk [vmem:[#allocation3 + $0x820] sm:$0xff] %vm2826, %v2739
  %2880 = vst.msk [vmem:[#allocation3 + $0x848] sm:$0xff] %vm2826, %v2741
  %2881 = vst.msk [vmem:[#allocation3 + $0x870] sm:$0xff] %vm2826, %v2743
  %2882 = vst.msk [vmem:[#allocation3 + $0x898] sm:$0xff] %vm2826, %v2745
  %2883 = vst.msk [vmem:[#allocation3 + $0x8c0] sm:$0xff] %vm2826, %v2747
  %2884 = vst.msk [vmem:[#allocation3 + $0x8e8] sm:$0xff] %vm2826, %v2749
  %2885 = vst.msk [vmem:[#allocation3 + $0x910] sm:$0xff] %vm2826, %v2751
  %2886 = vst.msk [vmem:[#allocation3 + $0x938] sm:$0xff] %vm2826, %v2753
  %2887 = vst.msk [vmem:[#allocation3 + $0x960] sm:$0xff] %vm2826, %v2755
  %2888 = vst.msk [vmem:[#allocation3 + $0x988] sm:$0xff] %vm2826, %v2757
  %2889 = vst.msk [vmem:[#allocation3 + $0x9b0] sm:$0xff] %vm2826, %v2759
  %2890 = vst.msk [vmem:[#allocation3 + $0x9d8] sm:$0xff] %vm2826, %v2761
  %v2891 = vld [vmem:[#allocation2 + $0x4] sm:$0xff]
  %v2892 = vld [vmem:[#allocation2 + $0xc] sm:$0xff]
  %v2893 = vld [vmem:[#allocation2 + $0x1c] sm:$0xff]
  %v2894 = vld [vmem:[#allocation2 + $0x24] sm:$0xff]
  %v2895 = vld [vmem:[#allocation2 + $0x34] sm:$0xff]
  %v2896 = vld [vmem:[#allocation2 + $0x3c] sm:$0xff]
  %v2897 = vld [vmem:[#allocation2 + $0x4c] sm:$0xff]
  %v2898 = vld [vmem:[#allocation2 + $0x54] sm:$0xff]
  %v2899 = vld [vmem:[#allocation2 + $0x64] sm:$0xff]
  %v2900 = vld [vmem:[#allocation2 + $0x6c] sm:$0xff]
  %v2901 = vld [vmem:[#allocation2 + $0x7c] sm:$0xff]
  %v2902 = vld [vmem:[#allocation2 + $0x84] sm:$0xff]
  %v2903 = vld [vmem:[#allocation2 + $0x94] sm:$0xff]
  %v2904 = vld [vmem:[#allocation2 + $0x9c] sm:$0xff]
  %v2905 = vld [vmem:[#allocation2 + $0xac] sm:$0xff]
  %v2906 = vld [vmem:[#allocation2 + $0xb4] sm:$0xff]
  %v2907 = vld [vmem:[#allocation2 + $0xc4] sm:$0xff]
  %v2908 = vld [vmem:[#allocation2 + $0xcc] sm:$0xff]
  %v2909 = vld [vmem:[#allocation2 + $0xdc] sm:$0xff]
  %v2910 = vld [vmem:[#allocation2 + $0xe4] sm:$0xff]
  %v2911 = vld [vmem:[#allocation2 + $0xf4] sm:$0xff]
  %v2912 = vld [vmem:[#allocation2 + $0xfc] sm:$0xff]
  %v2913 = vld [vmem:[#allocation2 + $0x10c] sm:$0xff]
  %v2914 = vld [vmem:[#allocation2 + $0x114] sm:$0xff]
  %v2915 = vld [vmem:[#allocation2 + $0x124] sm:$0xff]
  %v2916 = vld [vmem:[#allocation2 + $0x12c] sm:$0xff]
  %v2917 = vld [vmem:[#allocation2 + $0x13c] sm:$0xff]
  %v2918 = vld [vmem:[#allocation2 + $0x144] sm:$0xff]
  %v2919 = vld [vmem:[#allocation2 + $0x154] sm:$0xff]
  %v2920 = vld [vmem:[#allocation2 + $0x15c] sm:$0xff]
  %v2921 = vld [vmem:[#allocation2 + $0x16c] sm:$0xff]
  %v2922 = vld [vmem:[#allocation2 + $0x174] sm:$0xff]
  %v2923 = vld [vmem:[#allocation2 + $0x1e4] sm:$0xff]
  %v2924 = vld [vmem:[#allocation2 + $0x1ec] sm:$0xff]
  %v2925 = vld [vmem:[#allocation2 + $0x1fc] sm:$0xff]
  %v2926 = vld [vmem:[#allocation2 + $0x204] sm:$0xff]
  %v2927 = vld [vmem:[#allocation2 + $0x214] sm:$0xff]
  %v2928 = vld [vmem:[#allocation2 + $0x21c] sm:$0xff]
  %v2929 = vld [vmem:[#allocation2 + $0x22c] sm:$0xff]
  %v2930 = vld [vmem:[#allocation2 + $0x234] sm:$0xff]
  %v2931 = vld [vmem:[#allocation2 + $0x244] sm:$0xff]
  %v2932 = vld [vmem:[#allocation2 + $0x24c] sm:$0xff]
  %v2933 = vld [vmem:[#allocation2 + $0x25c] sm:$0xff]
  %v2934 = vld [vmem:[#allocation2 + $0x264] sm:$0xff]
  %v2935 = vld [vmem:[#allocation2 + $0x274] sm:$0xff]
  %v2936 = vld [vmem:[#allocation2 + $0x27c] sm:$0xff]
  %v2937 = vld [vmem:[#allocation2 + $0x28c] sm:$0xff]
  %v2938 = vld [vmem:[#allocation2 + $0x294] sm:$0xff]
  %v2939 = vld [vmem:[#allocation2 + $0x2a4] sm:$0xff]
  %v2940 = vld [vmem:[#allocation2 + $0x2ac] sm:$0xff]
  %v2941 = vld [vmem:[#allocation2 + $0x2bc] sm:$0xff]
  %v2942 = vld [vmem:[#allocation2 + $0x2c4] sm:$0xff]
  %v2943 = vld [vmem:[#allocation2 + $0x2d4] sm:$0xff]
  %v2944 = vld [vmem:[#allocation2 + $0x2dc] sm:$0xff]
  %v2945 = vld [vmem:[#allocation2 + $0x2ec] sm:$0xff]
  %v2946 = vld [vmem:[#allocation2 + $0x2f4] sm:$0xff]
  %v2947 = vld [vmem:[#allocation2 + $0x304] sm:$0xff]
  %v2948 = vld [vmem:[#allocation2 + $0x30c] sm:$0xff]
  %v2949 = vld [vmem:[#allocation2 + $0x31c] sm:$0xff]
  %v2950 = vld [vmem:[#allocation2 + $0x324] sm:$0xff]
  %v2951 = vld [vmem:[#allocation2 + $0x334] sm:$0xff]
  %v2952 = vld [vmem:[#allocation2 + $0x33c] sm:$0xff]
  %v2953 = vld [vmem:[#allocation2 + $0x34c] sm:$0xff]
  %v2954 = vld [vmem:[#allocation2 + $0x354] sm:$0xff]
  %2955 = vst.msk [vmem:[#allocation3 + $0x8] sm:$0xff] %vm1648, %v2891
  %2956 = vst.msk [vmem:[#allocation3 + $0x30] sm:$0xff] %vm1648, %v2892
  %2957 = vst.msk [vmem:[#allocation3 + $0x58] sm:$0xff] %vm1648, %v2893
  %2958 = vst.msk [vmem:[#allocation3 + $0x80] sm:$0xff] %vm1648, %v2894
  %2959 = vst.msk [vmem:[#allocation3 + $0xa8] sm:$0xff] %vm1648, %v2895
  %2960 = vst.msk [vmem:[#allocation3 + $0xd0] sm:$0xff] %vm1648, %v2896
  %2961 = vst.msk [vmem:[#allocation3 + $0xf8] sm:$0xff] %vm1648, %v2897
  %2962 = vst.msk [vmem:[#allocation3 + $0x120] sm:$0xff] %vm1648, %v2898
  %2963 = vst.msk [vmem:[#allocation3 + $0x148] sm:$0xff] %vm1648, %v2899
  %2964 = vst.msk [vmem:[#allocation3 + $0x170] sm:$0xff] %vm1648, %v2900
  %2965 = vst.msk [vmem:[#allocation3 + $0x198] sm:$0xff] %vm1648, %v2901
  %2966 = vst.msk [vmem:[#allocation3 + $0x1c0] sm:$0xff] %vm1648, %v2902
  %2967 = vst.msk [vmem:[#allocation3 + $0x1e8] sm:$0xff] %vm1648, %v2903
  %2968 = vst.msk [vmem:[#allocation3 + $0x210] sm:$0xff] %vm1648, %v2904
  %2969 = vst.msk [vmem:[#allocation3 + $0x238] sm:$0xff] %vm1648, %v2905
  %2970 = vst.msk [vmem:[#allocation3 + $0x260] sm:$0xff] %vm1648, %v2906
  %2971 = vst.msk [vmem:[#allocation3 + $0x288] sm:$0xff] %vm1648, %v2907
  %2972 = vst.msk [vmem:[#allocation3 + $0x2b0] sm:$0xff] %vm1648, %v2908
  %2973 = vst.msk [vmem:[#allocation3 + $0x2d8] sm:$0xff] %vm1648, %v2909
  %2974 = vst.msk [vmem:[#allocation3 + $0x300] sm:$0xff] %vm1648, %v2910
  %2975 = vst.msk [vmem:[#allocation3 + $0x328] sm:$0xff] %vm1648, %v2911
  %2976 = vst.msk [vmem:[#allocation3 + $0x350] sm:$0xff] %vm1648, %v2912
  %2977 = vst.msk [vmem:[#allocation3 + $0x378] sm:$0xff] %vm1648, %v2913
  %2978 = vst.msk [vmem:[#allocation3 + $0x3a0] sm:$0xff] %vm1648, %v2914
  %2979 = vst.msk [vmem:[#allocation3 + $0x3c8] sm:$0xff] %vm1648, %v2915
  %2980 = vst.msk [vmem:[#allocation3 + $0x3f0] sm:$0xff] %vm1648, %v2916
  %2981 = vst.msk [vmem:[#allocation3 + $0x418] sm:$0xff] %vm1648, %v2917
  %2982 = vst.msk [vmem:[#allocation3 + $0x440] sm:$0xff] %vm1648, %v2918
  %2983 = vst.msk [vmem:[#allocation3 + $0x468] sm:$0xff] %vm1648, %v2919
  %2984 = vst.msk [vmem:[#allocation3 + $0x490] sm:$0xff] %vm1648, %v2920
  %2985 = vst.msk [vmem:[#allocation3 + $0x4b8] sm:$0xff] %vm1648, %v2921
  %2986 = vst.msk [vmem:[#allocation3 + $0x4e0] sm:$0xff] %vm1648, %v2922
  %2987 = vst.msk [vmem:[#allocation3 + $0x508] sm:$0xff] %vm1648, %v2923
  %2988 = vst.msk [vmem:[#allocation3 + $0x530] sm:$0xff] %vm1648, %v2924
  %2989 = vst.msk [vmem:[#allocation3 + $0x558] sm:$0xff] %vm1648, %v2925
  %2990 = vst.msk [vmem:[#allocation3 + $0x580] sm:$0xff] %vm1648, %v2926
  %2991 = vst.msk [vmem:[#allocation3 + $0x5a8] sm:$0xff] %vm1648, %v2927
  %2992 = vst.msk [vmem:[#allocation3 + $0x5d0] sm:$0xff] %vm1648, %v2928
  %2993 = vst.msk [vmem:[#allocation3 + $0x5f8] sm:$0xff] %vm1648, %v2929
  %2994 = vst.msk [vmem:[#allocation3 + $0x620] sm:$0xff] %vm1648, %v2930
  %2995 = vst.msk [vmem:[#allocation3 + $0x648] sm:$0xff] %vm1648, %v2931
  %2996 = vst.msk [vmem:[#allocation3 + $0x670] sm:$0xff] %vm1648, %v2932
  %2997 = vst.msk [vmem:[#allocation3 + $0x698] sm:$0xff] %vm1648, %v2933
  %2998 = vst.msk [vmem:[#allocation3 + $0x6c0] sm:$0xff] %vm1648, %v2934
  %2999 = vst.msk [vmem:[#allocation3 + $0x6e8] sm:$0xff] %vm1648, %v2935
  %3000 = vst.msk [vmem:[#allocation3 + $0x710] sm:$0xff] %vm1648, %v2936
  %3001 = vst.msk [vmem:[#allocation3 + $0x738] sm:$0xff] %vm1648, %v2937
  %3002 = vst.msk [vmem:[#allocation3 + $0x760] sm:$0xff] %vm1648, %v2938
  %3003 = vst.msk [vmem:[#allocation3 + $0x788] sm:$0xff] %vm1648, %v2939
  %3004 = vst.msk [vmem:[#allocation3 + $0x7b0] sm:$0xff] %vm1648, %v2940
  %3005 = vst.msk [vmem:[#allocation3 + $0x7d8] sm:$0xff] %vm1648, %v2941
  %3006 = vst.msk [vmem:[#allocation3 + $0x800] sm:$0xff] %vm1648, %v2942
  %3007 = vst.msk [vmem:[#allocation3 + $0x828] sm:$0xff] %vm1648, %v2943
  %3008 = vst.msk [vmem:[#allocation3 + $0x850] sm:$0xff] %vm1648, %v2944
  %3009 = vst.msk [vmem:[#allocation3 + $0x878] sm:$0xff] %vm1648, %v2945
  %3010 = vst.msk [vmem:[#allocation3 + $0x8a0] sm:$0xff] %vm1648, %v2946
  %3011 = vst.msk [vmem:[#allocation3 + $0x8c8] sm:$0xff] %vm1648, %v2947
  %3012 = vst.msk [vmem:[#allocation3 + $0x8f0] sm:$0xff] %vm1648, %v2948
  %3013 = vst.msk [vmem:[#allocation3 + $0x918] sm:$0xff] %vm1648, %v2949
  %3014 = vst.msk [vmem:[#allocation3 + $0x940] sm:$0xff] %vm1648, %v2950
  %3015 = vst.msk [vmem:[#allocation3 + $0x968] sm:$0xff] %vm1648, %v2951
  %3016 = vst.msk [vmem:[#allocation3 + $0x990] sm:$0xff] %vm1648, %v2952
  %3017 = vst.msk [vmem:[#allocation3 + $0x9b8] sm:$0xff] %vm1648, %v2953
  %3018 = vst.msk [vmem:[#allocation3 + $0x9e0] sm:$0xff] %vm1648, %v2954
  %v3019 = vld [vmem:[%s2313] sm:$0xff]
  %v3020 = vld [vmem:[%s2313 + $0x8] sm:$0xff]
  %v3021 = vld [vmem:[%s2313 + $0x18] sm:$0xff]
  %v3022 = vld [vmem:[%s2313 + $0x20] sm:$0xff]
  %v3023 = vld [vmem:[%s2313 + $0x30] sm:$0xff]
  %v3024 = vld [vmem:[%s2313 + $0x38] sm:$0xff]
  %v3025 = vld [vmem:[%s2313 + $0x48] sm:$0xff]
  %v3026 = vld [vmem:[%s2313 + $0x50] sm:$0xff]
  %v3027 = vld [vmem:[%s2313 + $0x60] sm:$0xff]
  %v3028 = vld [vmem:[%s2313 + $0x68] sm:$0xff]
  %v3029 = vld [vmem:[%s2313 + $0x78] sm:$0xff]
  %v3030 = vld [vmem:[%s2313 + $0x80] sm:$0xff]
  %v3031 = vld [vmem:[%s2313 + $0x90] sm:$0xff]
  %v3032 = vld [vmem:[%s2313 + $0x98] sm:$0xff]
  %v3033 = vld [vmem:[%s2313 + $0xa8] sm:$0xff]
  %v3034 = vld [vmem:[%s2313 + $0xb0] sm:$0xff]
  %v3035 = vld [vmem:[%s2313 + $0xc0] sm:$0xff]
  %v3036 = vld [vmem:[%s2313 + $0xc8] sm:$0xff]
  %v3037 = vld [vmem:[%s2313 + $0xd8] sm:$0xff]
  %v3038 = vld [vmem:[%s2313 + $0xe0] sm:$0xff]
  %v3039 = vld [vmem:[%s2313 + $0xf0] sm:$0xff]
  %v3040 = vld [vmem:[%s2313 + $0xf8] sm:$0xff]
  %v3041 = vld [vmem:[%s2313 + $0x108] sm:$0xff]
  %v3042 = vld [vmem:[%s2313 + $0x110] sm:$0xff]
  %v3043 = vld [vmem:[%s2313 + $0x120] sm:$0xff]
  %v3044 = vld [vmem:[%s2313 + $0x128] sm:$0xff]
  %v3045 = vld [vmem:[%s2313 + $0x138] sm:$0xff]
  %v3046 = vld [vmem:[%s2313 + $0x140] sm:$0xff]
  %v3047 = vld [vmem:[%s2313 + $0x150] sm:$0xff]
  %v3048 = vld [vmem:[%s2313 + $0x158] sm:$0xff]
  %v3049 = vld [vmem:[%s2313 + $0x168] sm:$0xff]
  %v3050 = vld [vmem:[%s2313 + $0x170] sm:$0xff]
  %v3051 = vld [vmem:[%s2313 + $0x1e0] sm:$0xff]
  %v3052 = vld [vmem:[%s2313 + $0x1e8] sm:$0xff]
  %v3053 = vld [vmem:[%s2313 + $0x1f8] sm:$0xff]
  %v3054 = vld [vmem:[%s2313 + $0x200] sm:$0xff]
  %v3055 = vld [vmem:[%s2313 + $0x210] sm:$0xff]
  %v3056 = vld [vmem:[%s2313 + $0x218] sm:$0xff]
  %v3057 = vld [vmem:[%s2313 + $0x228] sm:$0xff]
  %v3058 = vld [vmem:[%s2313 + $0x230] sm:$0xff]
  %v3059 = vld [vmem:[%s2313 + $0x240] sm:$0xff]
  %v3060 = vld [vmem:[%s2313 + $0x248] sm:$0xff]
  %v3061 = vld [vmem:[%s2313 + $0x258] sm:$0xff]
  %v3062 = vld [vmem:[%s2313 + $0x260] sm:$0xff]
  %v3063 = vld [vmem:[%s2313 + $0x270] sm:$0xff]
  %v3064 = vld [vmem:[%s2313 + $0x278] sm:$0xff]
  %v3065 = vld [vmem:[%s2313 + $0x288] sm:$0xff]
  %v3066 = vld [vmem:[%s2313 + $0x290] sm:$0xff]
  %v3067 = vld [vmem:[%s2313 + $0x2a0] sm:$0xff]
  %v3068 = vld [vmem:[%s2313 + $0x2a8] sm:$0xff]
  %v3069 = vld [vmem:[%s2313 + $0x2b8] sm:$0xff]
  %v3070 = vld [vmem:[%s2313 + $0x2c0] sm:$0xff]
  %v3071 = vld [vmem:[%s2313 + $0x2d0] sm:$0xff]
  %v3072 = vld [vmem:[%s2313 + $0x2d8] sm:$0xff]
  %v3073 = vld [vmem:[%s2313 + $0x2e8] sm:$0xff]
  %v3074 = vld [vmem:[%s2313 + $0x2f0] sm:$0xff]
  %v3075 = vld [vmem:[%s2313 + $0x300] sm:$0xff]
  %v3076 = vld [vmem:[%s2313 + $0x308] sm:$0xff]
  %v3077 = vld [vmem:[%s2313 + $0x318] sm:$0xff]
  %v3078 = vld [vmem:[%s2313 + $0x320] sm:$0xff]
  %v3079 = vld [vmem:[%s2313 + $0x330] sm:$0xff]
  %v3080 = vld [vmem:[%s2313 + $0x338] sm:$0xff]
  %v3081 = vld [vmem:[%s2313 + $0x348] sm:$0xff]
  %v3082 = vld [vmem:[%s2313 + $0x350] sm:$0xff]
  %3147 = vrot.lane.b32.xlu0 %v3019, 64
  %v3148 = vpop.permute.xlu0 %3147
  %3149 = vrot.lane.b32.xlu0 %v3020, 64
  %v3150 = vpop.permute.xlu0 %3149
  %3151 = vrot.lane.b32.xlu0 %v3021, 64
  %v3152 = vpop.permute.xlu0 %3151
  %3153 = vrot.lane.b32.xlu0 %v3022, 64
  %v3154 = vpop.permute.xlu0 %3153
  %3155 = vrot.lane.b32.xlu0 %v3023, 64
  %v3156 = vpop.permute.xlu0 %3155
  %3157 = vrot.lane.b32.xlu0 %v3024, 64
  %v3158 = vpop.permute.xlu0 %3157
  %3159 = vrot.lane.b32.xlu0 %v3025, 64
  %v3160 = vpop.permute.xlu0 %3159
  %3161 = vrot.lane.b32.xlu0 %v3026, 64
  %v3162 = vpop.permute.xlu0 %3161
  %3163 = vrot.lane.b32.xlu0 %v3027, 64
  %v3164 = vpop.permute.xlu0 %3163
  %3165 = vrot.lane.b32.xlu0 %v3028, 64
  %v3166 = vpop.permute.xlu0 %3165
  %3167 = vrot.lane.b32.xlu0 %v3029, 64
  %v3168 = vpop.permute.xlu0 %3167
  %3169 = vrot.lane.b32.xlu0 %v3030, 64
  %v3170 = vpop.permute.xlu0 %3169
  %3171 = vrot.lane.b32.xlu0 %v3031, 64
  %v3172 = vpop.permute.xlu0 %3171
  %3173 = vrot.lane.b32.xlu0 %v3032, 64
  %v3174 = vpop.permute.xlu0 %3173
  %3175 = vrot.lane.b32.xlu0 %v3033, 64
  %v3176 = vpop.permute.xlu0 %3175
  %3177 = vrot.lane.b32.xlu0 %v3034, 64
  %v3178 = vpop.permute.xlu0 %3177
  %3179 = vrot.lane.b32.xlu0 %v3035, 64
  %v3180 = vpop.permute.xlu0 %3179
  %3181 = vrot.lane.b32.xlu0 %v3036, 64
  %v3182 = vpop.permute.xlu0 %3181
  %3183 = vrot.lane.b32.xlu0 %v3037, 64
  %v3184 = vpop.permute.xlu0 %3183
  %3185 = vrot.lane.b32.xlu0 %v3038, 64
  %v3186 = vpop.permute.xlu0 %3185
  %3187 = vrot.lane.b32.xlu0 %v3039, 64
  %v3188 = vpop.permute.xlu0 %3187
  %3189 = vrot.lane.b32.xlu0 %v3040, 64
  %v3190 = vpop.permute.xlu0 %3189
  %3191 = vrot.lane.b32.xlu0 %v3041, 64
  %v3192 = vpop.permute.xlu0 %3191
  %3193 = vrot.lane.b32.xlu0 %v3042, 64
  %v3194 = vpop.permute.xlu0 %3193
  %3195 = vrot.lane.b32.xlu0 %v3043, 64
  %v3196 = vpop.permute.xlu0 %3195
  %3197 = vrot.lane.b32.xlu0 %v3044, 64
  %v3198 = vpop.permute.xlu0 %3197
  %3199 = vrot.lane.b32.xlu0 %v3045, 64
  %v3200 = vpop.permute.xlu0 %3199
  %3201 = vrot.lane.b32.xlu0 %v3046, 64
  %v3202 = vpop.permute.xlu0 %3201
  %3203 = vrot.lane.b32.xlu0 %v3047, 64
  %v3204 = vpop.permute.xlu0 %3203
  %3205 = vrot.lane.b32.xlu0 %v3048, 64
  %v3206 = vpop.permute.xlu0 %3205
  %3207 = vrot.lane.b32.xlu0 %v3049, 64
  %v3208 = vpop.permute.xlu0 %3207
  %3209 = vrot.lane.b32.xlu0 %v3050, 64
  %v3210 = vpop.permute.xlu0 %3209
  %3211 = vrot.lane.b32.xlu0 %v3051, 64
  %v3212 = vpop.permute.xlu0 %3211
  %3213 = vrot.lane.b32.xlu0 %v3052, 64
  %v3214 = vpop.permute.xlu0 %3213
  %3215 = vrot.lane.b32.xlu0 %v3053, 64
  %v3216 = vpop.permute.xlu0 %3215
  %3217 = vrot.lane.b32.xlu0 %v3054, 64
  %v3218 = vpop.permute.xlu0 %3217
  %3219 = vrot.lane.b32.xlu0 %v3055, 64
  %v3220 = vpop.permute.xlu0 %3219
  %3221 = vrot.lane.b32.xlu0 %v3056, 64
  %v3222 = vpop.permute.xlu0 %3221
  %3223 = vrot.lane.b32.xlu0 %v3057, 64
  %v3224 = vpop.permute.xlu0 %3223
  %3225 = vrot.lane.b32.xlu0 %v3058, 64
  %v3226 = vpop.permute.xlu0 %3225
  %3227 = vrot.lane.b32.xlu0 %v3059, 64
  %v3228 = vpop.permute.xlu0 %3227
  %3229 = vrot.lane.b32.xlu0 %v3060, 64
  %v3230 = vpop.permute.xlu0 %3229
  %3231 = vrot.lane.b32.xlu0 %v3061, 64
  %v3232 = vpop.permute.xlu0 %3231
  %3233 = vrot.lane.b32.xlu0 %v3062, 64
  %v3234 = vpop.permute.xlu0 %3233
  %3235 = vrot.lane.b32.xlu0 %v3063, 64
  %v3236 = vpop.permute.xlu0 %3235
  %3237 = vrot.lane.b32.xlu0 %v3064, 64
  %v3238 = vpop.permute.xlu0 %3237
  %3239 = vrot.lane.b32.xlu0 %v3065, 64
  %v3240 = vpop.permute.xlu0 %3239
  %3241 = vrot.lane.b32.xlu0 %v3066, 64
  %v3242 = vpop.permute.xlu0 %3241
  %3243 = vrot.lane.b32.xlu0 %v3067, 64
  %v3244 = vpop.permute.xlu0 %3243
  %3245 = vrot.lane.b32.xlu0 %v3068, 64
  %v3246 = vpop.permute.xlu0 %3245
  %3247 = vrot.lane.b32.xlu0 %v3069, 64
  %v3248 = vpop.permute.xlu0 %3247
  %3249 = vrot.lane.b32.xlu0 %v3070, 64
  %v3250 = vpop.permute.xlu0 %3249
  %3251 = vrot.lane.b32.xlu0 %v3071, 64
  %v3252 = vpop.permute.xlu0 %3251
  %3253 = vrot.lane.b32.xlu0 %v3072, 64
  %v3254 = vpop.permute.xlu0 %3253
  %3255 = vrot.lane.b32.xlu0 %v3073, 64
  %v3256 = vpop.permute.xlu0 %3255
  %3257 = vrot.lane.b32.xlu0 %v3074, 64
  %v3258 = vpop.permute.xlu0 %3257
  %3259 = vrot.lane.b32.xlu0 %v3075, 64
  %v3260 = vpop.permute.xlu0 %3259
  %3261 = vrot.lane.b32.xlu0 %v3076, 64
  %v3262 = vpop.permute.xlu0 %3261
  %3263 = vrot.lane.b32.xlu0 %v3077, 64
  %v3264 = vpop.permute.xlu0 %3263
  %3265 = vrot.lane.b32.xlu0 %v3078, 64
  %v3266 = vpop.permute.xlu0 %3265
  %3267 = vrot.lane.b32.xlu0 %v3079, 64
  %v3268 = vpop.permute.xlu0 %3267
  %3269 = vrot.lane.b32.xlu0 %v3080, 64
  %v3270 = vpop.permute.xlu0 %3269
  %3271 = vrot.lane.b32.xlu0 %v3081, 64
  %v3272 = vpop.permute.xlu0 %3271
  %3273 = vrot.lane.b32.xlu0 %v3082, 64
  %v3274 = vpop.permute.xlu0 %3273
  %3339 = vst.msk [vmem:[#allocation3 + $0x8] sm:$0xff] %vm2826, %v3148
  %3340 = vst.msk [vmem:[#allocation3 + $0x30] sm:$0xff] %vm2826, %v3150
  %3341 = vst.msk [vmem:[#allocation3 + $0x58] sm:$0xff] %vm2826, %v3152
  %3342 = vst.msk [vmem:[#allocation3 + $0x80] sm:$0xff] %vm2826, %v3154
  %3343 = vst.msk [vmem:[#allocation3 + $0xa8] sm:$0xff] %vm2826, %v3156
  %3344 = vst.msk [vmem:[#allocation3 + $0xd0] sm:$0xff] %vm2826, %v3158
  %3345 = vst.msk [vmem:[#allocation3 + $0xf8] sm:$0xff] %vm2826, %v3160
  %3346 = vst.msk [vmem:[#allocation3 + $0x120] sm:$0xff] %vm2826, %v3162
  %3347 = vst.msk [vmem:[#allocation3 + $0x148] sm:$0xff] %vm2826, %v3164
  %3348 = vst.msk [vmem:[#allocation3 + $0x170] sm:$0xff] %vm2826, %v3166
  %3349 = vst.msk [vmem:[#allocation3 + $0x198] sm:$0xff] %vm2826, %v3168
  %3350 = vst.msk [vmem:[#allocation3 + $0x1c0] sm:$0xff] %vm2826, %v3170
  %3351 = vst.msk [vmem:[#allocation3 + $0x1e8] sm:$0xff] %vm2826, %v3172
  %3352 = vst.msk [vmem:[#allocation3 + $0x210] sm:$0xff] %vm2826, %v3174
  %3353 = vst.msk [vmem:[#allocation3 + $0x238] sm:$0xff] %vm2826, %v3176
  %3354 = vst.msk [vmem:[#allocation3 + $0x260] sm:$0xff] %vm2826, %v3178
  %3355 = vst.msk [vmem:[#allocation3 + $0x288] sm:$0xff] %vm2826, %v3180
  %3356 = vst.msk [vmem:[#allocation3 + $0x2b0] sm:$0xff] %vm2826, %v3182
  %3357 = vst.msk [vmem:[#allocation3 + $0x2d8] sm:$0xff] %vm2826, %v3184
  %3358 = vst.msk [vmem:[#allocation3 + $0x300] sm:$0xff] %vm2826, %v3186
  %3359 = vst.msk [vmem:[#allocation3 + $0x328] sm:$0xff] %vm2826, %v3188
  %3360 = vst.msk [vmem:[#allocation3 + $0x350] sm:$0xff] %vm2826, %v3190
  %3361 = vst.msk [vmem:[#allocation3 + $0x378] sm:$0xff] %vm2826, %v3192
  %3362 = vst.msk [vmem:[#allocation3 + $0x3a0] sm:$0xff] %vm2826, %v3194
  %3363 = vst.msk [vmem:[#allocation3 + $0x3c8] sm:$0xff] %vm2826, %v3196
  %3364 = vst.msk [vmem:[#allocation3 + $0x3f0] sm:$0xff] %vm2826, %v3198
  %3365 = vst.msk [vmem:[#allocation3 + $0x418] sm:$0xff] %vm2826, %v3200
  %3366 = vst.msk [vmem:[#allocation3 + $0x440] sm:$0xff] %vm2826, %v3202
  %3367 = vst.msk [vmem:[#allocation3 + $0x468] sm:$0xff] %vm2826, %v3204
  %3368 = vst.msk [vmem:[#allocation3 + $0x490] sm:$0xff] %vm2826, %v3206
  %3369 = vst.msk [vmem:[#allocation3 + $0x4b8] sm:$0xff] %vm2826, %v3208
  %3370 = vst.msk [vmem:[#allocation3 + $0x4e0] sm:$0xff] %vm2826, %v3210
  %3371 = vst.msk [vmem:[#allocation3 + $0x508] sm:$0xff] %vm2826, %v3212
  %3372 = vst.msk [vmem:[#allocation3 + $0x530] sm:$0xff] %vm2826, %v3214
  %3373 = vst.msk [vmem:[#allocation3 + $0x558] sm:$0xff] %vm2826, %v3216
  %3374 = vst.msk [vmem:[#allocation3 + $0x580] sm:$0xff] %vm2826, %v3218
  %3375 = vst.msk [vmem:[#allocation3 + $0x5a8] sm:$0xff] %vm2826, %v3220
  %3376 = vst.msk [vmem:[#allocation3 + $0x5d0] sm:$0xff] %vm2826, %v3222
  %3377 = vst.msk [vmem:[#allocation3 + $0x5f8] sm:$0xff] %vm2826, %v3224
  %3378 = vst.msk [vmem:[#allocation3 + $0x620] sm:$0xff] %vm2826, %v3226
  %3379 = vst.msk [vmem:[#allocation3 + $0x648] sm:$0xff] %vm2826, %v3228
  %3380 = vst.msk [vmem:[#allocation3 + $0x670] sm:$0xff] %vm2826, %v3230
  %3381 = vst.msk [vmem:[#allocation3 + $0x698] sm:$0xff] %vm2826, %v3232
  %3382 = vst.msk [vmem:[#allocation3 + $0x6c0] sm:$0xff] %vm2826, %v3234
  %3383 = vst.msk [vmem:[#allocation3 + $0x6e8] sm:$0xff] %vm2826, %v3236
  %3384 = vst.msk [vmem:[#allocation3 + $0x710] sm:$0xff] %vm2826, %v3238
  %3385 = vst.msk [vmem:[#allocation3 + $0x738] sm:$0xff] %vm2826, %v3240
  %3386 = vst.msk [vmem:[#allocation3 + $0x760] sm:$0xff] %vm2826, %v3242
  %3387 = vst.msk [vmem:[#allocation3 + $0x788] sm:$0xff] %vm2826, %v3244
  %3388 = vst.msk [vmem:[#allocation3 + $0x7b0] sm:$0xff] %vm2826, %v3246
  %3389 = vst.msk [vmem:[#allocation3 + $0x7d8] sm:$0xff] %vm2826, %v3248
  %3390 = vst.msk [vmem:[#allocation3 + $0x800] sm:$0xff] %vm2826, %v3250
  %3391 = vst.msk [vmem:[#allocation3 + $0x828] sm:$0xff] %vm2826, %v3252
  %3392 = vst.msk [vmem:[#allocation3 + $0x850] sm:$0xff] %vm2826, %v3254
  %3393 = vst.msk [vmem:[#allocation3 + $0x878] sm:$0xff] %vm2826, %v3256
  %3394 = vst.msk [vmem:[#allocation3 + $0x8a0] sm:$0xff] %vm2826, %v3258
  %3395 = vst.msk [vmem:[#allocation3 + $0x8c8] sm:$0xff] %vm2826, %v3260
  %3396 = vst.msk [vmem:[#allocation3 + $0x8f0] sm:$0xff] %vm2826, %v3262
  %3397 = vst.msk [vmem:[#allocation3 + $0x918] sm:$0xff] %vm2826, %v3264
  %3398 = vst.msk [vmem:[#allocation3 + $0x940] sm:$0xff] %vm2826, %v3266
  %3399 = vst.msk [vmem:[#allocation3 + $0x968] sm:$0xff] %vm2826, %v3268
  %3400 = vst.msk [vmem:[#allocation3 + $0x990] sm:$0xff] %vm2826, %v3270
  %3401 = vst.msk [vmem:[#allocation3 + $0x9b8] sm:$0xff] %vm2826, %v3272
  %3402 = vst.msk [vmem:[#allocation3 + $0x9e0] sm:$0xff] %vm2826, %v3274
  %v3403 = vld [vmem:[%s2313 + $0x2] sm:$0xff]
  %v3404 = vld [vmem:[%s2313 + $0xa] sm:$0xff]
  %v3405 = vld [vmem:[%s2313 + $0x1a] sm:$0xff]
  %v3406 = vld [vmem:[%s2313 + $0x22] sm:$0xff]
  %v3407 = vld [vmem:[%s2313 + $0x32] sm:$0xff]
  %v3408 = vld [vmem:[%s2313 + $0x3a] sm:$0xff]
  %v3409 = vld [vmem:[%s2313 + $0x4a] sm:$0xff]
  %v3410 = vld [vmem:[%s2313 + $0x52] sm:$0xff]
  %v3411 = vld [vmem:[%s2313 + $0x62] sm:$0xff]
  %v3412 = vld [vmem:[%s2313 + $0x6a] sm:$0xff]
  %v3413 = vld [vmem:[%s2313 + $0x7a] sm:$0xff]
  %v3414 = vld [vmem:[%s2313 + $0x82] sm:$0xff]
  %v3415 = vld [vmem:[%s2313 + $0x92] sm:$0xff]
  %v3416 = vld [vmem:[%s2313 + $0x9a] sm:$0xff]
  %v3417 = vld [vmem:[%s2313 + $0xaa] sm:$0xff]
  %v3418 = vld [vmem:[%s2313 + $0xb2] sm:$0xff]
  %v3419 = vld [vmem:[%s2313 + $0xc2] sm:$0xff]
  %v3420 = vld [vmem:[%s2313 + $0xca] sm:$0xff]
  %v3421 = vld [vmem:[%s2313 + $0xda] sm:$0xff]
  %v3422 = vld [vmem:[%s2313 + $0xe2] sm:$0xff]
  %v3423 = vld [vmem:[%s2313 + $0xf2] sm:$0xff]
  %v3424 = vld [vmem:[%s2313 + $0xfa] sm:$0xff]
  %v3425 = vld [vmem:[%s2313 + $0x10a] sm:$0xff]
  %v3426 = vld [vmem:[%s2313 + $0x112] sm:$0xff]
  %v3427 = vld [vmem:[%s2313 + $0x122] sm:$0xff]
  %v3428 = vld [vmem:[%s2313 + $0x12a] sm:$0xff]
  %v3429 = vld [vmem:[%s2313 + $0x13a] sm:$0xff]
  %v3430 = vld [vmem:[%s2313 + $0x142] sm:$0xff]
  %v3431 = vld [vmem:[%s2313 + $0x152] sm:$0xff]
  %v3432 = vld [vmem:[%s2313 + $0x15a] sm:$0xff]
  %v3433 = vld [vmem:[%s2313 + $0x16a] sm:$0xff]
  %v3434 = vld [vmem:[%s2313 + $0x172] sm:$0xff]
  %v3435 = vld [vmem:[%s2313 + $0x1e2] sm:$0xff]
  %v3436 = vld [vmem:[%s2313 + $0x1ea] sm:$0xff]
  %v3437 = vld [vmem:[%s2313 + $0x1fa] sm:$0xff]
  %v3438 = vld [vmem:[%s2313 + $0x202] sm:$0xff]
  %v3439 = vld [vmem:[%s2313 + $0x212] sm:$0xff]
  %v3440 = vld [vmem:[%s2313 + $0x21a] sm:$0xff]
  %v3441 = vld [vmem:[%s2313 + $0x22a] sm:$0xff]
  %v3442 = vld [vmem:[%s2313 + $0x232] sm:$0xff]
  %v3443 = vld [vmem:[%s2313 + $0x242] sm:$0xff]
  %v3444 = vld [vmem:[%s2313 + $0x24a] sm:$0xff]
  %v3445 = vld [vmem:[%s2313 + $0x25a] sm:$0xff]
  %v3446 = vld [vmem:[%s2313 + $0x262] sm:$0xff]
  %v3447 = vld [vmem:[%s2313 + $0x272] sm:$0xff]
  %v3448 = vld [vmem:[%s2313 + $0x27a] sm:$0xff]
  %v3449 = vld [vmem:[%s2313 + $0x28a] sm:$0xff]
  %v3450 = vld [vmem:[%s2313 + $0x292] sm:$0xff]
  %v3451 = vld [vmem:[%s2313 + $0x2a2] sm:$0xff]
  %v3452 = vld [vmem:[%s2313 + $0x2aa] sm:$0xff]
  %v3453 = vld [vmem:[%s2313 + $0x2ba] sm:$0xff]
  %v3454 = vld [vmem:[%s2313 + $0x2c2] sm:$0xff]
  %v3455 = vld [vmem:[%s2313 + $0x2d2] sm:$0xff]
  %v3456 = vld [vmem:[%s2313 + $0x2da] sm:$0xff]
  %v3457 = vld [vmem:[%s2313 + $0x2ea] sm:$0xff]
  %v3458 = vld [vmem:[%s2313 + $0x2f2] sm:$0xff]
  %v3459 = vld [vmem:[%s2313 + $0x302] sm:$0xff]
  %v3460 = vld [vmem:[%s2313 + $0x30a] sm:$0xff]
  %v3461 = vld [vmem:[%s2313 + $0x31a] sm:$0xff]
  %v3462 = vld [vmem:[%s2313 + $0x322] sm:$0xff]
  %v3463 = vld [vmem:[%s2313 + $0x332] sm:$0xff]
  %v3464 = vld [vmem:[%s2313 + $0x33a] sm:$0xff]
  %v3465 = vld [vmem:[%s2313 + $0x34a] sm:$0xff]
  %v3466 = vld [vmem:[%s2313 + $0x352] sm:$0xff]
  %3467 = vst.msk [vmem:[#allocation3 + $0x10] sm:$0xff] %vm1648, %v3403
  %3468 = vst.msk [vmem:[#allocation3 + $0x38] sm:$0xff] %vm1648, %v3404
  %3469 = vst.msk [vmem:[#allocation3 + $0x60] sm:$0xff] %vm1648, %v3405
  %3470 = vst.msk [vmem:[#allocation3 + $0x88] sm:$0xff] %vm1648, %v3406
  %3471 = vst.msk [vmem:[#allocation3 + $0xb0] sm:$0xff] %vm1648, %v3407
  %3472 = vst.msk [vmem:[#allocation3 + $0xd8] sm:$0xff] %vm1648, %v3408
  %3473 = vst.msk [vmem:[#allocation3 + $0x100] sm:$0xff] %vm1648, %v3409
  %3474 = vst.msk [vmem:[#allocation3 + $0x128] sm:$0xff] %vm1648, %v3410
  %3475 = vst.msk [vmem:[#allocation3 + $0x150] sm:$0xff] %vm1648, %v3411
  %3476 = vst.msk [vmem:[#allocation3 + $0x178] sm:$0xff] %vm1648, %v3412
  %3477 = vst.msk [vmem:[#allocation3 + $0x1a0] sm:$0xff] %vm1648, %v3413
  %3478 = vst.msk [vmem:[#allocation3 + $0x1c8] sm:$0xff] %vm1648, %v3414
  %3479 = vst.msk [vmem:[#allocation3 + $0x1f0] sm:$0xff] %vm1648, %v3415
  %3480 = vst.msk [vmem:[#allocation3 + $0x218] sm:$0xff] %vm1648, %v3416
  %3481 = vst.msk [vmem:[#allocation3 + $0x240] sm:$0xff] %vm1648, %v3417
  %3482 = vst.msk [vmem:[#allocation3 + $0x268] sm:$0xff] %vm1648, %v3418
  %3483 = vst.msk [vmem:[#allocation3 + $0x290] sm:$0xff] %vm1648, %v3419
  %3484 = vst.msk [vmem:[#allocation3 + $0x2b8] sm:$0xff] %vm1648, %v3420
  %3485 = vst.msk [vmem:[#allocation3 + $0x2e0] sm:$0xff] %vm1648, %v3421
  %3486 = vst.msk [vmem:[#allocation3 + $0x308] sm:$0xff] %vm1648, %v3422
  %3487 = vst.msk [vmem:[#allocation3 + $0x330] sm:$0xff] %vm1648, %v3423
  %3488 = vst.msk [vmem:[#allocation3 + $0x358] sm:$0xff] %vm1648, %v3424
  %3489 = vst.msk [vmem:[#allocation3 + $0x380] sm:$0xff] %vm1648, %v3425
  %3490 = vst.msk [vmem:[#allocation3 + $0x3a8] sm:$0xff] %vm1648, %v3426
  %3491 = vst.msk [vmem:[#allocation3 + $0x3d0] sm:$0xff] %vm1648, %v3427
  %3492 = vst.msk [vmem:[#allocation3 + $0x3f8] sm:$0xff] %vm1648, %v3428
  %3493 = vst.msk [vmem:[#allocation3 + $0x420] sm:$0xff] %vm1648, %v3429
  %3494 = vst.msk [vmem:[#allocation3 + $0x448] sm:$0xff] %vm1648, %v3430
  %3495 = vst.msk [vmem:[#allocation3 + $0x470] sm:$0xff] %vm1648, %v3431
  %3496 = vst.msk [vmem:[#allocation3 + $0x498] sm:$0xff] %vm1648, %v3432
  %3497 = vst.msk [vmem:[#allocation3 + $0x4c0] sm:$0xff] %vm1648, %v3433
  %3498 = vst.msk [vmem:[#allocation3 + $0x4e8] sm:$0xff] %vm1648, %v3434
  %3499 = vst.msk [vmem:[#allocation3 + $0x510] sm:$0xff] %vm1648, %v3435
  %3500 = vst.msk [vmem:[#allocation3 + $0x538] sm:$0xff] %vm1648, %v3436
  %3501 = vst.msk [vmem:[#allocation3 + $0x560] sm:$0xff] %vm1648, %v3437
  %3502 = vst.msk [vmem:[#allocation3 + $0x588] sm:$0xff] %vm1648, %v3438
  %3503 = vst.msk [vmem:[#allocation3 + $0x5b0] sm:$0xff] %vm1648, %v3439
  %3504 = vst.msk [vmem:[#allocation3 + $0x5d8] sm:$0xff] %vm1648, %v3440
  %3505 = vst.msk [vmem:[#allocation3 + $0x600] sm:$0xff] %vm1648, %v3441
  %3506 = vst.msk [vmem:[#allocation3 + $0x628] sm:$0xff] %vm1648, %v3442
  %3507 = vst.msk [vmem:[#allocation3 + $0x650] sm:$0xff] %vm1648, %v3443
  %3508 = vst.msk [vmem:[#allocation3 + $0x678] sm:$0xff] %vm1648, %v3444
  %3509 = vst.msk [vmem:[#allocation3 + $0x6a0] sm:$0xff] %vm1648, %v3445
  %3510 = vst.msk [vmem:[#allocation3 + $0x6c8] sm:$0xff] %vm1648, %v3446
  %3511 = vst.msk [vmem:[#allocation3 + $0x6f0] sm:$0xff] %vm1648, %v3447
  %3512 = vst.msk [vmem:[#allocation3 + $0x718] sm:$0xff] %vm1648, %v3448
  %3513 = vst.msk [vmem:[#allocation3 + $0x740] sm:$0xff] %vm1648, %v3449
  %3514 = vst.msk [vmem:[#allocation3 + $0x768] sm:$0xff] %vm1648, %v3450
  %3515 = vst.msk [vmem:[#allocation3 + $0x790] sm:$0xff] %vm1648, %v3451
  %3516 = vst.msk [vmem:[#allocation3 + $0x7b8] sm:$0xff] %vm1648, %v3452
  %3517 = vst.msk [vmem:[#allocation3 + $0x7e0] sm:$0xff] %vm1648, %v3453
  %3518 = vst.msk [vmem:[#allocation3 + $0x808] sm:$0xff] %vm1648, %v3454
  %3519 = vst.msk [vmem:[#allocation3 + $0x830] sm:$0xff] %vm1648, %v3455
  %3520 = vst.msk [vmem:[#allocation3 + $0x858] sm:$0xff] %vm1648, %v3456
  %3521 = vst.msk [vmem:[#allocation3 + $0x880] sm:$0xff] %vm1648, %v3457
  %3522 = vst.msk [vmem:[#allocation3 + $0x8a8] sm:$0xff] %vm1648, %v3458
  %3523 = vst.msk [vmem:[#allocation3 + $0x8d0] sm:$0xff] %vm1648, %v3459
  %3524 = vst.msk [vmem:[#allocation3 + $0x8f8] sm:$0xff] %vm1648, %v3460
  %3525 = vst.msk [vmem:[#allocation3 + $0x920] sm:$0xff] %vm1648, %v3461
  %3526 = vst.msk [vmem:[#allocation3 + $0x948] sm:$0xff] %vm1648, %v3462
  %3527 = vst.msk [vmem:[#allocation3 + $0x970] sm:$0xff] %vm1648, %v3463
  %3528 = vst.msk [vmem:[#allocation3 + $0x998] sm:$0xff] %vm1648, %v3464
  %3529 = vst.msk [vmem:[#allocation3 + $0x9c0] sm:$0xff] %vm1648, %v3465
  %3530 = vst.msk [vmem:[#allocation3 + $0x9e8] sm:$0xff] %vm1648, %v3466
  %v3531 = vld [vmem:[%s2313 + $0x4] sm:$0xff]
  %v3532 = vld [vmem:[%s2313 + $0xc] sm:$0xff]
  %v3533 = vld [vmem:[%s2313 + $0x1c] sm:$0xff]
  %v3534 = vld [vmem:[%s2313 + $0x24] sm:$0xff]
  %v3535 = vld [vmem:[%s2313 + $0x34] sm:$0xff]
  %v3536 = vld [vmem:[%s2313 + $0x3c] sm:$0xff]
  %v3537 = vld [vmem:[%s2313 + $0x4c] sm:$0xff]
  %v3538 = vld [vmem:[%s2313 + $0x54] sm:$0xff]
  %v3539 = vld [vmem:[%s2313 + $0x64] sm:$0xff]
  %v3540 = vld [vmem:[%s2313 + $0x6c] sm:$0xff]
  %v3541 = vld [vmem:[%s2313 + $0x7c] sm:$0xff]
  %v3542 = vld [vmem:[%s2313 + $0x84] sm:$0xff]
  %v3543 = vld [vmem:[%s2313 + $0x94] sm:$0xff]
  %v3544 = vld [vmem:[%s2313 + $0x9c] sm:$0xff]
  %v3545 = vld [vmem:[%s2313 + $0xac] sm:$0xff]
  %v3546 = vld [vmem:[%s2313 + $0xb4] sm:$0xff]
  %v3547 = vld [vmem:[%s2313 + $0xc4] sm:$0xff]
  %v3548 = vld [vmem:[%s2313 + $0xcc] sm:$0xff]
  %v3549 = vld [vmem:[%s2313 + $0xdc] sm:$0xff]
  %v3550 = vld [vmem:[%s2313 + $0xe4] sm:$0xff]
  %v3551 = vld [vmem:[%s2313 + $0xf4] sm:$0xff]
  %v3552 = vld [vmem:[%s2313 + $0xfc] sm:$0xff]
  %v3553 = vld [vmem:[%s2313 + $0x10c] sm:$0xff]
  %v3554 = vld [vmem:[%s2313 + $0x114] sm:$0xff]
  %v3555 = vld [vmem:[%s2313 + $0x124] sm:$0xff]
  %v3556 = vld [vmem:[%s2313 + $0x12c] sm:$0xff]
  %v3557 = vld [vmem:[%s2313 + $0x13c] sm:$0xff]
  %v3558 = vld [vmem:[%s2313 + $0x144] sm:$0xff]
  %v3559 = vld [vmem:[%s2313 + $0x154] sm:$0xff]
  %v3560 = vld [vmem:[%s2313 + $0x15c] sm:$0xff]
  %v3561 = vld [vmem:[%s2313 + $0x16c] sm:$0xff]
  %v3562 = vld [vmem:[%s2313 + $0x174] sm:$0xff]
  %v3563 = vld [vmem:[%s2313 + $0x1e4] sm:$0xff]
  %v3564 = vld [vmem:[%s2313 + $0x1ec] sm:$0xff]
  %v3565 = vld [vmem:[%s2313 + $0x1fc] sm:$0xff]
  %v3566 = vld [vmem:[%s2313 + $0x204] sm:$0xff]
  %v3567 = vld [vmem:[%s2313 + $0x214] sm:$0xff]
  %v3568 = vld [vmem:[%s2313 + $0x21c] sm:$0xff]
  %v3569 = vld [vmem:[%s2313 + $0x22c] sm:$0xff]
  %v3570 = vld [vmem:[%s2313 + $0x234] sm:$0xff]
  %v3571 = vld [vmem:[%s2313 + $0x244] sm:$0xff]
  %v3572 = vld [vmem:[%s2313 + $0x24c] sm:$0xff]
  %v3573 = vld [vmem:[%s2313 + $0x25c] sm:$0xff]
  %v3574 = vld [vmem:[%s2313 + $0x264] sm:$0xff]
  %v3575 = vld [vmem:[%s2313 + $0x274] sm:$0xff]
  %v3576 = vld [vmem:[%s2313 + $0x27c] sm:$0xff]
  %v3577 = vld [vmem:[%s2313 + $0x28c] sm:$0xff]
  %v3578 = vld [vmem:[%s2313 + $0x294] sm:$0xff]
  %v3579 = vld [vmem:[%s2313 + $0x2a4] sm:$0xff]
  %v3580 = vld [vmem:[%s2313 + $0x2ac] sm:$0xff]
  %v3581 = vld [vmem:[%s2313 + $0x2bc] sm:$0xff]
  %v3582 = vld [vmem:[%s2313 + $0x2c4] sm:$0xff]
  %v3583 = vld [vmem:[%s2313 + $0x2d4] sm:$0xff]
  %v3584 = vld [vmem:[%s2313 + $0x2dc] sm:$0xff]
  %v3585 = vld [vmem:[%s2313 + $0x2ec] sm:$0xff]
  %v3586 = vld [vmem:[%s2313 + $0x2f4] sm:$0xff]
  %v3587 = vld [vmem:[%s2313 + $0x304] sm:$0xff]
  %v3588 = vld [vmem:[%s2313 + $0x30c] sm:$0xff]
  %v3589 = vld [vmem:[%s2313 + $0x31c] sm:$0xff]
  %v3590 = vld [vmem:[%s2313 + $0x324] sm:$0xff]
  %v3591 = vld [vmem:[%s2313 + $0x334] sm:$0xff]
  %v3592 = vld [vmem:[%s2313 + $0x33c] sm:$0xff]
  %v3593 = vld [vmem:[%s2313 + $0x34c] sm:$0xff]
  %v3594 = vld [vmem:[%s2313 + $0x354] sm:$0xff]
  %3659 = vrot.lane.b32.xlu0 %v3531, 64
  %v3660 = vpop.permute.xlu0 %3659
  %3661 = vrot.lane.b32.xlu0 %v3532, 64
  %v3662 = vpop.permute.xlu0 %3661
  %3663 = vrot.lane.b32.xlu0 %v3533, 64
  %v3664 = vpop.permute.xlu0 %3663
  %3665 = vrot.lane.b32.xlu0 %v3534, 64
  %v3666 = vpop.permute.xlu0 %3665
  %3667 = vrot.lane.b32.xlu0 %v3535, 64
  %v3668 = vpop.permute.xlu0 %3667
  %3669 = vrot.lane.b32.xlu0 %v3536, 64
  %v3670 = vpop.permute.xlu0 %3669
  %3671 = vrot.lane.b32.xlu0 %v3537, 64
  %v3672 = vpop.permute.xlu0 %3671
  %3673 = vrot.lane.b32.xlu0 %v3538, 64
  %v3674 = vpop.permute.xlu0 %3673
  %3675 = vrot.lane.b32.xlu0 %v3539, 64
  %v3676 = vpop.permute.xlu0 %3675
  %3677 = vrot.lane.b32.xlu0 %v3540, 64
  %v3678 = vpop.permute.xlu0 %3677
  %3679 = vrot.lane.b32.xlu0 %v3541, 64
  %v3680 = vpop.permute.xlu0 %3679
  %3681 = vrot.lane.b32.xlu0 %v3542, 64
  %v3682 = vpop.permute.xlu0 %3681
  %3683 = vrot.lane.b32.xlu0 %v3543, 64
  %v3684 = vpop.permute.xlu0 %3683
  %3685 = vrot.lane.b32.xlu0 %v3544, 64
  %v3686 = vpop.permute.xlu0 %3685
  %3687 = vrot.lane.b32.xlu0 %v3545, 64
  %v3688 = vpop.permute.xlu0 %3687
  %3689 = vrot.lane.b32.xlu0 %v3546, 64
  %v3690 = vpop.permute.xlu0 %3689
  %3691 = vrot.lane.b32.xlu0 %v3547, 64
  %v3692 = vpop.permute.xlu0 %3691
  %3693 = vrot.lane.b32.xlu0 %v3548, 64
  %v3694 = vpop.permute.xlu0 %3693
  %3695 = vrot.lane.b32.xlu0 %v3549, 64
  %v3696 = vpop.permute.xlu0 %3695
  %3697 = vrot.lane.b32.xlu0 %v3550, 64
  %v3698 = vpop.permute.xlu0 %3697
  %3699 = vrot.lane.b32.xlu0 %v3551, 64
  %v3700 = vpop.permute.xlu0 %3699
  %3701 = vrot.lane.b32.xlu0 %v3552, 64
  %v3702 = vpop.permute.xlu0 %3701
  %3703 = vrot.lane.b32.xlu0 %v3553, 64
  %v3704 = vpop.permute.xlu0 %3703
  %3705 = vrot.lane.b32.xlu0 %v3554, 64
  %v3706 = vpop.permute.xlu0 %3705
  %3707 = vrot.lane.b32.xlu0 %v3555, 64
  %v3708 = vpop.permute.xlu0 %3707
  %3709 = vrot.lane.b32.xlu0 %v3556, 64
  %v3710 = vpop.permute.xlu0 %3709
  %3711 = vrot.lane.b32.xlu0 %v3557, 64
  %v3712 = vpop.permute.xlu0 %3711
  %3713 = vrot.lane.b32.xlu0 %v3558, 64
  %v3714 = vpop.permute.xlu0 %3713
  %3715 = vrot.lane.b32.xlu0 %v3559, 64
  %v3716 = vpop.permute.xlu0 %3715
  %3717 = vrot.lane.b32.xlu0 %v3560, 64
  %v3718 = vpop.permute.xlu0 %3717
  %3719 = vrot.lane.b32.xlu0 %v3561, 64
  %v3720 = vpop.permute.xlu0 %3719
  %3721 = vrot.lane.b32.xlu0 %v3562, 64
  %v3722 = vpop.permute.xlu0 %3721
  %3723 = vrot.lane.b32.xlu0 %v3563, 64
  %v3724 = vpop.permute.xlu0 %3723
  %3725 = vrot.lane.b32.xlu0 %v3564, 64
  %v3726 = vpop.permute.xlu0 %3725
  %3727 = vrot.lane.b32.xlu0 %v3565, 64
  %v3728 = vpop.permute.xlu0 %3727
  %3729 = vrot.lane.b32.xlu0 %v3566, 64
  %v3730 = vpop.permute.xlu0 %3729
  %3731 = vrot.lane.b32.xlu0 %v3567, 64
  %v3732 = vpop.permute.xlu0 %3731
  %3733 = vrot.lane.b32.xlu0 %v3568, 64
  %v3734 = vpop.permute.xlu0 %3733
  %3735 = vrot.lane.b32.xlu0 %v3569, 64
  %v3736 = vpop.permute.xlu0 %3735
  %3737 = vrot.lane.b32.xlu0 %v3570, 64
  %v3738 = vpop.permute.xlu0 %3737
  %3739 = vrot.lane.b32.xlu0 %v3571, 64
  %v3740 = vpop.permute.xlu0 %3739
  %3741 = vrot.lane.b32.xlu0 %v3572, 64
  %v3742 = vpop.permute.xlu0 %3741
  %3743 = vrot.lane.b32.xlu0 %v3573, 64
  %v3744 = vpop.permute.xlu0 %3743
  %3745 = vrot.lane.b32.xlu0 %v3574, 64
  %v3746 = vpop.permute.xlu0 %3745
  %3747 = vrot.lane.b32.xlu0 %v3575, 64
  %v3748 = vpop.permute.xlu0 %3747
  %3749 = vrot.lane.b32.xlu0 %v3576, 64
  %v3750 = vpop.permute.xlu0 %3749
  %3751 = vrot.lane.b32.xlu0 %v3577, 64
  %v3752 = vpop.permute.xlu0 %3751
  %3753 = vrot.lane.b32.xlu0 %v3578, 64
  %v3754 = vpop.permute.xlu0 %3753
  %3755 = vrot.lane.b32.xlu0 %v3579, 64
  %v3756 = vpop.permute.xlu0 %3755
  %3757 = vrot.lane.b32.xlu0 %v3580, 64
  %v3758 = vpop.permute.xlu0 %3757
  %3759 = vrot.lane.b32.xlu0 %v3581, 64
  %v3760 = vpop.permute.xlu0 %3759
  %3761 = vrot.lane.b32.xlu0 %v3582, 64
  %v3762 = vpop.permute.xlu0 %3761
  %3763 = vrot.lane.b32.xlu0 %v3583, 64
  %v3764 = vpop.permute.xlu0 %3763
  %3765 = vrot.lane.b32.xlu0 %v3584, 64
  %v3766 = vpop.permute.xlu0 %3765
  %3767 = vrot.lane.b32.xlu0 %v3585, 64
  %v3768 = vpop.permute.xlu0 %3767
  %3769 = vrot.lane.b32.xlu0 %v3586, 64
  %v3770 = vpop.permute.xlu0 %3769
  %3771 = vrot.lane.b32.xlu0 %v3587, 64
  %v3772 = vpop.permute.xlu0 %3771
  %3773 = vrot.lane.b32.xlu0 %v3588, 64
  %v3774 = vpop.permute.xlu0 %3773
  %3775 = vrot.lane.b32.xlu0 %v3589, 64
  %v3776 = vpop.permute.xlu0 %3775
  %3777 = vrot.lane.b32.xlu0 %v3590, 64
  %v3778 = vpop.permute.xlu0 %3777
  %3779 = vrot.lane.b32.xlu0 %v3591, 64
  %v3780 = vpop.permute.xlu0 %3779
  %3781 = vrot.lane.b32.xlu0 %v3592, 64
  %v3782 = vpop.permute.xlu0 %3781
  %3783 = vrot.lane.b32.xlu0 %v3593, 64
  %v3784 = vpop.permute.xlu0 %3783
  %3785 = vrot.lane.b32.xlu0 %v3594, 64
  %v3786 = vpop.permute.xlu0 %3785
  %3851 = vst.msk [vmem:[#allocation3 + $0x10] sm:$0xff] %vm2826, %v3660
  %3852 = vst.msk [vmem:[#allocation3 + $0x38] sm:$0xff] %vm2826, %v3662
  %3853 = vst.msk [vmem:[#allocation3 + $0x60] sm:$0xff] %vm2826, %v3664
  %3854 = vst.msk [vmem:[#allocation3 + $0x88] sm:$0xff] %vm2826, %v3666
  %3855 = vst.msk [vmem:[#allocation3 + $0xb0] sm:$0xff] %vm2826, %v3668
  %3856 = vst.msk [vmem:[#allocation3 + $0xd8] sm:$0xff] %vm2826, %v3670
  %3857 = vst.msk [vmem:[#allocation3 + $0x100] sm:$0xff] %vm2826, %v3672
  %3858 = vst.msk [vmem:[#allocation3 + $0x128] sm:$0xff] %vm2826, %v3674
  %3859 = vst.msk [vmem:[#allocation3 + $0x150] sm:$0xff] %vm2826, %v3676
  %3860 = vst.msk [vmem:[#allocation3 + $0x178] sm:$0xff] %vm2826, %v3678
  %3861 = vst.msk [vmem:[#allocation3 + $0x1a0] sm:$0xff] %vm2826, %v3680
  %3862 = vst.msk [vmem:[#allocation3 + $0x1c8] sm:$0xff] %vm2826, %v3682
  %3863 = vst.msk [vmem:[#allocation3 + $0x1f0] sm:$0xff] %vm2826, %v3684
  %3864 = vst.msk [vmem:[#allocation3 + $0x218] sm:$0xff] %vm2826, %v3686
  %3865 = vst.msk [vmem:[#allocation3 + $0x240] sm:$0xff] %vm2826, %v3688
  %3866 = vst.msk [vmem:[#allocation3 + $0x268] sm:$0xff] %vm2826, %v3690
  %3867 = vst.msk [vmem:[#allocation3 + $0x290] sm:$0xff] %vm2826, %v3692
  %3868 = vst.msk [vmem:[#allocation3 + $0x2b8] sm:$0xff] %vm2826, %v3694
  %3869 = vst.msk [vmem:[#allocation3 + $0x2e0] sm:$0xff] %vm2826, %v3696
  %3870 = vst.msk [vmem:[#allocation3 + $0x308] sm:$0xff] %vm2826, %v3698
  %3871 = vst.msk [vmem:[#allocation3 + $0x330] sm:$0xff] %vm2826, %v3700
  %3872 = vst.msk [vmem:[#allocation3 + $0x358] sm:$0xff] %vm2826, %v3702
  %3873 = vst.msk [vmem:[#allocation3 + $0x380] sm:$0xff] %vm2826, %v3704
  %3874 = vst.msk [vmem:[#allocation3 + $0x3a8] sm:$0xff] %vm2826, %v3706
  %3875 = vst.msk [vmem:[#allocation3 + $0x3d0] sm:$0xff] %vm2826, %v3708
  %3876 = vst.msk [vmem:[#allocation3 + $0x3f8] sm:$0xff] %vm2826, %v3710
  %3877 = vst.msk [vmem:[#allocation3 + $0x420] sm:$0xff] %vm2826, %v3712
  %3878 = vst.msk [vmem:[#allocation3 + $0x448] sm:$0xff] %vm2826, %v3714
  %3879 = vst.msk [vmem:[#allocation3 + $0x470] sm:$0xff] %vm2826, %v3716
  %3880 = vst.msk [vmem:[#allocation3 + $0x498] sm:$0xff] %vm2826, %v3718
  %3881 = vst.msk [vmem:[#allocation3 + $0x4c0] sm:$0xff] %vm2826, %v3720
  %3882 = vst.msk [vmem:[#allocation3 + $0x4e8] sm:$0xff] %vm2826, %v3722
  %3883 = vst.msk [vmem:[#allocation3 + $0x510] sm:$0xff] %vm2826, %v3724
  %3884 = vst.msk [vmem:[#allocation3 + $0x538] sm:$0xff] %vm2826, %v3726
  %3885 = vst.msk [vmem:[#allocation3 + $0x560] sm:$0xff] %vm2826, %v3728
  %3886 = vst.msk [vmem:[#allocation3 + $0x588] sm:$0xff] %vm2826, %v3730
  %3887 = vst.msk [vmem:[#allocation3 + $0x5b0] sm:$0xff] %vm2826, %v3732
  %3888 = vst.msk [vmem:[#allocation3 + $0x5d8] sm:$0xff] %vm2826, %v3734
  %3889 = vst.msk [vmem:[#allocation3 + $0x600] sm:$0xff] %vm2826, %v3736
  %3890 = vst.msk [vmem:[#allocation3 + $0x628] sm:$0xff] %vm2826, %v3738
  %3891 = vst.msk [vmem:[#allocation3 + $0x650] sm:$0xff] %vm2826, %v3740
  %3892 = vst.msk [vmem:[#allocation3 + $0x678] sm:$0xff] %vm2826, %v3742
  %3893 = vst.msk [vmem:[#allocation3 + $0x6a0] sm:$0xff] %vm2826, %v3744
  %3894 = vst.msk [vmem:[#allocation3 + $0x6c8] sm:$0xff] %vm2826, %v3746
  %3895 = vst.msk [vmem:[#allocation3 + $0x6f0] sm:$0xff] %vm2826, %v3748
  %3896 = vst.msk [vmem:[#allocation3 + $0x718] sm:$0xff] %vm2826, %v3750
  %3897 = vst.msk [vmem:[#allocation3 + $0x740] sm:$0xff] %vm2826, %v3752
  %3898 = vst.msk [vmem:[#allocation3 + $0x768] sm:$0xff] %vm2826, %v3754
  %3899 = vst.msk [vmem:[#allocation3 + $0x790] sm:$0xff] %vm2826, %v3756
  %3900 = vst.msk [vmem:[#allocation3 + $0x7b8] sm:$0xff] %vm2826, %v3758
  %3901 = vst.msk [vmem:[#allocation3 + $0x7e0] sm:$0xff] %vm2826, %v3760
  %3902 = vst.msk [vmem:[#allocation3 + $0x808] sm:$0xff] %vm2826, %v3762
  %3903 = vst.msk [vmem:[#allocation3 + $0x830] sm:$0xff] %vm2826, %v3764
  %3904 = vst.msk [vmem:[#allocation3 + $0x858] sm:$0xff] %vm2826, %v3766
  %3905 = vst.msk [vmem:[#allocation3 + $0x880] sm:$0xff] %vm2826, %v3768
  %3906 = vst.msk [vmem:[#allocation3 + $0x8a8] sm:$0xff] %vm2826, %v3770
  %3907 = vst.msk [vmem:[#allocation3 + $0x8d0] sm:$0xff] %vm2826, %v3772
  %3908 = vst.msk [vmem:[#allocation3 + $0x8f8] sm:$0xff] %vm2826, %v3774
  %3909 = vst.msk [vmem:[#allocation3 + $0x920] sm:$0xff] %vm2826, %v3776
  %3910 = vst.msk [vmem:[#allocation3 + $0x948] sm:$0xff] %vm2826, %v3778
  %3911 = vst.msk [vmem:[#allocation3 + $0x970] sm:$0xff] %vm2826, %v3780
  %3912 = vst.msk [vmem:[#allocation3 + $0x998] sm:$0xff] %vm2826, %v3782
  %3913 = vst.msk [vmem:[#allocation3 + $0x9c0] sm:$0xff] %vm2826, %v3784
  %3914 = vst.msk [vmem:[#allocation3 + $0x9e8] sm:$0xff] %vm2826, %v3786
  %s3915 = scalar_lea.vmem [#allocation2], 96
  %v3916 = vld [vmem:[%s3915] sm:$0xff]
  %v3917 = vld [vmem:[%s3915 + $0x8] sm:$0xff]
  %v3918 = vld [vmem:[%s3915 + $0x18] sm:$0xff]
  %v3919 = vld [vmem:[%s3915 + $0x20] sm:$0xff]
  %v3920 = vld [vmem:[%s3915 + $0x30] sm:$0xff]
  %v3921 = vld [vmem:[%s3915 + $0x38] sm:$0xff]
  %v3922 = vld [vmem:[%s3915 + $0x48] sm:$0xff]
  %v3923 = vld [vmem:[%s3915 + $0x50] sm:$0xff]
  %v3924 = vld [vmem:[%s3915 + $0x60] sm:$0xff]
  %v3925 = vld [vmem:[%s3915 + $0x68] sm:$0xff]
  %v3926 = vld [vmem:[%s3915 + $0x78] sm:$0xff]
  %v3927 = vld [vmem:[%s3915 + $0x80] sm:$0xff]
  %v3928 = vld [vmem:[%s3915 + $0x90] sm:$0xff]
  %v3929 = vld [vmem:[%s3915 + $0x98] sm:$0xff]
  %v3930 = vld [vmem:[%s3915 + $0xa8] sm:$0xff]
  %v3931 = vld [vmem:[%s3915 + $0xb0] sm:$0xff]
  %v3932 = vld [vmem:[%s3915 + $0xc0] sm:$0xff]
  %v3933 = vld [vmem:[%s3915 + $0xc8] sm:$0xff]
  %v3934 = vld [vmem:[%s3915 + $0xd8] sm:$0xff]
  %v3935 = vld [vmem:[%s3915 + $0xe0] sm:$0xff]
  %v3936 = vld [vmem:[%s3915 + $0xf0] sm:$0xff]
  %v3937 = vld [vmem:[%s3915 + $0xf8] sm:$0xff]
  %v3938 = vld [vmem:[%s3915 + $0x108] sm:$0xff]
  %v3939 = vld [vmem:[%s3915 + $0x110] sm:$0xff]
  %v3940 = vld [vmem:[%s3915 + $0x120] sm:$0xff]
  %v3941 = vld [vmem:[%s3915 + $0x128] sm:$0xff]
  %v3942 = vld [vmem:[%s3915 + $0x138] sm:$0xff]
  %v3943 = vld [vmem:[%s3915 + $0x140] sm:$0xff]
  %v3944 = vld [vmem:[%s3915 + $0x150] sm:$0xff]
  %v3945 = vld [vmem:[%s3915 + $0x158] sm:$0xff]
  %v3946 = vld [vmem:[%s3915 + $0x168] sm:$0xff]
  %v3947 = vld [vmem:[%s3915 + $0x170] sm:$0xff]
  %v3948 = vld [vmem:[%s3915 + $0x1e0] sm:$0xff]
  %v3949 = vld [vmem:[%s3915 + $0x1e8] sm:$0xff]
  %v3950 = vld [vmem:[%s3915 + $0x1f8] sm:$0xff]
  %v3951 = vld [vmem:[%s3915 + $0x200] sm:$0xff]
  %v3952 = vld [vmem:[%s3915 + $0x210] sm:$0xff]
  %v3953 = vld [vmem:[%s3915 + $0x218] sm:$0xff]
  %v3954 = vld [vmem:[%s3915 + $0x228] sm:$0xff]
  %v3955 = vld [vmem:[%s3915 + $0x230] sm:$0xff]
  %v3956 = vld [vmem:[%s3915 + $0x240] sm:$0xff]
  %v3957 = vld [vmem:[%s3915 + $0x248] sm:$0xff]
  %v3958 = vld [vmem:[%s3915 + $0x258] sm:$0xff]
  %v3959 = vld [vmem:[%s3915 + $0x260] sm:$0xff]
  %v3960 = vld [vmem:[%s3915 + $0x270] sm:$0xff]
  %v3961 = vld [vmem:[%s3915 + $0x278] sm:$0xff]
  %v3962 = vld [vmem:[%s3915 + $0x288] sm:$0xff]
  %v3963 = vld [vmem:[%s3915 + $0x290] sm:$0xff]
  %v3964 = vld [vmem:[%s3915 + $0x2a0] sm:$0xff]
  %v3965 = vld [vmem:[%s3915 + $0x2a8] sm:$0xff]
  %v3966 = vld [vmem:[%s3915 + $0x2b8] sm:$0xff]
  %v3967 = vld [vmem:[%s3915 + $0x2c0] sm:$0xff]
  %v3968 = vld [vmem:[%s3915 + $0x2d0] sm:$0xff]
  %v3969 = vld [vmem:[%s3915 + $0x2d8] sm:$0xff]
  %v3970 = vld [vmem:[%s3915 + $0x2e8] sm:$0xff]
  %v3971 = vld [vmem:[%s3915 + $0x2f0] sm:$0xff]
  %v3972 = vld [vmem:[%s3915 + $0x300] sm:$0xff]
  %v3973 = vld [vmem:[%s3915 + $0x308] sm:$0xff]
  %v3974 = vld [vmem:[%s3915 + $0x318] sm:$0xff]
  %v3975 = vld [vmem:[%s3915 + $0x320] sm:$0xff]
  %v3976 = vld [vmem:[%s3915 + $0x330] sm:$0xff]
  %v3977 = vld [vmem:[%s3915 + $0x338] sm:$0xff]
  %v3978 = vld [vmem:[%s3915 + $0x348] sm:$0xff]
  %v3979 = vld [vmem:[%s3915 + $0x350] sm:$0xff]
  %3980 = vst.msk [vmem:[#allocation3 + $0x18] sm:$0xff] %vm1648, %v3916
  %3981 = vst.msk [vmem:[#allocation3 + $0x40] sm:$0xff] %vm1648, %v3917
  %3982 = vst.msk [vmem:[#allocation3 + $0x68] sm:$0xff] %vm1648, %v3918
  %3983 = vst.msk [vmem:[#allocation3 + $0x90] sm:$0xff] %vm1648, %v3919
  %3984 = vst.msk [vmem:[#allocation3 + $0xb8] sm:$0xff] %vm1648, %v3920
  %3985 = vst.msk [vmem:[#allocation3 + $0xe0] sm:$0xff] %vm1648, %v3921
  %3986 = vst.msk [vmem:[#allocation3 + $0x108] sm:$0xff] %vm1648, %v3922
  %3987 = vst.msk [vmem:[#allocation3 + $0x130] sm:$0xff] %vm1648, %v3923
  %3988 = vst.msk [vmem:[#allocation3 + $0x158] sm:$0xff] %vm1648, %v3924
  %3989 = vst.msk [vmem:[#allocation3 + $0x180] sm:$0xff] %vm1648, %v3925
  %3990 = vst.msk [vmem:[#allocation3 + $0x1a8] sm:$0xff] %vm1648, %v3926
  %3991 = vst.msk [vmem:[#allocation3 + $0x1d0] sm:$0xff] %vm1648, %v3927
  %3992 = vst.msk [vmem:[#allocation3 + $0x1f8] sm:$0xff] %vm1648, %v3928
  %3993 = vst.msk [vmem:[#allocation3 + $0x220] sm:$0xff] %vm1648, %v3929
  %3994 = vst.msk [vmem:[#allocation3 + $0x248] sm:$0xff] %vm1648, %v3930
  %3995 = vst.msk [vmem:[#allocation3 + $0x270] sm:$0xff] %vm1648, %v3931
  %3996 = vst.msk [vmem:[#allocation3 + $0x298] sm:$0xff] %vm1648, %v3932
  %3997 = vst.msk [vmem:[#allocation3 + $0x2c0] sm:$0xff] %vm1648, %v3933
  %3998 = vst.msk [vmem:[#allocation3 + $0x2e8] sm:$0xff] %vm1648, %v3934
  %3999 = vst.msk [vmem:[#allocation3 + $0x310] sm:$0xff] %vm1648, %v3935
  %4000 = vst.msk [vmem:[#allocation3 + $0x338] sm:$0xff] %vm1648, %v3936
  %4001 = vst.msk [vmem:[#allocation3 + $0x360] sm:$0xff] %vm1648, %v3937
  %4002 = vst.msk [vmem:[#allocation3 + $0x388] sm:$0xff] %vm1648, %v3938
  %4003 = vst.msk [vmem:[#allocation3 + $0x3b0] sm:$0xff] %vm1648, %v3939
  %4004 = vst.msk [vmem:[#allocation3 + $0x3d8] sm:$0xff] %vm1648, %v3940
  %4005 = vst.msk [vmem:[#allocation3 + $0x400] sm:$0xff] %vm1648, %v3941
  %4006 = vst.msk [vmem:[#allocation3 + $0x428] sm:$0xff] %vm1648, %v3942
  %4007 = vst.msk [vmem:[#allocation3 + $0x450] sm:$0xff] %vm1648, %v3943
  %4008 = vst.msk [vmem:[#allocation3 + $0x478] sm:$0xff] %vm1648, %v3944
  %4009 = vst.msk [vmem:[#allocation3 + $0x4a0] sm:$0xff] %vm1648, %v3945
  %4010 = vst.msk [vmem:[#allocation3 + $0x4c8] sm:$0xff] %vm1648, %v3946
  %4011 = vst.msk [vmem:[#allocation3 + $0x4f0] sm:$0xff] %vm1648, %v3947
  %4012 = vst.msk [vmem:[#allocation3 + $0x518] sm:$0xff] %vm1648, %v3948
  %4013 = vst.msk [vmem:[#allocation3 + $0x540] sm:$0xff] %vm1648, %v3949
  %4014 = vst.msk [vmem:[#allocation3 + $0x568] sm:$0xff] %vm1648, %v3950
  %4015 = vst.msk [vmem:[#allocation3 + $0x590] sm:$0xff] %vm1648, %v3951
  %4016 = vst.msk [vmem:[#allocation3 + $0x5b8] sm:$0xff] %vm1648, %v3952
  %4017 = vst.msk [vmem:[#allocation3 + $0x5e0] sm:$0xff] %vm1648, %v3953
  %4018 = vst.msk [vmem:[#allocation3 + $0x608] sm:$0xff] %vm1648, %v3954
  %4019 = vst.msk [vmem:[#allocation3 + $0x630] sm:$0xff] %vm1648, %v3955
  %4020 = vst.msk [vmem:[#allocation3 + $0x658] sm:$0xff] %vm1648, %v3956
  %4021 = vst.msk [vmem:[#allocation3 + $0x680] sm:$0xff] %vm1648, %v3957
  %4022 = vst.msk [vmem:[#allocation3 + $0x6a8] sm:$0xff] %vm1648, %v3958
  %4023 = vst.msk [vmem:[#allocation3 + $0x6d0] sm:$0xff] %vm1648, %v3959
  %4024 = vst.msk [vmem:[#allocation3 + $0x6f8] sm:$0xff] %vm1648, %v3960
  %4025 = vst.msk [vmem:[#allocation3 + $0x720] sm:$0xff] %vm1648, %v3961
  %4026 = vst.msk [vmem:[#allocation3 + $0x748] sm:$0xff] %vm1648, %v3962
  %4027 = vst.msk [vmem:[#allocation3 + $0x770] sm:$0xff] %vm1648, %v3963
  %4028 = vst.msk [vmem:[#allocation3 + $0x798] sm:$0xff] %vm1648, %v3964
  %4029 = vst.msk [vmem:[#allocation3 + $0x7c0] sm:$0xff] %vm1648, %v3965
  %4030 = vst.msk [vmem:[#allocation3 + $0x7e8] sm:$0xff] %vm1648, %v3966
  %4031 = vst.msk [vmem:[#allocation3 + $0x810] sm:$0xff] %vm1648, %v3967
  %4032 = vst.msk [vmem:[#allocation3 + $0x838] sm:$0xff] %vm1648, %v3968
  %4033 = vst.msk [vmem:[#allocation3 + $0x860] sm:$0xff] %vm1648, %v3969
  %4034 = vst.msk [vmem:[#allocation3 + $0x888] sm:$0xff] %vm1648, %v3970
  %4035 = vst.msk [vmem:[#allocation3 + $0x8b0] sm:$0xff] %vm1648, %v3971
  %4036 = vst.msk [vmem:[#allocation3 + $0x8d8] sm:$0xff] %vm1648, %v3972
  %4037 = vst.msk [vmem:[#allocation3 + $0x900] sm:$0xff] %vm1648, %v3973
  %4038 = vst.msk [vmem:[#allocation3 + $0x928] sm:$0xff] %vm1648, %v3974
  %4039 = vst.msk [vmem:[#allocation3 + $0x950] sm:$0xff] %vm1648, %v3975
  %4040 = vst.msk [vmem:[#allocation3 + $0x978] sm:$0xff] %vm1648, %v3976
  %4041 = vst.msk [vmem:[#allocation3 + $0x9a0] sm:$0xff] %vm1648, %v3977
  %4042 = vst.msk [vmem:[#allocation3 + $0x9c8] sm:$0xff] %vm1648, %v3978
  %4043 = vst.msk [vmem:[#allocation3 + $0x9f0] sm:$0xff] %vm1648, %v3979
  %v4044 = vld [vmem:[%s3915 + $0x2] sm:$0xff]
  %v4045 = vld [vmem:[%s3915 + $0xa] sm:$0xff]
  %v4046 = vld [vmem:[%s3915 + $0x1a] sm:$0xff]
  %v4047 = vld [vmem:[%s3915 + $0x22] sm:$0xff]
  %v4048 = vld [vmem:[%s3915 + $0x32] sm:$0xff]
  %v4049 = vld [vmem:[%s3915 + $0x3a] sm:$0xff]
  %v4050 = vld [vmem:[%s3915 + $0x4a] sm:$0xff]
  %v4051 = vld [vmem:[%s3915 + $0x52] sm:$0xff]
  %v4052 = vld [vmem:[%s3915 + $0x62] sm:$0xff]
  %v4053 = vld [vmem:[%s3915 + $0x6a] sm:$0xff]
  %v4054 = vld [vmem:[%s3915 + $0x7a] sm:$0xff]
  %v4055 = vld [vmem:[%s3915 + $0x82] sm:$0xff]
  %v4056 = vld [vmem:[%s3915 + $0x92] sm:$0xff]
  %v4057 = vld [vmem:[%s3915 + $0x9a] sm:$0xff]
  %v4058 = vld [vmem:[%s3915 + $0xaa] sm:$0xff]
  %v4059 = vld [vmem:[%s3915 + $0xb2] sm:$0xff]
  %v4060 = vld [vmem:[%s3915 + $0xc2] sm:$0xff]
  %v4061 = vld [vmem:[%s3915 + $0xca] sm:$0xff]
  %v4062 = vld [vmem:[%s3915 + $0xda] sm:$0xff]
  %v4063 = vld [vmem:[%s3915 + $0xe2] sm:$0xff]
  %v4064 = vld [vmem:[%s3915 + $0xf2] sm:$0xff]
  %v4065 = vld [vmem:[%s3915 + $0xfa] sm:$0xff]
  %v4066 = vld [vmem:[%s3915 + $0x10a] sm:$0xff]
  %v4067 = vld [vmem:[%s3915 + $0x112] sm:$0xff]
  %v4068 = vld [vmem:[%s3915 + $0x122] sm:$0xff]
  %v4069 = vld [vmem:[%s3915 + $0x12a] sm:$0xff]
  %v4070 = vld [vmem:[%s3915 + $0x13a] sm:$0xff]
  %v4071 = vld [vmem:[%s3915 + $0x142] sm:$0xff]
  %v4072 = vld [vmem:[%s3915 + $0x152] sm:$0xff]
  %v4073 = vld [vmem:[%s3915 + $0x15a] sm:$0xff]
  %v4074 = vld [vmem:[%s3915 + $0x16a] sm:$0xff]
  %v4075 = vld [vmem:[%s3915 + $0x172] sm:$0xff]
  %v4076 = vld [vmem:[%s3915 + $0x1e2] sm:$0xff]
  %v4077 = vld [vmem:[%s3915 + $0x1ea] sm:$0xff]
  %v4078 = vld [vmem:[%s3915 + $0x1fa] sm:$0xff]
  %v4079 = vld [vmem:[%s3915 + $0x202] sm:$0xff]
  %v4080 = vld [vmem:[%s3915 + $0x212] sm:$0xff]
  %v4081 = vld [vmem:[%s3915 + $0x21a] sm:$0xff]
  %v4082 = vld [vmem:[%s3915 + $0x22a] sm:$0xff]
  %v4083 = vld [vmem:[%s3915 + $0x232] sm:$0xff]
  %v4084 = vld [vmem:[%s3915 + $0x242] sm:$0xff]
  %v4085 = vld [vmem:[%s3915 + $0x24a] sm:$0xff]
  %v4086 = vld [vmem:[%s3915 + $0x25a] sm:$0xff]
  %v4087 = vld [vmem:[%s3915 + $0x262] sm:$0xff]
  %v4088 = vld [vmem:[%s3915 + $0x272] sm:$0xff]
  %v4089 = vld [vmem:[%s3915 + $0x27a] sm:$0xff]
  %v4090 = vld [vmem:[%s3915 + $0x28a] sm:$0xff]
  %v4091 = vld [vmem:[%s3915 + $0x292] sm:$0xff]
  %v4092 = vld [vmem:[%s3915 + $0x2a2] sm:$0xff]
  %v4093 = vld [vmem:[%s3915 + $0x2aa] sm:$0xff]
  %v4094 = vld [vmem:[%s3915 + $0x2ba] sm:$0xff]
  %v4095 = vld [vmem:[%s3915 + $0x2c2] sm:$0xff]
  %v4096 = vld [vmem:[%s3915 + $0x2d2] sm:$0xff]
  %v4097 = vld [vmem:[%s3915 + $0x2da] sm:$0xff]
  %v4098 = vld [vmem:[%s3915 + $0x2ea] sm:$0xff]
  %v4099 = vld [vmem:[%s3915 + $0x2f2] sm:$0xff]
  %v4100 = vld [vmem:[%s3915 + $0x302] sm:$0xff]
  %v4101 = vld [vmem:[%s3915 + $0x30a] sm:$0xff]
  %v4102 = vld [vmem:[%s3915 + $0x31a] sm:$0xff]
  %v4103 = vld [vmem:[%s3915 + $0x322] sm:$0xff]
  %v4104 = vld [vmem:[%s3915 + $0x332] sm:$0xff]
  %v4105 = vld [vmem:[%s3915 + $0x33a] sm:$0xff]
  %v4106 = vld [vmem:[%s3915 + $0x34a] sm:$0xff]
  %v4107 = vld [vmem:[%s3915 + $0x352] sm:$0xff]
  %4172 = vrot.lane.b32.xlu0 %v4044, 64
  %v4173 = vpop.permute.xlu0 %4172
  %4174 = vrot.lane.b32.xlu0 %v4045, 64
  %v4175 = vpop.permute.xlu0 %4174
  %4176 = vrot.lane.b32.xlu0 %v4046, 64
  %v4177 = vpop.permute.xlu0 %4176
  %4178 = vrot.lane.b32.xlu0 %v4047, 64
  %v4179 = vpop.permute.xlu0 %4178
  %4180 = vrot.lane.b32.xlu0 %v4048, 64
  %v4181 = vpop.permute.xlu0 %4180
  %4182 = vrot.lane.b32.xlu0 %v4049, 64
  %v4183 = vpop.permute.xlu0 %4182
  %4184 = vrot.lane.b32.xlu0 %v4050, 64
  %v4185 = vpop.permute.xlu0 %4184
  %4186 = vrot.lane.b32.xlu0 %v4051, 64
  %v4187 = vpop.permute.xlu0 %4186
  %4188 = vrot.lane.b32.xlu0 %v4052, 64
  %v4189 = vpop.permute.xlu0 %4188
  %4190 = vrot.lane.b32.xlu0 %v4053, 64
  %v4191 = vpop.permute.xlu0 %4190
  %4192 = vrot.lane.b32.xlu0 %v4054, 64
  %v4193 = vpop.permute.xlu0 %4192
  %4194 = vrot.lane.b32.xlu0 %v4055, 64
  %v4195 = vpop.permute.xlu0 %4194
  %4196 = vrot.lane.b32.xlu0 %v4056, 64
  %v4197 = vpop.permute.xlu0 %4196
  %4198 = vrot.lane.b32.xlu0 %v4057, 64
  %v4199 = vpop.permute.xlu0 %4198
  %4200 = vrot.lane.b32.xlu0 %v4058, 64
  %v4201 = vpop.permute.xlu0 %4200
  %4202 = vrot.lane.b32.xlu0 %v4059, 64
  %v4203 = vpop.permute.xlu0 %4202
  %4204 = vrot.lane.b32.xlu0 %v4060, 64
  %v4205 = vpop.permute.xlu0 %4204
  %4206 = vrot.lane.b32.xlu0 %v4061, 64
  %v4207 = vpop.permute.xlu0 %4206
  %4208 = vrot.lane.b32.xlu0 %v4062, 64
  %v4209 = vpop.permute.xlu0 %4208
  %4210 = vrot.lane.b32.xlu0 %v4063, 64
  %v4211 = vpop.permute.xlu0 %4210
  %4212 = vrot.lane.b32.xlu0 %v4064, 64
  %v4213 = vpop.permute.xlu0 %4212
  %4214 = vrot.lane.b32.xlu0 %v4065, 64
  %v4215 = vpop.permute.xlu0 %4214
  %4216 = vrot.lane.b32.xlu0 %v4066, 64
  %v4217 = vpop.permute.xlu0 %4216
  %4218 = vrot.lane.b32.xlu0 %v4067, 64
  %v4219 = vpop.permute.xlu0 %4218
  %4220 = vrot.lane.b32.xlu0 %v4068, 64
  %v4221 = vpop.permute.xlu0 %4220
  %4222 = vrot.lane.b32.xlu0 %v4069, 64
  %v4223 = vpop.permute.xlu0 %4222
  %4224 = vrot.lane.b32.xlu0 %v4070, 64
  %v4225 = vpop.permute.xlu0 %4224
  %4226 = vrot.lane.b32.xlu0 %v4071, 64
  %v4227 = vpop.permute.xlu0 %4226
  %4228 = vrot.lane.b32.xlu0 %v4072, 64
  %v4229 = vpop.permute.xlu0 %4228
  %4230 = vrot.lane.b32.xlu0 %v4073, 64
  %v4231 = vpop.permute.xlu0 %4230
  %4232 = vrot.lane.b32.xlu0 %v4074, 64
  %v4233 = vpop.permute.xlu0 %4232
  %4234 = vrot.lane.b32.xlu0 %v4075, 64
  %v4235 = vpop.permute.xlu0 %4234
  %4236 = vrot.lane.b32.xlu0 %v4076, 64
  %v4237 = vpop.permute.xlu0 %4236
  %4238 = vrot.lane.b32.xlu0 %v4077, 64
  %v4239 = vpop.permute.xlu0 %4238
  %4240 = vrot.lane.b32.xlu0 %v4078, 64
  %v4241 = vpop.permute.xlu0 %4240
  %4242 = vrot.lane.b32.xlu0 %v4079, 64
  %v4243 = vpop.permute.xlu0 %4242
  %4244 = vrot.lane.b32.xlu0 %v4080, 64
  %v4245 = vpop.permute.xlu0 %4244
  %4246 = vrot.lane.b32.xlu0 %v4081, 64
  %v4247 = vpop.permute.xlu0 %4246
  %4248 = vrot.lane.b32.xlu0 %v4082, 64
  %v4249 = vpop.permute.xlu0 %4248
  %4250 = vrot.lane.b32.xlu0 %v4083, 64
  %v4251 = vpop.permute.xlu0 %4250
  %4252 = vrot.lane.b32.xlu0 %v4084, 64
  %v4253 = vpop.permute.xlu0 %4252
  %4254 = vrot.lane.b32.xlu0 %v4085, 64
  %v4255 = vpop.permute.xlu0 %4254
  %4256 = vrot.lane.b32.xlu0 %v4086, 64
  %v4257 = vpop.permute.xlu0 %4256
  %4258 = vrot.lane.b32.xlu0 %v4087, 64
  %v4259 = vpop.permute.xlu0 %4258
  %4260 = vrot.lane.b32.xlu0 %v4088, 64
  %v4261 = vpop.permute.xlu0 %4260
  %4262 = vrot.lane.b32.xlu0 %v4089, 64
  %v4263 = vpop.permute.xlu0 %4262
  %4264 = vrot.lane.b32.xlu0 %v4090, 64
  %v4265 = vpop.permute.xlu0 %4264
  %4266 = vrot.lane.b32.xlu0 %v4091, 64
  %v4267 = vpop.permute.xlu0 %4266
  %4268 = vrot.lane.b32.xlu0 %v4092, 64
  %v4269 = vpop.permute.xlu0 %4268
  %4270 = vrot.lane.b32.xlu0 %v4093, 64
  %v4271 = vpop.permute.xlu0 %4270
  %4272 = vrot.lane.b32.xlu0 %v4094, 64
  %v4273 = vpop.permute.xlu0 %4272
  %4274 = vrot.lane.b32.xlu0 %v4095, 64
  %v4275 = vpop.permute.xlu0 %4274
  %4276 = vrot.lane.b32.xlu0 %v4096, 64
  %v4277 = vpop.permute.xlu0 %4276
  %4278 = vrot.lane.b32.xlu0 %v4097, 64
  %v4279 = vpop.permute.xlu0 %4278
  %4280 = vrot.lane.b32.xlu0 %v4098, 64
  %v4281 = vpop.permute.xlu0 %4280
  %4282 = vrot.lane.b32.xlu0 %v4099, 64
  %v4283 = vpop.permute.xlu0 %4282
  %4284 = vrot.lane.b32.xlu0 %v4100, 64
  %v4285 = vpop.permute.xlu0 %4284
  %4286 = vrot.lane.b32.xlu0 %v4101, 64
  %v4287 = vpop.permute.xlu0 %4286
  %4288 = vrot.lane.b32.xlu0 %v4102, 64
  %v4289 = vpop.permute.xlu0 %4288
  %4290 = vrot.lane.b32.xlu0 %v4103, 64
  %v4291 = vpop.permute.xlu0 %4290
  %4292 = vrot.lane.b32.xlu0 %v4104, 64
  %v4293 = vpop.permute.xlu0 %4292
  %4294 = vrot.lane.b32.xlu0 %v4105, 64
  %v4295 = vpop.permute.xlu0 %4294
  %4296 = vrot.lane.b32.xlu0 %v4106, 64
  %v4297 = vpop.permute.xlu0 %4296
  %4298 = vrot.lane.b32.xlu0 %v4107, 64
  %v4299 = vpop.permute.xlu0 %4298
  %4364 = vst.msk [vmem:[#allocation3 + $0x18] sm:$0xff] %vm2826, %v4173
  %4365 = vst.msk [vmem:[#allocation3 + $0x40] sm:$0xff] %vm2826, %v4175
  %4366 = vst.msk [vmem:[#allocation3 + $0x68] sm:$0xff] %vm2826, %v4177
  %4367 = vst.msk [vmem:[#allocation3 + $0x90] sm:$0xff] %vm2826, %v4179
  %4368 = vst.msk [vmem:[#allocation3 + $0xb8] sm:$0xff] %vm2826, %v4181
  %4369 = vst.msk [vmem:[#allocation3 + $0xe0] sm:$0xff] %vm2826, %v4183
  %4370 = vst.msk [vmem:[#allocation3 + $0x108] sm:$0xff] %vm2826, %v4185
  %4371 = vst.msk [vmem:[#allocation3 + $0x130] sm:$0xff] %vm2826, %v4187
  %4372 = vst.msk [vmem:[#allocation3 + $0x158] sm:$0xff] %vm2826, %v4189
  %4373 = vst.msk [vmem:[#allocation3 + $0x180] sm:$0xff] %vm2826, %v4191
  %4374 = vst.msk [vmem:[#allocation3 + $0x1a8] sm:$0xff] %vm2826, %v4193
  %4375 = vst.msk [vmem:[#allocation3 + $0x1d0] sm:$0xff] %vm2826, %v4195
  %4376 = vst.msk [vmem:[#allocation3 + $0x1f8] sm:$0xff] %vm2826, %v4197
  %4377 = vst.msk [vmem:[#allocation3 + $0x220] sm:$0xff] %vm2826, %v4199
  %4378 = vst.msk [vmem:[#allocation3 + $0x248] sm:$0xff] %vm2826, %v4201
  %4379 = vst.msk [vmem:[#allocation3 + $0x270] sm:$0xff] %vm2826, %v4203
  %4380 = vst.msk [vmem:[#allocation3 + $0x298] sm:$0xff] %vm2826, %v4205
  %4381 = vst.msk [vmem:[#allocation3 + $0x2c0] sm:$0xff] %vm2826, %v4207
  %4382 = vst.msk [vmem:[#allocation3 + $0x2e8] sm:$0xff] %vm2826, %v4209
  %4383 = vst.msk [vmem:[#allocation3 + $0x310] sm:$0xff] %vm2826, %v4211
  %4384 = vst.msk [vmem:[#allocation3 + $0x338] sm:$0xff] %vm2826, %v4213
  %4385 = vst.msk [vmem:[#allocation3 + $0x360] sm:$0xff] %vm2826, %v4215
  %4386 = vst.msk [vmem:[#allocation3 + $0x388] sm:$0xff] %vm2826, %v4217
  %4387 = vst.msk [vmem:[#allocation3 + $0x3b0] sm:$0xff] %vm2826, %v4219
  %4388 = vst.msk [vmem:[#allocation3 + $0x3d8] sm:$0xff] %vm2826, %v4221
  %4389 = vst.msk [vmem:[#allocation3 + $0x400] sm:$0xff] %vm2826, %v4223
  %4390 = vst.msk [vmem:[#allocation3 + $0x428] sm:$0xff] %vm2826, %v4225
  %4391 = vst.msk [vmem:[#allocation3 + $0x450] sm:$0xff] %vm2826, %v4227
  %4392 = vst.msk [vmem:[#allocation3 + $0x478] sm:$0xff] %vm2826, %v4229
  %4393 = vst.msk [vmem:[#allocation3 + $0x4a0] sm:$0xff] %vm2826, %v4231
  %4394 = vst.msk [vmem:[#allocation3 + $0x4c8] sm:$0xff] %vm2826, %v4233
  %4395 = vst.msk [vmem:[#allocation3 + $0x4f0] sm:$0xff] %vm2826, %v4235
  %4396 = vst.msk [vmem:[#allocation3 + $0x518] sm:$0xff] %vm2826, %v4237
  %4397 = vst.msk [vmem:[#allocation3 + $0x540] sm:$0xff] %vm2826, %v4239
  %4398 = vst.msk [vmem:[#allocation3 + $0x568] sm:$0xff] %vm2826, %v4241
  %4399 = vst.msk [vmem:[#allocation3 + $0x590] sm:$0xff] %vm2826, %v4243
  %4400 = vst.msk [vmem:[#allocation3 + $0x5b8] sm:$0xff] %vm2826, %v4245
  %4401 = vst.msk [vmem:[#allocation3 + $0x5e0] sm:$0xff] %vm2826, %v4247
  %4402 = vst.msk [vmem:[#allocation3 + $0x608] sm:$0xff] %vm2826, %v4249
  %4403 = vst.msk [vmem:[#allocation3 + $0x630] sm:$0xff] %vm2826, %v4251
  %4404 = vst.msk [vmem:[#allocation3 + $0x658] sm:$0xff] %vm2826, %v4253
  %4405 = vst.msk [vmem:[#allocation3 + $0x680] sm:$0xff] %vm2826, %v4255
  %4406 = vst.msk [vmem:[#allocation3 + $0x6a8] sm:$0xff] %vm2826, %v4257
  %4407 = vst.msk [vmem:[#allocation3 + $0x6d0] sm:$0xff] %vm2826, %v4259
  %4408 = vst.msk [vmem:[#allocation3 + $0x6f8] sm:$0xff] %vm2826, %v4261
  %4409 = vst.msk [vmem:[#allocation3 + $0x720] sm:$0xff] %vm2826, %v4263
  %4410 = vst.msk [vmem:[#allocation3 + $0x748] sm:$0xff] %vm2826, %v4265
  %4411 = vst.msk [vmem:[#allocation3 + $0x770] sm:$0xff] %vm2826, %v4267
  %4412 = vst.msk [vmem:[#allocation3 + $0x798] sm:$0xff] %vm2826, %v4269
  %4413 = vst.msk [vmem:[#allocation3 + $0x7c0] sm:$0xff] %vm2826, %v4271
  %4414 = vst.msk [vmem:[#allocation3 + $0x7e8] sm:$0xff] %vm2826, %v4273
  %4415 = vst.msk [vmem:[#allocation3 + $0x810] sm:$0xff] %vm2826, %v4275
  %4416 = vst.msk [vmem:[#allocation3 + $0x838] sm:$0xff] %vm2826, %v4277
  %4417 = vst.msk [vmem:[#allocation3 + $0x860] sm:$0xff] %vm2826, %v4279
  %4418 = vst.msk [vmem:[#allocation3 + $0x888] sm:$0xff] %vm2826, %v4281
  %4419 = vst.msk [vmem:[#allocation3 + $0x8b0] sm:$0xff] %vm2826, %v4283
  %4420 = vst.msk [vmem:[#allocation3 + $0x8d8] sm:$0xff] %vm2826, %v4285
  %4421 = vst.msk [vmem:[#allocation3 + $0x900] sm:$0xff] %vm2826, %v4287
  %4422 = vst.msk [vmem:[#allocation3 + $0x928] sm:$0xff] %vm2826, %v4289
  %4423 = vst.msk [vmem:[#allocation3 + $0x950] sm:$0xff] %vm2826, %v4291
  %4424 = vst.msk [vmem:[#allocation3 + $0x978] sm:$0xff] %vm2826, %v4293
  %4425 = vst.msk [vmem:[#allocation3 + $0x9a0] sm:$0xff] %vm2826, %v4295
  %4426 = vst.msk [vmem:[#allocation3 + $0x9c8] sm:$0xff] %vm2826, %v4297
  %4427 = vst.msk [vmem:[#allocation3 + $0x9f0] sm:$0xff] %vm2826, %v4299
  %v4428 = vld [vmem:[%s3915 + $0x4] sm:$0xff]
  %v4429 = vld [vmem:[%s3915 + $0xc] sm:$0xff]
  %v4430 = vld [vmem:[%s3915 + $0x1c] sm:$0xff]
  %v4431 = vld [vmem:[%s3915 + $0x24] sm:$0xff]
  %v4432 = vld [vmem:[%s3915 + $0x34] sm:$0xff]
  %v4433 = vld [vmem:[%s3915 + $0x3c] sm:$0xff]
  %v4434 = vld [vmem:[%s3915 + $0x4c] sm:$0xff]
  %v4435 = vld [vmem:[%s3915 + $0x54] sm:$0xff]
  %v4436 = vld [vmem:[%s3915 + $0x64] sm:$0xff]
  %v4437 = vld [vmem:[%s3915 + $0x6c] sm:$0xff]
  %v4438 = vld [vmem:[%s3915 + $0x7c] sm:$0xff]
  %v4439 = vld [vmem:[%s3915 + $0x84] sm:$0xff]
  %v4440 = vld [vmem:[%s3915 + $0x94] sm:$0xff]
  %v4441 = vld [vmem:[%s3915 + $0x9c] sm:$0xff]
  %v4442 = vld [vmem:[%s3915 + $0xac] sm:$0xff]
  %v4443 = vld [vmem:[%s3915 + $0xb4] sm:$0xff]
  %v4444 = vld [vmem:[%s3915 + $0xc4] sm:$0xff]
  %v4445 = vld [vmem:[%s3915 + $0xcc] sm:$0xff]
  %v4446 = vld [vmem:[%s3915 + $0xdc] sm:$0xff]
  %v4447 = vld [vmem:[%s3915 + $0xe4] sm:$0xff]
  %v4448 = vld [vmem:[%s3915 + $0xf4] sm:$0xff]
  %v4449 = vld [vmem:[%s3915 + $0xfc] sm:$0xff]
  %v4450 = vld [vmem:[%s3915 + $0x10c] sm:$0xff]
  %v4451 = vld [vmem:[%s3915 + $0x114] sm:$0xff]
  %v4452 = vld [vmem:[%s3915 + $0x124] sm:$0xff]
  %v4453 = vld [vmem:[%s3915 + $0x12c] sm:$0xff]
  %v4454 = vld [vmem:[%s3915 + $0x13c] sm:$0xff]
  %v4455 = vld [vmem:[%s3915 + $0x144] sm:$0xff]
  %v4456 = vld [vmem:[%s3915 + $0x154] sm:$0xff]
  %v4457 = vld [vmem:[%s3915 + $0x15c] sm:$0xff]
  %v4458 = vld [vmem:[%s3915 + $0x16c] sm:$0xff]
  %v4459 = vld [vmem:[%s3915 + $0x174] sm:$0xff]
  %v4460 = vld [vmem:[%s3915 + $0x1e4] sm:$0xff]
  %v4461 = vld [vmem:[%s3915 + $0x1ec] sm:$0xff]
  %v4462 = vld [vmem:[%s3915 + $0x1fc] sm:$0xff]
  %v4463 = vld [vmem:[%s3915 + $0x204] sm:$0xff]
  %v4464 = vld [vmem:[%s3915 + $0x214] sm:$0xff]
  %v4465 = vld [vmem:[%s3915 + $0x21c] sm:$0xff]
  %v4466 = vld [vmem:[%s3915 + $0x22c] sm:$0xff]
  %v4467 = vld [vmem:[%s3915 + $0x234] sm:$0xff]
  %v4468 = vld [vmem:[%s3915 + $0x244] sm:$0xff]
  %v4469 = vld [vmem:[%s3915 + $0x24c] sm:$0xff]
  %v4470 = vld [vmem:[%s3915 + $0x25c] sm:$0xff]
  %v4471 = vld [vmem:[%s3915 + $0x264] sm:$0xff]
  %v4472 = vld [vmem:[%s3915 + $0x274] sm:$0xff]
  %v4473 = vld [vmem:[%s3915 + $0x27c] sm:$0xff]
  %v4474 = vld [vmem:[%s3915 + $0x28c] sm:$0xff]
  %v4475 = vld [vmem:[%s3915 + $0x294] sm:$0xff]
  %v4476 = vld [vmem:[%s3915 + $0x2a4] sm:$0xff]
  %v4477 = vld [vmem:[%s3915 + $0x2ac] sm:$0xff]
  %v4478 = vld [vmem:[%s3915 + $0x2bc] sm:$0xff]
  %v4479 = vld [vmem:[%s3915 + $0x2c4] sm:$0xff]
  %v4480 = vld [vmem:[%s3915 + $0x2d4] sm:$0xff]
  %v4481 = vld [vmem:[%s3915 + $0x2dc] sm:$0xff]
  %v4482 = vld [vmem:[%s3915 + $0x2ec] sm:$0xff]
  %v4483 = vld [vmem:[%s3915 + $0x2f4] sm:$0xff]
  %v4484 = vld [vmem:[%s3915 + $0x304] sm:$0xff]
  %v4485 = vld [vmem:[%s3915 + $0x30c] sm:$0xff]
  %v4486 = vld [vmem:[%s3915 + $0x31c] sm:$0xff]
  %v4487 = vld [vmem:[%s3915 + $0x324] sm:$0xff]
  %v4488 = vld [vmem:[%s3915 + $0x334] sm:$0xff]
  %v4489 = vld [vmem:[%s3915 + $0x33c] sm:$0xff]
  %v4490 = vld [vmem:[%s3915 + $0x34c] sm:$0xff]
  %v4491 = vld [vmem:[%s3915 + $0x354] sm:$0xff]
  %4492 = vst.msk [vmem:[#allocation3 + $0x20] sm:$0xff] %vm1648, %v4428
  %4493 = vst.msk [vmem:[#allocation3 + $0x48] sm:$0xff] %vm1648, %v4429
  %4494 = vst.msk [vmem:[#allocation3 + $0x70] sm:$0xff] %vm1648, %v4430
  %4495 = vst.msk [vmem:[#allocation3 + $0x98] sm:$0xff] %vm1648, %v4431
  %4496 = vst.msk [vmem:[#allocation3 + $0xc0] sm:$0xff] %vm1648, %v4432
  %4497 = vst.msk [vmem:[#allocation3 + $0xe8] sm:$0xff] %vm1648, %v4433
  %4498 = vst.msk [vmem:[#allocation3 + $0x110] sm:$0xff] %vm1648, %v4434
  %4499 = vst.msk [vmem:[#allocation3 + $0x138] sm:$0xff] %vm1648, %v4435
  %4500 = vst.msk [vmem:[#allocation3 + $0x160] sm:$0xff] %vm1648, %v4436
  %4501 = vst.msk [vmem:[#allocation3 + $0x188] sm:$0xff] %vm1648, %v4437
  %4502 = vst.msk [vmem:[#allocation3 + $0x1b0] sm:$0xff] %vm1648, %v4438
  %4503 = vst.msk [vmem:[#allocation3 + $0x1d8] sm:$0xff] %vm1648, %v4439
  %4504 = vst.msk [vmem:[#allocation3 + $0x200] sm:$0xff] %vm1648, %v4440
  %4505 = vst.msk [vmem:[#allocation3 + $0x228] sm:$0xff] %vm1648, %v4441
  %4506 = vst.msk [vmem:[#allocation3 + $0x250] sm:$0xff] %vm1648, %v4442
  %4507 = vst.msk [vmem:[#allocation3 + $0x278] sm:$0xff] %vm1648, %v4443
  %4508 = vst.msk [vmem:[#allocation3 + $0x2a0] sm:$0xff] %vm1648, %v4444
  %4509 = vst.msk [vmem:[#allocation3 + $0x2c8] sm:$0xff] %vm1648, %v4445
  %4510 = vst.msk [vmem:[#allocation3 + $0x2f0] sm:$0xff] %vm1648, %v4446
  %4511 = vst.msk [vmem:[#allocation3 + $0x318] sm:$0xff] %vm1648, %v4447
  %4512 = vst.msk [vmem:[#allocation3 + $0x340] sm:$0xff] %vm1648, %v4448
  %4513 = vst.msk [vmem:[#allocation3 + $0x368] sm:$0xff] %vm1648, %v4449
  %4514 = vst.msk [vmem:[#allocation3 + $0x390] sm:$0xff] %vm1648, %v4450
  %4515 = vst.msk [vmem:[#allocation3 + $0x3b8] sm:$0xff] %vm1648, %v4451
  %4516 = vst.msk [vmem:[#allocation3 + $0x3e0] sm:$0xff] %vm1648, %v4452
  %4517 = vst.msk [vmem:[#allocation3 + $0x408] sm:$0xff] %vm1648, %v4453
  %4518 = vst.msk [vmem:[#allocation3 + $0x430] sm:$0xff] %vm1648, %v4454
  %4519 = vst.msk [vmem:[#allocation3 + $0x458] sm:$0xff] %vm1648, %v4455
  %4520 = vst.msk [vmem:[#allocation3 + $0x480] sm:$0xff] %vm1648, %v4456
  %4521 = vst.msk [vmem:[#allocation3 + $0x4a8] sm:$0xff] %vm1648, %v4457
  %4522 = vst.msk [vmem:[#allocation3 + $0x4d0] sm:$0xff] %vm1648, %v4458
  %4523 = vst.msk [vmem:[#allocation3 + $0x4f8] sm:$0xff] %vm1648, %v4459
  %4524 = vst.msk [vmem:[#allocation3 + $0x520] sm:$0xff] %vm1648, %v4460
  %4525 = vst.msk [vmem:[#allocation3 + $0x548] sm:$0xff] %vm1648, %v4461
  %4526 = vst.msk [vmem:[#allocation3 + $0x570] sm:$0xff] %vm1648, %v4462
  %4527 = vst.msk [vmem:[#allocation3 + $0x598] sm:$0xff] %vm1648, %v4463
  %4528 = vst.msk [vmem:[#allocation3 + $0x5c0] sm:$0xff] %vm1648, %v4464
  %4529 = vst.msk [vmem:[#allocation3 + $0x5e8] sm:$0xff] %vm1648, %v4465
  %4530 = vst.msk [vmem:[#allocation3 + $0x610] sm:$0xff] %vm1648, %v4466
  %4531 = vst.msk [vmem:[#allocation3 + $0x638] sm:$0xff] %vm1648, %v4467
  %4532 = vst.msk [vmem:[#allocation3 + $0x660] sm:$0xff] %vm1648, %v4468
  %4533 = vst.msk [vmem:[#allocation3 + $0x688] sm:$0xff] %vm1648, %v4469
  %4534 = vst.msk [vmem:[#allocation3 + $0x6b0] sm:$0xff] %vm1648, %v4470
  %4535 = vst.msk [vmem:[#allocation3 + $0x6d8] sm:$0xff] %vm1648, %v4471
  %4536 = vst.msk [vmem:[#allocation3 + $0x700] sm:$0xff] %vm1648, %v4472
  %4537 = vst.msk [vmem:[#allocation3 + $0x728] sm:$0xff] %vm1648, %v4473
  %4538 = vst.msk [vmem:[#allocation3 + $0x750] sm:$0xff] %vm1648, %v4474
  %4539 = vst.msk [vmem:[#allocation3 + $0x778] sm:$0xff] %vm1648, %v4475
  %4540 = vst.msk [vmem:[#allocation3 + $0x7a0] sm:$0xff] %vm1648, %v4476
  %4541 = vst.msk [vmem:[#allocation3 + $0x7c8] sm:$0xff] %vm1648, %v4477
  %4542 = vst.msk [vmem:[#allocation3 + $0x7f0] sm:$0xff] %vm1648, %v4478
  %4543 = vst.msk [vmem:[#allocation3 + $0x818] sm:$0xff] %vm1648, %v4479
  %4544 = vst.msk [vmem:[#allocation3 + $0x840] sm:$0xff] %vm1648, %v4480
  %4545 = vst.msk [vmem:[#allocation3 + $0x868] sm:$0xff] %vm1648, %v4481
  %4546 = vst.msk [vmem:[#allocation3 + $0x890] sm:$0xff] %vm1648, %v4482
  %4547 = vst.msk [vmem:[#allocation3 + $0x8b8] sm:$0xff] %vm1648, %v4483
  %4548 = vst.msk [vmem:[#allocation3 + $0x8e0] sm:$0xff] %vm1648, %v4484
  %4549 = vst.msk [vmem:[#allocation3 + $0x908] sm:$0xff] %vm1648, %v4485
  %4550 = vst.msk [vmem:[#allocation3 + $0x930] sm:$0xff] %vm1648, %v4486
  %4551 = vst.msk [vmem:[#allocation3 + $0x958] sm:$0xff] %vm1648, %v4487
  %4552 = vst.msk [vmem:[#allocation3 + $0x980] sm:$0xff] %vm1648, %v4488
  %4553 = vst.msk [vmem:[#allocation3 + $0x9a8] sm:$0xff] %vm1648, %v4489
  %4554 = vst.msk [vmem:[#allocation3 + $0x9d0] sm:$0xff] %vm1648, %v4490
  %4555 = vst.msk [vmem:[#allocation3 + $0x9f8] sm:$0xff] %vm1648, %v4491
  %v4556 = vld [vmem:[#allocation3] sm:$0xff]
  %v4557 = vld [vmem:[#allocation3 + $0x8] sm:$0xff]
  %v4558 = vld [vmem:[#allocation3 + $0x10] sm:$0xff]
  %v4559 = vld [vmem:[#allocation3 + $0x18] sm:$0xff]
  %v4560 = vld [vmem:[#allocation3 + $0x20] sm:$0xff]
  %v4561 = vld [vmem:[#allocation3 + $0x28] sm:$0xff]
  %v4562 = vld [vmem:[#allocation3 + $0x30] sm:$0xff]
  %v4563 = vld [vmem:[#allocation3 + $0x38] sm:$0xff]
  %v4564 = vld [vmem:[#allocation3 + $0x40] sm:$0xff]
  %v4565 = vld [vmem:[#allocation3 + $0x48] sm:$0xff]
  %v4566 = vld [vmem:[#allocation3 + $0x50] sm:$0xff]
  %v4567 = vld [vmem:[#allocation3 + $0x58] sm:$0xff]
  %v4568 = vld [vmem:[#allocation3 + $0x60] sm:$0xff]
  %v4569 = vld [vmem:[#allocation3 + $0x68] sm:$0xff]
  %v4570 = vld [vmem:[#allocation3 + $0x70] sm:$0xff]
  %v4571 = vld [vmem:[#allocation3 + $0x78] sm:$0xff]
  %v4572 = vld [vmem:[#allocation3 + $0x80] sm:$0xff]
  %v4573 = vld [vmem:[#allocation3 + $0x88] sm:$0xff]
  %v4574 = vld [vmem:[#allocation3 + $0x90] sm:$0xff]
  %v4575 = vld [vmem:[#allocation3 + $0x98] sm:$0xff]
  %v4576 = vld [vmem:[#allocation3 + $0xa0] sm:$0xff]
  %v4577 = vld [vmem:[#allocation3 + $0xa8] sm:$0xff]
  %v4578 = vld [vmem:[#allocation3 + $0xb0] sm:$0xff]
  %v4579 = vld [vmem:[#allocation3 + $0xb8] sm:$0xff]
  %v4580 = vld [vmem:[#allocation3 + $0xc0] sm:$0xff]
  %v4581 = vld [vmem:[#allocation3 + $0xc8] sm:$0xff]
  %v4582 = vld [vmem:[#allocation3 + $0xd0] sm:$0xff]
  %v4583 = vld [vmem:[#allocation3 + $0xd8] sm:$0xff]
  %v4584 = vld [vmem:[#allocation3 + $0xe0] sm:$0xff]
  %v4585 = vld [vmem:[#allocation3 + $0xe8] sm:$0xff]
  %v4586 = vld [vmem:[#allocation3 + $0xf0] sm:$0xff]
  %v4587 = vld [vmem:[#allocation3 + $0xf8] sm:$0xff]
  %v4588 = vld [vmem:[#allocation3 + $0x100] sm:$0xff]
  %v4589 = vld [vmem:[#allocation3 + $0x108] sm:$0xff]
  %v4590 = vld [vmem:[#allocation3 + $0x110] sm:$0xff]
  %v4591 = vld [vmem:[#allocation3 + $0x118] sm:$0xff]
  %v4592 = vld [vmem:[#allocation3 + $0x120] sm:$0xff]
  %v4593 = vld [vmem:[#allocation3 + $0x128] sm:$0xff]
  %v4594 = vld [vmem:[#allocation3 + $0x130] sm:$0xff]
  %v4595 = vld [vmem:[#allocation3 + $0x138] sm:$0xff]
  %v4596 = vld [vmem:[#allocation3 + $0x140] sm:$0xff]
  %v4597 = vld [vmem:[#allocation3 + $0x148] sm:$0xff]
  %v4598 = vld [vmem:[#allocation3 + $0x150] sm:$0xff]
  %v4599 = vld [vmem:[#allocation3 + $0x158] sm:$0xff]
  %v4600 = vld [vmem:[#allocation3 + $0x160] sm:$0xff]
  %v4601 = vld [vmem:[#allocation3 + $0x168] sm:$0xff]
  %v4602 = vld [vmem:[#allocation3 + $0x170] sm:$0xff]
  %v4603 = vld [vmem:[#allocation3 + $0x178] sm:$0xff]
  %v4604 = vld [vmem:[#allocation3 + $0x180] sm:$0xff]
  %v4605 = vld [vmem:[#allocation3 + $0x188] sm:$0xff]
  %v4606 = vld [vmem:[#allocation3 + $0x190] sm:$0xff]
  %v4607 = vld [vmem:[#allocation3 + $0x198] sm:$0xff]
  %v4608 = vld [vmem:[#allocation3 + $0x1a0] sm:$0xff]
  %v4609 = vld [vmem:[#allocation3 + $0x1a8] sm:$0xff]
  %v4610 = vld [vmem:[#allocation3 + $0x1b0] sm:$0xff]
  %v4611 = vld [vmem:[#allocation3 + $0x1b8] sm:$0xff]
  %v4612 = vld [vmem:[#allocation3 + $0x1c0] sm:$0xff]
  %v4613 = vld [vmem:[#allocation3 + $0x1c8] sm:$0xff]
  %v4614 = vld [vmem:[#allocation3 + $0x1d0] sm:$0xff]
  %v4615 = vld [vmem:[#allocation3 + $0x1d8] sm:$0xff]
  %v4616 = vld [vmem:[#allocation3 + $0x1e0] sm:$0xff]
  %v4617 = vld [vmem:[#allocation3 + $0x1e8] sm:$0xff]
  %v4618 = vld [vmem:[#allocation3 + $0x1f0] sm:$0xff]
  %v4619 = vld [vmem:[#allocation3 + $0x1f8] sm:$0xff]
  %v4620 = vld [vmem:[#allocation3 + $0x200] sm:$0xff]
  %v4621 = vld [vmem:[#allocation3 + $0x208] sm:$0xff]
  %v4622 = vld [vmem:[#allocation3 + $0x210] sm:$0xff]
  %v4623 = vld [vmem:[#allocation3 + $0x218] sm:$0xff]
  %v4624 = vld [vmem:[#allocation3 + $0x220] sm:$0xff]
  %v4625 = vld [vmem:[#allocation3 + $0x228] sm:$0xff]
  %v4626 = vld [vmem:[#allocation3 + $0x230] sm:$0xff]
  %v4627 = vld [vmem:[#allocation3 + $0x238] sm:$0xff]
  %v4628 = vld [vmem:[#allocation3 + $0x240] sm:$0xff]
  %v4629 = vld [vmem:[#allocation3 + $0x248] sm:$0xff]
  %v4630 = vld [vmem:[#allocation3 + $0x250] sm:$0xff]
  %v4631 = vld [vmem:[#allocation3 + $0x258] sm:$0xff]
  %v4632 = vld [vmem:[#allocation3 + $0x260] sm:$0xff]
  %v4633 = vld [vmem:[#allocation3 + $0x268] sm:$0xff]
  %v4634 = vld [vmem:[#allocation3 + $0x270] sm:$0xff]
  %v4635 = vld [vmem:[#allocation3 + $0x278] sm:$0xff]
  %v4636 = vld [vmem:[#allocation3 + $0x280] sm:$0xff]
  %v4637 = vld [vmem:[#allocation3 + $0x288] sm:$0xff]
  %v4638 = vld [vmem:[#allocation3 + $0x290] sm:$0xff]
  %v4639 = vld [vmem:[#allocation3 + $0x298] sm:$0xff]
  %v4640 = vld [vmem:[#allocation3 + $0x2a0] sm:$0xff]
  %v4641 = vld [vmem:[#allocation3 + $0x2a8] sm:$0xff]
  %v4642 = vld [vmem:[#allocation3 + $0x2b0] sm:$0xff]
  %v4643 = vld [vmem:[#allocation3 + $0x2b8] sm:$0xff]
  %v4644 = vld [vmem:[#allocation3 + $0x2c0] sm:$0xff]
  %v4645 = vld [vmem:[#allocation3 + $0x2c8] sm:$0xff]
  %v4646 = vld [vmem:[#allocation3 + $0x2d0] sm:$0xff]
  %v4647 = vld [vmem:[#allocation3 + $0x2d8] sm:$0xff]
  %v4648 = vld [vmem:[#allocation3 + $0x2e0] sm:$0xff]
  %v4649 = vld [vmem:[#allocation3 + $0x2e8] sm:$0xff]
  %v4650 = vld [vmem:[#allocation3 + $0x2f0] sm:$0xff]
  %v4651 = vld [vmem:[#allocation3 + $0x2f8] sm:$0xff]
  %v4652 = vld [vmem:[#allocation3 + $0x300] sm:$0xff]
  %v4653 = vld [vmem:[#allocation3 + $0x308] sm:$0xff]
  %v4654 = vld [vmem:[#allocation3 + $0x310] sm:$0xff]
  %v4655 = vld [vmem:[#allocation3 + $0x318] sm:$0xff]
  %v4656 = vld [vmem:[#allocation3 + $0x320] sm:$0xff]
  %v4657 = vld [vmem:[#allocation3 + $0x328] sm:$0xff]
  %v4658 = vld [vmem:[#allocation3 + $0x330] sm:$0xff]
  %v4659 = vld [vmem:[#allocation3 + $0x338] sm:$0xff]
  %v4660 = vld [vmem:[#allocation3 + $0x340] sm:$0xff]
  %v4661 = vld [vmem:[#allocation3 + $0x348] sm:$0xff]
  %v4662 = vld [vmem:[#allocation3 + $0x350] sm:$0xff]
  %v4663 = vld [vmem:[#allocation3 + $0x358] sm:$0xff]
  %v4664 = vld [vmem:[#allocation3 + $0x360] sm:$0xff]
  %v4665 = vld [vmem:[#allocation3 + $0x368] sm:$0xff]
  %v4666 = vld [vmem:[#allocation3 + $0x370] sm:$0xff]
  %v4667 = vld [vmem:[#allocation3 + $0x378] sm:$0xff]
  %v4668 = vld [vmem:[#allocation3 + $0x380] sm:$0xff]
  %v4669 = vld [vmem:[#allocation3 + $0x388] sm:$0xff]
  %v4670 = vld [vmem:[#allocation3 + $0x390] sm:$0xff]
  %v4671 = vld [vmem:[#allocation3 + $0x398] sm:$0xff]
  %v4672 = vld [vmem:[#allocation3 + $0x3a0] sm:$0xff]
  %v4673 = vld [vmem:[#allocation3 + $0x3a8] sm:$0xff]
  %v4674 = vld [vmem:[#allocation3 + $0x3b0] sm:$0xff]
  %v4675 = vld [vmem:[#allocation3 + $0x3b8] sm:$0xff]
  %v4676 = vld [vmem:[#allocation3 + $0x3c0] sm:$0xff]
  %v4677 = vld [vmem:[#allocation3 + $0x3c8] sm:$0xff]
  %v4678 = vld [vmem:[#allocation3 + $0x3d0] sm:$0xff]
  %v4679 = vld [vmem:[#allocation3 + $0x3d8] sm:$0xff]
  %v4680 = vld [vmem:[#allocation3 + $0x3e0] sm:$0xff]
  %v4681 = vld [vmem:[#allocation3 + $0x3e8] sm:$0xff]
  %v4682 = vld [vmem:[#allocation3 + $0x3f0] sm:$0xff]
  %v4683 = vld [vmem:[#allocation3 + $0x3f8] sm:$0xff]
  %v4684 = vld [vmem:[#allocation3 + $0x400] sm:$0xff]
  %v4685 = vld [vmem:[#allocation3 + $0x408] sm:$0xff]
  %v4686 = vld [vmem:[#allocation3 + $0x410] sm:$0xff]
  %v4687 = vld [vmem:[#allocation3 + $0x418] sm:$0xff]
  %v4688 = vld [vmem:[#allocation3 + $0x420] sm:$0xff]
  %v4689 = vld [vmem:[#allocation3 + $0x428] sm:$0xff]
  %v4690 = vld [vmem:[#allocation3 + $0x430] sm:$0xff]
  %v4691 = vld [vmem:[#allocation3 + $0x438] sm:$0xff]
  %v4692 = vld [vmem:[#allocation3 + $0x440] sm:$0xff]
  %v4693 = vld [vmem:[#allocation3 + $0x448] sm:$0xff]
  %v4694 = vld [vmem:[#allocation3 + $0x450] sm:$0xff]
  %v4695 = vld [vmem:[#allocation3 + $0x458] sm:$0xff]
  %v4696 = vld [vmem:[#allocation3 + $0x460] sm:$0xff]
  %v4697 = vld [vmem:[#allocation3 + $0x468] sm:$0xff]
  %v4698 = vld [vmem:[#allocation3 + $0x470] sm:$0xff]
  %v4699 = vld [vmem:[#allocation3 + $0x478] sm:$0xff]
  %v4700 = vld [vmem:[#allocation3 + $0x480] sm:$0xff]
  %v4701 = vld [vmem:[#allocation3 + $0x488] sm:$0xff]
  %v4702 = vld [vmem:[#allocation3 + $0x490] sm:$0xff]
  %v4703 = vld [vmem:[#allocation3 + $0x498] sm:$0xff]
  %v4704 = vld [vmem:[#allocation3 + $0x4a0] sm:$0xff]
  %v4705 = vld [vmem:[#allocation3 + $0x4a8] sm:$0xff]
  %v4706 = vld [vmem:[#allocation3 + $0x4b0] sm:$0xff]
  %v4707 = vld [vmem:[#allocation3 + $0x4b8] sm:$0xff]
  %v4708 = vld [vmem:[#allocation3 + $0x4c0] sm:$0xff]
  %v4709 = vld [vmem:[#allocation3 + $0x4c8] sm:$0xff]
  %v4710 = vld [vmem:[#allocation3 + $0x4d0] sm:$0xff]
  %v4711 = vld [vmem:[#allocation3 + $0x4d8] sm:$0xff]
  %v4712 = vld [vmem:[#allocation3 + $0x4e0] sm:$0xff]
  %v4713 = vld [vmem:[#allocation3 + $0x4e8] sm:$0xff]
  %v4714 = vld [vmem:[#allocation3 + $0x4f0] sm:$0xff]
  %v4715 = vld [vmem:[#allocation3 + $0x4f8] sm:$0xff]
  %v4716 = vld [vmem:[#allocation3 + $0x500] sm:$0xff]
  %v4717 = vld [vmem:[#allocation3 + $0x508] sm:$0xff]
  %v4718 = vld [vmem:[#allocation3 + $0x510] sm:$0xff]
  %v4719 = vld [vmem:[#allocation3 + $0x518] sm:$0xff]
  %v4720 = vld [vmem:[#allocation3 + $0x520] sm:$0xff]
  %v4721 = vld [vmem:[#allocation3 + $0x528] sm:$0xff]
  %v4722 = vld [vmem:[#allocation3 + $0x530] sm:$0xff]
  %v4723 = vld [vmem:[#allocation3 + $0x538] sm:$0xff]
  %v4724 = vld [vmem:[#allocation3 + $0x540] sm:$0xff]
  %v4725 = vld [vmem:[#allocation3 + $0x548] sm:$0xff]
  %v4726 = vld [vmem:[#allocation3 + $0x550] sm:$0xff]
  %v4727 = vld [vmem:[#allocation3 + $0x558] sm:$0xff]
  %v4728 = vld [vmem:[#allocation3 + $0x560] sm:$0xff]
  %v4729 = vld [vmem:[#allocation3 + $0x568] sm:$0xff]
  %v4730 = vld [vmem:[#allocation3 + $0x570] sm:$0xff]
  %v4731 = vld [vmem:[#allocation3 + $0x578] sm:$0xff]
  %v4732 = vld [vmem:[#allocation3 + $0x580] sm:$0xff]
  %v4733 = vld [vmem:[#allocation3 + $0x588] sm:$0xff]
  %v4734 = vld [vmem:[#allocation3 + $0x590] sm:$0xff]
  %v4735 = vld [vmem:[#allocation3 + $0x598] sm:$0xff]
  %v4736 = vld [vmem:[#allocation3 + $0x5a0] sm:$0xff]
  %v4737 = vld [vmem:[#allocation3 + $0x5a8] sm:$0xff]
  %v4738 = vld [vmem:[#allocation3 + $0x5b0] sm:$0xff]
  %v4739 = vld [vmem:[#allocation3 + $0x5b8] sm:$0xff]
  %v4740 = vld [vmem:[#allocation3 + $0x5c0] sm:$0xff]
  %v4741 = vld [vmem:[#allocation3 + $0x5c8] sm:$0xff]
  %v4742 = vld [vmem:[#allocation3 + $0x5d0] sm:$0xff]
  %v4743 = vld [vmem:[#allocation3 + $0x5d8] sm:$0xff]
  %v4744 = vld [vmem:[#allocation3 + $0x5e0] sm:$0xff]
  %v4745 = vld [vmem:[#allocation3 + $0x5e8] sm:$0xff]
  %v4746 = vld [vmem:[#allocation3 + $0x5f0] sm:$0xff]
  %v4747 = vld [vmem:[#allocation3 + $0x5f8] sm:$0xff]
  %v4748 = vld [vmem:[#allocation3 + $0x600] sm:$0xff]
  %v4749 = vld [vmem:[#allocation3 + $0x608] sm:$0xff]
  %v4750 = vld [vmem:[#allocation3 + $0x610] sm:$0xff]
  %v4751 = vld [vmem:[#allocation3 + $0x618] sm:$0xff]
  %v4752 = vld [vmem:[#allocation3 + $0x620] sm:$0xff]
  %v4753 = vld [vmem:[#allocation3 + $0x628] sm:$0xff]
  %v4754 = vld [vmem:[#allocation3 + $0x630] sm:$0xff]
  %v4755 = vld [vmem:[#allocation3 + $0x638] sm:$0xff]
  %v4756 = vld [vmem:[#allocation3 + $0x640] sm:$0xff]
  %v4757 = vld [vmem:[#allocation3 + $0x648] sm:$0xff]
  %v4758 = vld [vmem:[#allocation3 + $0x650] sm:$0xff]
  %v4759 = vld [vmem:[#allocation3 + $0x658] sm:$0xff]
  %v4760 = vld [vmem:[#allocation3 + $0x660] sm:$0xff]
  %v4761 = vld [vmem:[#allocation3 + $0x668] sm:$0xff]
  %v4762 = vld [vmem:[#allocation3 + $0x670] sm:$0xff]
  %v4763 = vld [vmem:[#allocation3 + $0x678] sm:$0xff]
  %v4764 = vld [vmem:[#allocation3 + $0x680] sm:$0xff]
  %v4765 = vld [vmem:[#allocation3 + $0x688] sm:$0xff]
  %v4766 = vld [vmem:[#allocation3 + $0x690] sm:$0xff]
  %v4767 = vld [vmem:[#allocation3 + $0x698] sm:$0xff]
  %v4768 = vld [vmem:[#allocation3 + $0x6a0] sm:$0xff]
  %v4769 = vld [vmem:[#allocation3 + $0x6a8] sm:$0xff]
  %v4770 = vld [vmem:[#allocation3 + $0x6b0] sm:$0xff]
  %v4771 = vld [vmem:[#allocation3 + $0x6b8] sm:$0xff]
  %v4772 = vld [vmem:[#allocation3 + $0x6c0] sm:$0xff]
  %v4773 = vld [vmem:[#allocation3 + $0x6c8] sm:$0xff]
  %v4774 = vld [vmem:[#allocation3 + $0x6d0] sm:$0xff]
  %v4775 = vld [vmem:[#allocation3 + $0x6d8] sm:$0xff]
  %v4776 = vld [vmem:[#allocation3 + $0x6e0] sm:$0xff]
  %v4777 = vld [vmem:[#allocation3 + $0x6e8] sm:$0xff]
  %v4778 = vld [vmem:[#allocation3 + $0x6f0] sm:$0xff]
  %v4779 = vld [vmem:[#allocation3 + $0x6f8] sm:$0xff]
  %v4780 = vld [vmem:[#allocation3 + $0x700] sm:$0xff]
  %v4781 = vld [vmem:[#allocation3 + $0x708] sm:$0xff]
  %v4782 = vld [vmem:[#allocation3 + $0x710] sm:$0xff]
  %v4783 = vld [vmem:[#allocation3 + $0x718] sm:$0xff]
  %v4784 = vld [vmem:[#allocation3 + $0x720] sm:$0xff]
  %v4785 = vld [vmem:[#allocation3 + $0x728] sm:$0xff]
  %v4786 = vld [vmem:[#allocation3 + $0x730] sm:$0xff]
  %v4787 = vld [vmem:[#allocation3 + $0x738] sm:$0xff]
  %v4788 = vld [vmem:[#allocation3 + $0x740] sm:$0xff]
  %v4789 = vld [vmem:[#allocation3 + $0x748] sm:$0xff]
  %v4790 = vld [vmem:[#allocation3 + $0x750] sm:$0xff]
  %v4791 = vld [vmem:[#allocation3 + $0x758] sm:$0xff]
  %v4792 = vld [vmem:[#allocation3 + $0x760] sm:$0xff]
  %v4793 = vld [vmem:[#allocation3 + $0x768] sm:$0xff]
  %v4794 = vld [vmem:[#allocation3 + $0x770] sm:$0xff]
  %v4795 = vld [vmem:[#allocation3 + $0x778] sm:$0xff]
  %v4796 = vld [vmem:[#allocation3 + $0x780] sm:$0xff]
  %v4797 = vld [vmem:[#allocation3 + $0x788] sm:$0xff]
  %v4798 = vld [vmem:[#allocation3 + $0x790] sm:$0xff]
  %v4799 = vld [vmem:[#allocation3 + $0x798] sm:$0xff]
  %v4800 = vld [vmem:[#allocation3 + $0x7a0] sm:$0xff]
  %v4801 = vld [vmem:[#allocation3 + $0x7a8] sm:$0xff]
  %v4802 = vld [vmem:[#allocation3 + $0x7b0] sm:$0xff]
  %v4803 = vld [vmem:[#allocation3 + $0x7b8] sm:$0xff]
  %v4804 = vld [vmem:[#allocation3 + $0x7c0] sm:$0xff]
  %v4805 = vld [vmem:[#allocation3 + $0x7c8] sm:$0xff]
  %v4806 = vld [vmem:[#allocation3 + $0x7d0] sm:$0xff]
  %v4807 = vld [vmem:[#allocation3 + $0x7d8] sm:$0xff]
  %v4808 = vld [vmem:[#allocation3 + $0x7e0] sm:$0xff]
  %v4809 = vld [vmem:[#allocation3 + $0x7e8] sm:$0xff]
  %v4810 = vld [vmem:[#allocation3 + $0x7f0] sm:$0xff]
  %v4811 = vld [vmem:[#allocation3 + $0x7f8] sm:$0xff]
  %v4812 = vld [vmem:[#allocation3 + $0x800] sm:$0xff]
  %v4813 = vld [vmem:[#allocation3 + $0x808] sm:$0xff]
  %v4814 = vld [vmem:[#allocation3 + $0x810] sm:$0xff]
  %v4815 = vld [vmem:[#allocation3 + $0x818] sm:$0xff]
  %v4816 = vld [vmem:[#allocation3 + $0x820] sm:$0xff]
  %v4817 = vld [vmem:[#allocation3 + $0x828] sm:$0xff]
  %v4818 = vld [vmem:[#allocation3 + $0x830] sm:$0xff]
  %v4819 = vld [vmem:[#allocation3 + $0x838] sm:$0xff]
  %v4820 = vld [vmem:[#allocation3 + $0x840] sm:$0xff]
  %v4821 = vld [vmem:[#allocation3 + $0x848] sm:$0xff]
  %v4822 = vld [vmem:[#allocation3 + $0x850] sm:$0xff]
  %v4823 = vld [vmem:[#allocation3 + $0x858] sm:$0xff]
  %v4824 = vld [vmem:[#allocation3 + $0x860] sm:$0xff]
  %v4825 = vld [vmem:[#allocation3 + $0x868] sm:$0xff]
  %v4826 = vld [vmem:[#allocation3 + $0x870] sm:$0xff]
  %v4827 = vld [vmem:[#allocation3 + $0x878] sm:$0xff]
  %v4828 = vld [vmem:[#allocation3 + $0x880] sm:$0xff]
  %v4829 = vld [vmem:[#allocation3 + $0x888] sm:$0xff]
  %v4830 = vld [vmem:[#allocation3 + $0x890] sm:$0xff]
  %v4831 = vld [vmem:[#allocation3 + $0x898] sm:$0xff]
  %v4832 = vld [vmem:[#allocation3 + $0x8a0] sm:$0xff]
  %v4833 = vld [vmem:[#allocation3 + $0x8a8] sm:$0xff]
  %v4834 = vld [vmem:[#allocation3 + $0x8b0] sm:$0xff]
  %v4835 = vld [vmem:[#allocation3 + $0x8b8] sm:$0xff]
  %v4836 = vld [vmem:[#allocation3 + $0x8c0] sm:$0xff]
  %v4837 = vld [vmem:[#allocation3 + $0x8c8] sm:$0xff]
  %v4838 = vld [vmem:[#allocation3 + $0x8d0] sm:$0xff]
  %v4839 = vld [vmem:[#allocation3 + $0x8d8] sm:$0xff]
  %v4840 = vld [vmem:[#allocation3 + $0x8e0] sm:$0xff]
  %v4841 = vld [vmem:[#allocation3 + $0x8e8] sm:$0xff]
  %v4842 = vld [vmem:[#allocation3 + $0x8f0] sm:$0xff]
  %v4843 = vld [vmem:[#allocation3 + $0x8f8] sm:$0xff]
  %v4844 = vld [vmem:[#allocation3 + $0x900] sm:$0xff]
  %v4845 = vld [vmem:[#allocation3 + $0x908] sm:$0xff]
  %v4846 = vld [vmem:[#allocation3 + $0x910] sm:$0xff]
  %v4847 = vld [vmem:[#allocation3 + $0x918] sm:$0xff]
  %v4848 = vld [vmem:[#allocation3 + $0x920] sm:$0xff]
  %v4849 = vld [vmem:[#allocation3 + $0x928] sm:$0xff]
  %v4850 = vld [vmem:[#allocation3 + $0x930] sm:$0xff]
  %v4851 = vld [vmem:[#allocation3 + $0x938] sm:$0xff]
  %v4852 = vld [vmem:[#allocation3 + $0x940] sm:$0xff]
  %v4853 = vld [vmem:[#allocation3 + $0x948] sm:$0xff]
  %v4854 = vld [vmem:[#allocation3 + $0x950] sm:$0xff]
  %v4855 = vld [vmem:[#allocation3 + $0x958] sm:$0xff]
  %v4856 = vld [vmem:[#allocation3 + $0x960] sm:$0xff]
  %v4857 = vld [vmem:[#allocation3 + $0x968] sm:$0xff]
  %v4858 = vld [vmem:[#allocation3 + $0x970] sm:$0xff]
  %v4859 = vld [vmem:[#allocation3 + $0x978] sm:$0xff]
  %v4860 = vld [vmem:[#allocation3 + $0x980] sm:$0xff]
  %v4861 = vld [vmem:[#allocation3 + $0x988] sm:$0xff]
  %v4862 = vld [vmem:[#allocation3 + $0x990] sm:$0xff]
  %v4863 = vld [vmem:[#allocation3 + $0x998] sm:$0xff]
  %v4864 = vld [vmem:[#allocation3 + $0x9a0] sm:$0xff]
  %v4865 = vld [vmem:[#allocation3 + $0x9a8] sm:$0xff]
  %v4866 = vld [vmem:[#allocation3 + $0x9b0] sm:$0xff]
  %v4867 = vld [vmem:[#allocation3 + $0x9b8] sm:$0xff]
  %v4868 = vld [vmem:[#allocation3 + $0x9c0] sm:$0xff]
  %v4869 = vld [vmem:[#allocation3 + $0x9c8] sm:$0xff]
  %v4870 = vld [vmem:[#allocation3 + $0x9d0] sm:$0xff]
  %v4871 = vld [vmem:[#allocation3 + $0x9d8] sm:$0xff]
  %v4872 = vld [vmem:[#allocation3 + $0x9e0] sm:$0xff]
  %v4873 = vld [vmem:[#allocation3 + $0x9e8] sm:$0xff]
  %v4874 = vld [vmem:[#allocation3 + $0x9f0] sm:$0xff]
  %v4875 = vld [vmem:[#allocation3 + $0x9f8] sm:$0xff]
  %v4876 = vld [vmem:[%s2] sm:$0xff]
  %v4877 = vld [vmem:[%s2 + $0x8] sm:$0xff]
  %v4878 = vld [vmem:[%s2 + $0x10] sm:$0xff]
  %v4879 = vld [vmem:[%s2 + $0x18] sm:$0xff]
  %v4880 = vld [vmem:[%s2 + $0x20] sm:$0xff]
  %v4881 = vld [vmem:[%s2 + $0x28] sm:$0xff]
  %v4882 = vld [vmem:[%s2 + $0x30] sm:$0xff]
  %v4883 = vld [vmem:[%s2 + $0x38] sm:$0xff]
  %v4884 = vld [vmem:[%s2 + $0x40] sm:$0xff]
  %v4885 = vld [vmem:[%s2 + $0x48] sm:$0xff]
  %v4886 = vld [vmem:[%s2 + $0x50] sm:$0xff]
  %v4887 = vld [vmem:[%s2 + $0x58] sm:$0xff]
  %v4888 = vld [vmem:[%s2 + $0x60] sm:$0xff]
  %v4889 = vld [vmem:[%s2 + $0x68] sm:$0xff]
  %v4890 = vld [vmem:[%s2 + $0x70] sm:$0xff]
  %v4891 = vld [vmem:[%s2 + $0x78] sm:$0xff]
  %v4892 = vld [vmem:[%s2 + $0x80] sm:$0xff]
  %v4893 = vld [vmem:[%s2 + $0x88] sm:$0xff]
  %v4894 = vld [vmem:[%s2 + $0x90] sm:$0xff]
  %v4895 = vld [vmem:[%s2 + $0x98] sm:$0xff]
  %v4896 = vld [vmem:[%s2 + $0xa0] sm:$0xff]
  %v4897 = vld [vmem:[%s2 + $0xa8] sm:$0xff]
  %v4898 = vld [vmem:[%s2 + $0xb0] sm:$0xff]
  %v4899 = vld [vmem:[%s2 + $0xb8] sm:$0xff]
  %v4900 = vld [vmem:[%s2 + $0xc0] sm:$0xff]
  %v4901 = vld [vmem:[%s2 + $0xc8] sm:$0xff]
  %v4902 = vld [vmem:[%s2 + $0xd0] sm:$0xff]
  %v4903 = vld [vmem:[%s2 + $0xd8] sm:$0xff]
  %v4904 = vld [vmem:[%s2 + $0xe0] sm:$0xff]
  %v4905 = vld [vmem:[%s2 + $0xe8] sm:$0xff]
  %v4906 = vld [vmem:[%s2 + $0xf0] sm:$0xff]
  %v4907 = vld [vmem:[%s2 + $0xf8] sm:$0xff]
  %v4908 = vld [vmem:[%s2 + $0x100] sm:$0xff]
  %v4909 = vld [vmem:[%s2 + $0x108] sm:$0xff]
  %v4910 = vld [vmem:[%s2 + $0x110] sm:$0xff]
  %v4911 = vld [vmem:[%s2 + $0x118] sm:$0xff]
  %v4912 = vld [vmem:[%s2 + $0x120] sm:$0xff]
  %v4913 = vld [vmem:[%s2 + $0x128] sm:$0xff]
  %v4914 = vld [vmem:[%s2 + $0x130] sm:$0xff]
  %v4915 = vld [vmem:[%s2 + $0x138] sm:$0xff]
  %v4916 = vld [vmem:[%s2 + $0x140] sm:$0xff]
  %v4917 = vld [vmem:[%s2 + $0x148] sm:$0xff]
  %v4918 = vld [vmem:[%s2 + $0x150] sm:$0xff]
  %v4919 = vld [vmem:[%s2 + $0x158] sm:$0xff]
  %v4920 = vld [vmem:[%s2 + $0x160] sm:$0xff]
  %v4921 = vld [vmem:[%s2 + $0x168] sm:$0xff]
  %v4922 = vld [vmem:[%s2 + $0x170] sm:$0xff]
  %v4923 = vld [vmem:[%s2 + $0x178] sm:$0xff]
  %v4924 = vld [vmem:[%s2 + $0x180] sm:$0xff]
  %v4925 = vld [vmem:[%s2 + $0x188] sm:$0xff]
  %v4926 = vld [vmem:[%s2 + $0x190] sm:$0xff]
  %v4927 = vld [vmem:[%s2 + $0x198] sm:$0xff]
  %v4928 = vld [vmem:[%s2 + $0x1a0] sm:$0xff]
  %v4929 = vld [vmem:[%s2 + $0x1a8] sm:$0xff]
  %v4930 = vld [vmem:[%s2 + $0x1b0] sm:$0xff]
  %v4931 = vld [vmem:[%s2 + $0x1b8] sm:$0xff]
  %v4932 = vld [vmem:[%s2 + $0x1c0] sm:$0xff]
  %v4933 = vld [vmem:[%s2 + $0x1c8] sm:$0xff]
  %v4934 = vld [vmem:[%s2 + $0x1d0] sm:$0xff]
  %v4935 = vld [vmem:[%s2 + $0x1d8] sm:$0xff]
  %v4936 = vld [vmem:[%s2 + $0x1e0] sm:$0xff]
  %v4937 = vld [vmem:[%s2 + $0x1e8] sm:$0xff]
  %v4938 = vld [vmem:[%s2 + $0x1f0] sm:$0xff]
  %v4939 = vld [vmem:[%s2 + $0x1f8] sm:$0xff]
  %v4940 = vld [vmem:[%s2 + $0x200] sm:$0xff]
  %v4941 = vld [vmem:[%s2 + $0x208] sm:$0xff]
  %v4942 = vld [vmem:[%s2 + $0x210] sm:$0xff]
  %v4943 = vld [vmem:[%s2 + $0x218] sm:$0xff]
  %v4944 = vld [vmem:[%s2 + $0x220] sm:$0xff]
  %v4945 = vld [vmem:[%s2 + $0x228] sm:$0xff]
  %v4946 = vld [vmem:[%s2 + $0x230] sm:$0xff]
  %v4947 = vld [vmem:[%s2 + $0x238] sm:$0xff]
  %v4949 = vsel %vm1648, %v4560, 0
  %v4952 = vsel %vm1648, %v4565, 0
  %v4955 = vsel %vm1648, %v4570, 0
  %v4958 = vsel %vm1648, %v4575, 0
  %v4961 = vsel %vm1648, %v4580, 0
  %v4964 = vsel %vm1648, %v4585, 0
  %v4967 = vsel %vm1648, %v4590, 0
  %v4970 = vsel %vm1648, %v4595, 0
  %v4973 = vsel %vm1648, %v4600, 0
  %v4976 = vsel %vm1648, %v4605, 0
  %v4979 = vsel %vm1648, %v4610, 0
  %v4982 = vsel %vm1648, %v4615, 0
  %v4985 = vsel %vm1648, %v4620, 0
  %v4988 = vsel %vm1648, %v4625, 0
  %v4991 = vsel %vm1648, %v4630, 0
  %v4994 = vsel %vm1648, %v4635, 0
  %v4997 = vsel %vm1648, %v4640, 0
  %v5000 = vsel %vm1648, %v4645, 0
  %v5003 = vsel %vm1648, %v4650, 0
  %v5006 = vsel %vm1648, %v4655, 0
  %v5009 = vsel %vm1648, %v4660, 0
  %v5012 = vsel %vm1648, %v4665, 0
  %v5015 = vsel %vm1648, %v4670, 0
  %v5018 = vsel %vm1648, %v4675, 0
  %v5021 = vsel %vm1648, %v4680, 0
  %v5024 = vsel %vm1648, %v4685, 0
  %v5027 = vsel %vm1648, %v4690, 0
  %v5030 = vsel %vm1648, %v4695, 0
  %v5033 = vsel %vm1648, %v4700, 0
  %v5036 = vsel %vm1648, %v4705, 0
  %v5039 = vsel %vm1648, %v4710, 0
  %v5042 = vsel %vm1648, %v4715, 0
  %v5045 = vsel %vm1648, %v4720, 0
  %v5048 = vsel %vm1648, %v4725, 0
  %v5051 = vsel %vm1648, %v4730, 0
  %v5054 = vsel %vm1648, %v4735, 0
  %v5057 = vsel %vm1648, %v4740, 0
  %v5060 = vsel %vm1648, %v4745, 0
  %v5063 = vsel %vm1648, %v4750, 0
  %v5066 = vsel %vm1648, %v4755, 0
  %v5069 = vsel %vm1648, %v4760, 0
  %v5072 = vsel %vm1648, %v4765, 0
  %v5075 = vsel %vm1648, %v4770, 0
  %v5078 = vsel %vm1648, %v4775, 0
  %v5081 = vsel %vm1648, %v4780, 0
  %v5084 = vsel %vm1648, %v4785, 0
  %v5087 = vsel %vm1648, %v4790, 0
  %v5090 = vsel %vm1648, %v4795, 0
  %v5093 = vsel %vm1648, %v4800, 0
  %v5096 = vsel %vm1648, %v4805, 0
  %v5099 = vsel %vm1648, %v4810, 0
  %v5102 = vsel %vm1648, %v4815, 0
  %v5105 = vsel %vm1648, %v4820, 0
  %v5108 = vsel %vm1648, %v4825, 0
  %v5111 = vsel %vm1648, %v4830, 0
  %v5114 = vsel %vm1648, %v4835, 0
  %v5117 = vsel %vm1648, %v4840, 0
  %v5120 = vsel %vm1648, %v4845, 0
  %v5123 = vsel %vm1648, %v4850, 0
  %v5126 = vsel %vm1648, %v4855, 0
  %v5129 = vsel %vm1648, %v4860, 0
  %v5132 = vsel %vm1648, %v4865, 0
  %v5135 = vsel %vm1648, %v4870, 0
  %v5138 = vsel %vm1648, %v4875, 0
  %5140 = vmatprep.subr.mxu0 0.0
  %5141 = vmatpush1.msra.mxu0 %v4876
  %5142 = vmatprep.subr.mxu0 0.0
  %5143 = vmatpush1.msra.mxu0 %v4877
  %5144 = vmatprep.subr.mxu0 0.0
  %5145 = vmatpush1.msra.mxu0 %v4878
  %5146 = vmatprep.subr.mxu0 0.0
  %5147 = vmatpush1.msra.mxu0 %v4879
  %5148 = vmatprep.subr.mxu0 0.0
  %5149 = vmatpush1.msra.mxu0 %v4880
  %5150 = vmatprep.subr.mxu0 0.0
  %5151 = vmatpush1.msra.mxu0 %v4881
  %5152 = vmatprep.subr.mxu0 0.0
  %5153 = vmatpush1.msra.mxu0 %v4882
  %5154 = vmatprep.subr.mxu0 0.0
  %5155 = vmatpush1.msra.mxu0 %v4883
  %5156 = vmatprep.subr.mxu0 0.0
  %5157 = vmatpush1.msra.mxu0 %v4884
  %5158 = vmatprep.subr.mxu0 0.0
  %5159 = vmatpush1.msra.mxu0 %v4885
  %5160 = vmatprep.subr.mxu0 0.0
  %5161 = vmatpush1.msra.mxu0 %v4886
  %5162 = vmatprep.subr.mxu0 0.0
  %5163 = vmatpush1.msra.mxu0 %v4887
  %5164 = vmatprep.subr.mxu0 0.0
  %5165 = vmatpush1.msra.mxu0 %v4888
  %5166 = vmatprep.subr.mxu0 0.0
  %5167 = vmatpush1.msra.mxu0 %v4889
  %5168 = vmatprep.subr.mxu0 0.0
  %5169 = vmatpush1.msra.mxu0 %v4890
  %5170 = vmatprep.subr.mxu0 0.0
  %5171 = vmatpush1.msra.mxu0 %v4891
  %5172 = vmatprep.subr.mxu0 0.0
  %5173 = vmatpush1.msra.mxu0 %v4892
  %5174 = vmatprep.subr.mxu0 0.0
  %5175 = vmatpush1.msra.mxu0 %v4893
  %5176 = vmatprep.subr.mxu0 0.0
  %5177 = vmatpush1.msra.mxu0 %v4894
  %5178 = vmatprep.subr.mxu0 0.0
  %5179 = vmatpush1.msra.mxu0 %v4895
  %5180 = vmatprep.subr.mxu0 0.0
  %5181 = vmatpush1.msra.mxu0 %v4896
  %5182 = vmatprep.subr.mxu0 0.0
  %5183 = vmatpush1.msra.mxu0 %v4897
  %5184 = vmatprep.subr.mxu0 0.0
  %5185 = vmatpush1.msra.mxu0 %v4898
  %5186 = vmatprep.subr.mxu0 0.0
  %5187 = vmatpush1.msra.mxu0 %v4899
  %5188 = vmatprep.subr.mxu0 0.0
  %5189 = vmatpush1.msra.mxu0 %v4900
  %5190 = vmatprep.subr.mxu0 0.0
  %5191 = vmatpush1.msra.mxu0 %v4901
  %5192 = vmatprep.subr.mxu0 0.0
  %5193 = vmatpush1.msra.mxu0 %v4902
  %5194 = vmatprep.subr.mxu0 0.0
  %5195 = vmatpush1.msra.mxu0 %v4903
  %5196 = vmatprep.subr.mxu0 0.0
  %5197 = vmatpush1.msra.mxu0 %v4904
  %5198 = vmatprep.subr.mxu0 0.0
  %5199 = vmatpush1.msra.mxu0 %v4905
  %5200 = vmatprep.subr.mxu0 0.0
  %5201 = vmatpush1.msra.mxu0 %v4906
  %5202 = vmatprep.subr.mxu0 0.0
  %5203 = vmatpush1.msra.mxu0 %v4907
  %5204 = vmatprep.mubr.f32.mxu0 %v4557
  %5205 = vmatmul.mubr.f32.gmra.mrb[0].mxu0 %v4556
  %v5206 = vpop.f32.mrb[0].mxu0
  %v5207 = vadd.f32 0.0, %v5206
  %v5208 = vpop.f32.mrb[0].mxu0
  %5209 = vmatprep.mubr.f32.mxu0 %v4562
  %5210 = vmatmul.mubr.f32.gmra.mrb[0].mxu0 %v4561
  %v5211 = vpop.f32.mrb[0].mxu0
  %v5212 = vadd.f32 0.0, %v5211
  %v5213 = vpop.f32.mrb[0].mxu0
  %5214 = vmatprep.mubr.f32.mxu0 %v4567
  %5215 = vmatmul.mubr.f32.gmra.mrb[0].mxu0 %v4566
  %v5216 = vpop.f32.mrb[0].mxu0
  %v5217 = vadd.f32 0.0, %v5216
  %v5218 = vpop.f32.mrb[0].mxu0
  %5219 = vmatprep.mubr.f32.mxu0 %v4572
  %5220 = vmatmul.mubr.f32.gmra.mrb[0].mxu0 %v4571
  %v5221 = vpop.f32.mrb[0].mxu0
  %v5222 = vadd.f32 0.0, %v5221
  %v5223 = vpop.f32.mrb[0].mxu0
  %5224 = vmatprep.mubr.f32.mxu0 %v4577
  %5225 = vmatmul.mubr.f32.gmra.mrb[0].mxu0 %v4576
  %v5226 = vpop.f32.mrb[0].mxu0
  %v5227 = vadd.f32 0.0, %v5226
  %v5228 = vpop.f32.mrb[0].mxu0
  %5229 = vmatprep.mubr.f32.mxu0 %v4582
  %5230 = vmatmul.mubr.f32.gmra.mrb[0].mxu0 %v4581
  %v5231 = vpop.f32.mrb[0].mxu0
  %v5232 = vadd.f32 0.0, %v5231
  %v5233 = vpop.f32.mrb[0].mxu0
  %5234 = vmatprep.mubr.f32.mxu0 %v4587
  %5235 = vmatmul.mubr.f32.gmra.mrb[0].mxu0 %v4586
  %v5236 = vpop.f32.mrb[0].mxu0
  %v5237 = vadd.f32 0.0, %v5236
  %v5238 = vpop.f32.mrb[0].mxu0
  %5239 = vmatprep.mubr.f32.mxu0 %v4592
  %5240 = vmatmul.mubr.f32.gmra.mrb[0].mxu0 %v4591
  %v5241 = vpop.f32.mrb[0].mxu0
  %v5242 = vadd.f32 0.0, %v5241
  %v5243 = vpop.f32.mrb[0].mxu0
  %5244 = vmatprep.mubr.f32.mxu0 %v4597
  %5245 = vmatmul.mubr.f32.gmra.mrb[0].mxu0 %v4596
  %v5246 = vpop.f32.mrb[0].mxu0
  %v5247 = vadd.f32 0.0, %v5246
  %v5248 = vpop.f32.mrb[0].mxu0
  %5249 = vmatprep.mubr.f32.mxu0 %v4602
  %5250 = vmatmul.mubr.f32.gmra.mrb[0].mxu0 %v4601
  %v5251 = vpop.f32.mrb[0].mxu0
  %v5252 = vadd.f32 0.0, %v5251
  %v5253 = vpop.f32.mrb[0].mxu0
  %5254 = vmatprep.mubr.f32.mxu0 %v4607
  %5255 = vmatmul.mubr.f32.gmra.mrb[0].mxu0 %v4606
  %v5256 = vpop.f32.mrb[0].mxu0
  %v5257 = vadd.f32 0.0, %v5256
  %v5258 = vpop.f32.mrb[0].mxu0
  %5259 = vmatprep.mubr.f32.mxu0 %v4612
  %5260 = vmatmul.mubr.f32.gmra.mrb[0].mxu0 %v4611
  %v5261 = vpop.f32.mrb[0].mxu0
  %v5262 = vadd.f32 0.0, %v5261
  %v5263 = vpop.f32.mrb[0].mxu0
  %5264 = vmatprep.mubr.f32.mxu0 %v4617
  %5265 = vmatmul.mubr.f32.gmra.mrb[0].mxu0 %v4616
  %v5266 = vpop.f32.mrb[0].mxu0
  %v5267 = vadd.f32 0.0, %v5266
  %v5268 = vpop.f32.mrb[0].mxu0
  %5269 = vmatprep.mubr.f32.mxu0 %v4622
  %5270 = vmatmul.mubr.f32.gmra.mrb[0].mxu0 %v4621
  %v5271 = vpop.f32.mrb[0].mxu0
  %v5272 = vadd.f32 0.0, %v5271
  %v5273 = vpop.f32.mrb[0].mxu0
  %5274 = vmatprep.mubr.f32.mxu0 %v4627
  %5275 = vmatmul.mubr.f32.gmra.mrb[0].mxu0 %v4626
  %v5276 = vpop.f32.mrb[0].mxu0
  %v5277 = vadd.f32 0.0, %v5276
  %v5278 = vpop.f32.mrb[0].mxu0
  %5279 = vmatprep.mubr.f32.mxu0 %v4632
  %5280 = vmatmul.mubr.f32.gmra.mrb[0].mxu0 %v4631
  %v5281 = vpop.f32.mrb[0].mxu0
  %v5282 = vadd.f32 0.0, %v5281
  %v5283 = vpop.f32.mrb[0].mxu0
  %5284 = vmatprep.mubr.f32.mxu0 %v4637
  %5285 = vmatmul.mubr.f32.gmra.mrb[0].mxu0 %v4636
  %v5286 = vpop.f32.mrb[0].mxu0
  %v5287 = vadd.f32 0.0, %v5286
  %v5288 = vpop.f32.mrb[0].mxu0
  %5289 = vmatprep.mubr.f32.mxu0 %v4642
  %5290 = vmatmul.mubr.f32.gmra.mrb[0].mxu0 %v4641
  %v5291 = vpop.f32.mrb[0].mxu0
  %v5292 = vadd.f32 0.0, %v5291
  %v5293 = vpop.f32.mrb[0].mxu0
  %5294 = vmatprep.mubr.f32.mxu0 %v4647
  %5295 = vmatmul.mubr.f32.gmra.mrb[0].mxu0 %v4646
  %v5296 = vpop.f32.mrb[0].mxu0
  %v5297 = vadd.f32 0.0, %v5296
  %v5298 = vpop.f32.mrb[0].mxu0
  %5299 = vmatprep.mubr.f32.mxu0 %v4652
  %5300 = vmatmul.mubr.f32.gmra.mrb[0].mxu0 %v4651
  %v5301 = vpop.f32.mrb[0].mxu0
  %v5302 = vadd.f32 0.0, %v5301
  %v5303 = vpop.f32.mrb[0].mxu0
  %5304 = vmatprep.mubr.f32.mxu0 %v4657
  %5305 = vmatmul.mubr.f32.gmra.mrb[0].mxu0 %v4656
  %v5306 = vpop.f32.mrb[0].mxu0
  %v5307 = vadd.f32 0.0, %v5306
  %v5308 = vpop.f32.mrb[0].mxu0
  %5309 = vmatprep.mubr.f32.mxu0 %v4662
  %5310 = vmatmul.mubr.f32.gmra.mrb[0].mxu0 %v4661
  %v5311 = vpop.f32.mrb[0].mxu0
  %v5312 = vadd.f32 0.0, %v5311
  %v5313 = vpop.f32.mrb[0].mxu0
  %5314 = vmatprep.mubr.f32.mxu0 %v4667
  %5315 = vmatmul.mubr.f32.gmra.mrb[0].mxu0 %v4666
  %v5316 = vpop.f32.mrb[0].mxu0
  %v5317 = vadd.f32 0.0, %v5316
  %v5318 = vpop.f32.mrb[0].mxu0
  %5319 = vmatprep.mubr.f32.mxu0 %v4672
  %5320 = vmatmul.mubr.f32.gmra.mrb[0].mxu0 %v4671
  %v5321 = vpop.f32.mrb[0].mxu0
  %v5322 = vadd.f32 0.0, %v5321
  %v5323 = vpop.f32.mrb[0].mxu0
  %5324 = vmatprep.mubr.f32.mxu0 %v4677
  %5325 = vmatmul.mubr.f32.gmra.mrb[0].mxu0 %v4676
  %v5326 = vpop.f32.mrb[0].mxu0
  %v5327 = vadd.f32 0.0, %v5326
  %v5328 = vpop.f32.mrb[0].mxu0
  %5329 = vmatprep.mubr.f32.mxu0 %v4682
  %5330 = vmatmul.mubr.f32.gmra.mrb[0].mxu0 %v4681
  %v5331 = vpop.f32.mrb[0].mxu0
  %v5332 = vadd.f32 0.0, %v5331
  %v5333 = vpop.f32.mrb[0].mxu0
  %5334 = vmatprep.mubr.f32.mxu0 %v4687
  %5335 = vmatmul.mubr.f32.gmra.mrb[0].mxu0 %v4686
  %v5336 = vpop.f32.mrb[0].mxu0
  %v5337 = vadd.f32 0.0, %v5336
  %v5338 = vpop.f32.mrb[0].mxu0
  %5339 = vmatprep.mubr.f32.mxu0 %v4692
  %5340 = vmatmul.mubr.f32.gmra.mrb[0].mxu0 %v4691
  %v5341 = vpop.f32.mrb[0].mxu0
  %v5342 = vadd.f32 0.0, %v5341
  %v5343 = vpop.f32.mrb[0].mxu0
  %5344 = vmatprep.mubr.f32.mxu0 %v4697
  %5345 = vmatmul.mubr.f32.gmra.mrb[0].mxu0 %v4696
  %v5346 = vpop.f32.mrb[0].mxu0
  %v5347 = vadd.f32 0.0, %v5346
  %v5348 = vpop.f32.mrb[0].mxu0
  %5349 = vmatprep.mubr.f32.mxu0 %v4702
  %5350 = vmatmul.mubr.f32.gmra.mrb[0].mxu0 %v4701
  %v5351 = vpop.f32.mrb[0].mxu0
  %v5352 = vadd.f32 0.0, %v5351
  %v5353 = vpop.f32.mrb[0].mxu0
  %5354 = vmatprep.mubr.f32.mxu0 %v4707
  %5355 = vmatmul.mubr.f32.gmra.mrb[0].mxu0 %v4706
  %v5356 = vpop.f32.mrb[0].mxu0
  %v5357 = vadd.f32 0.0, %v5356
  %v5358 = vpop.f32.mrb[0].mxu0
  %5359 = vmatprep.mubr.f32.mxu0 %v4712
  %5360 = vmatmul.mubr.f32.gmra.mrb[0].mxu0 %v4711
  %v5361 = vpop.f32.mrb[0].mxu0
  %v5362 = vadd.f32 0.0, %v5361
  %v5363 = vpop.f32.mrb[0].mxu0
  %5364 = vmatprep.mubr.f32.mxu0 %v4717
  %5365 = vmatmul.mubr.f32.gmra.mrb[0].mxu0 %v4716
  %v5366 = vpop.f32.mrb[0].mxu0
  %v5367 = vadd.f32 0.0, %v5366
  %v5368 = vpop.f32.mrb[0].mxu0
  %5369 = vmatprep.mubr.f32.mxu0 %v4722
  %5370 = vmatmul.mubr.f32.gmra.mrb[0].mxu0 %v4721
  %v5371 = vpop.f32.mrb[0].mxu0
  %v5372 = vadd.f32 0.0, %v5371
  %v5373 = vpop.f32.mrb[0].mxu0
  %5374 = vmatprep.mubr.f32.mxu0 %v4727
  %5375 = vmatmul.mubr.f32.gmra.mrb[0].mxu0 %v4726
  %v5376 = vpop.f32.mrb[0].mxu0
  %v5377 = vadd.f32 0.0, %v5376
  %v5378 = vpop.f32.mrb[0].mxu0
  %5379 = vmatprep.mubr.f32.mxu0 %v4732
  %5380 = vmatmul.mubr.f32.gmra.mrb[0].mxu0 %v4731
  %v5381 = vpop.f32.mrb[0].mxu0
  %v5382 = vadd.f32 0.0, %v5381
  %v5383 = vpop.f32.mrb[0].mxu0
  %5384 = vmatprep.mubr.f32.mxu0 %v4737
  %5385 = vmatmul.mubr.f32.gmra.mrb[0].mxu0 %v4736
  %v5386 = vpop.f32.mrb[0].mxu0
  %v5387 = vadd.f32 0.0, %v5386
  %v5388 = vpop.f32.mrb[0].mxu0
  %5389 = vmatprep.mubr.f32.mxu0 %v4742
  %5390 = vmatmul.mubr.f32.gmra.mrb[0].mxu0 %v4741
  %v5391 = vpop.f32.mrb[0].mxu0
  %v5392 = vadd.f32 0.0, %v5391
  %v5393 = vpop.f32.mrb[0].mxu0
  %5394 = vmatprep.mubr.f32.mxu0 %v4747
  %5395 = vmatmul.mubr.f32.gmra.mrb[0].mxu0 %v4746
  %v5396 = vpop.f32.mrb[0].mxu0
  %v5397 = vadd.f32 0.0, %v5396
  %v5398 = vpop.f32.mrb[0].mxu0
  %5399 = vmatprep.mubr.f32.mxu0 %v4752
  %5400 = vmatmul.mubr.f32.gmra.mrb[0].mxu0 %v4751
  %v5401 = vpop.f32.mrb[0].mxu0
  %v5402 = vadd.f32 0.0, %v5401
  %v5403 = vpop.f32.mrb[0].mxu0
  %5404 = vmatprep.mubr.f32.mxu0 %v4757
  %5405 = vmatmul.mubr.f32.gmra.mrb[0].mxu0 %v4756
  %v5406 = vpop.f32.mrb[0].mxu0
  %v5407 = vadd.f32 0.0, %v5406
  %v5408 = vpop.f32.mrb[0].mxu0
  %5409 = vmatprep.mubr.f32.mxu0 %v4762
  %5410 = vmatmul.mubr.f32.gmra.mrb[0].mxu0 %v4761
  %v5411 = vpop.f32.mrb[0].mxu0
  %v5412 = vadd.f32 0.0, %v5411
  %v5413 = vpop.f32.mrb[0].mxu0
  %5414 = vmatprep.mubr.f32.mxu0 %v4767
  %5415 = vmatmul.mubr.f32.gmra.mrb[0].mxu0 %v4766
  %v5416 = vpop.f32.mrb[0].mxu0
  %v5417 = vadd.f32 0.0, %v5416
  %v5418 = vpop.f32.mrb[0].mxu0
  %5419 = vmatprep.mubr.f32.mxu0 %v4772
  %5420 = vmatmul.mubr.f32.gmra.mrb[0].mxu0 %v4771
  %v5421 = vpop.f32.mrb[0].mxu0
  %v5422 = vadd.f32 0.0, %v5421
  %v5423 = vpop.f32.mrb[0].mxu0
  %5424 = vmatprep.mubr.f32.mxu0 %v4777
  %5425 = vmatmul.mubr.f32.gmra.mrb[0].mxu0 %v4776
  %v5426 = vpop.f32.mrb[0].mxu0
  %v5427 = vadd.f32 0.0, %v5426
  %v5428 = vpop.f32.mrb[0].mxu0
  %5429 = vmatprep.mubr.f32.mxu0 %v4782
  %5430 = vmatmul.mubr.f32.gmra.mrb[0].mxu0 %v4781
  %v5431 = vpop.f32.mrb[0].mxu0
  %v5432 = vadd.f32 0.0, %v5431
  %v5433 = vpop.f32.mrb[0].mxu0
  %5434 = vmatprep.mubr.f32.mxu0 %v4787
  %5435 = vmatmul.mubr.f32.gmra.mrb[0].mxu0 %v4786
  %v5436 = vpop.f32.mrb[0].mxu0
  %v5437 = vadd.f32 0.0, %v5436
  %v5438 = vpop.f32.mrb[0].mxu0
  %5439 = vmatprep.mubr.f32.mxu0 %v4792
  %5440 = vmatmul.mubr.f32.gmra.mrb[0].mxu0 %v4791
  %v5441 = vpop.f32.mrb[0].mxu0
  %v5442 = vadd.f32 0.0, %v5441
  %v5443 = vpop.f32.mrb[0].mxu0
  %5444 = vmatprep.mubr.f32.mxu0 %v4797
  %5445 = vmatmul.mubr.f32.gmra.mrb[0].mxu0 %v4796
  %v5446 = vpop.f32.mrb[0].mxu0
  %v5447 = vadd.f32 0.0, %v5446
  %v5448 = vpop.f32.mrb[0].mxu0
  %5449 = vmatprep.mubr.f32.mxu0 %v4802
  %5450 = vmatmul.mubr.f32.gmra.mrb[0].mxu0 %v4801
  %v5451 = vpop.f32.mrb[0].mxu0
  %v5452 = vadd.f32 0.0, %v5451
  %v5453 = vpop.f32.mrb[0].mxu0
  %5454 = vmatprep.mubr.f32.mxu0 %v4807
  %5455 = vmatmul.mubr.f32.gmra.mrb[0].mxu0 %v4806
  %v5456 = vpop.f32.mrb[0].mxu0
  %v5457 = vadd.f32 0.0, %v5456
  %v5458 = vpop.f32.mrb[0].mxu0
  %5459 = vmatprep.mubr.f32.mxu0 %v4812
  %5460 = vmatmul.mubr.f32.gmra.mrb[0].mxu0 %v4811
  %v5461 = vpop.f32.mrb[0].mxu0
  %v5462 = vadd.f32 0.0, %v5461
  %v5463 = vpop.f32.mrb[0].mxu0
  %5464 = vmatprep.mubr.f32.mxu0 %v4817
  %5465 = vmatmul.mubr.f32.gmra.mrb[0].mxu0 %v4816
  %v5466 = vpop.f32.mrb[0].mxu0
  %v5467 = vadd.f32 0.0, %v5466
  %v5468 = vpop.f32.mrb[0].mxu0
  %5469 = vmatprep.mubr.f32.mxu0 %v4822
  %5470 = vmatmul.mubr.f32.gmra.mrb[0].mxu0 %v4821
  %v5471 = vpop.f32.mrb[0].mxu0
  %v5472 = vadd.f32 0.0, %v5471
  %v5473 = vpop.f32.mrb[0].mxu0
  %5474 = vmatprep.mubr.f32.mxu0 %v4827
  %5475 = vmatmul.mubr.f32.gmra.mrb[0].mxu0 %v4826
  %v5476 = vpop.f32.mrb[0].mxu0
  %v5477 = vadd.f32 0.0, %v5476
  %v5478 = vpop.f32.mrb[0].mxu0
  %5479 = vmatprep.mubr.f32.mxu0 %v4832
  %5480 = vmatmul.mubr.f32.gmra.mrb[0].mxu0 %v4831
  %v5481 = vpop.f32.mrb[0].mxu0
  %v5482 = vadd.f32 0.0, %v5481
  %v5483 = vpop.f32.mrb[0].mxu0
  %5484 = vmatprep.mubr.f32.mxu0 %v4837
  %5485 = vmatmul.mubr.f32.gmra.mrb[0].mxu0 %v4836
  %v5486 = vpop.f32.mrb[0].mxu0
  %v5487 = vadd.f32 0.0, %v5486
  %v5488 = vpop.f32.mrb[0].mxu0
  %5489 = vmatprep.mubr.f32.mxu0 %v4842
  %5490 = vmatmul.mubr.f32.gmra.mrb[0].mxu0 %v4841
  %v5491 = vpop.f32.mrb[0].mxu0
  %v5492 = vadd.f32 0.0, %v5491
  %v5493 = vpop.f32.mrb[0].mxu0
  %5494 = vmatprep.mubr.f32.mxu0 %v4847
  %5495 = vmatmul.mubr.f32.gmra.mrb[0].mxu0 %v4846
  %v5496 = vpop.f32.mrb[0].mxu0
  %v5497 = vadd.f32 0.0, %v5496
  %v5498 = vpop.f32.mrb[0].mxu0
  %5499 = vmatprep.mubr.f32.mxu0 %v4852
  %5500 = vmatmul.mubr.f32.gmra.mrb[0].mxu0 %v4851
  %v5501 = vpop.f32.mrb[0].mxu0
  %v5502 = vadd.f32 0.0, %v5501
  %v5503 = vpop.f32.mrb[0].mxu0
  %5504 = vmatprep.mubr.f32.mxu0 %v4857
  %5505 = vmatmul.mubr.f32.gmra.mrb[0].mxu0 %v4856
  %v5506 = vpop.f32.mrb[0].mxu0
  %v5507 = vadd.f32 0.0, %v5506
  %v5508 = vpop.f32.mrb[0].mxu0
  %5509 = vmatprep.mubr.f32.mxu0 %v4862
  %5510 = vmatmul.mubr.f32.gmra.mrb[0].mxu0 %v4861
  %v5511 = vpop.f32.mrb[0].mxu0
  %v5512 = vadd.f32 0.0, %v5511
  %v5513 = vpop.f32.mrb[0].mxu0
  %5514 = vmatprep.mubr.f32.mxu0 %v4867
  %5515 = vmatmul.mubr.f32.gmra.mrb[0].mxu0 %v4866
  %v5516 = vpop.f32.mrb[0].mxu0
  %v5517 = vadd.f32 0.0, %v5516
  %v5518 = vpop.f32.mrb[0].mxu0
  %5519 = vmatprep.mubr.f32.mxu0 %v4872
  %5520 = vmatmul.mubr.f32.gmra.mrb[0].mxu0 %v4871
  %v5521 = vpop.f32.mrb[0].mxu0
  %v5522 = vadd.f32 0.0, %v5521
  %v5523 = vpop.f32.mrb[0].mxu0
  %5524 = vdwg.mxu0
  %5525 = vmatprep.subr.mxu0 0.0
  %5526 = vmatpush1.msra.mxu0 %v4908
  %5527 = vmatprep.subr.mxu0 0.0
  %5528 = vmatpush1.msra.mxu0 %v4909
  %5529 = vmatprep.subr.mxu0 0.0
  %5530 = vmatpush1.msra.mxu0 %v4910
  %5531 = vmatprep.subr.mxu0 0.0
  %5532 = vmatpush1.msra.mxu0 %v4911
  %5533 = vmatprep.subr.mxu0 0.0
  %5534 = vmatpush1.msra.mxu0 %v4912
  %5535 = vmatprep.subr.mxu0 0.0
  %5536 = vmatpush1.msra.mxu0 %v4913
  %5537 = vmatprep.subr.mxu0 0.0
  %5538 = vmatpush1.msra.mxu0 %v4914
  %5539 = vmatprep.subr.mxu0 0.0
  %5540 = vmatpush1.msra.mxu0 %v4915
  %5541 = vmatprep.subr.mxu0 0.0
  %5542 = vmatpush1.msra.mxu0 %v4916
  %5543 = vmatprep.subr.mxu0 0.0
  %5544 = vmatpush1.msra.mxu0 %v4917
  %5545 = vmatprep.subr.mxu0 0.0
  %5546 = vmatpush1.msra.mxu0 %v4918
  %5547 = vmatprep.subr.mxu0 0.0
  %5548 = vmatpush1.msra.mxu0 %v4919
  %5549 = vmatprep.subr.mxu0 0.0
  %5550 = vmatpush1.msra.mxu0 %v4920
  %5551 = vmatprep.subr.mxu0 0.0
  %5552 = vmatpush1.msra.mxu0 %v4921
  %5553 = vmatprep.subr.mxu0 0.0
  %5554 = vmatpush1.msra.mxu0 %v4922
  %5555 = vmatprep.subr.mxu0 0.0
  %5556 = vmatpush1.msra.mxu0 %v4923
  %5557 = vmatprep.subr.mxu0 0.0
  %5558 = vmatpush1.msra.mxu0 %v4924
  %5559 = vmatprep.subr.mxu0 0.0
  %5560 = vmatpush1.msra.mxu0 %v4925
  %5561 = vmatprep.subr.mxu0 0.0
  %5562 = vmatpush1.msra.mxu0 %v4926
  %5563 = vmatprep.subr.mxu0 0.0
  %5564 = vmatpush1.msra.mxu0 %v4927
  %5565 = vmatprep.subr.mxu0 0.0
  %5566 = vmatpush1.msra.mxu0 %v4928
  %5567 = vmatprep.subr.mxu0 0.0
  %5568 = vmatpush1.msra.mxu0 %v4929
  %5569 = vmatprep.subr.mxu0 0.0
  %5570 = vmatpush1.msra.mxu0 %v4930
  %5571 = vmatprep.subr.mxu0 0.0
  %5572 = vmatpush1.msra.mxu0 %v4931
  %5573 = vmatprep.subr.mxu0 0.0
  %5574 = vmatpush1.msra.mxu0 %v4932
  %5575 = vmatprep.subr.mxu0 0.0
  %5576 = vmatpush1.msra.mxu0 %v4933
  %5577 = vmatprep.subr.mxu0 0.0
  %5578 = vmatpush1.msra.mxu0 %v4934
  %5579 = vmatprep.subr.mxu0 0.0
  %5580 = vmatpush1.msra.mxu0 %v4935
  %5581 = vmatprep.subr.mxu0 0.0
  %5582 = vmatpush1.msra.mxu0 %v4936
  %5583 = vmatprep.subr.mxu0 0.0
  %5584 = vmatpush1.msra.mxu0 %v4937
  %5585 = vmatprep.subr.mxu0 0.0
  %5586 = vmatpush1.msra.mxu0 %v4938
  %5587 = vmatprep.subr.mxu0 0.0
  %5588 = vmatpush1.msra.mxu0 %v4939
  %5589 = vmatprep.mubr.f32.mxu0 %v4559
  %5590 = vmatmul.mubr.f32.gmra.mrb[0].mxu0 %v4558
  %v5591 = vpop.f32.mrb[0].mxu0
  %v5592 = vadd.f32 %v5207, %v5591
  %v5593 = vpop.f32.mrb[0].mxu0
  %5594 = vmatprep.mubr.f32.mxu0 %v4564
  %5595 = vmatmul.mubr.f32.gmra.mrb[0].mxu0 %v4563
  %v5596 = vpop.f32.mrb[0].mxu0
  %v5597 = vadd.f32 %v5212, %v5596
  %v5598 = vpop.f32.mrb[0].mxu0
  %5599 = vmatprep.mubr.f32.mxu0 %v4569
  %5600 = vmatmul.mubr.f32.gmra.mrb[0].mxu0 %v4568
  %v5601 = vpop.f32.mrb[0].mxu0
  %v5602 = vadd.f32 %v5217, %v5601
  %v5603 = vpop.f32.mrb[0].mxu0
  %5604 = vmatprep.mubr.f32.mxu0 %v4574
  %5605 = vmatmul.mubr.f32.gmra.mrb[0].mxu0 %v4573
  %v5606 = vpop.f32.mrb[0].mxu0
  %v5607 = vadd.f32 %v5222, %v5606
  %v5608 = vpop.f32.mrb[0].mxu0
  %5609 = vmatprep.mubr.f32.mxu0 %v4579
  %5610 = vmatmul.mubr.f32.gmra.mrb[0].mxu0 %v4578
  %v5611 = vpop.f32.mrb[0].mxu0
  %v5612 = vadd.f32 %v5227, %v5611
  %v5613 = vpop.f32.mrb[0].mxu0
  %5614 = vmatprep.mubr.f32.mxu0 %v4584
  %5615 = vmatmul.mubr.f32.gmra.mrb[0].mxu0 %v4583
  %v5616 = vpop.f32.mrb[0].mxu0
  %v5617 = vadd.f32 %v5232, %v5616
  %v5618 = vpop.f32.mrb[0].mxu0
  %5619 = vmatprep.mubr.f32.mxu0 %v4589
  %5620 = vmatmul.mubr.f32.gmra.mrb[0].mxu0 %v4588
  %v5621 = vpop.f32.mrb[0].mxu0
  %v5622 = vadd.f32 %v5237, %v5621
  %v5623 = vpop.f32.mrb[0].mxu0
  %5624 = vmatprep.mubr.f32.mxu0 %v4594
  %5625 = vmatmul.mubr.f32.gmra.mrb[0].mxu0 %v4593
  %v5626 = vpop.f32.mrb[0].mxu0
  %v5627 = vadd.f32 %v5242, %v5626
  %v5628 = vpop.f32.mrb[0].mxu0
  %5629 = vmatprep.mubr.f32.mxu0 %v4599
  %5630 = vmatmul.mubr.f32.gmra.mrb[0].mxu0 %v4598
  %v5631 = vpop.f32.mrb[0].mxu0
  %v5632 = vadd.f32 %v5247, %v5631
  %v5633 = vpop.f32.mrb[0].mxu0
  %5634 = vmatprep.mubr.f32.mxu0 %v4604
  %5635 = vmatmul.mubr.f32.gmra.mrb[0].mxu0 %v4603
  %v5636 = vpop.f32.mrb[0].mxu0
  %v5637 = vadd.f32 %v5252, %v5636
  %v5638 = vpop.f32.mrb[0].mxu0
  %5639 = vmatprep.mubr.f32.mxu0 %v4609
  %5640 = vmatmul.mubr.f32.gmra.mrb[0].mxu0 %v4608
  %v5641 = vpop.f32.mrb[0].mxu0
  %v5642 = vadd.f32 %v5257, %v5641
  %v5643 = vpop.f32.mrb[0].mxu0
  %5644 = vmatprep.mubr.f32.mxu0 %v4614
  %5645 = vmatmul.mubr.f32.gmra.mrb[0].mxu0 %v4613
  %v5646 = vpop.f32.mrb[0].mxu0
  %v5647 = vadd.f32 %v5262, %v5646
  %v5648 = vpop.f32.mrb[0].mxu0
  %5649 = vmatprep.mubr.f32.mxu0 %v4619
  %5650 = vmatmul.mubr.f32.gmra.mrb[0].mxu0 %v4618
  %v5651 = vpop.f32.mrb[0].mxu0
  %v5652 = vadd.f32 %v5267, %v5651
  %v5653 = vpop.f32.mrb[0].mxu0
  %5654 = vmatprep.mubr.f32.mxu0 %v4624
  %5655 = vmatmul.mubr.f32.gmra.mrb[0].mxu0 %v4623
  %v5656 = vpop.f32.mrb[0].mxu0
  %v5657 = vadd.f32 %v5272, %v5656
  %v5658 = vpop.f32.mrb[0].mxu0
  %5659 = vmatprep.mubr.f32.mxu0 %v4629
  %5660 = vmatmul.mubr.f32.gmra.mrb[0].mxu0 %v4628
  %v5661 = vpop.f32.mrb[0].mxu0
  %v5662 = vadd.f32 %v5277, %v5661
  %v5663 = vpop.f32.mrb[0].mxu0
  %5664 = vmatprep.mubr.f32.mxu0 %v4634
  %5665 = vmatmul.mubr.f32.gmra.mrb[0].mxu0 %v4633
  %v5666 = vpop.f32.mrb[0].mxu0
  %v5667 = vadd.f32 %v5282, %v5666
  %v5668 = vpop.f32.mrb[0].mxu0
  %5669 = vmatprep.mubr.f32.mxu0 %v4639
  %5670 = vmatmul.mubr.f32.gmra.mrb[0].mxu0 %v4638
  %v5671 = vpop.f32.mrb[0].mxu0
  %v5672 = vadd.f32 %v5287, %v5671
  %v5673 = vpop.f32.mrb[0].mxu0
  %5674 = vmatprep.mubr.f32.mxu0 %v4644
  %5675 = vmatmul.mubr.f32.gmra.mrb[0].mxu0 %v4643
  %v5676 = vpop.f32.mrb[0].mxu0
  %v5677 = vadd.f32 %v5292, %v5676
  %v5678 = vpop.f32.mrb[0].mxu0
  %5679 = vmatprep.mubr.f32.mxu0 %v4649
  %5680 = vmatmul.mubr.f32.gmra.mrb[0].mxu0 %v4648
  %v5681 = vpop.f32.mrb[0].mxu0
  %v5682 = vadd.f32 %v5297, %v5681
  %v5683 = vpop.f32.mrb[0].mxu0
  %5684 = vmatprep.mubr.f32.mxu0 %v4654
  %5685 = vmatmul.mubr.f32.gmra.mrb[0].mxu0 %v4653
  %v5686 = vpop.f32.mrb[0].mxu0
  %v5687 = vadd.f32 %v5302, %v5686
  %v5688 = vpop.f32.mrb[0].mxu0
  %5689 = vmatprep.mubr.f32.mxu0 %v4659
  %5690 = vmatmul.mubr.f32.gmra.mrb[0].mxu0 %v4658
  %v5691 = vpop.f32.mrb[0].mxu0
  %v5692 = vadd.f32 %v5307, %v5691
  %v5693 = vpop.f32.mrb[0].mxu0
  %5694 = vmatprep.mubr.f32.mxu0 %v4664
  %5695 = vmatmul.mubr.f32.gmra.mrb[0].mxu0 %v4663
  %v5696 = vpop.f32.mrb[0].mxu0
  %v5697 = vadd.f32 %v5312, %v5696
  %v5698 = vpop.f32.mrb[0].mxu0
  %5699 = vmatprep.mubr.f32.mxu0 %v4669
  %5700 = vmatmul.mubr.f32.gmra.mrb[0].mxu0 %v4668
  %v5701 = vpop.f32.mrb[0].mxu0
  %v5702 = vadd.f32 %v5317, %v5701
  %v5703 = vpop.f32.mrb[0].mxu0
  %5704 = vmatprep.mubr.f32.mxu0 %v4674
  %5705 = vmatmul.mubr.f32.gmra.mrb[0].mxu0 %v4673
  %v5706 = vpop.f32.mrb[0].mxu0
  %v5707 = vadd.f32 %v5322, %v5706
  %v5708 = vpop.f32.mrb[0].mxu0
  %5709 = vmatprep.mubr.f32.mxu0 %v4679
  %5710 = vmatmul.mubr.f32.gmra.mrb[0].mxu0 %v4678
  %v5711 = vpop.f32.mrb[0].mxu0
  %v5712 = vadd.f32 %v5327, %v5711
  %v5713 = vpop.f32.mrb[0].mxu0
  %5714 = vmatprep.mubr.f32.mxu0 %v4684
  %5715 = vmatmul.mubr.f32.gmra.mrb[0].mxu0 %v4683
  %v5716 = vpop.f32.mrb[0].mxu0
  %v5717 = vadd.f32 %v5332, %v5716
  %v5718 = vpop.f32.mrb[0].mxu0
  %5719 = vmatprep.mubr.f32.mxu0 %v4689
  %5720 = vmatmul.mubr.f32.gmra.mrb[0].mxu0 %v4688
  %v5721 = vpop.f32.mrb[0].mxu0
  %v5722 = vadd.f32 %v5337, %v5721
  %v5723 = vpop.f32.mrb[0].mxu0
  %5724 = vmatprep.mubr.f32.mxu0 %v4694
  %5725 = vmatmul.mubr.f32.gmra.mrb[0].mxu0 %v4693
  %v5726 = vpop.f32.mrb[0].mxu0
  %v5727 = vadd.f32 %v5342, %v5726
  %v5728 = vpop.f32.mrb[0].mxu0
  %5729 = vmatprep.mubr.f32.mxu0 %v4699
  %5730 = vmatmul.mubr.f32.gmra.mrb[0].mxu0 %v4698
  %v5731 = vpop.f32.mrb[0].mxu0
  %v5732 = vadd.f32 %v5347, %v5731
  %v5733 = vpop.f32.mrb[0].mxu0
  %5734 = vmatprep.mubr.f32.mxu0 %v4704
  %5735 = vmatmul.mubr.f32.gmra.mrb[0].mxu0 %v4703
  %v5736 = vpop.f32.mrb[0].mxu0
  %v5737 = vadd.f32 %v5352, %v5736
  %v5738 = vpop.f32.mrb[0].mxu0
  %5739 = vmatprep.mubr.f32.mxu0 %v4709
  %5740 = vmatmul.mubr.f32.gmra.mrb[0].mxu0 %v4708
  %v5741 = vpop.f32.mrb[0].mxu0
  %v5742 = vadd.f32 %v5357, %v5741
  %v5743 = vpop.f32.mrb[0].mxu0
  %5744 = vmatprep.mubr.f32.mxu0 %v4714
  %5745 = vmatmul.mubr.f32.gmra.mrb[0].mxu0 %v4713
  %v5746 = vpop.f32.mrb[0].mxu0
  %v5747 = vadd.f32 %v5362, %v5746
  %v5748 = vpop.f32.mrb[0].mxu0
  %5749 = vmatprep.mubr.f32.mxu0 %v4719
  %5750 = vmatmul.mubr.f32.gmra.mrb[0].mxu0 %v4718
  %v5751 = vpop.f32.mrb[0].mxu0
  %v5752 = vadd.f32 %v5367, %v5751
  %v5753 = vpop.f32.mrb[0].mxu0
  %5754 = vmatprep.mubr.f32.mxu0 %v4724
  %5755 = vmatmul.mubr.f32.gmra.mrb[0].mxu0 %v4723
  %v5756 = vpop.f32.mrb[0].mxu0
  %v5757 = vadd.f32 %v5372, %v5756
  %v5758 = vpop.f32.mrb[0].mxu0
  %5759 = vmatprep.mubr.f32.mxu0 %v4729
  %5760 = vmatmul.mubr.f32.gmra.mrb[0].mxu0 %v4728
  %v5761 = vpop.f32.mrb[0].mxu0
  %v5762 = vadd.f32 %v5377, %v5761
  %v5763 = vpop.f32.mrb[0].mxu0
  %5764 = vmatprep.mubr.f32.mxu0 %v4734
  %5765 = vmatmul.mubr.f32.gmra.mrb[0].mxu0 %v4733
  %v5766 = vpop.f32.mrb[0].mxu0
  %v5767 = vadd.f32 %v5382, %v5766
  %v5768 = vpop.f32.mrb[0].mxu0
  %5769 = vmatprep.mubr.f32.mxu0 %v4739
  %5770 = vmatmul.mubr.f32.gmra.mrb[0].mxu0 %v4738
  %v5771 = vpop.f32.mrb[0].mxu0
  %v5772 = vadd.f32 %v5387, %v5771
  %v5773 = vpop.f32.mrb[0].mxu0
  %5774 = vmatprep.mubr.f32.mxu0 %v4744
  %5775 = vmatmul.mubr.f32.gmra.mrb[0].mxu0 %v4743
  %v5776 = vpop.f32.mrb[0].mxu0
  %v5777 = vadd.f32 %v5392, %v5776
  %v5778 = vpop.f32.mrb[0].mxu0
  %5779 = vmatprep.mubr.f32.mxu0 %v4749
  %5780 = vmatmul.mubr.f32.gmra.mrb[0].mxu0 %v4748
  %v5781 = vpop.f32.mrb[0].mxu0
  %v5782 = vadd.f32 %v5397, %v5781
  %v5783 = vpop.f32.mrb[0].mxu0
  %5784 = vmatprep.mubr.f32.mxu0 %v4754
  %5785 = vmatmul.mubr.f32.gmra.mrb[0].mxu0 %v4753
  %v5786 = vpop.f32.mrb[0].mxu0
  %v5787 = vadd.f32 %v5402, %v5786
  %v5788 = vpop.f32.mrb[0].mxu0
  %5789 = vmatprep.mubr.f32.mxu0 %v4759
  %5790 = vmatmul.mubr.f32.gmra.mrb[0].mxu0 %v4758
  %v5791 = vpop.f32.mrb[0].mxu0
  %v5792 = vadd.f32 %v5407, %v5791
  %v5793 = vpop.f32.mrb[0].mxu0
  %5794 = vmatprep.mubr.f32.mxu0 %v4764
  %5795 = vmatmul.mubr.f32.gmra.mrb[0].mxu0 %v4763
  %v5796 = vpop.f32.mrb[0].mxu0
  %v5797 = vadd.f32 %v5412, %v5796
  %v5798 = vpop.f32.mrb[0].mxu0
  %5799 = vmatprep.mubr.f32.mxu0 %v4769
  %5800 = vmatmul.mubr.f32.gmra.mrb[0].mxu0 %v4768
  %v5801 = vpop.f32.mrb[0].mxu0
  %v5802 = vadd.f32 %v5417, %v5801
  %v5803 = vpop.f32.mrb[0].mxu0
  %5804 = vmatprep.mubr.f32.mxu0 %v4774
  %5805 = vmatmul.mubr.f32.gmra.mrb[0].mxu0 %v4773
  %v5806 = vpop.f32.mrb[0].mxu0
  %v5807 = vadd.f32 %v5422, %v5806
  %v5808 = vpop.f32.mrb[0].mxu0
  %5809 = vmatprep.mubr.f32.mxu0 %v4779
  %5810 = vmatmul.mubr.f32.gmra.mrb[0].mxu0 %v4778
  %v5811 = vpop.f32.mrb[0].mxu0
  %v5812 = vadd.f32 %v5427, %v5811
  %v5813 = vpop.f32.mrb[0].mxu0
  %5814 = vmatprep.mubr.f32.mxu0 %v4784
  %5815 = vmatmul.mubr.f32.gmra.mrb[0].mxu0 %v4783
  %v5816 = vpop.f32.mrb[0].mxu0
  %v5817 = vadd.f32 %v5432, %v5816
  %v5818 = vpop.f32.mrb[0].mxu0
  %5819 = vmatprep.mubr.f32.mxu0 %v4789
  %5820 = vmatmul.mubr.f32.gmra.mrb[0].mxu0 %v4788
  %v5821 = vpop.f32.mrb[0].mxu0
  %v5822 = vadd.f32 %v5437, %v5821
  %v5823 = vpop.f32.mrb[0].mxu0
  %5824 = vmatprep.mubr.f32.mxu0 %v4794
  %5825 = vmatmul.mubr.f32.gmra.mrb[0].mxu0 %v4793
  %v5826 = vpop.f32.mrb[0].mxu0
  %v5827 = vadd.f32 %v5442, %v5826
  %v5828 = vpop.f32.mrb[0].mxu0
  %5829 = vmatprep.mubr.f32.mxu0 %v4799
  %5830 = vmatmul.mubr.f32.gmra.mrb[0].mxu0 %v4798
  %v5831 = vpop.f32.mrb[0].mxu0
  %v5832 = vadd.f32 %v5447, %v5831
  %v5833 = vpop.f32.mrb[0].mxu0
  %5834 = vmatprep.mubr.f32.mxu0 %v4804
  %5835 = vmatmul.mubr.f32.gmra.mrb[0].mxu0 %v4803
  %v5836 = vpop.f32.mrb[0].mxu0
  %v5837 = vadd.f32 %v5452, %v5836
  %v5838 = vpop.f32.mrb[0].mxu0
  %5839 = vmatprep.mubr.f32.mxu0 %v4809
  %5840 = vmatmul.mubr.f32.gmra.mrb[0].mxu0 %v4808
  %v5841 = vpop.f32.mrb[0].mxu0
  %v5842 = vadd.f32 %v5457, %v5841
  %v5843 = vpop.f32.mrb[0].mxu0
  %5844 = vmatprep.mubr.f32.mxu0 %v4814
  %5845 = vmatmul.mubr.f32.gmra.mrb[0].mxu0 %v4813
  %v5846 = vpop.f32.mrb[0].mxu0
  %v5847 = vadd.f32 %v5462, %v5846
  %v5848 = vpop.f32.mrb[0].mxu0
  %5849 = vmatprep.mubr.f32.mxu0 %v4819
  %5850 = vmatmul.mubr.f32.gmra.mrb[0].mxu0 %v4818
  %v5851 = vpop.f32.mrb[0].mxu0
  %v5852 = vadd.f32 %v5467, %v5851
  %v5853 = vpop.f32.mrb[0].mxu0
  %5854 = vmatprep.mubr.f32.mxu0 %v4824
  %5855 = vmatmul.mubr.f32.gmra.mrb[0].mxu0 %v4823
  %v5856 = vpop.f32.mrb[0].mxu0
  %v5857 = vadd.f32 %v5472, %v5856
  %v5858 = vpop.f32.mrb[0].mxu0
  %5859 = vmatprep.mubr.f32.mxu0 %v4829
  %5860 = vmatmul.mubr.f32.gmra.mrb[0].mxu0 %v4828
  %v5861 = vpop.f32.mrb[0].mxu0
  %v5862 = vadd.f32 %v5477, %v5861
  %v5863 = vpop.f32.mrb[0].mxu0
  %5864 = vmatprep.mubr.f32.mxu0 %v4834
  %5865 = vmatmul.mubr.f32.gmra.mrb[0].mxu0 %v4833
  %v5866 = vpop.f32.mrb[0].mxu0
  %v5867 = vadd.f32 %v5482, %v5866
  %v5868 = vpop.f32.mrb[0].mxu0
  %5869 = vmatprep.mubr.f32.mxu0 %v4839
  %5870 = vmatmul.mubr.f32.gmra.mrb[0].mxu0 %v4838
  %v5871 = vpop.f32.mrb[0].mxu0
  %v5872 = vadd.f32 %v5487, %v5871
  %v5873 = vpop.f32.mrb[0].mxu0
  %5874 = vmatprep.mubr.f32.mxu0 %v4844
  %5875 = vmatmul.mubr.f32.gmra.mrb[0].mxu0 %v4843
  %v5876 = vpop.f32.mrb[0].mxu0
  %v5877 = vadd.f32 %v5492, %v5876
  %v5878 = vpop.f32.mrb[0].mxu0
  %5879 = vmatprep.mubr.f32.mxu0 %v4849
  %5880 = vmatmul.mubr.f32.gmra.mrb[0].mxu0 %v4848
  %v5881 = vpop.f32.mrb[0].mxu0
  %v5882 = vadd.f32 %v5497, %v5881
  %v5883 = vpop.f32.mrb[0].mxu0
  %5884 = vmatprep.mubr.f32.mxu0 %v4854
  %5885 = vmatmul.mubr.f32.gmra.mrb[0].mxu0 %v4853
  %v5886 = vpop.f32.mrb[0].mxu0
  %v5887 = vadd.f32 %v5502, %v5886
  %v5888 = vpop.f32.mrb[0].mxu0
  %5889 = vmatprep.mubr.f32.mxu0 %v4859
  %5890 = vmatmul.mubr.f32.gmra.mrb[0].mxu0 %v4858
  %v5891 = vpop.f32.mrb[0].mxu0
  %v5892 = vadd.f32 %v5507, %v5891
  %v5893 = vpop.f32.mrb[0].mxu0
  %5894 = vmatprep.mubr.f32.mxu0 %v4864
  %5895 = vmatmul.mubr.f32.gmra.mrb[0].mxu0 %v4863
  %v5896 = vpop.f32.mrb[0].mxu0
  %v5897 = vadd.f32 %v5512, %v5896
  %v5898 = vpop.f32.mrb[0].mxu0
  %5899 = vmatprep.mubr.f32.mxu0 %v4869
  %5900 = vmatmul.mubr.f32.gmra.mrb[0].mxu0 %v4868
  %v5901 = vpop.f32.mrb[0].mxu0
  %v5902 = vadd.f32 %v5517, %v5901
  %v5903 = vpop.f32.mrb[0].mxu0
  %5904 = vmatprep.mubr.f32.mxu0 %v4874
  %5905 = vmatmul.mubr.f32.gmra.mrb[0].mxu0 %v4873
  %v5906 = vpop.f32.mrb[0].mxu0
  %v5907 = vadd.f32 %v5522, %v5906
  %v5908 = vpop.f32.mrb[0].mxu0
  %5909 = vdwg.mxu0
  %5910 = vmatprep.subr.mxu0 0.0
  %5911 = vmatpush1.msra.mxu0 %v4940
  %5912 = vmatprep.subr.mxu0 0.0
  %5913 = vmatpush1.msra.mxu0 %v4941
  %5914 = vmatprep.subr.mxu0 0.0
  %5915 = vmatpush1.msra.mxu0 %v4942
  %5916 = vmatprep.subr.mxu0 0.0
  %5917 = vmatpush1.msra.mxu0 %v4943
  %5918 = vmatprep.subr.mxu0 0.0
  %5919 = vmatpush1.msra.mxu0 %v4944
  %5920 = vmatprep.subr.mxu0 0.0
  %5921 = vmatpush1.msra.mxu0 %v4945
  %5922 = vmatprep.subr.mxu0 0.0
  %5923 = vmatpush1.msra.mxu0 %v4946
  %5924 = vmatprep.subr.mxu0 0.0
  %5925 = vmatpush1.msra.mxu0 %v4947
  %5926 = vmatprep.subr.mxu0 0.0
  %5927 = vmatpush1.msra.mxu0 0.0
  %5928 = vmatprep.subr.mxu0 0.0
  %5929 = vmatpush1.msra.mxu0 0.0
  %5930 = vmatprep.subr.mxu0 0.0
  %5931 = vmatpush1.msra.mxu0 0.0
  %5932 = vmatprep.subr.mxu0 0.0
  %5933 = vmatpush1.msra.mxu0 0.0
  %5934 = vmatprep.subr.mxu0 0.0
  %5935 = vmatpush1.msra.mxu0 0.0
  %5936 = vmatprep.subr.mxu0 0.0
  %5937 = vmatpush1.msra.mxu0 0.0
  %5938 = vmatprep.subr.mxu0 0.0
  %5939 = vmatpush1.msra.mxu0 0.0
  %5940 = vmatprep.subr.mxu0 0.0
  %5941 = vmatpush1.msra.mxu0 0.0
  %5942 = vmatprep.subr.mxu0 0.0
  %5943 = vmatpush1.msra.mxu0 0.0
  %5944 = vmatprep.subr.mxu0 0.0
  %5945 = vmatpush1.msra.mxu0 0.0
  %5946 = vmatprep.subr.mxu0 0.0
  %5947 = vmatpush1.msra.mxu0 0.0
  %5948 = vmatprep.subr.mxu0 0.0
  %5949 = vmatpush1.msra.mxu0 0.0
  %5950 = vmatprep.subr.mxu0 0.0
  %5951 = vmatpush1.msra.mxu0 0.0
  %5952 = vmatprep.subr.mxu0 0.0
  %5953 = vmatpush1.msra.mxu0 0.0
  %5954 = vmatprep.subr.mxu0 0.0
  %5955 = vmatpush1.msra.mxu0 0.0
  %5956 = vmatprep.subr.mxu0 0.0
  %5957 = vmatpush1.msra.mxu0 0.0
  %5958 = vmatprep.subr.mxu0 0.0
  %5959 = vmatpush1.msra.mxu0 0.0
  %5960 = vmatprep.subr.mxu0 0.0
  %5961 = vmatpush1.msra.mxu0 0.0
  %5962 = vmatprep.subr.mxu0 0.0
  %5963 = vmatpush1.msra.mxu0 0.0
  %5964 = vmatprep.subr.mxu0 0.0
  %5965 = vmatpush1.msra.mxu0 0.0
  %5966 = vmatprep.subr.mxu0 0.0
  %5967 = vmatpush1.msra.mxu0 0.0
  %5968 = vmatprep.subr.mxu0 0.0
  %5969 = vmatpush1.msra.mxu0 0.0
  %5970 = vmatprep.subr.mxu0 0.0
  %5971 = vmatpush1.msra.mxu0 0.0
  %5972 = vmatprep.subr.mxu0 0.0
  %5973 = vmatpush1.msra.mxu0 0.0
  %5974 = vmatprep.mubr.f32.mxu0 0.0
  %5975 = vmatmul.mubr.f32.gmra.mrb[0].mxu0 %v4949
  %v5976 = vpop.f32.mrb[0].mxu0
  %v5977 = vadd.f32 %v5592, %v5976
  %v5978 = vpop.f32.mrb[0].mxu0
  %5979 = vmatprep.mubr.f32.mxu0 0.0
  %5980 = vmatmul.mubr.f32.gmra.mrb[0].mxu0 %v4952
  %v5981 = vpop.f32.mrb[0].mxu0
  %v5982 = vadd.f32 %v5597, %v5981
  %v5983 = vpop.f32.mrb[0].mxu0
  %5984 = vmatprep.mubr.f32.mxu0 0.0
  %5985 = vmatmul.mubr.f32.gmra.mrb[0].mxu0 %v4955
  %v5986 = vpop.f32.mrb[0].mxu0
  %v5987 = vadd.f32 %v5602, %v5986
  %v5988 = vpop.f32.mrb[0].mxu0
  %5989 = vmatprep.mubr.f32.mxu0 0.0
  %5990 = vmatmul.mubr.f32.gmra.mrb[0].mxu0 %v4958
  %v5991 = vpop.f32.mrb[0].mxu0
  %v5992 = vadd.f32 %v5607, %v5991
  %v5993 = vpop.f32.mrb[0].mxu0
  %5994 = vmatprep.mubr.f32.mxu0 0.0
  %5995 = vmatmul.mubr.f32.gmra.mrb[0].mxu0 %v4961
  %v5996 = vpop.f32.mrb[0].mxu0
  %v5997 = vadd.f32 %v5612, %v5996
  %v5998 = vpop.f32.mrb[0].mxu0
  %5999 = vmatprep.mubr.f32.mxu0 0.0
  %6000 = vmatmul.mubr.f32.gmra.mrb[0].mxu0 %v4964
  %v6001 = vpop.f32.mrb[0].mxu0
  %v6002 = vadd.f32 %v5617, %v6001
  %v6003 = vpop.f32.mrb[0].mxu0
  %6004 = vmatprep.mubr.f32.mxu0 0.0
  %6005 = vmatmul.mubr.f32.gmra.mrb[0].mxu0 %v4967
  %v6006 = vpop.f32.mrb[0].mxu0
  %v6007 = vadd.f32 %v5622, %v6006
  %v6008 = vpop.f32.mrb[0].mxu0
  %6009 = vmatprep.mubr.f32.mxu0 0.0
  %6010 = vmatmul.mubr.f32.gmra.mrb[0].mxu0 %v4970
  %v6011 = vpop.f32.mrb[0].mxu0
  %v6012 = vadd.f32 %v5627, %v6011
  %v6013 = vpop.f32.mrb[0].mxu0
  %6014 = vmatprep.mubr.f32.mxu0 0.0
  %6015 = vmatmul.mubr.f32.gmra.mrb[0].mxu0 %v4973
  %v6016 = vpop.f32.mrb[0].mxu0
  %v6017 = vadd.f32 %v5632, %v6016
  %v6018 = vpop.f32.mrb[0].mxu0
  %6019 = vmatprep.mubr.f32.mxu0 0.0
  %6020 = vmatmul.mubr.f32.gmra.mrb[0].mxu0 %v4976
  %v6021 = vpop.f32.mrb[0].mxu0
  %v6022 = vadd.f32 %v5637, %v6021
  %v6023 = vpop.f32.mrb[0].mxu0
  %6024 = vmatprep.mubr.f32.mxu0 0.0
  %6025 = vmatmul.mubr.f32.gmra.mrb[0].mxu0 %v4979
  %v6026 = vpop.f32.mrb[0].mxu0
  %v6027 = vadd.f32 %v5642, %v6026
  %v6028 = vpop.f32.mrb[0].mxu0
  %6029 = vmatprep.mubr.f32.mxu0 0.0
  %6030 = vmatmul.mubr.f32.gmra.mrb[0].mxu0 %v4982
  %v6031 = vpop.f32.mrb[0].mxu0
  %v6032 = vadd.f32 %v5647, %v6031
  %v6033 = vpop.f32.mrb[0].mxu0
  %6034 = vmatprep.mubr.f32.mxu0 0.0
  %6035 = vmatmul.mubr.f32.gmra.mrb[0].mxu0 %v4985
  %v6036 = vpop.f32.mrb[0].mxu0
  %v6037 = vadd.f32 %v5652, %v6036
  %v6038 = vpop.f32.mrb[0].mxu0
  %6039 = vmatprep.mubr.f32.mxu0 0.0
  %6040 = vmatmul.mubr.f32.gmra.mrb[0].mxu0 %v4988
  %v6041 = vpop.f32.mrb[0].mxu0
  %v6042 = vadd.f32 %v5657, %v6041
  %v6043 = vpop.f32.mrb[0].mxu0
  %6044 = vmatprep.mubr.f32.mxu0 0.0
  %6045 = vmatmul.mubr.f32.gmra.mrb[0].mxu0 %v4991
  %v6046 = vpop.f32.mrb[0].mxu0
  %v6047 = vadd.f32 %v5662, %v6046
  %v6048 = vpop.f32.mrb[0].mxu0
  %6049 = vmatprep.mubr.f32.mxu0 0.0
  %6050 = vmatmul.mubr.f32.gmra.mrb[0].mxu0 %v4994
  %v6051 = vpop.f32.mrb[0].mxu0
  %v6052 = vadd.f32 %v5667, %v6051
  %v6053 = vpop.f32.mrb[0].mxu0
  %6054 = vmatprep.mubr.f32.mxu0 0.0
  %6055 = vmatmul.mubr.f32.gmra.mrb[0].mxu0 %v4997
  %v6056 = vpop.f32.mrb[0].mxu0
  %v6057 = vadd.f32 %v5672, %v6056
  %v6058 = vpop.f32.mrb[0].mxu0
  %6059 = vmatprep.mubr.f32.mxu0 0.0
  %6060 = vmatmul.mubr.f32.gmra.mrb[0].mxu0 %v5000
  %v6061 = vpop.f32.mrb[0].mxu0
  %v6062 = vadd.f32 %v5677, %v6061
  %v6063 = vpop.f32.mrb[0].mxu0
  %6064 = vmatprep.mubr.f32.mxu0 0.0
  %6065 = vmatmul.mubr.f32.gmra.mrb[0].mxu0 %v5003
  %v6066 = vpop.f32.mrb[0].mxu0
  %v6067 = vadd.f32 %v5682, %v6066
  %v6068 = vpop.f32.mrb[0].mxu0
  %6069 = vmatprep.mubr.f32.mxu0 0.0
  %6070 = vmatmul.mubr.f32.gmra.mrb[0].mxu0 %v5006
  %v6071 = vpop.f32.mrb[0].mxu0
  %v6072 = vadd.f32 %v5687, %v6071
  %v6073 = vpop.f32.mrb[0].mxu0
  %6074 = vmatprep.mubr.f32.mxu0 0.0
  %6075 = vmatmul.mubr.f32.gmra.mrb[0].mxu0 %v5009
  %v6076 = vpop.f32.mrb[0].mxu0
  %v6077 = vadd.f32 %v5692, %v6076
  %v6078 = vpop.f32.mrb[0].mxu0
  %6079 = vmatprep.mubr.f32.mxu0 0.0
  %6080 = vmatmul.mubr.f32.gmra.mrb[0].mxu0 %v5012
  %v6081 = vpop.f32.mrb[0].mxu0
  %v6082 = vadd.f32 %v5697, %v6081
  %v6083 = vpop.f32.mrb[0].mxu0
  %6084 = vmatprep.mubr.f32.mxu0 0.0
  %6085 = vmatmul.mubr.f32.gmra.mrb[0].mxu0 %v5015
  %v6086 = vpop.f32.mrb[0].mxu0
  %v6087 = vadd.f32 %v5702, %v6086
  %v6088 = vpop.f32.mrb[0].mxu0
  %6089 = vmatprep.mubr.f32.mxu0 0.0
  %6090 = vmatmul.mubr.f32.gmra.mrb[0].mxu0 %v5018
  %v6091 = vpop.f32.mrb[0].mxu0
  %v6092 = vadd.f32 %v5707, %v6091
  %v6093 = vpop.f32.mrb[0].mxu0
  %6094 = vmatprep.mubr.f32.mxu0 0.0
  %6095 = vmatmul.mubr.f32.gmra.mrb[0].mxu0 %v5021
  %v6096 = vpop.f32.mrb[0].mxu0
  %v6097 = vadd.f32 %v5712, %v6096
  %v6098 = vpop.f32.mrb[0].mxu0
  %6099 = vmatprep.mubr.f32.mxu0 0.0
  %6100 = vmatmul.mubr.f32.gmra.mrb[0].mxu0 %v5024
  %v6101 = vpop.f32.mrb[0].mxu0
  %v6102 = vadd.f32 %v5717, %v6101
  %v6103 = vpop.f32.mrb[0].mxu0
  %6104 = vmatprep.mubr.f32.mxu0 0.0
  %6105 = vmatmul.mubr.f32.gmra.mrb[0].mxu0 %v5027
  %v6106 = vpop.f32.mrb[0].mxu0
  %v6107 = vadd.f32 %v5722, %v6106
  %v6108 = vpop.f32.mrb[0].mxu0
  %6109 = vmatprep.mubr.f32.mxu0 0.0
  %6110 = vmatmul.mubr.f32.gmra.mrb[0].mxu0 %v5030
  %v6111 = vpop.f32.mrb[0].mxu0
  %v6112 = vadd.f32 %v5727, %v6111
  %v6113 = vpop.f32.mrb[0].mxu0
  %6114 = vmatprep.mubr.f32.mxu0 0.0
  %6115 = vmatmul.mubr.f32.gmra.mrb[0].mxu0 %v5033
  %v6116 = vpop.f32.mrb[0].mxu0
  %v6117 = vadd.f32 %v5732, %v6116
  %v6118 = vpop.f32.mrb[0].mxu0
  %6119 = vmatprep.mubr.f32.mxu0 0.0
  %6120 = vmatmul.mubr.f32.gmra.mrb[0].mxu0 %v5036
  %v6121 = vpop.f32.mrb[0].mxu0
  %v6122 = vadd.f32 %v5737, %v6121
  %v6123 = vpop.f32.mrb[0].mxu0
  %6124 = vmatprep.mubr.f32.mxu0 0.0
  %6125 = vmatmul.mubr.f32.gmra.mrb[0].mxu0 %v5039
  %v6126 = vpop.f32.mrb[0].mxu0
  %v6127 = vadd.f32 %v5742, %v6126
  %v6128 = vpop.f32.mrb[0].mxu0
  %6129 = vmatprep.mubr.f32.mxu0 0.0
  %6130 = vmatmul.mubr.f32.gmra.mrb[0].mxu0 %v5042
  %v6131 = vpop.f32.mrb[0].mxu0
  %v6132 = vadd.f32 %v5747, %v6131
  %v6133 = vpop.f32.mrb[0].mxu0
  %6134 = vmatprep.mubr.f32.mxu0 0.0
  %6135 = vmatmul.mubr.f32.gmra.mrb[0].mxu0 %v5045
  %v6136 = vpop.f32.mrb[0].mxu0
  %v6137 = vadd.f32 %v5752, %v6136
  %v6138 = vpop.f32.mrb[0].mxu0
  %6139 = vmatprep.mubr.f32.mxu0 0.0
  %6140 = vmatmul.mubr.f32.gmra.mrb[0].mxu0 %v5048
  %v6141 = vpop.f32.mrb[0].mxu0
  %v6142 = vadd.f32 %v5757, %v6141
  %v6143 = vpop.f32.mrb[0].mxu0
  %6144 = vmatprep.mubr.f32.mxu0 0.0
  %6145 = vmatmul.mubr.f32.gmra.mrb[0].mxu0 %v5051
  %v6146 = vpop.f32.mrb[0].mxu0
  %v6147 = vadd.f32 %v5762, %v6146
  %v6148 = vpop.f32.mrb[0].mxu0
  %6149 = vmatprep.mubr.f32.mxu0 0.0
  %6150 = vmatmul.mubr.f32.gmra.mrb[0].mxu0 %v5054
  %v6151 = vpop.f32.mrb[0].mxu0
  %v6152 = vadd.f32 %v5767, %v6151
  %v6153 = vpop.f32.mrb[0].mxu0
  %6154 = vmatprep.mubr.f32.mxu0 0.0
  %6155 = vmatmul.mubr.f32.gmra.mrb[0].mxu0 %v5057
  %v6156 = vpop.f32.mrb[0].mxu0
  %v6157 = vadd.f32 %v5772, %v6156
  %v6158 = vpop.f32.mrb[0].mxu0
  %6159 = vmatprep.mubr.f32.mxu0 0.0
  %6160 = vmatmul.mubr.f32.gmra.mrb[0].mxu0 %v5060
  %v6161 = vpop.f32.mrb[0].mxu0
  %v6162 = vadd.f32 %v5777, %v6161
  %v6163 = vpop.f32.mrb[0].mxu0
  %6164 = vmatprep.mubr.f32.mxu0 0.0
  %6165 = vmatmul.mubr.f32.gmra.mrb[0].mxu0 %v5063
  %v6166 = vpop.f32.mrb[0].mxu0
  %v6167 = vadd.f32 %v5782, %v6166
  %v6168 = vpop.f32.mrb[0].mxu0
  %6169 = vmatprep.mubr.f32.mxu0 0.0
  %6170 = vmatmul.mubr.f32.gmra.mrb[0].mxu0 %v5066
  %v6171 = vpop.f32.mrb[0].mxu0
  %v6172 = vadd.f32 %v5787, %v6171
  %v6173 = vpop.f32.mrb[0].mxu0
  %6174 = vmatprep.mubr.f32.mxu0 0.0
  %6175 = vmatmul.mubr.f32.gmra.mrb[0].mxu0 %v5069
  %v6176 = vpop.f32.mrb[0].mxu0
  %v6177 = vadd.f32 %v5792, %v6176
  %v6178 = vpop.f32.mrb[0].mxu0
  %6179 = vmatprep.mubr.f32.mxu0 0.0
  %6180 = vmatmul.mubr.f32.gmra.mrb[0].mxu0 %v5072
  %v6181 = vpop.f32.mrb[0].mxu0
  %v6182 = vadd.f32 %v5797, %v6181
  %v6183 = vpop.f32.mrb[0].mxu0
  %6184 = vmatprep.mubr.f32.mxu0 0.0
  %6185 = vmatmul.mubr.f32.gmra.mrb[0].mxu0 %v5075
  %v6186 = vpop.f32.mrb[0].mxu0
  %v6187 = vadd.f32 %v5802, %v6186
  %v6188 = vpop.f32.mrb[0].mxu0
  %6189 = vmatprep.mubr.f32.mxu0 0.0
  %6190 = vmatmul.mubr.f32.gmra.mrb[0].mxu0 %v5078
  %v6191 = vpop.f32.mrb[0].mxu0
  %v6192 = vadd.f32 %v5807, %v6191
  %v6193 = vpop.f32.mrb[0].mxu0
  %6194 = vmatprep.mubr.f32.mxu0 0.0
  %6195 = vmatmul.mubr.f32.gmra.mrb[0].mxu0 %v5081
  %v6196 = vpop.f32.mrb[0].mxu0
  %v6197 = vadd.f32 %v5812, %v6196
  %v6198 = vpop.f32.mrb[0].mxu0
  %6199 = vmatprep.mubr.f32.mxu0 0.0
  %6200 = vmatmul.mubr.f32.gmra.mrb[0].mxu0 %v5084
  %v6201 = vpop.f32.mrb[0].mxu0
  %v6202 = vadd.f32 %v5817, %v6201
  %v6203 = vpop.f32.mrb[0].mxu0
  %6204 = vmatprep.mubr.f32.mxu0 0.0
  %6205 = vmatmul.mubr.f32.gmra.mrb[0].mxu0 %v5087
  %v6206 = vpop.f32.mrb[0].mxu0
  %v6207 = vadd.f32 %v5822, %v6206
  %v6208 = vpop.f32.mrb[0].mxu0
  %6209 = vmatprep.mubr.f32.mxu0 0.0
  %6210 = vmatmul.mubr.f32.gmra.mrb[0].mxu0 %v5090
  %v6211 = vpop.f32.mrb[0].mxu0
  %v6212 = vadd.f32 %v5827, %v6211
  %v6213 = vpop.f32.mrb[0].mxu0
  %6214 = vmatprep.mubr.f32.mxu0 0.0
  %6215 = vmatmul.mubr.f32.gmra.mrb[0].mxu0 %v5093
  %v6216 = vpop.f32.mrb[0].mxu0
  %v6217 = vadd.f32 %v5832, %v6216
  %v6218 = vpop.f32.mrb[0].mxu0
  %6219 = vmatprep.mubr.f32.mxu0 0.0
  %6220 = vmatmul.mubr.f32.gmra.mrb[0].mxu0 %v5096
  %v6221 = vpop.f32.mrb[0].mxu0
  %v6222 = vadd.f32 %v5837, %v6221
  %v6223 = vpop.f32.mrb[0].mxu0
  %6224 = vmatprep.mubr.f32.mxu0 0.0
  %6225 = vmatmul.mubr.f32.gmra.mrb[0].mxu0 %v5099
  %v6226 = vpop.f32.mrb[0].mxu0
  %v6227 = vadd.f32 %v5842, %v6226
  %v6228 = vpop.f32.mrb[0].mxu0
  %6229 = vmatprep.mubr.f32.mxu0 0.0
  %6230 = vmatmul.mubr.f32.gmra.mrb[0].mxu0 %v5102
  %v6231 = vpop.f32.mrb[0].mxu0
  %v6232 = vadd.f32 %v5847, %v6231
  %v6233 = vpop.f32.mrb[0].mxu0
  %6234 = vmatprep.mubr.f32.mxu0 0.0
  %6235 = vmatmul.mubr.f32.gmra.mrb[0].mxu0 %v5105
  %v6236 = vpop.f32.mrb[0].mxu0
  %v6237 = vadd.f32 %v5852, %v6236
  %v6238 = vpop.f32.mrb[0].mxu0
  %6239 = vmatprep.mubr.f32.mxu0 0.0
  %6240 = vmatmul.mubr.f32.gmra.mrb[0].mxu0 %v5108
  %v6241 = vpop.f32.mrb[0].mxu0
  %v6242 = vadd.f32 %v5857, %v6241
  %v6243 = vpop.f32.mrb[0].mxu0
  %6244 = vmatprep.mubr.f32.mxu0 0.0
  %6245 = vmatmul.mubr.f32.gmra.mrb[0].mxu0 %v5111
  %v6246 = vpop.f32.mrb[0].mxu0
  %v6247 = vadd.f32 %v5862, %v6246
  %v6248 = vpop.f32.mrb[0].mxu0
  %6249 = vmatprep.mubr.f32.mxu0 0.0
  %6250 = vmatmul.mubr.f32.gmra.mrb[0].mxu0 %v5114
  %v6251 = vpop.f32.mrb[0].mxu0
  %v6252 = vadd.f32 %v5867, %v6251
  %v6253 = vpop.f32.mrb[0].mxu0
  %6254 = vmatprep.mubr.f32.mxu0 0.0
  %6255 = vmatmul.mubr.f32.gmra.mrb[0].mxu0 %v5117
  %v6256 = vpop.f32.mrb[0].mxu0
  %v6257 = vadd.f32 %v5872, %v6256
  %v6258 = vpop.f32.mrb[0].mxu0
  %6259 = vmatprep.mubr.f32.mxu0 0.0
  %6260 = vmatmul.mubr.f32.gmra.mrb[0].mxu0 %v5120
  %v6261 = vpop.f32.mrb[0].mxu0
  %v6262 = vadd.f32 %v5877, %v6261
  %v6263 = vpop.f32.mrb[0].mxu0
  %6264 = vmatprep.mubr.f32.mxu0 0.0
  %6265 = vmatmul.mubr.f32.gmra.mrb[0].mxu0 %v5123
  %v6266 = vpop.f32.mrb[0].mxu0
  %v6267 = vadd.f32 %v5882, %v6266
  %v6268 = vpop.f32.mrb[0].mxu0
  %6269 = vmatprep.mubr.f32.mxu0 0.0
  %6270 = vmatmul.mubr.f32.gmra.mrb[0].mxu0 %v5126
  %v6271 = vpop.f32.mrb[0].mxu0
  %v6272 = vadd.f32 %v5887, %v6271
  %v6273 = vpop.f32.mrb[0].mxu0
  %6274 = vmatprep.mubr.f32.mxu0 0.0
  %6275 = vmatmul.mubr.f32.gmra.mrb[0].mxu0 %v5129
  %v6276 = vpop.f32.mrb[0].mxu0
  %v6277 = vadd.f32 %v5892, %v6276
  %v6278 = vpop.f32.mrb[0].mxu0
  %6279 = vmatprep.mubr.f32.mxu0 0.0
  %6280 = vmatmul.mubr.f32.gmra.mrb[0].mxu0 %v5132
  %v6281 = vpop.f32.mrb[0].mxu0
  %v6282 = vadd.f32 %v5897, %v6281
  %v6283 = vpop.f32.mrb[0].mxu0
  %6284 = vmatprep.mubr.f32.mxu0 0.0
  %6285 = vmatmul.mubr.f32.gmra.mrb[0].mxu0 %v5135
  %v6286 = vpop.f32.mrb[0].mxu0
  %v6287 = vadd.f32 %v5902, %v6286
  %v6288 = vpop.f32.mrb[0].mxu0
  %6289 = vmatprep.mubr.f32.mxu0 0.0
  %6290 = vmatmul.mubr.f32.gmra.mrb[0].mxu0 %v5138
  %v6291 = vpop.f32.mrb[0].mxu0
  %v6292 = vadd.f32 %v5907, %v6291
  %v6293 = vpop.f32.mrb[0].mxu0
  %6294 = vdwg.mxu0
  %v6295 = vld [vmem:[%s5] sm:$0x1]
  %v6296 = vld [vmem:[%s6] sm:$0x1]
  %v6297 = vsel %vm1648, %v5977, 0.0
  %v6298 = vsel %vm1648, %v5982, 0.0
  %v6299 = vadd.f32 %v6297, %v6298
  %v6300 = vsel %vm1648, %v5987, 0.0
  %v6301 = vadd.f32 %v6299, %v6300
  %v6302 = vsel %vm1648, %v5992, 0.0
  %v6303 = vadd.f32 %v6301, %v6302
  %v6304 = vsel %vm1648, %v5997, 0.0
  %v6305 = vadd.f32 %v6303, %v6304
  %v6306 = vsel %vm1648, %v6002, 0.0
  %v6307 = vadd.f32 %v6305, %v6306
  %v6308 = vsel %vm1648, %v6007, 0.0
  %v6309 = vadd.f32 %v6307, %v6308
  %v6310 = vsel %vm1648, %v6012, 0.0
  %v6311 = vadd.f32 %v6309, %v6310
  %v6312 = vsel %vm1648, %v6017, 0.0
  %v6313 = vadd.f32 %v6311, %v6312
  %v6314 = vsel %vm1648, %v6022, 0.0
  %v6315 = vadd.f32 %v6313, %v6314
  %v6316 = vsel %vm1648, %v6027, 0.0
  %v6317 = vadd.f32 %v6315, %v6316
  %v6318 = vsel %vm1648, %v6032, 0.0
  %v6319 = vadd.f32 %v6317, %v6318
  %v6320 = vsel %vm1648, %v6037, 0.0
  %v6321 = vadd.f32 %v6319, %v6320
  %v6322 = vsel %vm1648, %v6042, 0.0
  %v6323 = vadd.f32 %v6321, %v6322
  %v6324 = vsel %vm1648, %v6047, 0.0
  %v6325 = vadd.f32 %v6323, %v6324
  %v6326 = vsel %vm1648, %v6052, 0.0
  %v6327 = vadd.f32 %v6325, %v6326
  %v6328 = vsel %vm1648, %v6057, 0.0
  %v6329 = vadd.f32 %v6327, %v6328
  %v6330 = vsel %vm1648, %v6062, 0.0
  %v6331 = vadd.f32 %v6329, %v6330
  %v6332 = vsel %vm1648, %v6067, 0.0
  %v6333 = vadd.f32 %v6331, %v6332
  %v6334 = vsel %vm1648, %v6072, 0.0
  %v6335 = vadd.f32 %v6333, %v6334
  %v6336 = vsel %vm1648, %v6077, 0.0
  %v6337 = vadd.f32 %v6335, %v6336
  %v6338 = vsel %vm1648, %v6082, 0.0
  %v6339 = vadd.f32 %v6337, %v6338
  %v6340 = vsel %vm1648, %v6087, 0.0
  %v6341 = vadd.f32 %v6339, %v6340
  %v6342 = vsel %vm1648, %v6092, 0.0
  %v6343 = vadd.f32 %v6341, %v6342
  %v6344 = vsel %vm1648, %v6097, 0.0
  %v6345 = vadd.f32 %v6343, %v6344
  %v6346 = vsel %vm1648, %v6102, 0.0
  %v6347 = vadd.f32 %v6345, %v6346
  %v6348 = vsel %vm1648, %v6107, 0.0
  %v6349 = vadd.f32 %v6347, %v6348
  %v6350 = vsel %vm1648, %v6112, 0.0
  %v6351 = vadd.f32 %v6349, %v6350
  %v6352 = vsel %vm1648, %v6117, 0.0
  %v6353 = vadd.f32 %v6351, %v6352
  %v6354 = vsel %vm1648, %v6122, 0.0
  %v6355 = vadd.f32 %v6353, %v6354
  %v6356 = vsel %vm1648, %v6127, 0.0
  %v6357 = vadd.f32 %v6355, %v6356
  %v6358 = vsel %vm1648, %v6132, 0.0
  %v6359 = vadd.f32 %v6357, %v6358
  %v6360 = vsel %vm1648, %v6137, 0.0
  %v6361 = vadd.f32 %v6359, %v6360
  %v6362 = vsel %vm1648, %v6142, 0.0
  %v6363 = vadd.f32 %v6361, %v6362
  %v6364 = vsel %vm1648, %v6147, 0.0
  %v6365 = vadd.f32 %v6363, %v6364
  %v6366 = vsel %vm1648, %v6152, 0.0
  %v6367 = vadd.f32 %v6365, %v6366
  %v6368 = vsel %vm1648, %v6157, 0.0
  %v6369 = vadd.f32 %v6367, %v6368
  %v6370 = vsel %vm1648, %v6162, 0.0
  %v6371 = vadd.f32 %v6369, %v6370
  %v6372 = vsel %vm1648, %v6167, 0.0
  %v6373 = vadd.f32 %v6371, %v6372
  %v6374 = vsel %vm1648, %v6172, 0.0
  %v6375 = vadd.f32 %v6373, %v6374
  %v6376 = vsel %vm1648, %v6177, 0.0
  %v6377 = vadd.f32 %v6375, %v6376
  %v6378 = vsel %vm1648, %v6182, 0.0
  %v6379 = vadd.f32 %v6377, %v6378
  %v6380 = vsel %vm1648, %v6187, 0.0
  %v6381 = vadd.f32 %v6379, %v6380
  %v6382 = vsel %vm1648, %v6192, 0.0
  %v6383 = vadd.f32 %v6381, %v6382
  %v6384 = vsel %vm1648, %v6197, 0.0
  %v6385 = vadd.f32 %v6383, %v6384
  %v6386 = vsel %vm1648, %v6202, 0.0
  %v6387 = vadd.f32 %v6385, %v6386
  %v6388 = vsel %vm1648, %v6207, 0.0
  %v6389 = vadd.f32 %v6387, %v6388
  %v6390 = vsel %vm1648, %v6212, 0.0
  %v6391 = vadd.f32 %v6389, %v6390
  %v6392 = vsel %vm1648, %v6217, 0.0
  %v6393 = vadd.f32 %v6391, %v6392
  %v6394 = vsel %vm1648, %v6222, 0.0
  %v6395 = vadd.f32 %v6393, %v6394
  %v6396 = vsel %vm1648, %v6227, 0.0
  %v6397 = vadd.f32 %v6395, %v6396
  %v6398 = vsel %vm1648, %v6232, 0.0
  %v6399 = vadd.f32 %v6397, %v6398
  %v6400 = vsel %vm1648, %v6237, 0.0
  %v6401 = vadd.f32 %v6399, %v6400
  %v6402 = vsel %vm1648, %v6242, 0.0
  %v6403 = vadd.f32 %v6401, %v6402
  %v6404 = vsel %vm1648, %v6247, 0.0
  %v6405 = vadd.f32 %v6403, %v6404
  %v6406 = vsel %vm1648, %v6252, 0.0
  %v6407 = vadd.f32 %v6405, %v6406
  %v6408 = vsel %vm1648, %v6257, 0.0
  %v6409 = vadd.f32 %v6407, %v6408
  %v6410 = vsel %vm1648, %v6262, 0.0
  %v6411 = vadd.f32 %v6409, %v6410
  %v6412 = vsel %vm1648, %v6267, 0.0
  %v6413 = vadd.f32 %v6411, %v6412
  %v6414 = vsel %vm1648, %v6272, 0.0
  %v6415 = vadd.f32 %v6413, %v6414
  %v6416 = vsel %vm1648, %v6277, 0.0
  %v6417 = vadd.f32 %v6415, %v6416
  %v6418 = vsel %vm1648, %v6282, 0.0
  %v6419 = vadd.f32 %v6417, %v6418
  %v6420 = vsel %vm1648, %v6287, 0.0
  %v6421 = vadd.f32 %v6419, %v6420
  %v6422 = vsel %vm1648, %v6292, 0.0
  %v6423 = vadd.f32 %v6421, %v6422
  %v6424 = vrot.slane %v6423, 4
  %v6425 = vadd.f32 %v6423, %v6424
  %v6426 = vrot.slane %v6425, 2
  %v6427 = vadd.f32 %v6425, %v6426
  %v6428 = vrot.slane %v6427, 1
  %v6429 = vadd.f32 %v6427, %v6428
  %v6430 = vmul.f32 %v6429, 0.001953125
  %v6431 = vmul.f32 %v5977, %v5977
  %v6432 = vmul.f32 %v5982, %v5982
  %v6433 = vmul.f32 %v5987, %v5987
  %v6434 = vmul.f32 %v5992, %v5992
  %v6435 = vmul.f32 %v5997, %v5997
  %v6436 = vmul.f32 %v6002, %v6002
  %v6437 = vmul.f32 %v6007, %v6007
  %v6438 = vmul.f32 %v6012, %v6012
  %v6439 = vmul.f32 %v6017, %v6017
  %v6440 = vmul.f32 %v6022, %v6022
  %v6441 = vmul.f32 %v6027, %v6027
  %v6442 = vmul.f32 %v6032, %v6032
  %v6443 = vmul.f32 %v6037, %v6037
  %v6444 = vmul.f32 %v6042, %v6042
  %v6445 = vmul.f32 %v6047, %v6047
  %v6446 = vmul.f32 %v6052, %v6052
  %v6447 = vmul.f32 %v6057, %v6057
  %v6448 = vmul.f32 %v6062, %v6062
  %v6449 = vmul.f32 %v6067, %v6067
  %v6450 = vmul.f32 %v6072, %v6072
  %v6451 = vmul.f32 %v6077, %v6077
  %v6452 = vmul.f32 %v6082, %v6082
  %v6453 = vmul.f32 %v6087, %v6087
  %v6454 = vmul.f32 %v6092, %v6092
  %v6455 = vmul.f32 %v6097, %v6097
  %v6456 = vmul.f32 %v6102, %v6102
  %v6457 = vmul.f32 %v6107, %v6107
  %v6458 = vmul.f32 %v6112, %v6112
  %v6459 = vmul.f32 %v6117, %v6117
  %v6460 = vmul.f32 %v6122, %v6122
  %v6461 = vmul.f32 %v6127, %v6127
  %v6462 = vmul.f32 %v6132, %v6132
  %v6463 = vmul.f32 %v6137, %v6137
  %v6464 = vmul.f32 %v6142, %v6142
  %v6465 = vmul.f32 %v6147, %v6147
  %v6466 = vmul.f32 %v6152, %v6152
  %v6467 = vmul.f32 %v6157, %v6157
  %v6468 = vmul.f32 %v6162, %v6162
  %v6469 = vmul.f32 %v6167, %v6167
  %v6470 = vmul.f32 %v6172, %v6172
  %v6471 = vmul.f32 %v6177, %v6177
  %v6472 = vmul.f32 %v6182, %v6182
  %v6473 = vmul.f32 %v6187, %v6187
  %v6474 = vmul.f32 %v6192, %v6192
  %v6475 = vmul.f32 %v6197, %v6197
  %v6476 = vmul.f32 %v6202, %v6202
  %v6477 = vmul.f32 %v6207, %v6207
  %v6478 = vmul.f32 %v6212, %v6212
  %v6479 = vmul.f32 %v6217, %v6217
  %v6480 = vmul.f32 %v6222, %v6222
  %v6481 = vmul.f32 %v6227, %v6227
  %v6482 = vmul.f32 %v6232, %v6232
  %v6483 = vmul.f32 %v6237, %v6237
  %v6484 = vmul.f32 %v6242, %v6242
  %v6485 = vmul.f32 %v6247, %v6247
  %v6486 = vmul.f32 %v6252, %v6252
  %v6487 = vmul.f32 %v6257, %v6257
  %v6488 = vmul.f32 %v6262, %v6262
  %v6489 = vmul.f32 %v6267, %v6267
  %v6490 = vmul.f32 %v6272, %v6272
  %v6491 = vmul.f32 %v6277, %v6277
  %v6492 = vmul.f32 %v6282, %v6282
  %v6493 = vmul.f32 %v6287, %v6287
  %v6494 = vmul.f32 %v6292, %v6292
  %v6495 = vsel %vm1648, %v6431, 0.0
  %v6496 = vsel %vm1648, %v6432, 0.0
  %v6497 = vadd.f32 %v6495, %v6496
  %v6498 = vsel %vm1648, %v6433, 0.0
  %v6499 = vadd.f32 %v6497, %v6498
  %v6500 = vsel %vm1648, %v6434, 0.0
  %v6501 = vadd.f32 %v6499, %v6500
  %v6502 = vsel %vm1648, %v6435, 0.0
  %v6503 = vadd.f32 %v6501, %v6502
  %v6504 = vsel %vm1648, %v6436, 0.0
  %v6505 = vadd.f32 %v6503, %v6504
  %v6506 = vsel %vm1648, %v6437, 0.0
  %v6507 = vadd.f32 %v6505, %v6506
  %v6508 = vsel %vm1648, %v6438, 0.0
  %v6509 = vadd.f32 %v6507, %v6508
  %v6510 = vsel %vm1648, %v6439, 0.0
  %v6511 = vadd.f32 %v6509, %v6510
  %v6512 = vsel %vm1648, %v6440, 0.0
  %v6513 = vadd.f32 %v6511, %v6512
  %v6514 = vsel %vm1648, %v6441, 0.0
  %v6515 = vadd.f32 %v6513, %v6514
  %v6516 = vsel %vm1648, %v6442, 0.0
  %v6517 = vadd.f32 %v6515, %v6516
  %v6518 = vsel %vm1648, %v6443, 0.0
  %v6519 = vadd.f32 %v6517, %v6518
  %v6520 = vsel %vm1648, %v6444, 0.0
  %v6521 = vadd.f32 %v6519, %v6520
  %v6522 = vsel %vm1648, %v6445, 0.0
  %v6523 = vadd.f32 %v6521, %v6522
  %v6524 = vsel %vm1648, %v6446, 0.0
  %v6525 = vadd.f32 %v6523, %v6524
  %v6526 = vsel %vm1648, %v6447, 0.0
  %v6527 = vadd.f32 %v6525, %v6526
  %v6528 = vsel %vm1648, %v6448, 0.0
  %v6529 = vadd.f32 %v6527, %v6528
  %v6530 = vsel %vm1648, %v6449, 0.0
  %v6531 = vadd.f32 %v6529, %v6530
  %v6532 = vsel %vm1648, %v6450, 0.0
  %v6533 = vadd.f32 %v6531, %v6532
  %v6534 = vsel %vm1648, %v6451, 0.0
  %v6535 = vadd.f32 %v6533, %v6534
  %v6536 = vsel %vm1648, %v6452, 0.0
  %v6537 = vadd.f32 %v6535, %v6536
  %v6538 = vsel %vm1648, %v6453, 0.0
  %v6539 = vadd.f32 %v6537, %v6538
  %v6540 = vsel %vm1648, %v6454, 0.0
  %v6541 = vadd.f32 %v6539, %v6540
  %v6542 = vsel %vm1648, %v6455, 0.0
  %v6543 = vadd.f32 %v6541, %v6542
  %v6544 = vsel %vm1648, %v6456, 0.0
  %v6545 = vadd.f32 %v6543, %v6544
  %v6546 = vsel %vm1648, %v6457, 0.0
  %v6547 = vadd.f32 %v6545, %v6546
  %v6548 = vsel %vm1648, %v6458, 0.0
  %v6549 = vadd.f32 %v6547, %v6548
  %v6550 = vsel %vm1648, %v6459, 0.0
  %v6551 = vadd.f32 %v6549, %v6550
  %v6552 = vsel %vm1648, %v6460, 0.0
  %v6553 = vadd.f32 %v6551, %v6552
  %v6554 = vsel %vm1648, %v6461, 0.0
  %v6555 = vadd.f32 %v6553, %v6554
  %v6556 = vsel %vm1648, %v6462, 0.0
  %v6557 = vadd.f32 %v6555, %v6556
  %v6558 = vsel %vm1648, %v6463, 0.0
  %v6559 = vadd.f32 %v6557, %v6558
  %v6560 = vsel %vm1648, %v6464, 0.0
  %v6561 = vadd.f32 %v6559, %v6560
  %v6562 = vsel %vm1648, %v6465, 0.0
  %v6563 = vadd.f32 %v6561, %v6562
  %v6564 = vsel %vm1648, %v6466, 0.0
  %v6565 = vadd.f32 %v6563, %v6564
  %v6566 = vsel %vm1648, %v6467, 0.0
  %v6567 = vadd.f32 %v6565, %v6566
  %v6568 = vsel %vm1648, %v6468, 0.0
  %v6569 = vadd.f32 %v6567, %v6568
  %v6570 = vsel %vm1648, %v6469, 0.0
  %v6571 = vadd.f32 %v6569, %v6570
  %v6572 = vsel %vm1648, %v6470, 0.0
  %v6573 = vadd.f32 %v6571, %v6572
  %v6574 = vsel %vm1648, %v6471, 0.0
  %v6575 = vadd.f32 %v6573, %v6574
  %v6576 = vsel %vm1648, %v6472, 0.0
  %v6577 = vadd.f32 %v6575, %v6576
  %v6578 = vsel %vm1648, %v6473, 0.0
  %v6579 = vadd.f32 %v6577, %v6578
  %v6580 = vsel %vm1648, %v6474, 0.0
  %v6581 = vadd.f32 %v6579, %v6580
  %v6582 = vsel %vm1648, %v6475, 0.0
  %v6583 = vadd.f32 %v6581, %v6582
  %v6584 = vsel %vm1648, %v6476, 0.0
  %v6585 = vadd.f32 %v6583, %v6584
  %v6586 = vsel %vm1648, %v6477, 0.0
  %v6587 = vadd.f32 %v6585, %v6586
  %v6588 = vsel %vm1648, %v6478, 0.0
  %v6589 = vadd.f32 %v6587, %v6588
  %v6590 = vsel %vm1648, %v6479, 0.0
  %v6591 = vadd.f32 %v6589, %v6590
  %v6592 = vsel %vm1648, %v6480, 0.0
  %v6593 = vadd.f32 %v6591, %v6592
  %v6594 = vsel %vm1648, %v6481, 0.0
  %v6595 = vadd.f32 %v6593, %v6594
  %v6596 = vsel %vm1648, %v6482, 0.0
  %v6597 = vadd.f32 %v6595, %v6596
  %v6598 = vsel %vm1648, %v6483, 0.0
  %v6599 = vadd.f32 %v6597, %v6598
  %v6600 = vsel %vm1648, %v6484, 0.0
  %v6601 = vadd.f32 %v6599, %v6600
  %v6602 = vsel %vm1648, %v6485, 0.0
  %v6603 = vadd.f32 %v6601, %v6602
  %v6604 = vsel %vm1648, %v6486, 0.0
  %v6605 = vadd.f32 %v6603, %v6604
  %v6606 = vsel %vm1648, %v6487, 0.0
  %v6607 = vadd.f32 %v6605, %v6606
  %v6608 = vsel %vm1648, %v6488, 0.0
  %v6609 = vadd.f32 %v6607, %v6608
  %v6610 = vsel %vm1648, %v6489, 0.0
  %v6611 = vadd.f32 %v6609, %v6610
  %v6612 = vsel %vm1648, %v6490, 0.0
  %v6613 = vadd.f32 %v6611, %v6612
  %v6614 = vsel %vm1648, %v6491, 0.0
  %v6615 = vadd.f32 %v6613, %v6614
  %v6616 = vsel %vm1648, %v6492, 0.0
  %v6617 = vadd.f32 %v6615, %v6616
  %v6618 = vsel %vm1648, %v6493, 0.0
  %v6619 = vadd.f32 %v6617, %v6618
  %v6620 = vsel %vm1648, %v6494, 0.0
  %v6621 = vadd.f32 %v6619, %v6620
  %v6622 = vrot.slane %v6621, 4
  %v6623 = vadd.f32 %v6621, %v6622
  %v6624 = vrot.slane %v6623, 2
  %v6625 = vadd.f32 %v6623, %v6624
  %v6626 = vrot.slane %v6625, 1
  %v6627 = vadd.f32 %v6625, %v6626
  %v6628 = vmul.f32 %v6627, 0.001953125
  %v6629 = vmul.f32 %v6430, %v6430
  %v6630 = vsub.f32 %v6628, %v6629
  %v6631 = vadd.f32 %v6630, 1e-05
  %v6632 = vrsqrt.pop %v6631
  %v6633 = vmul.f32 %v6295, %v6632
  %v6634 = vmul.f32 %v6430, %v6633
  %v6635 = vsub.f32 %v6296, %v6634
  %v6637 = vlaneseq
  %v6638 = vshrl.u32 %v6637, 7
  %v6639 = vsub.s32 0, %v6638
  %v6640 = vrot.slane %v6633, %v6639
  %v6642 = vmul.f32 %v5977, %v6640
  %v6643 = vmul.f32 %v5982, %v6640
  %v6644 = vmul.f32 %v5987, %v6640
  %v6645 = vmul.f32 %v5992, %v6640
  %v6646 = vmul.f32 %v5997, %v6640
  %v6647 = vmul.f32 %v6002, %v6640
  %v6648 = vmul.f32 %v6007, %v6640
  %v6649 = vmul.f32 %v6012, %v6640
  %v6650 = vmul.f32 %v6017, %v6640
  %v6651 = vmul.f32 %v6022, %v6640
  %v6652 = vmul.f32 %v6027, %v6640
  %v6653 = vmul.f32 %v6032, %v6640
  %v6654 = vmul.f32 %v6037, %v6640
  %v6655 = vmul.f32 %v6042, %v6640
  %v6656 = vmul.f32 %v6047, %v6640
  %v6657 = vmul.f32 %v6052, %v6640
  %v6658 = vmul.f32 %v6057, %v6640
  %v6659 = vmul.f32 %v6062, %v6640
  %v6660 = vmul.f32 %v6067, %v6640
  %v6661 = vmul.f32 %v6072, %v6640
  %v6662 = vmul.f32 %v6077, %v6640
  %v6663 = vmul.f32 %v6082, %v6640
  %v6664 = vmul.f32 %v6087, %v6640
  %v6665 = vmul.f32 %v6092, %v6640
  %v6666 = vmul.f32 %v6097, %v6640
  %v6667 = vmul.f32 %v6102, %v6640
  %v6668 = vmul.f32 %v6107, %v6640
  %v6669 = vmul.f32 %v6112, %v6640
  %v6670 = vmul.f32 %v6117, %v6640
  %v6671 = vmul.f32 %v6122, %v6640
  %v6672 = vmul.f32 %v6127, %v6640
  %v6673 = vmul.f32 %v6132, %v6640
  %v6674 = vmul.f32 %v6137, %v6640
  %v6675 = vmul.f32 %v6142, %v6640
  %v6676 = vmul.f32 %v6147, %v6640
  %v6677 = vmul.f32 %v6152, %v6640
  %v6678 = vmul.f32 %v6157, %v6640
  %v6679 = vmul.f32 %v6162, %v6640
  %v6680 = vmul.f32 %v6167, %v6640
  %v6681 = vmul.f32 %v6172, %v6640
  %v6682 = vmul.f32 %v6177, %v6640
  %v6683 = vmul.f32 %v6182, %v6640
  %v6684 = vmul.f32 %v6187, %v6640
  %v6685 = vmul.f32 %v6192, %v6640
  %v6686 = vmul.f32 %v6197, %v6640
  %v6687 = vmul.f32 %v6202, %v6640
  %v6688 = vmul.f32 %v6207, %v6640
  %v6689 = vmul.f32 %v6212, %v6640
  %v6690 = vmul.f32 %v6217, %v6640
  %v6691 = vmul.f32 %v6222, %v6640
  %v6692 = vmul.f32 %v6227, %v6640
  %v6693 = vmul.f32 %v6232, %v6640
  %v6694 = vmul.f32 %v6237, %v6640
  %v6695 = vmul.f32 %v6242, %v6640
  %v6696 = vmul.f32 %v6247, %v6640
  %v6697 = vmul.f32 %v6252, %v6640
  %v6698 = vmul.f32 %v6257, %v6640
  %v6699 = vmul.f32 %v6262, %v6640
  %v6700 = vmul.f32 %v6267, %v6640
  %v6701 = vmul.f32 %v6272, %v6640
  %v6702 = vmul.f32 %v6277, %v6640
  %v6703 = vmul.f32 %v6282, %v6640
  %v6704 = vmul.f32 %v6287, %v6640
  %v6705 = vmul.f32 %v6292, %v6640
  %v6707 = vlaneseq
  %v6708 = vshrl.u32 %v6707, 7
  %v6709 = vsub.s32 0, %v6708
  %v6710 = vrot.slane %v6635, %v6709
  %v6712 = vadd.f32 %v6642, %v6710
  %v6713 = vadd.f32 %v6643, %v6710
  %v6714 = vadd.f32 %v6644, %v6710
  %v6715 = vadd.f32 %v6645, %v6710
  %v6716 = vadd.f32 %v6646, %v6710
  %v6717 = vadd.f32 %v6647, %v6710
  %v6718 = vadd.f32 %v6648, %v6710
  %v6719 = vadd.f32 %v6649, %v6710
  %v6720 = vadd.f32 %v6650, %v6710
  %v6721 = vadd.f32 %v6651, %v6710
  %v6722 = vadd.f32 %v6652, %v6710
  %v6723 = vadd.f32 %v6653, %v6710
  %v6724 = vadd.f32 %v6654, %v6710
  %v6725 = vadd.f32 %v6655, %v6710
  %v6726 = vadd.f32 %v6656, %v6710
  %v6727 = vadd.f32 %v6657, %v6710
  %v6728 = vadd.f32 %v6658, %v6710
  %v6729 = vadd.f32 %v6659, %v6710
  %v6730 = vadd.f32 %v6660, %v6710
  %v6731 = vadd.f32 %v6661, %v6710
  %v6732 = vadd.f32 %v6662, %v6710
  %v6733 = vadd.f32 %v6663, %v6710
  %v6734 = vadd.f32 %v6664, %v6710
  %v6735 = vadd.f32 %v6665, %v6710
  %v6736 = vadd.f32 %v6666, %v6710
  %v6737 = vadd.f32 %v6667, %v6710
  %v6738 = vadd.f32 %v6668, %v6710
  %v6739 = vadd.f32 %v6669, %v6710
  %v6740 = vadd.f32 %v6670, %v6710
  %v6741 = vadd.f32 %v6671, %v6710
  %v6742 = vadd.f32 %v6672, %v6710
  %v6743 = vadd.f32 %v6673, %v6710
  %v6744 = vadd.f32 %v6674, %v6710
  %v6745 = vadd.f32 %v6675, %v6710
  %v6746 = vadd.f32 %v6676, %v6710
  %v6747 = vadd.f32 %v6677, %v6710
  %v6748 = vadd.f32 %v6678, %v6710
  %v6749 = vadd.f32 %v6679, %v6710
  %v6750 = vadd.f32 %v6680, %v6710
  %v6751 = vadd.f32 %v6681, %v6710
  %v6752 = vadd.f32 %v6682, %v6710
  %v6753 = vadd.f32 %v6683, %v6710
  %v6754 = vadd.f32 %v6684, %v6710
  %v6755 = vadd.f32 %v6685, %v6710
  %v6756 = vadd.f32 %v6686, %v6710
  %v6757 = vadd.f32 %v6687, %v6710
  %v6758 = vadd.f32 %v6688, %v6710
  %v6759 = vadd.f32 %v6689, %v6710
  %v6760 = vadd.f32 %v6690, %v6710
  %v6761 = vadd.f32 %v6691, %v6710
  %v6762 = vadd.f32 %v6692, %v6710
  %v6763 = vadd.f32 %v6693, %v6710
  %v6764 = vadd.f32 %v6694, %v6710
  %v6765 = vadd.f32 %v6695, %v6710
  %v6766 = vadd.f32 %v6696, %v6710
  %v6767 = vadd.f32 %v6697, %v6710
  %v6768 = vadd.f32 %v6698, %v6710
  %v6769 = vadd.f32 %v6699, %v6710
  %v6770 = vadd.f32 %v6700, %v6710
  %v6771 = vadd.f32 %v6701, %v6710
  %v6772 = vadd.f32 %v6702, %v6710
  %v6773 = vadd.f32 %v6703, %v6710
  %v6774 = vadd.f32 %v6704, %v6710
  %v6775 = vadd.f32 %v6705, %v6710
  %v6776 = vmax.f32 %v6712, 0.0
  %v6777 = vmax.f32 %v6713, 0.0
  %v6778 = vmax.f32 %v6714, 0.0
  %v6779 = vmax.f32 %v6715, 0.0
  %v6780 = vmax.f32 %v6716, 0.0
  %v6781 = vmax.f32 %v6717, 0.0
  %v6782 = vmax.f32 %v6718, 0.0
  %v6783 = vmax.f32 %v6719, 0.0
  %v6784 = vmax.f32 %v6720, 0.0
  %v6785 = vmax.f32 %v6721, 0.0
  %v6786 = vmax.f32 %v6722, 0.0
  %v6787 = vmax.f32 %v6723, 0.0
  %v6788 = vmax.f32 %v6724, 0.0
  %v6789 = vmax.f32 %v6725, 0.0
  %v6790 = vmax.f32 %v6726, 0.0
  %v6791 = vmax.f32 %v6727, 0.0
  %v6792 = vmax.f32 %v6728, 0.0
  %v6793 = vmax.f32 %v6729, 0.0
  %v6794 = vmax.f32 %v6730, 0.0
  %v6795 = vmax.f32 %v6731, 0.0
  %v6796 = vmax.f32 %v6732, 0.0
  %v6797 = vmax.f32 %v6733, 0.0
  %v6798 = vmax.f32 %v6734, 0.0
  %v6799 = vmax.f32 %v6735, 0.0
  %v6800 = vmax.f32 %v6736, 0.0
  %v6801 = vmax.f32 %v6737, 0.0
  %v6802 = vmax.f32 %v6738, 0.0
  %v6803 = vmax.f32 %v6739, 0.0
  %v6804 = vmax.f32 %v6740, 0.0
  %v6805 = vmax.f32 %v6741, 0.0
  %v6806 = vmax.f32 %v6742, 0.0
  %v6807 = vmax.f32 %v6743, 0.0
  %v6808 = vmax.f32 %v6744, 0.0
  %v6809 = vmax.f32 %v6745, 0.0
  %v6810 = vmax.f32 %v6746, 0.0
  %v6811 = vmax.f32 %v6747, 0.0
  %v6812 = vmax.f32 %v6748, 0.0
  %v6813 = vmax.f32 %v6749, 0.0
  %v6814 = vmax.f32 %v6750, 0.0
  %v6815 = vmax.f32 %v6751, 0.0
  %v6816 = vmax.f32 %v6752, 0.0
  %v6817 = vmax.f32 %v6753, 0.0
  %v6818 = vmax.f32 %v6754, 0.0
  %v6819 = vmax.f32 %v6755, 0.0
  %v6820 = vmax.f32 %v6756, 0.0
  %v6821 = vmax.f32 %v6757, 0.0
  %v6822 = vmax.f32 %v6758, 0.0
  %v6823 = vmax.f32 %v6759, 0.0
  %v6824 = vmax.f32 %v6760, 0.0
  %v6825 = vmax.f32 %v6761, 0.0
  %v6826 = vmax.f32 %v6762, 0.0
  %v6827 = vmax.f32 %v6763, 0.0
  %v6828 = vmax.f32 %v6764, 0.0
  %v6829 = vmax.f32 %v6765, 0.0
  %v6830 = vmax.f32 %v6766, 0.0
  %v6831 = vmax.f32 %v6767, 0.0
  %v6832 = vmax.f32 %v6768, 0.0
  %v6833 = vmax.f32 %v6769, 0.0
  %v6834 = vmax.f32 %v6770, 0.0
  %v6835 = vmax.f32 %v6771, 0.0
  %v6836 = vmax.f32 %v6772, 0.0
  %v6837 = vmax.f32 %v6773, 0.0
  %v6838 = vmax.f32 %v6774, 0.0
  %v6839 = vmax.f32 %v6775, 0.0
  %6840 = vst.msk [vmem:[%s7] sm:$0xff] %vm1648, %v6776
  %6841 = vst.msk [vmem:[%s7 + $0x8] sm:$0xff] %vm1648, %v6777
  %6842 = vst.msk [vmem:[%s7 + $0x10] sm:$0xff] %vm1648, %v6778
  %6843 = vst.msk [vmem:[%s7 + $0x18] sm:$0xff] %vm1648, %v6779
  %6844 = vst.msk [vmem:[%s7 + $0x20] sm:$0xff] %vm1648, %v6780
  %6845 = vst.msk [vmem:[%s7 + $0x28] sm:$0xff] %vm1648, %v6781
  %6846 = vst.msk [vmem:[%s7 + $0x30] sm:$0xff] %vm1648, %v6782
  %6847 = vst.msk [vmem:[%s7 + $0x38] sm:$0xff] %vm1648, %v6783
  %6848 = vst.msk [vmem:[%s7 + $0x40] sm:$0xff] %vm1648, %v6784
  %6849 = vst.msk [vmem:[%s7 + $0x48] sm:$0xff] %vm1648, %v6785
  %6850 = vst.msk [vmem:[%s7 + $0x50] sm:$0xff] %vm1648, %v6786
  %6851 = vst.msk [vmem:[%s7 + $0x58] sm:$0xff] %vm1648, %v6787
  %6852 = vst.msk [vmem:[%s7 + $0x60] sm:$0xff] %vm1648, %v6788
  %6853 = vst.msk [vmem:[%s7 + $0x68] sm:$0xff] %vm1648, %v6789
  %6854 = vst.msk [vmem:[%s7 + $0x70] sm:$0xff] %vm1648, %v6790
  %6855 = vst.msk [vmem:[%s7 + $0x78] sm:$0xff] %vm1648, %v6791
  %6856 = vst.msk [vmem:[%s7 + $0x80] sm:$0xff] %vm1648, %v6792
  %6857 = vst.msk [vmem:[%s7 + $0x88] sm:$0xff] %vm1648, %v6793
  %6858 = vst.msk [vmem:[%s7 + $0x90] sm:$0xff] %vm1648, %v6794
  %6859 = vst.msk [vmem:[%s7 + $0x98] sm:$0xff] %vm1648, %v6795
  %6860 = vst.msk [vmem:[%s7 + $0xa0] sm:$0xff] %vm1648, %v6796
  %6861 = vst.msk [vmem:[%s7 + $0xa8] sm:$0xff] %vm1648, %v6797
  %6862 = vst.msk [vmem:[%s7 + $0xb0] sm:$0xff] %vm1648, %v6798
  %6863 = vst.msk [vmem:[%s7 + $0xb8] sm:$0xff] %vm1648, %v6799
  %6864 = vst.msk [vmem:[%s7 + $0xc0] sm:$0xff] %vm1648, %v6800
  %6865 = vst.msk [vmem:[%s7 + $0xc8] sm:$0xff] %vm1648, %v6801
  %6866 = vst.msk [vmem:[%s7 + $0xd0] sm:$0xff] %vm1648, %v6802
  %6867 = vst.msk [vmem:[%s7 + $0xd8] sm:$0xff] %vm1648, %v6803
  %6868 = vst.msk [vmem:[%s7 + $0xe0] sm:$0xff] %vm1648, %v6804
  %6869 = vst.msk [vmem:[%s7 + $0xe8] sm:$0xff] %vm1648, %v6805
  %6870 = vst.msk [vmem:[%s7 + $0xf0] sm:$0xff] %vm1648, %v6806
  %6871 = vst.msk [vmem:[%s7 + $0xf8] sm:$0xff] %vm1648, %v6807
  %6872 = vst.msk [vmem:[%s7 + $0x100] sm:$0xff] %vm1648, %v6808
  %6873 = vst.msk [vmem:[%s7 + $0x108] sm:$0xff] %vm1648, %v6809
  %6874 = vst.msk [vmem:[%s7 + $0x110] sm:$0xff] %vm1648, %v6810
  %6875 = vst.msk [vmem:[%s7 + $0x118] sm:$0xff] %vm1648, %v6811
  %6876 = vst.msk [vmem:[%s7 + $0x120] sm:$0xff] %vm1648, %v6812
  %6877 = vst.msk [vmem:[%s7 + $0x128] sm:$0xff] %vm1648, %v6813
  %6878 = vst.msk [vmem:[%s7 + $0x130] sm:$0xff] %vm1648, %v6814
  %6879 = vst.msk [vmem:[%s7 + $0x138] sm:$0xff] %vm1648, %v6815
  %6880 = vst.msk [vmem:[%s7 + $0x140] sm:$0xff] %vm1648, %v6816
  %6881 = vst.msk [vmem:[%s7 + $0x148] sm:$0xff] %vm1648, %v6817
  %6882 = vst.msk [vmem:[%s7 + $0x150] sm:$0xff] %vm1648, %v6818
  %6883 = vst.msk [vmem:[%s7 + $0x158] sm:$0xff] %vm1648, %v6819
  %6884 = vst.msk [vmem:[%s7 + $0x160] sm:$0xff] %vm1648, %v6820
  %6885 = vst.msk [vmem:[%s7 + $0x168] sm:$0xff] %vm1648, %v6821
  %6886 = vst.msk [vmem:[%s7 + $0x170] sm:$0xff] %vm1648, %v6822
  %6887 = vst.msk [vmem:[%s7 + $0x178] sm:$0xff] %vm1648, %v6823
  %6888 = vst.msk [vmem:[%s7 + $0x180] sm:$0xff] %vm1648, %v6824
  %6889 = vst.msk [vmem:[%s7 + $0x188] sm:$0xff] %vm1648, %v6825
  %6890 = vst.msk [vmem:[%s7 + $0x190] sm:$0xff] %vm1648, %v6826
  %6891 = vst.msk [vmem:[%s7 + $0x198] sm:$0xff] %vm1648, %v6827
  %6892 = vst.msk [vmem:[%s7 + $0x1a0] sm:$0xff] %vm1648, %v6828
  %6893 = vst.msk [vmem:[%s7 + $0x1a8] sm:$0xff] %vm1648, %v6829
  %6894 = vst.msk [vmem:[%s7 + $0x1b0] sm:$0xff] %vm1648, %v6830
  %6895 = vst.msk [vmem:[%s7 + $0x1b8] sm:$0xff] %vm1648, %v6831
  %6896 = vst.msk [vmem:[%s7 + $0x1c0] sm:$0xff] %vm1648, %v6832
  %6897 = vst.msk [vmem:[%s7 + $0x1c8] sm:$0xff] %vm1648, %v6833
  %6898 = vst.msk [vmem:[%s7 + $0x1d0] sm:$0xff] %vm1648, %v6834
  %6899 = vst.msk [vmem:[%s7 + $0x1d8] sm:$0xff] %vm1648, %v6835
  %6900 = vst.msk [vmem:[%s7 + $0x1e0] sm:$0xff] %vm1648, %v6836
  %6901 = vst.msk [vmem:[%s7 + $0x1e8] sm:$0xff] %vm1648, %v6837
  %6902 = vst.msk [vmem:[%s7 + $0x1f0] sm:$0xff] %vm1648, %v6838
  %6903 = vst.msk [vmem:[%s7 + $0x1f8] sm:$0xff] %vm1648, %v6839
  // Predicated region
  $region30: #{db1_forward.1} parent=0 // pred_check
    _
  $region31: #{db1_forward.1} parent=0 // pred_check_branch
    %6905 = sbr.rel (0) target = $region33
  $region32: #{db1_forward.1} parent=0 // pred_region
    _
  $region33: #{db1_forward.1} parent=0 // pred_fallthru
    _
  // Predicated region
  $region34: #{db1_forward.1} parent=0 // pred_check
    _
  $region35: #{db1_forward.1} parent=0 // pred_check_branch
    %6907 = sbr.rel (0) target = $region37
  $region36: #{db1_forward.1} parent=0 // pred_region
    _
  $region37: #{db1_forward.1} parent=0 // pred_fallthru
    _

</llo_original>
